<compile_context>
chip_gen: v7x
topology: tpu7x:2x2x1
jax: 0.10.0
libtpu: 0.0.40
codegen_flags: <defaults>
</compile_context>

<pallas_src>
import math

import jax
import jax.numpy as jnp
from jax import lax
from jax.experimental import pallas as pl
from jax.experimental.pallas import tpu as pltpu

_PAD_L = 7   # left skirt along W so the interior write starts at column 8


def _double_conv_kernel(x_ref, w1_ref, s1_ref, b1_ref, w2_ref, s2_ref, b2_ref,
                        o_ref, xpad_ref, midpad_ref):
    """Fused (conv3x3 -> BN scale/bias -> ReLU) x 2 for one image.

    x_ref:      (1, H, W, Cin)          input tile (bf16)
    w1_ref:     (9*Cin_p, Cmid_p)       stage-1 weights, tap-major (bf16)
    s1_ref/b1_ref: (1, Cmid_p)          stage-1 BN scale / bias (f32)
    w2_ref:     (9*Cmid_p, Cout_p)      stage-2 weights, tap-major (bf16)
    s2_ref/b2_ref: (1, Cout_p)          stage-2 BN scale / bias (f32)
    o_ref:      (1, H, W, Cout_p)       output tile (f32)
    xpad_ref:   (H+2, W+2+_PAD_L, Cin_p)   bf16 scratch (zero halo)
    midpad_ref: (H+2, W+2+_PAD_L, Cmid_p)  bf16 scratch for the intermediate
    """
    H = o_ref.shape[1]
    W = o_ref.shape[2]
    cin = x_ref.shape[3]
    cin_p = xpad_ref.shape[-1]
    cmid_p = midpad_ref.shape[-1]
    wtot = xpad_ref.shape[1]
    off = wtot - (W + 2)          # = _PAD_L; interior columns start at off+1 (=8)

    # ---- halo-only zeroing (interior is fully overwritten below) ----------
    def zero_halo(pad_ref):
        c = pad_ref.shape[-1]
        zrow = jnp.zeros((1, W + 2, c), pad_ref.dtype)
        pad_ref[0:1, off:wtot, :] = zrow                  # top halo row
        pad_ref[H + 1:H + 2, off:wtot, :] = zrow          # bottom halo row
        zcol = jnp.zeros((H, 1, c), pad_ref.dtype)
        pad_ref[1:H + 1, off:off + 1, :] = zcol           # left halo col
        pad_ref[1:H + 1, wtot - 1:wtot, :] = zcol         # right halo col

    zero_halo(xpad_ref)
    zero_halo(midpad_ref)
    if cin_p > cin:  # padded input-channel lanes must be 0 (uninit VMEM may be NaN)
        xpad_ref[1:H + 1, off + 1:off + 1 + W, cin:cin_p] = jnp.zeros(
            (H, W, cin_p - cin), xpad_ref.dtype)

    # ---- 3x3 conv as 9 accumulated per-tap matmuls ------------------------
    def conv3x3(pad_ref, w_ref):
        c = pad_ref.shape[-1]
        cout = w_ref.shape[-1]
        acc = jnp.zeros((H * W, cout), jnp.float32)
        t = 0
        for dy in range(3):
            for dx in range(3):
                tap = pad_ref[dy:dy + H, off + dx:off + dx + W, :].reshape(H * W, c)
                acc = acc + jnp.dot(tap, w_ref[t * c:(t + 1) * c, :],
                                    preferred_element_type=jnp.float32)
                t += 1
        return acc

    # ---- stage 1: conv3x3 -> BN (f32 scale+bias) -> ReLU -------------------
    xpad_ref[1:H + 1, off + 1:off + 1 + W, :cin] = x_ref[0].astype(xpad_ref.dtype)
    y1 = jnp.maximum(conv3x3(xpad_ref, w1_ref) * s1_ref[...] + b1_ref[...], 0.0)
    midpad_ref[1:H + 1, off + 1:off + 1 + W, :] = (
        y1.reshape(H, W, cmid_p).astype(midpad_ref.dtype))

    # ---- stage 2: conv3x3 -> BN -> ReLU ------------------------------------
    y2 = jnp.maximum(conv3x3(midpad_ref, w2_ref) * s2_ref[...] + b2_ref[...], 0.0)
    o_ref[0] = y2.reshape(H, W, -1).astype(o_ref.dtype)


def _round_up(n, m):
    return ((n + m - 1) // m) * m


@jax.jit
def double_conv(x_nchw, params):
    """DoubleConv forward. x_nchw: (N, Cin, H, W) f32 -> (N, Cout, H, W) f32."""
    (w1, g1, b1, m1, v1, w2, g2, b2, m2, v2) = params
    N, Cin, H, W = x_nchw.shape
    Cmid = w1.shape[-1]
    Cout = w2.shape[-1]
    # Pad channels only to the packing multiple (8), NOT to 128: small-Cin /
    # small-Cout layers would otherwise multiply zeros on the MXU and blow up
    # HBM writeback. Realistic channel counts are already multiples of 8.
    Cin_p = _round_up(Cin, 8)
    Cmid_p = _round_up(Cmid, 8)
    Cout_p = _round_up(Cout, 8)
    Wtot = W + 2 + _PAD_L

    # NCHW -> NHWC (C on the lane axis); bf16 activations halve HBM reads.
    x = jnp.transpose(x_nchw, (0, 2, 3, 1)).astype(jnp.bfloat16)

    # Lay the 3x3 taps out as a (9*Cin_p, Cout_p) tap-major matrix (matches the
    # kernel's per-tap row slices). BN stays as an f32 scale/bias epilogue.
    def prep(w, g, b, m, v, cin_p, cout_p, eps=1e-5):
        cin, cout = w.shape[2], w.shape[3]
        wp = jnp.pad(w, ((0, 0), (0, 0), (0, cin_p - cin), (0, cout_p - cout)))
        wmat = wp.reshape(9 * cin_p, cout_p).astype(jnp.bfloat16)
        scale = g / jnp.sqrt(v + eps)
        bias = b - m * scale
        scale = jnp.pad(scale, ((0, cout_p - cout),), constant_values=1.0)
        bias = jnp.pad(bias, ((0, cout_p - cout),))
        return (wmat,
                scale.reshape(1, cout_p).astype(jnp.float32),
                bias.reshape(1, cout_p).astype(jnp.float32))

    w1m, s1v, b1v = prep(w1, g1, b1, m1, v1, Cin_p, Cmid_p)
    w2m, s2v, b2v = prep(w2, g2, b2, m2, v2, Cmid_p, Cout_p)

    # Explicit scoped-VMEM sizing from the actual buffers.
    def nbytes(shape, dtype):
        return math.prod(shape) * jnp.dtype(dtype).itemsize

    est = (2 * nbytes((1, H, W, Cin), jnp.bfloat16)          # dbl-buffered in tile
           + 2 * nbytes((1, H, W, Cout_p), jnp.float32)      # dbl-buffered out tile
           + nbytes((9 * Cin_p, Cmid_p), jnp.bfloat16)       # weights (single-buf)
           + nbytes((9 * Cmid_p, Cout_p), jnp.bfloat16)
           + 2 * nbytes((1, Cmid_p), jnp.float32)
           + 2 * nbytes((1, Cout_p), jnp.float32)
           + nbytes((H + 2, Wtot, Cin_p), jnp.bfloat16)      # xpad scratch
           + nbytes((H + 2, Wtot, Cmid_p), jnp.bfloat16)     # midpad scratch
           + nbytes((H * W, Cmid_p), jnp.float32)            # acc1
           + nbytes((H * W, Cout_p), jnp.float32)            # acc2
           + 2 * nbytes((H * W, max(Cin_p, Cmid_p)), jnp.bfloat16))  # tap temps
    vmem_limit = int(min(max(2 * est + (4 << 20), 32 << 20), 64 << 20))

    const2 = lambda n: (0, 0)   # noqa: E731 (resident weight/scale/bias blocks)
    out = pl.pallas_call(
        _double_conv_kernel,
        out_shape=jax.ShapeDtypeStruct((N, H, W, Cout_p), jnp.float32),
        grid_spec=pltpu.PrefetchScalarGridSpec(
            num_scalar_prefetch=0,
            grid=(N,),
            in_specs=[
                pl.BlockSpec((1, H, W, Cin), lambda n: (n, 0, 0, 0)),
                pl.BlockSpec((9 * Cin_p, Cmid_p), const2,
                             pipeline_mode=pl.Buffered(1)),
                pl.BlockSpec((1, Cmid_p), const2, pipeline_mode=pl.Buffered(1)),
                pl.BlockSpec((1, Cmid_p), const2, pipeline_mode=pl.Buffered(1)),
                pl.BlockSpec((9 * Cmid_p, Cout_p), const2,
                             pipeline_mode=pl.Buffered(1)),
                pl.BlockSpec((1, Cout_p), const2, pipeline_mode=pl.Buffered(1)),
                pl.BlockSpec((1, Cout_p), const2, pipeline_mode=pl.Buffered(1)),
            ],
            out_specs=pl.BlockSpec((1, H, W, Cout_p), lambda n: (n, 0, 0, 0)),
            scratch_shapes=[
                pltpu.VMEM((H + 2, Wtot, Cin_p), jnp.bfloat16),
                pltpu.VMEM((H + 2, Wtot, Cmid_p), jnp.bfloat16),
            ],
        ),
        compiler_params=pltpu.CompilerParams(
            dimension_semantics=("parallel",),
            vmem_limit_bytes=vmem_limit),
    )(x, w1m, s1v, b1v, w2m, s2v, b2v)

    out = out[..., :Cout]                       # drop (small) lane padding
    return jnp.transpose(out, (0, 3, 1, 2))     # NHWC -> NCHW (module contract)


def _reference(x_nchw, params):
    """Pure-JAX f32 reference (lax.conv) matching PyTorch eval-mode semantics."""
    (w1, g1, b1, m1, v1, w2, g2, b2, m2, v2) = params

    def block(x, w, g, b, m, v):
        y = lax.conv_general_dilated(
            x, w, window_strides=(1, 1), padding="SAME",
            dimension_numbers=("NCHW", "HWIO", "NCHW"),
        )
        scale = g / jnp.sqrt(v + 1e-5)
        bias = b - m * scale
        y = y * scale[None, :, None, None] + bias[None, :, None, None]
        return jnp.maximum(y, 0.0)

    y = block(x_nchw, w1, g1, b1, m1, v1)
    return block(y, w2, g2, b2, m2, v2)


def make_params(key, in_channels, out_channels, mid_channels=None):
    if not mid_channels:
        mid_channels = out_channels
    mid_channels = max(1, mid_channels)
    ks = jax.random.split(key, 6)
    # Conv weights in HWIO (3, 3, Cin, Cout), Kaiming-ish scale.
    w1 = jax.random.normal(ks[0], (3, 3, in_channels, mid_channels), jnp.float32)
    w1 = w1 * (2.0 / (9 * in_channels)) ** 0.5
    w2 = jax.random.normal(ks[1], (3, 3, mid_channels, out_channels), jnp.float32)
    w2 = w2 * (2.0 / (9 * mid_channels)) ** 0.5
    # BN params (eval-mode running stats), deterministic but non-trivial.
    g1 = 1.0 + 0.1 * jax.random.normal(ks[2], (mid_channels,), jnp.float32)
    b1 = 0.1 * jax.random.normal(ks[3], (mid_channels,), jnp.float32)
    m1 = 0.05 * jnp.arange(mid_channels, dtype=jnp.float32)
    v1 = 1.0 + 0.01 * jnp.arange(mid_channels, dtype=jnp.float32)
    g2 = 1.0 + 0.1 * jax.random.normal(ks[4], (out_channels,), jnp.float32)
    b2 = 0.1 * jax.random.normal(ks[5], (out_channels,), jnp.float32)
    m2 = 0.03 * jnp.arange(out_channels, dtype=jnp.float32)
    v2 = 1.0 + 0.02 * jnp.arange(out_channels, dtype=jnp.float32)
    return (w1, g1, b1, m1, v1, w2, g2, b2, m2, v2)


if __name__ == "__main__":
    key = jax.random.PRNGKey(0)
    k_x, k_p = jax.random.split(key)

    N, Cin, H, W = 2, 4, 16, 16
    Cout = 8
    x = jax.random.normal(k_x, (N, Cin, H, W), jnp.float32)
    params = make_params(k_p, Cin, Cout)

    out = jax.block_until_ready(double_conv(x, params))
    ref = _reference(x, params)

    assert out.shape == (N, Cout, H, W)
    # Matmul inputs are bf16 (f32 accumulation, f32 BN epilogue), so compare
    # with a relative tolerance; a real bug (wrong taps / halo / BN) => O(1) err.
    err = jnp.max(jnp.abs(out - ref))
    rel = err / (jnp.max(jnp.abs(ref)) + 1e-6)
    assert rel < 3e-2, f"mismatch vs JAX reference: max_abs={err}, rel={rel}"

    print("KERNEL_OK")
</pallas_src>

<mosaic_0001>
module attributes {stable_mosaic.version = 11 : i64} {
  func.func @_double_conv_kernel(%arg0: i32, %arg1: memref<1x16x16x4xbf16, #tpu.memory_space<vmem>>, %arg2: memref<72x8xbf16, #tpu.memory_space<vmem>>, %arg3: memref<1x8xf32, #tpu.memory_space<vmem>>, %arg4: memref<1x8xf32, #tpu.memory_space<vmem>>, %arg5: memref<72x8xbf16, #tpu.memory_space<vmem>>, %arg6: memref<1x8xf32, #tpu.memory_space<vmem>>, %arg7: memref<1x8xf32, #tpu.memory_space<vmem>>, %arg8: memref<1x16x16x8xf32, #tpu.memory_space<vmem>>, %arg9: memref<18x25x8xbf16, #tpu.memory_space<vmem>>, %arg10: memref<18x25x8xbf16, #tpu.memory_space<vmem>>) attributes {dimension_semantics = [#tpu.dimension_semantics<parallel>], iteration_bounds = array<i64: 2>, scalar_prefetch = 0 : i64, scratch_operands = 2 : i64, tpu.core_type = #tpu.core_type<tc>, window_params = [{transform_indices = @transform_0, window_bounds = array<i64: 1, 16, 16, 4>}, {pipeline_mode = #tpu.pipeline_mode<synchronous>, transform_indices = @transform_1, window_bounds = array<i64: 72, 8>}, {pipeline_mode = #tpu.pipeline_mode<synchronous>, transform_indices = @transform_2, window_bounds = array<i64: 1, 8>}, {pipeline_mode = #tpu.pipeline_mode<synchronous>, transform_indices = @transform_3, window_bounds = array<i64: 1, 8>}, {pipeline_mode = #tpu.pipeline_mode<synchronous>, transform_indices = @transform_4, window_bounds = array<i64: 72, 8>}, {pipeline_mode = #tpu.pipeline_mode<synchronous>, transform_indices = @transform_5, window_bounds = array<i64: 1, 8>}, {pipeline_mode = #tpu.pipeline_mode<synchronous>, transform_indices = @transform_6, window_bounds = array<i64: 1, 8>}, {transform_indices = @transform_7, window_bounds = array<i64: 1, 16, 16, 8>}]} {
    %cst = arith.constant 0.000000e+00 : bf16
    %0 = vector.broadcast %cst : bf16 to vector<1x18x8xbf16>
    %c0 = arith.constant 0 : index
    %c7 = arith.constant 7 : index
    %c0_0 = arith.constant 0 : index
    %1 = vector.load %arg9[%c0, %c7, %c0_0] : memref<18x25x8xbf16, #tpu.memory_space<vmem>>, vector<1x18x8xbf16>
    tpu.vector_store %arg9[%c0, %c7, %c0_0], %0 {strides = array<i32>} : memref<18x25x8xbf16, #tpu.memory_space<vmem>>, vector<1x18x8xbf16>,
    %c17 = arith.constant 17 : index
    %c7_1 = arith.constant 7 : index
    %c0_2 = arith.constant 0 : index
    %2 = vector.load %arg9[%c17, %c7_1, %c0_2] : memref<18x25x8xbf16, #tpu.memory_space<vmem>>, vector<1x18x8xbf16>
    tpu.vector_store %arg9[%c17, %c7_1, %c0_2], %0 {strides = array<i32>} : memref<18x25x8xbf16, #tpu.memory_space<vmem>>, vector<1x18x8xbf16>,
    %cst_3 = arith.constant 0.000000e+00 : bf16
    %3 = vector.broadcast %cst_3 : bf16 to vector<16x1x8xbf16>
    %c1 = arith.constant 1 : index
    %c7_4 = arith.constant 7 : index
    %c0_5 = arith.constant 0 : index
    %4 = vector.load %arg9[%c1, %c7_4, %c0_5] : memref<18x25x8xbf16, #tpu.memory_space<vmem>>, vector<16x1x8xbf16>
    tpu.vector_store %arg9[%c1, %c7_4, %c0_5], %3 {strides = array<i32>} : memref<18x25x8xbf16, #tpu.memory_space<vmem>>, vector<16x1x8xbf16>,
    %c1_6 = arith.constant 1 : index
    %c24 = arith.constant 24 : index
    %c0_7 = arith.constant 0 : index
    %5 = vector.load %arg9[%c1_6, %c24, %c0_7] : memref<18x25x8xbf16, #tpu.memory_space<vmem>>, vector<16x1x8xbf16>
    tpu.vector_store %arg9[%c1_6, %c24, %c0_7], %3 {strides = array<i32>} : memref<18x25x8xbf16, #tpu.memory_space<vmem>>, vector<16x1x8xbf16>,
    %cst_8 = arith.constant 0.000000e+00 : bf16
    %6 = vector.broadcast %cst_8 : bf16 to vector<1x18x8xbf16>
    %c0_9 = arith.constant 0 : index
    %c7_10 = arith.constant 7 : index
    %c0_11 = arith.constant 0 : index
    %7 = vector.load %arg10[%c0_9, %c7_10, %c0_11] : memref<18x25x8xbf16, #tpu.memory_space<vmem>>, vector<1x18x8xbf16>
    tpu.vector_store %arg10[%c0_9, %c7_10, %c0_11], %6 {strides = array<i32>} : memref<18x25x8xbf16, #tpu.memory_space<vmem>>, vector<1x18x8xbf16>,
    %c17_12 = arith.constant 17 : index
    %c7_13 = arith.constant 7 : index
    %c0_14 = arith.constant 0 : index
    %8 = vector.load %arg10[%c17_12, %c7_13, %c0_14] : memref<18x25x8xbf16, #tpu.memory_space<vmem>>, vector<1x18x8xbf16>
    tpu.vector_store %arg10[%c17_12, %c7_13, %c0_14], %6 {strides = array<i32>} : memref<18x25x8xbf16, #tpu.memory_space<vmem>>, vector<1x18x8xbf16>,
    %cst_15 = arith.constant 0.000000e+00 : bf16
    %9 = vector.broadcast %cst_15 : bf16 to vector<16x1x8xbf16>
    %c1_16 = arith.constant 1 : index
    %c7_17 = arith.constant 7 : index
    %c0_18 = arith.constant 0 : index
    %10 = vector.load %arg10[%c1_16, %c7_17, %c0_18] : memref<18x25x8xbf16, #tpu.memory_space<vmem>>, vector<16x1x8xbf16>
    tpu.vector_store %arg10[%c1_16, %c7_17, %c0_18], %9 {strides = array<i32>} : memref<18x25x8xbf16, #tpu.memory_space<vmem>>, vector<16x1x8xbf16>,
    %c1_19 = arith.constant 1 : index
    %c24_20 = arith.constant 24 : index
    %c0_21 = arith.constant 0 : index
    %11 = vector.load %arg10[%c1_19, %c24_20, %c0_21] : memref<18x25x8xbf16, #tpu.memory_space<vmem>>, vector<16x1x8xbf16>
    tpu.vector_store %arg10[%c1_19, %c24_20, %c0_21], %9 {strides = array<i32>} : memref<18x25x8xbf16, #tpu.memory_space<vmem>>, vector<16x1x8xbf16>,
    %cst_22 = arith.constant 0.000000e+00 : bf16
    %12 = vector.broadcast %cst_22 : bf16 to vector<16x16x4xbf16>
    %c1_23 = arith.constant 1 : index
    %c8 = arith.constant 8 : index
    %c4 = arith.constant 4 : index
    %13 = vector.load %arg9[%c1_23, %c8, %c4] : memref<18x25x8xbf16, #tpu.memory_space<vmem>>, vector<16x16x4xbf16>
    tpu.vector_store %arg9[%c1_23, %c8, %c4], %12 {strides = array<i32>} : memref<18x25x8xbf16, #tpu.memory_space<vmem>>, vector<16x16x4xbf16>,
    %c0_24 = arith.constant 0 : index
    %c0_25 = arith.constant 0 : index
    %c0_26 = arith.constant 0 : index
    %c0_27 = arith.constant 0 : index
    %14 = vector.load %arg1[%c0_24, %c0_25, %c0_26, %c0_27] : memref<1x16x16x4xbf16, #tpu.memory_space<vmem>>, vector<1x16x16x4xbf16>
    %15 = vector.shape_cast %14 : vector<1x16x16x4xbf16> to vector<16x16x4xbf16>
    %c1_28 = arith.constant 1 : index
    %c8_29 = arith.constant 8 : index
    %c0_30 = arith.constant 0 : index
    %16 = vector.load %arg9[%c1_28, %c8_29, %c0_30] : memref<18x25x8xbf16, #tpu.memory_space<vmem>>, vector<16x16x4xbf16>
    tpu.vector_store %arg9[%c1_28, %c8_29, %c0_30], %15 {strides = array<i32>} : memref<18x25x8xbf16, #tpu.memory_space<vmem>>, vector<16x16x4xbf16>,
    %cst_31 = arith.constant 0.000000e+00 : f32
    %17 = vector.broadcast %cst_31 : f32 to vector<256x8xf32>
    %c0_32 = arith.constant 0 : index
    %c7_33 = arith.constant 7 : index
    %c0_34 = arith.constant 0 : index
    %18 = vector.load %arg9[%c0_32, %c7_33, %c0_34] : memref<18x25x8xbf16, #tpu.memory_space<vmem>>, vector<16x16x8xbf16>
    %19 = vector.shape_cast %18 : vector<16x16x8xbf16> to vector<256x8xbf16>
    %c0_35 = arith.constant 0 : index
    %c0_36 = arith.constant 0 : index
    %20 = vector.load %arg2[%c0_35, %c0_36] : memref<72x8xbf16, #tpu.memory_space<vmem>>, vector<8x8xbf16>
    %cst_37 = arith.constant dense<0.000000e+00> : vector<256x8xf32>
    %21 = tpu.matmul %19, %20, %cst_37 {dimension_numbers = #tpu.dot_dimension_numbers<[1], [0], [0], [1], [0, 0, 1, 1], [], []>} : vector<256x8xbf16>, vector<8x8xbf16>, vector<256x8xf32> -> vector<256x8xf32>
    %22 = arith.addf %17, %21 : vector<256x8xf32>
    %c0_38 = arith.constant 0 : index
    %c8_39 = arith.constant 8 : index
    %c0_40 = arith.constant 0 : index
    %23 = vector.load %arg9[%c0_38, %c8_39, %c0_40] : memref<18x25x8xbf16, #tpu.memory_space<vmem>>, vector<16x16x8xbf16>
    %24 = vector.shape_cast %23 : vector<16x16x8xbf16> to vector<256x8xbf16>
    %c8_41 = arith.constant 8 : index
    %c0_42 = arith.constant 0 : index
    %25 = vector.load %arg2[%c8_41, %c0_42] : memref<72x8xbf16, #tpu.memory_space<vmem>>, vector<8x8xbf16>
    %cst_43 = arith.constant dense<0.000000e+00> : vector<256x8xf32>
    %26 = tpu.matmul %24, %25, %cst_43 {dimension_numbers = #tpu.dot_dimension_numbers<[1], [0], [0], [1], [0, 0, 1, 1], [], []>} : vector<256x8xbf16>, vector<8x8xbf16>, vector<256x8xf32> -> vector<256x8xf32>
    %27 = arith.addf %22, %26 : vector<256x8xf32>
    %c0_44 = arith.constant 0 : index
    %c9 = arith.constant 9 : index
    %c0_45 = arith.constant 0 : index
    %28 = vector.load %arg9[%c0_44, %c9, %c0_45] : memref<18x25x8xbf16, #tpu.memory_space<vmem>>, vector<16x16x8xbf16>
    %29 = vector.shape_cast %28 : vector<16x16x8xbf16> to vector<256x8xbf16>
    %c16 = arith.constant 16 : index
    %c0_46 = arith.constant 0 : index
    %30 = vector.load %arg2[%c16, %c0_46] : memref<72x8xbf16, #tpu.memory_space<vmem>>, vector<8x8xbf16>
    %cst_47 = arith.constant dense<0.000000e+00> : vector<256x8xf32>
    %31 = tpu.matmul %29, %30, %cst_47 {dimension_numbers = #tpu.dot_dimension_numbers<[1], [0], [0], [1], [0, 0, 1, 1], [], []>} : vector<256x8xbf16>, vector<8x8xbf16>, vector<256x8xf32> -> vector<256x8xf32>
    %32 = arith.addf %27, %31 : vector<256x8xf32>
    %c1_48 = arith.constant 1 : index
    %c7_49 = arith.constant 7 : index
    %c0_50 = arith.constant 0 : index
    %33 = vector.load %arg9[%c1_48, %c7_49, %c0_50] : memref<18x25x8xbf16, #tpu.memory_space<vmem>>, vector<16x16x8xbf16>
    %34 = vector.shape_cast %33 : vector<16x16x8xbf16> to vector<256x8xbf16>
    %c24_51 = arith.constant 24 : index
    %c0_52 = arith.constant 0 : index
    %35 = vector.load %arg2[%c24_51, %c0_52] : memref<72x8xbf16, #tpu.memory_space<vmem>>, vector<8x8xbf16>
    %cst_53 = arith.constant dense<0.000000e+00> : vector<256x8xf32>
    %36 = tpu.matmul %34, %35, %cst_53 {dimension_numbers = #tpu.dot_dimension_numbers<[1], [0], [0], [1], [0, 0, 1, 1], [], []>} : vector<256x8xbf16>, vector<8x8xbf16>, vector<256x8xf32> -> vector<256x8xf32>
    %37 = arith.addf %32, %36 : vector<256x8xf32>
    %c1_54 = arith.constant 1 : index
    %c8_55 = arith.constant 8 : index
    %c0_56 = arith.constant 0 : index
    %38 = vector.load %arg9[%c1_54, %c8_55, %c0_56] : memref<18x25x8xbf16, #tpu.memory_space<vmem>>, vector<16x16x8xbf16>
    %39 = vector.shape_cast %38 : vector<16x16x8xbf16> to vector<256x8xbf16>
    %c32 = arith.constant 32 : index
    %c0_57 = arith.constant 0 : index
    %40 = vector.load %arg2[%c32, %c0_57] : memref<72x8xbf16, #tpu.memory_space<vmem>>, vector<8x8xbf16>
    %cst_58 = arith.constant dense<0.000000e+00> : vector<256x8xf32>
    %41 = tpu.matmul %39, %40, %cst_58 {dimension_numbers = #tpu.dot_dimension_numbers<[1], [0], [0], [1], [0, 0, 1, 1], [], []>} : vector<256x8xbf16>, vector<8x8xbf16>, vector<256x8xf32> -> vector<256x8xf32>
    %42 = arith.addf %37, %41 : vector<256x8xf32>
    %c1_59 = arith.constant 1 : index
    %c9_60 = arith.constant 9 : index
    %c0_61 = arith.constant 0 : index
    %43 = vector.load %arg9[%c1_59, %c9_60, %c0_61] : memref<18x25x8xbf16, #tpu.memory_space<vmem>>, vector<16x16x8xbf16>
    %44 = vector.shape_cast %43 : vector<16x16x8xbf16> to vector<256x8xbf16>
    %c40 = arith.constant 40 : index
    %c0_62 = arith.constant 0 : index
    %45 = vector.load %arg2[%c40, %c0_62] : memref<72x8xbf16, #tpu.memory_space<vmem>>, vector<8x8xbf16>
    %cst_63 = arith.constant dense<0.000000e+00> : vector<256x8xf32>
    %46 = tpu.matmul %44, %45, %cst_63 {dimension_numbers = #tpu.dot_dimension_numbers<[1], [0], [0], [1], [0, 0, 1, 1], [], []>} : vector<256x8xbf16>, vector<8x8xbf16>, vector<256x8xf32> -> vector<256x8xf32>
    %47 = arith.addf %42, %46 : vector<256x8xf32>
    %c2 = arith.constant 2 : index
    %c7_64 = arith.constant 7 : index
    %c0_65 = arith.constant 0 : index
    %48 = vector.load %arg9[%c2, %c7_64, %c0_65] : memref<18x25x8xbf16, #tpu.memory_space<vmem>>, vector<16x16x8xbf16>
    %49 = vector.shape_cast %48 : vector<16x16x8xbf16> to vector<256x8xbf16>
    %c48 = arith.constant 48 : index
    %c0_66 = arith.constant 0 : index
    %50 = vector.load %arg2[%c48, %c0_66] : memref<72x8xbf16, #tpu.memory_space<vmem>>, vector<8x8xbf16>
    %cst_67 = arith.constant dense<0.000000e+00> : vector<256x8xf32>
    %51 = tpu.matmul %49, %50, %cst_67 {dimension_numbers = #tpu.dot_dimension_numbers<[1], [0], [0], [1], [0, 0, 1, 1], [], []>} : vector<256x8xbf16>, vector<8x8xbf16>, vector<256x8xf32> -> vector<256x8xf32>
    %52 = arith.addf %47, %51 : vector<256x8xf32>
    %c2_68 = arith.constant 2 : index
    %c8_69 = arith.constant 8 : index
    %c0_70 = arith.constant 0 : index
    %53 = vector.load %arg9[%c2_68, %c8_69, %c0_70] : memref<18x25x8xbf16, #tpu.memory_space<vmem>>, vector<16x16x8xbf16>
    %54 = vector.shape_cast %53 : vector<16x16x8xbf16> to vector<256x8xbf16>
    %c56 = arith.constant 56 : index
    %c0_71 = arith.constant 0 : index
    %55 = vector.load %arg2[%c56, %c0_71] : memref<72x8xbf16, #tpu.memory_space<vmem>>, vector<8x8xbf16>
    %cst_72 = arith.constant dense<0.000000e+00> : vector<256x8xf32>
    %56 = tpu.matmul %54, %55, %cst_72 {dimension_numbers = #tpu.dot_dimension_numbers<[1], [0], [0], [1], [0, 0, 1, 1], [], []>} : vector<256x8xbf16>, vector<8x8xbf16>, vector<256x8xf32> -> vector<256x8xf32>
    %57 = arith.addf %52, %56 : vector<256x8xf32>
    %c2_73 = arith.constant 2 : index
    %c9_74 = arith.constant 9 : index
    %c0_75 = arith.constant 0 : index
    %58 = vector.load %arg9[%c2_73, %c9_74, %c0_75] : memref<18x25x8xbf16, #tpu.memory_space<vmem>>, vector<16x16x8xbf16>
    %59 = vector.shape_cast %58 : vector<16x16x8xbf16> to vector<256x8xbf16>
    %c64 = arith.constant 64 : index
    %c0_76 = arith.constant 0 : index
    %60 = vector.load %arg2[%c64, %c0_76] : memref<72x8xbf16, #tpu.memory_space<vmem>>, vector<8x8xbf16>
    %cst_77 = arith.constant dense<0.000000e+00> : vector<256x8xf32>
    %61 = tpu.matmul %59, %60, %cst_77 {dimension_numbers = #tpu.dot_dimension_numbers<[1], [0], [0], [1], [0, 0, 1, 1], [], []>} : vector<256x8xbf16>, vector<8x8xbf16>, vector<256x8xf32> -> vector<256x8xf32>
    %62 = arith.addf %57, %61 : vector<256x8xf32>
    %c0_78 = arith.constant 0 : index
    %c0_79 = arith.constant 0 : index
    %63 = vector.load %arg3[%c0_78, %c0_79] : memref<1x8xf32, #tpu.memory_space<vmem>>, vector<1x8xf32>
    %64 = vector.broadcast %63 : vector<1x8xf32> to vector<256x8xf32>
    %65 = arith.mulf %62, %64 : vector<256x8xf32>
    %c0_80 = arith.constant 0 : index
    %c0_81 = arith.constant 0 : index
    %66 = vector.load %arg4[%c0_80, %c0_81] : memref<1x8xf32, #tpu.memory_space<vmem>>, vector<1x8xf32>
    %67 = vector.broadcast %66 : vector<1x8xf32> to vector<256x8xf32>
    %68 = arith.addf %65, %67 : vector<256x8xf32>
    %cst_82 = arith.constant 0.000000e+00 : f32
    %69 = vector.broadcast %cst_82 : f32 to vector<256x8xf32>
    %70 = arith.maximumf %68, %69 : vector<256x8xf32>
    %71 = vector.shape_cast %70 : vector<256x8xf32> to vector<16x16x8xf32>
    %72 = arith.truncf %71 : vector<16x16x8xf32> to vector<16x16x8xbf16>
    %c1_83 = arith.constant 1 : index
    %c8_84 = arith.constant 8 : index
    %c0_85 = arith.constant 0 : index
    %73 = vector.load %arg10[%c1_83, %c8_84, %c0_85] : memref<18x25x8xbf16, #tpu.memory_space<vmem>>, vector<16x16x8xbf16>
    tpu.vector_store %arg10[%c1_83, %c8_84, %c0_85], %72 {strides = array<i32>} : memref<18x25x8xbf16, #tpu.memory_space<vmem>>, vector<16x16x8xbf16>,
    %cst_86 = arith.constant 0.000000e+00 : f32
    %74 = vector.broadcast %cst_86 : f32 to vector<256x8xf32>
    %c0_87 = arith.constant 0 : index
    %c7_88 = arith.constant 7 : index
    %c0_89 = arith.constant 0 : index
    %75 = vector.load %arg10[%c0_87, %c7_88, %c0_89] : memref<18x25x8xbf16, #tpu.memory_space<vmem>>, vector<16x16x8xbf16>
    %76 = vector.shape_cast %75 : vector<16x16x8xbf16> to vector<256x8xbf16>
    %c0_90 = arith.constant 0 : index
    %c0_91 = arith.constant 0 : index
    %77 = vector.load %arg5[%c0_90, %c0_91] : memref<72x8xbf16, #tpu.memory_space<vmem>>, vector<8x8xbf16>
    %cst_92 = arith.constant dense<0.000000e+00> : vector<256x8xf32>
    %78 = tpu.matmul %76, %77, %cst_92 {dimension_numbers = #tpu.dot_dimension_numbers<[1], [0], [0], [1], [0, 0, 1, 1], [], []>} : vector<256x8xbf16>, vector<8x8xbf16>, vector<256x8xf32> -> vector<256x8xf32>
    %79 = arith.addf %74, %78 : vector<256x8xf32>
    %c0_93 = arith.constant 0 : index
    %c8_94 = arith.constant 8 : index
    %c0_95 = arith.constant 0 : index
    %80 = vector.load %arg10[%c0_93, %c8_94, %c0_95] : memref<18x25x8xbf16, #tpu.memory_space<vmem>>, vector<16x16x8xbf16>
    %81 = vector.shape_cast %80 : vector<16x16x8xbf16> to vector<256x8xbf16>
    %c8_96 = arith.constant 8 : index
    %c0_97 = arith.constant 0 : index
    %82 = vector.load %arg5[%c8_96, %c0_97] : memref<72x8xbf16, #tpu.memory_space<vmem>>, vector<8x8xbf16>
    %cst_98 = arith.constant dense<0.000000e+00> : vector<256x8xf32>
    %83 = tpu.matmul %81, %82, %cst_98 {dimension_numbers = #tpu.dot_dimension_numbers<[1], [0], [0], [1], [0, 0, 1, 1], [], []>} : vector<256x8xbf16>, vector<8x8xbf16>, vector<256x8xf32> -> vector<256x8xf32>
    %84 = arith.addf %79, %83 : vector<256x8xf32>
    %c0_99 = arith.constant 0 : index
    %c9_100 = arith.constant 9 : index
    %c0_101 = arith.constant 0 : index
    %85 = vector.load %arg10[%c0_99, %c9_100, %c0_101] : memref<18x25x8xbf16, #tpu.memory_space<vmem>>, vector<16x16x8xbf16>
    %86 = vector.shape_cast %85 : vector<16x16x8xbf16> to vector<256x8xbf16>
    %c16_102 = arith.constant 16 : index
    %c0_103 = arith.constant 0 : index
    %87 = vector.load %arg5[%c16_102, %c0_103] : memref<72x8xbf16, #tpu.memory_space<vmem>>, vector<8x8xbf16>
    %cst_104 = arith.constant dense<0.000000e+00> : vector<256x8xf32>
    %88 = tpu.matmul %86, %87, %cst_104 {dimension_numbers = #tpu.dot_dimension_numbers<[1], [0], [0], [1], [0, 0, 1, 1], [], []>} : vector<256x8xbf16>, vector<8x8xbf16>, vector<256x8xf32> -> vector<256x8xf32>
    %89 = arith.addf %84, %88 : vector<256x8xf32>
    %c1_105 = arith.constant 1 : index
    %c7_106 = arith.constant 7 : index
    %c0_107 = arith.constant 0 : index
    %90 = vector.load %arg10[%c1_105, %c7_106, %c0_107] : memref<18x25x8xbf16, #tpu.memory_space<vmem>>, vector<16x16x8xbf16>
    %91 = vector.shape_cast %90 : vector<16x16x8xbf16> to vector<256x8xbf16>
    %c24_108 = arith.constant 24 : index
    %c0_109 = arith.constant 0 : index
    %92 = vector.load %arg5[%c24_108, %c0_109] : memref<72x8xbf16, #tpu.memory_space<vmem>>, vector<8x8xbf16>
    %cst_110 = arith.constant dense<0.000000e+00> : vector<256x8xf32>
    %93 = tpu.matmul %91, %92, %cst_110 {dimension_numbers = #tpu.dot_dimension_numbers<[1], [0], [0], [1], [0, 0, 1, 1], [], []>} : vector<256x8xbf16>, vector<8x8xbf16>, vector<256x8xf32> -> vector<256x8xf32>
    %94 = arith.addf %89, %93 : vector<256x8xf32>
    %c1_111 = arith.constant 1 : index
    %c8_112 = arith.constant 8 : index
    %c0_113 = arith.constant 0 : index
    %95 = vector.load %arg10[%c1_111, %c8_112, %c0_113] : memref<18x25x8xbf16, #tpu.memory_space<vmem>>, vector<16x16x8xbf16>
    %96 = vector.shape_cast %95 : vector<16x16x8xbf16> to vector<256x8xbf16>
    %c32_114 = arith.constant 32 : index
    %c0_115 = arith.constant 0 : index
    %97 = vector.load %arg5[%c32_114, %c0_115] : memref<72x8xbf16, #tpu.memory_space<vmem>>, vector<8x8xbf16>
    %cst_116 = arith.constant dense<0.000000e+00> : vector<256x8xf32>
    %98 = tpu.matmul %96, %97, %cst_116 {dimension_numbers = #tpu.dot_dimension_numbers<[1], [0], [0], [1], [0, 0, 1, 1], [], []>} : vector<256x8xbf16>, vector<8x8xbf16>, vector<256x8xf32> -> vector<256x8xf32>
    %99 = arith.addf %94, %98 : vector<256x8xf32>
    %c1_117 = arith.constant 1 : index
    %c9_118 = arith.constant 9 : index
    %c0_119 = arith.constant 0 : index
    %100 = vector.load %arg10[%c1_117, %c9_118, %c0_119] : memref<18x25x8xbf16, #tpu.memory_space<vmem>>, vector<16x16x8xbf16>
    %101 = vector.shape_cast %100 : vector<16x16x8xbf16> to vector<256x8xbf16>
    %c40_120 = arith.constant 40 : index
    %c0_121 = arith.constant 0 : index
    %102 = vector.load %arg5[%c40_120, %c0_121] : memref<72x8xbf16, #tpu.memory_space<vmem>>, vector<8x8xbf16>
    %cst_122 = arith.constant dense<0.000000e+00> : vector<256x8xf32>
    %103 = tpu.matmul %101, %102, %cst_122 {dimension_numbers = #tpu.dot_dimension_numbers<[1], [0], [0], [1], [0, 0, 1, 1], [], []>} : vector<256x8xbf16>, vector<8x8xbf16>, vector<256x8xf32> -> vector<256x8xf32>
    %104 = arith.addf %99, %103 : vector<256x8xf32>
    %c2_123 = arith.constant 2 : index
    %c7_124 = arith.constant 7 : index
    %c0_125 = arith.constant 0 : index
    %105 = vector.load %arg10[%c2_123, %c7_124, %c0_125] : memref<18x25x8xbf16, #tpu.memory_space<vmem>>, vector<16x16x8xbf16>
    %106 = vector.shape_cast %105 : vector<16x16x8xbf16> to vector<256x8xbf16>
    %c48_126 = arith.constant 48 : index
    %c0_127 = arith.constant 0 : index
    %107 = vector.load %arg5[%c48_126, %c0_127] : memref<72x8xbf16, #tpu.memory_space<vmem>>, vector<8x8xbf16>
    %cst_128 = arith.constant dense<0.000000e+00> : vector<256x8xf32>
    %108 = tpu.matmul %106, %107, %cst_128 {dimension_numbers = #tpu.dot_dimension_numbers<[1], [0], [0], [1], [0, 0, 1, 1], [], []>} : vector<256x8xbf16>, vector<8x8xbf16>, vector<256x8xf32> -> vector<256x8xf32>
    %109 = arith.addf %104, %108 : vector<256x8xf32>
    %c2_129 = arith.constant 2 : index
    %c8_130 = arith.constant 8 : index
    %c0_131 = arith.constant 0 : index
    %110 = vector.load %arg10[%c2_129, %c8_130, %c0_131] : memref<18x25x8xbf16, #tpu.memory_space<vmem>>, vector<16x16x8xbf16>
    %111 = vector.shape_cast %110 : vector<16x16x8xbf16> to vector<256x8xbf16>
    %c56_132 = arith.constant 56 : index
    %c0_133 = arith.constant 0 : index
    %112 = vector.load %arg5[%c56_132, %c0_133] : memref<72x8xbf16, #tpu.memory_space<vmem>>, vector<8x8xbf16>
    %cst_134 = arith.constant dense<0.000000e+00> : vector<256x8xf32>
    %113 = tpu.matmul %111, %112, %cst_134 {dimension_numbers = #tpu.dot_dimension_numbers<[1], [0], [0], [1], [0, 0, 1, 1], [], []>} : vector<256x8xbf16>, vector<8x8xbf16>, vector<256x8xf32> -> vector<256x8xf32>
    %114 = arith.addf %109, %113 : vector<256x8xf32>
    %c2_135 = arith.constant 2 : index
    %c9_136 = arith.constant 9 : index
    %c0_137 = arith.constant 0 : index
    %115 = vector.load %arg10[%c2_135, %c9_136, %c0_137] : memref<18x25x8xbf16, #tpu.memory_space<vmem>>, vector<16x16x8xbf16>
    %116 = vector.shape_cast %115 : vector<16x16x8xbf16> to vector<256x8xbf16>
    %c64_138 = arith.constant 64 : index
    %c0_139 = arith.constant 0 : index
    %117 = vector.load %arg5[%c64_138, %c0_139] : memref<72x8xbf16, #tpu.memory_space<vmem>>, vector<8x8xbf16>
    %cst_140 = arith.constant dense<0.000000e+00> : vector<256x8xf32>
    %118 = tpu.matmul %116, %117, %cst_140 {dimension_numbers = #tpu.dot_dimension_numbers<[1], [0], [0], [1], [0, 0, 1, 1], [], []>} : vector<256x8xbf16>, vector<8x8xbf16>, vector<256x8xf32> -> vector<256x8xf32>
    %119 = arith.addf %114, %118 : vector<256x8xf32>
    %c0_141 = arith.constant 0 : index
    %c0_142 = arith.constant 0 : index
    %120 = vector.load %arg6[%c0_141, %c0_142] : memref<1x8xf32, #tpu.memory_space<vmem>>, vector<1x8xf32>
    %121 = vector.broadcast %120 : vector<1x8xf32> to vector<256x8xf32>
    %122 = arith.mulf %119, %121 : vector<256x8xf32>
    %c0_143 = arith.constant 0 : index
    %c0_144 = arith.constant 0 : index
    %123 = vector.load %arg7[%c0_143, %c0_144] : memref<1x8xf32, #tpu.memory_space<vmem>>, vector<1x8xf32>
    %124 = vector.broadcast %123 : vector<1x8xf32> to vector<256x8xf32>
    %125 = arith.addf %122, %124 : vector<256x8xf32>
    %cst_145 = arith.constant 0.000000e+00 : f32
    %126 = vector.broadcast %cst_145 : f32 to vector<256x8xf32>
    %127 = arith.maximumf %125, %126 : vector<256x8xf32>
    %128 = vector.shape_cast %127 : vector<256x8xf32> to vector<16x16x8xf32>
    %c0_146 = arith.constant 0 : index
    %c0_147 = arith.constant 0 : index
    %c0_148 = arith.constant 0 : index
    %c0_149 = arith.constant 0 : index
    %129 = vector.load %arg8[%c0_146, %c0_147, %c0_148, %c0_149] : memref<1x16x16x8xf32, #tpu.memory_space<vmem>>, vector<1x16x16x8xf32>
    %130 = vector.shape_cast %129 : vector<1x16x16x8xf32> to vector<16x16x8xf32>
    %131 = vector.shape_cast %128 : vector<16x16x8xf32> to vector<1x16x16x8xf32>
    tpu.vector_store %arg8[%c0_146, %c0_147, %c0_148, %c0_149], %131 {strides = array<i32>} : memref<1x16x16x8xf32, #tpu.memory_space<vmem>>, vector<1x16x16x8xf32>,
    return
  }
  func.func @transform_0(%arg0: i32) -> (i32, i32, i32, i32) {
    %c0_i32 = arith.constant 0 : i32
    %c0_i32_0 = arith.constant 0 : i32
    %c0_i32_1 = arith.constant 0 : i32
    %c0_i32_2 = arith.constant 0 : i32
    return %arg0, %c0_i32, %c0_i32_0, %c0_i32_1 : i32, i32, i32, i32
  }
  func.func @transform_1(%arg0: i32) -> (i32, i32) {
    %c0_i32 = arith.constant 0 : i32
    %c0_i32_0 = arith.constant 0 : i32
    %c0_i32_1 = arith.constant 0 : i32
    return %c0_i32, %c0_i32_0 : i32, i32
  }
  func.func @transform_2(%arg0: i32) -> (i32, i32) {
    %c0_i32 = arith.constant 0 : i32
    %c0_i32_0 = arith.constant 0 : i32
    %c0_i32_1 = arith.constant 0 : i32
    return %c0_i32, %c0_i32_0 : i32, i32
  }
  func.func @transform_3(%arg0: i32) -> (i32, i32) {
    %c0_i32 = arith.constant 0 : i32
    %c0_i32_0 = arith.constant 0 : i32
    %c0_i32_1 = arith.constant 0 : i32
    return %c0_i32, %c0_i32_0 : i32, i32
  }
  func.func @transform_4(%arg0: i32) -> (i32, i32) {
    %c0_i32 = arith.constant 0 : i32
    %c0_i32_0 = arith.constant 0 : i32
    %c0_i32_1 = arith.constant 0 : i32
    return %c0_i32, %c0_i32_0 : i32, i32
  }
  func.func @transform_5(%arg0: i32) -> (i32, i32) {
    %c0_i32 = arith.constant 0 : i32
    %c0_i32_0 = arith.constant 0 : i32
    %c0_i32_1 = arith.constant 0 : i32
    return %c0_i32, %c0_i32_0 : i32, i32
  }
  func.func @transform_6(%arg0: i32) -> (i32, i32) {
    %c0_i32 = arith.constant 0 : i32
    %c0_i32_0 = arith.constant 0 : i32
    %c0_i32_1 = arith.constant 0 : i32
    return %c0_i32, %c0_i32_0 : i32, i32
  }
  func.func @transform_7(%arg0: i32) -> (i32, i32, i32, i32) {
    %c0_i32 = arith.constant 0 : i32
    %c0_i32_0 = arith.constant 0 : i32
    %c0_i32_1 = arith.constant 0 : i32
    %c0_i32_2 = arith.constant 0 : i32
    return %arg0, %c0_i32, %c0_i32_0, %c0_i32_1 : i32, i32, i32, i32
  }
}

</mosaic_0001>

<llo_original>
// kernel: double_conv.1
$region0: #{double_conv.1}
  #allocation0 [shape = 'u32[]', space=smem, size = 0x4, offset = 0x4, fixed_abs, tag = 'smem constant byte address 0x4 - core index']
  #allocation1 [shape = 'u32[144,128]{1,0:T(1,128)}', space=vmem, size = 0x12000, scoped, tag = 'internal scratch']
  #allocation2 [shape = 'bf16[18,25,8]{2,1,0:T(8,128)(2,1)}', space=vmem, size = 0x24000, scoped, tag = 'scratch operand']
  #allocation3 [shape = 'bf16[18,25,8]{2,1,0:T(8,128)(2,1)}', space=vmem, size = 0x24000, scoped, tag = 'scratch operand']
  %s0 = inlined_call_operand.vmem [shape: bf16[2,16,16,4], index: 0, kind: input, shape index: {}]
  %s1 = inlined_call_operand.vmem [shape: bf16[72,8], index: 1, kind: input, shape index: {}]
  %s2 = inlined_call_operand.vmem [shape: f32[1,8], index: 2, kind: input, shape index: {}]
  %s3 = inlined_call_operand.vmem [shape: f32[1,8], index: 3, kind: input, shape index: {}]
  %s4 = inlined_call_operand.vmem [shape: bf16[72,8], index: 4, kind: input, shape index: {}]
  %s5 = inlined_call_operand.vmem [shape: f32[1,8], index: 5, kind: input, shape index: {}]
  %s6 = inlined_call_operand.vmem [shape: f32[1,8], index: 6, kind: input, shape index: {}]
  %s7 = inlined_call_operand.vmem [shape: f32[2,16,16,8], index: 7, kind: output, shape index: {}]
  %s8 = sld [smem:[#allocation0]]
  $region61: #{double_conv.1} parent=0
    _
  %s10 = ssub.s32 1, %s8
  %s11 = scalar_select 0, %s10, %s8
  loop: start=0, step=1, limit=4
  $region2: #{double_conv.1} parent=0 // loop_pre_header
    _
  $region3: #{double_conv.1} parent=0 // loop_header
    %s13 = sphi 0, %s17
    %p14 = scmp.ge.s32.totalorder %s13, 4
    %s23 = sphi 0, %s25
    %s26 = sphi 0, %s23
    %s27 = sphi 0, %s26
    %s43 = sphi 0, %s27
    %s47 = sphi 0, %s47
    %s49 = sphi 0, %s47
    %s50 = sphi 0, %s49
    %s64 = sphi 0, %s50
    %s68 = sphi 0, %s68
    %s70 = sphi 0, %s68
    %s71 = sphi 0, %s70
    %s85 = sphi 0, %s71
    %s89 = sphi 0, %s89
    %s91 = sphi 0, %s89
    %s92 = sphi 0, %s91
    %s106 = sphi 0, %s92
    %s110 = sphi 0, %s110
    %s112 = sphi 0, %s110
    %s113 = sphi 0, %s112
    %s127 = sphi 0, %s113
    %s131 = sphi 0, %s131
    %s133 = sphi 0, %s131
    %s134 = sphi 0, %s133
    %s148 = sphi 0, %s134
    %s152 = sphi 0, %s152
    %s154 = sphi 0, %s152
    %s155 = sphi 0, %s154
    %s169 = sphi 0, %s155
    %s175 = sphi 0, %s177
    %s178 = sphi 0, %s175
    %s179 = sphi 0, %s178
    %s195 = sphi 0, %s179
  $region4: #{double_conv.1} parent=0 // loop_header_branch
    %16 = sbr.rel (%p14) target = $region8
  $region5: #{double_conv.1} parent=0 // loop_body
    %s18 = ssub.s32 %s13, 1
    %s19 = ssub.s32 %s13, 2
    %s20 = sadd.s32 %s13, 1
    %s21 = ssub.s32 %s13, %s20
    %p22 = scmp.eq.s32.totalorder %s21, 0
    %s24 = sadd.s32 %s23, 1
    %s25 = scalar_select %p22, %s23, %s24
    %p28 = pneg %p22
    %p29 = scmp.eq.s32.totalorder %s13, 1
    %p30 = por %p28, %p29
    %p31 = scmp.ne.s32.totalorder %s23, %s26
    %p32 = scmp.eq.s32.totalorder %s13, 0
    %p33 = por %p31, %p32
    %p34 = scmp.ne.s32.totalorder %s23, %s26
    %p35 = scmp.eq.s32.totalorder %s18, 1
    %p36 = por %p34, %p35
    %p37 = scmp.ne.s32.totalorder %s26, %s27
    %p38 = scmp.eq.s32.totalorder %s18, 0
    %p39 = por %p37, %p38
    %p40 = scmp.ne.s32.totalorder %s26, %s27
    %p41 = scmp.eq.s32.totalorder %s19, 1
    %p42 = por %p40, %p41
    %p44 = scmp.ne.s32.totalorder %s27, %s43
    %p45 = scmp.eq.s32.totalorder %s19, 0
    %p46 = por %p44, %p45
    %s48 = sadd.s32 %s47, 1
    %p51 = scmp.eq.s32.totalorder %s13, 1
    %p52 = scmp.ne.s32.totalorder %s47, %s49
    %p53 = scmp.eq.s32.totalorder %s13, 0
    %p54 = por %p52, %p53
    %p55 = scmp.ne.s32.totalorder %s47, %s49
    %p56 = scmp.eq.s32.totalorder %s18, 1
    %p57 = por %p55, %p56
    %p58 = scmp.ne.s32.totalorder %s49, %s50
    %p59 = scmp.eq.s32.totalorder %s18, 0
    %p60 = por %p58, %p59
    %p61 = scmp.ne.s32.totalorder %s49, %s50
    %p62 = scmp.eq.s32.totalorder %s19, 1
    %p63 = por %p61, %p62
    %p65 = scmp.ne.s32.totalorder %s50, %s64
    %p66 = scmp.eq.s32.totalorder %s19, 0
    %p67 = por %p65, %p66
    %s69 = sadd.s32 %s68, 1
    %p72 = scmp.eq.s32.totalorder %s13, 1
    %p73 = scmp.ne.s32.totalorder %s68, %s70
    %p74 = scmp.eq.s32.totalorder %s13, 0
    %p75 = por %p73, %p74
    %p76 = scmp.ne.s32.totalorder %s68, %s70
    %p77 = scmp.eq.s32.totalorder %s18, 1
    %p78 = por %p76, %p77
    %p79 = scmp.ne.s32.totalorder %s70, %s71
    %p80 = scmp.eq.s32.totalorder %s18, 0
    %p81 = por %p79, %p80
    %p82 = scmp.ne.s32.totalorder %s70, %s71
    %p83 = scmp.eq.s32.totalorder %s19, 1
    %p84 = por %p82, %p83
    %p86 = scmp.ne.s32.totalorder %s71, %s85
    %p87 = scmp.eq.s32.totalorder %s19, 0
    %p88 = por %p86, %p87
    %s90 = sadd.s32 %s89, 1
    %p93 = scmp.eq.s32.totalorder %s13, 1
    %p94 = scmp.ne.s32.totalorder %s89, %s91
    %p95 = scmp.eq.s32.totalorder %s13, 0
    %p96 = por %p94, %p95
    %p97 = scmp.ne.s32.totalorder %s89, %s91
    %p98 = scmp.eq.s32.totalorder %s18, 1
    %p99 = por %p97, %p98
    %p100 = scmp.ne.s32.totalorder %s91, %s92
    %p101 = scmp.eq.s32.totalorder %s18, 0
    %p102 = por %p100, %p101
    %p103 = scmp.ne.s32.totalorder %s91, %s92
    %p104 = scmp.eq.s32.totalorder %s19, 1
    %p105 = por %p103, %p104
    %p107 = scmp.ne.s32.totalorder %s92, %s106
    %p108 = scmp.eq.s32.totalorder %s19, 0
    %p109 = por %p107, %p108
    %s111 = sadd.s32 %s110, 1
    %p114 = scmp.eq.s32.totalorder %s13, 1
    %p115 = scmp.ne.s32.totalorder %s110, %s112
    %p116 = scmp.eq.s32.totalorder %s13, 0
    %p117 = por %p115, %p116
    %p118 = scmp.ne.s32.totalorder %s110, %s112
    %p119 = scmp.eq.s32.totalorder %s18, 1
    %p120 = por %p118, %p119
    %p121 = scmp.ne.s32.totalorder %s112, %s113
    %p122 = scmp.eq.s32.totalorder %s18, 0
    %p123 = por %p121, %p122
    %p124 = scmp.ne.s32.totalorder %s112, %s113
    %p125 = scmp.eq.s32.totalorder %s19, 1
    %p126 = por %p124, %p125
    %p128 = scmp.ne.s32.totalorder %s113, %s127
    %p129 = scmp.eq.s32.totalorder %s19, 0
    %p130 = por %p128, %p129
    %s132 = sadd.s32 %s131, 1
    %p135 = scmp.eq.s32.totalorder %s13, 1
    %p136 = scmp.ne.s32.totalorder %s131, %s133
    %p137 = scmp.eq.s32.totalorder %s13, 0
    %p138 = por %p136, %p137
    %p139 = scmp.ne.s32.totalorder %s131, %s133
    %p140 = scmp.eq.s32.totalorder %s18, 1
    %p141 = por %p139, %p140
    %p142 = scmp.ne.s32.totalorder %s133, %s134
    %p143 = scmp.eq.s32.totalorder %s18, 0
    %p144 = por %p142, %p143
    %p145 = scmp.ne.s32.totalorder %s133, %s134
    %p146 = scmp.eq.s32.totalorder %s19, 1
    %p147 = por %p145, %p146
    %p149 = scmp.ne.s32.totalorder %s134, %s148
    %p150 = scmp.eq.s32.totalorder %s19, 0
    %p151 = por %p149, %p150
    %s153 = sadd.s32 %s152, 1
    %p156 = scmp.eq.s32.totalorder %s13, 1
    %p157 = scmp.ne.s32.totalorder %s152, %s154
    %p158 = scmp.eq.s32.totalorder %s13, 0
    %p159 = por %p157, %p158
    %p160 = scmp.ne.s32.totalorder %s152, %s154
    %p161 = scmp.eq.s32.totalorder %s18, 1
    %p162 = por %p160, %p161
    %p163 = scmp.ne.s32.totalorder %s154, %s155
    %p164 = scmp.eq.s32.totalorder %s18, 0
    %p165 = por %p163, %p164
    %p166 = scmp.ne.s32.totalorder %s154, %s155
    %p167 = scmp.eq.s32.totalorder %s19, 1
    %p168 = por %p166, %p167
    %p170 = scmp.ne.s32.totalorder %s155, %s169
    %p171 = scmp.eq.s32.totalorder %s19, 0
    %p172 = por %p170, %p171
    %s173 = ssub.s32 %s13, %s20
    %p174 = scmp.eq.s32.totalorder %s173, 0
    %s176 = sadd.s32 %s175, 1
    %s177 = scalar_select %p174, %s175, %s176
    %p180 = pneg %p174
    %p181 = scmp.eq.s32.totalorder %s13, 1
    %p182 = por %p180, %p181
    %p183 = scmp.ne.s32.totalorder %s175, %s178
    %p184 = scmp.eq.s32.totalorder %s13, 0
    %p185 = por %p183, %p184
    %p186 = scmp.ne.s32.totalorder %s175, %s178
    %p187 = scmp.eq.s32.totalorder %s18, 1
    %p188 = por %p186, %p187
    %p189 = scmp.ne.s32.totalorder %s178, %s179
    %p190 = scmp.eq.s32.totalorder %s18, 0
    %p191 = por %p189, %p190
    %p192 = scmp.ne.s32.totalorder %s178, %s179
    %p193 = scmp.eq.s32.totalorder %s19, 1
    %p194 = por %p192, %p193
    %p196 = scmp.ne.s32.totalorder %s179, %s195
    %p197 = scmp.eq.s32.totalorder %s19, 0
    %p198 = por %p196, %p197
    %p199 = scmp.le.s32.totalorder 1, %s13
    %p200 = scmp.lt.s32.totalorder %s13, 3
    %p201 = pnand %p199, %p200
    %p202 = pneg %p201
    // Predicated region
    $region9: #{double_conv.1} parent=5 // pred_check
      _
    $region10: #{double_conv.1} parent=5 // pred_check_branch
      %204 = sbr.rel (%p201) target = $region12
    $region11: #{double_conv.1} parent=5 // pred_region
      %s205 = ssub.s32 %s13, 1
      // Predicated region
      $region13: #{double_conv.1} parent=11 // pred_check
        %p206 = pneg %p60
      $region14: #{double_conv.1} parent=11 // pred_check_branch
        %208 = sbr.rel (%p206) target = $region16
      $region15: #{double_conv.1} parent=11 // pred_region
        _
      $region16: #{double_conv.1} parent=11 // pred_fallthru
        _
      // Predicated region
      $region17: #{double_conv.1} parent=11 // pred_check
        %p209 = pneg %p81
      $region18: #{double_conv.1} parent=11 // pred_check_branch
        %211 = sbr.rel (%p209) target = $region20
      $region19: #{double_conv.1} parent=11 // pred_region
        _
      $region20: #{double_conv.1} parent=11 // pred_fallthru
        _
      // Predicated region
      $region21: #{double_conv.1} parent=11 // pred_check
        %p212 = pneg %p102
      $region22: #{double_conv.1} parent=11 // pred_check_branch
        %214 = sbr.rel (%p212) target = $region24
      $region23: #{double_conv.1} parent=11 // pred_region
        _
      $region24: #{double_conv.1} parent=11 // pred_fallthru
        _
      // Predicated region
      $region25: #{double_conv.1} parent=11 // pred_check
        %p215 = pneg %p123
      $region26: #{double_conv.1} parent=11 // pred_check_branch
        %217 = sbr.rel (%p215) target = $region28
      $region27: #{double_conv.1} parent=11 // pred_region
        _
      $region28: #{double_conv.1} parent=11 // pred_fallthru
        _
      // Predicated region
      $region29: #{double_conv.1} parent=11 // pred_check
        %p218 = pneg %p144
      $region30: #{double_conv.1} parent=11 // pred_check_branch
        %220 = sbr.rel (%p218) target = $region32
      $region31: #{double_conv.1} parent=11 // pred_region
        _
      $region32: #{double_conv.1} parent=11 // pred_fallthru
        _
      // Predicated region
      $region33: #{double_conv.1} parent=11 // pred_check
        %p221 = pneg %p165
      $region34: #{double_conv.1} parent=11 // pred_check_branch
        %223 = sbr.rel (%p221) target = $region36
      $region35: #{double_conv.1} parent=11 // pred_region
        _
      $region36: #{double_conv.1} parent=11 // pred_fallthru
        _
    $region12: #{double_conv.1} parent=5 // pred_fallthru
      _
    %p224 = scmp.lt.s32.totalorder %s13, 2
    // Predicated region
    $region37: #{double_conv.1} parent=5 // pred_check
      %p225 = pneg %p224
    $region38: #{double_conv.1} parent=5 // pred_check_branch
      %227 = sbr.rel (%p225) target = $region40
    $region39: #{double_conv.1} parent=5 // pred_region
      // Predicated region
      $region41: #{double_conv.1} parent=39 // pred_check
        %p228 = pneg %p33
      $region42: #{double_conv.1} parent=39 // pred_check_branch
        %230 = sbr.rel (%p228) target = $region44
      $region43: #{double_conv.1} parent=39 // pred_region
        %p231 = scmp.lt.s32.totalorder %s13, 1
        %s232 = scalar_select %p231, %s13, 1
        %s233 = smul.addr %s232, 32
        %s234 = smul.addr %s233, 4
        %s235 = scalar_lea.vmem %s0, %s234
      $region44: #{double_conv.1} parent=39 // pred_fallthru
        _
    $region40: #{double_conv.1} parent=5 // pred_fallthru
      _
    %p236 = scmp.le.s32.totalorder 1, %s13
    %p237 = scmp.lt.s32.totalorder %s13, 3
    %p238 = pnand %p236, %p237
    %p239 = pneg %p238
    // Predicated region
    $region45: #{double_conv.1} parent=5 // pred_check
      _
    $region46: #{double_conv.1} parent=5 // pred_check_branch
      %241 = sbr.rel (%p238) target = $region48
    $region47: #{double_conv.1} parent=5 // pred_region
      %s242 = ssub.s32 %s13, 1
      %p243 = scmp.lt.s32.totalorder %s18, 1
      %s244 = scalar_select %p243, %s18, 1
      %s245 = smul.addr %s244, 32
      %s246 = smul.addr %s245, 4
      %s247 = scalar_lea.vmem %s0, %s246
      %p248 = pneg %p39
      %p249 = pneg %p36
      %p250 = pneg %p60
      %p251 = pneg %p57
      %p252 = pneg %p81
      %p253 = pneg %p78
      %p254 = pneg %p102
      %p255 = pneg %p99
      %p256 = pneg %p123
      %p257 = pneg %p120
      %p258 = pneg %p144
      %p259 = pneg %p141
      %p260 = pneg %p165
      %p261 = pneg %p162
      %p262 = pneg %p191
      %p263 = pneg %p188
      %p264 = scmp.lt.s32.totalorder %s18, 1
      %s265 = scalar_select %p264, %s18, 1
      %s266 = smul.addr %s265, 32
      %s267 = smul.addr %s266, 8
      %s268 = scalar_lea.vmem %s7, %s267
      %p269 = scmp.lt.s32.totalorder %s18, 1
      %s270 = scalar_select %p269, %s18, 1
      %s271 = smul.addr %s270, 32
      %s272 = smul.addr %s271, 4
      %s273 = scalar_lea.vmem %s0, %s272
      %p274 = scmp.lt.s32.totalorder %s18, 1
      %s275 = scalar_select %p274, %s18, 1
      %s276 = smul.addr %s275, 32
      %s277 = smul.addr %s276, 8
      %s278 = scalar_lea.vmem %s7, %s277
      %vm280 = vcmask 60419
      %vm281 = vsmask.f32 7950
      %vm282 = vmand %vm280, %vm281
      %v283 = vld [vmem:[#allocation2] sm:$0x8]
      %v284 = vsel %vm282, 0, %v283
      %285 = vst [vmem:[#allocation2] sm:$0x8] %v284
      %vm286 = vcmask 60416
      %287 = vst.msk [vmem:[#allocation2 + $0x4] sm:$0xf] %vm286, 0
      %288 = vst.msk [vmem:[#allocation2 + $0x8] sm:$0xf] %vm286, 0
      %vm289 = vcmask 57344
      %vm290 = vsmask.f32 256
      %vm291 = vmand %vm289, %vm290
      %v292 = vld [vmem:[#allocation2 + $0xc] sm:$0x1]
      %v293 = vsel %vm291, 0, %v292
      %294 = vst [vmem:[#allocation2 + $0xc] sm:$0x1] %v293
      %s295 = scalar_lea.vmem [#allocation2], 272
      %v296 = vld [vmem:[%s295] sm:$0x8]
      %v297 = vsel %vm282, 0, %v296
      %298 = vst [vmem:[%s295] sm:$0x8] %v297
      %299 = vst.msk [vmem:[%s295 + $0x4] sm:$0xf] %vm286, 0
      %300 = vst.msk [vmem:[%s295 + $0x8] sm:$0xf] %vm286, 0
      %v301 = vld [vmem:[%s295 + $0xc] sm:$0x1]
      %v302 = vsel %vm291, 0, %v301
      %303 = vst [vmem:[%s295 + $0xc] sm:$0x1] %v302
      %s304 = scalar_lea.vmem [#allocation2], 16
      %v305 = vld [vmem:[%s304] sm:$0x8]
      %v306 = vsel %vm282, 0, %v305
      %307 = vst [vmem:[%s304] sm:$0x8] %v306
      %v308 = vld [vmem:[%s304 + $0x10] sm:$0x8]
      %v309 = vsel %vm282, 0, %v308
      %310 = vst [vmem:[%s304 + $0x10] sm:$0x8] %v309
      %v311 = vld [vmem:[%s304 + $0x20] sm:$0x8]
      %v312 = vsel %vm282, 0, %v311
      %313 = vst [vmem:[%s304 + $0x20] sm:$0x8] %v312
      %v314 = vld [vmem:[%s304 + $0x30] sm:$0x8]
      %v315 = vsel %vm282, 0, %v314
      %316 = vst [vmem:[%s304 + $0x30] sm:$0x8] %v315
      %v317 = vld [vmem:[%s304 + $0x40] sm:$0x8]
      %v318 = vsel %vm282, 0, %v317
      %319 = vst [vmem:[%s304 + $0x40] sm:$0x8] %v318
      %v320 = vld [vmem:[%s304 + $0x50] sm:$0x8]
      %v321 = vsel %vm282, 0, %v320
      %322 = vst [vmem:[%s304 + $0x50] sm:$0x8] %v321
      %v323 = vld [vmem:[%s304 + $0x60] sm:$0x8]
      %v324 = vsel %vm282, 0, %v323
      %325 = vst [vmem:[%s304 + $0x60] sm:$0x8] %v324
      %v326 = vld [vmem:[%s304 + $0x70] sm:$0x8]
      %v327 = vsel %vm282, 0, %v326
      %328 = vst [vmem:[%s304 + $0x70] sm:$0x8] %v327
      %v329 = vld [vmem:[%s304 + $0x80] sm:$0x8]
      %v330 = vsel %vm282, 0, %v329
      %331 = vst [vmem:[%s304 + $0x80] sm:$0x8] %v330
      %v332 = vld [vmem:[%s304 + $0x90] sm:$0x8]
      %v333 = vsel %vm282, 0, %v332
      %334 = vst [vmem:[%s304 + $0x90] sm:$0x8] %v333
      %v335 = vld [vmem:[%s304 + $0xa0] sm:$0x8]
      %v336 = vsel %vm282, 0, %v335
      %337 = vst [vmem:[%s304 + $0xa0] sm:$0x8] %v336
      %v338 = vld [vmem:[%s304 + $0xb0] sm:$0x8]
      %v339 = vsel %vm282, 0, %v338
      %340 = vst [vmem:[%s304 + $0xb0] sm:$0x8] %v339
      %v341 = vld [vmem:[%s304 + $0xc0] sm:$0x8]
      %v342 = vsel %vm282, 0, %v341
      %343 = vst [vmem:[%s304 + $0xc0] sm:$0x8] %v342
      %v344 = vld [vmem:[%s304 + $0xd0] sm:$0x8]
      %v345 = vsel %vm282, 0, %v344
      %346 = vst [vmem:[%s304 + $0xd0] sm:$0x8] %v345
      %v347 = vld [vmem:[%s304 + $0xe0] sm:$0x8]
      %v348 = vsel %vm282, 0, %v347
      %349 = vst [vmem:[%s304 + $0xe0] sm:$0x8] %v348
      %v350 = vld [vmem:[%s304 + $0xf0] sm:$0x8]
      %v351 = vsel %vm282, 0, %v350
      %352 = vst [vmem:[%s304 + $0xf0] sm:$0x8] %v351
      %v353 = vld [vmem:[%s304 + $0xc] sm:$0x1]
      %v354 = vsel %vm291, 0, %v353
      %355 = vst [vmem:[%s304 + $0xc] sm:$0x1] %v354
      %v356 = vld [vmem:[%s304 + $0x1c] sm:$0x1]
      %v357 = vsel %vm291, 0, %v356
      %358 = vst [vmem:[%s304 + $0x1c] sm:$0x1] %v357
      %v359 = vld [vmem:[%s304 + $0x2c] sm:$0x1]
      %v360 = vsel %vm291, 0, %v359
      %361 = vst [vmem:[%s304 + $0x2c] sm:$0x1] %v360
      %v362 = vld [vmem:[%s304 + $0x3c] sm:$0x1]
      %v363 = vsel %vm291, 0, %v362
      %364 = vst [vmem:[%s304 + $0x3c] sm:$0x1] %v363
      %v365 = vld [vmem:[%s304 + $0x4c] sm:$0x1]
      %v366 = vsel %vm291, 0, %v365
      %367 = vst [vmem:[%s304 + $0x4c] sm:$0x1] %v366
      %v368 = vld [vmem:[%s304 + $0x5c] sm:$0x1]
      %v369 = vsel %vm291, 0, %v368
      %370 = vst [vmem:[%s304 + $0x5c] sm:$0x1] %v369
      %v371 = vld [vmem:[%s304 + $0x6c] sm:$0x1]
      %v372 = vsel %vm291, 0, %v371
      %373 = vst [vmem:[%s304 + $0x6c] sm:$0x1] %v372
      %v374 = vld [vmem:[%s304 + $0x7c] sm:$0x1]
      %v375 = vsel %vm291, 0, %v374
      %376 = vst [vmem:[%s304 + $0x7c] sm:$0x1] %v375
      %v377 = vld [vmem:[%s304 + $0x8c] sm:$0x1]
      %v378 = vsel %vm291, 0, %v377
      %379 = vst [vmem:[%s304 + $0x8c] sm:$0x1] %v378
      %v380 = vld [vmem:[%s304 + $0x9c] sm:$0x1]
      %v381 = vsel %vm291, 0, %v380
      %382 = vst [vmem:[%s304 + $0x9c] sm:$0x1] %v381
      %v383 = vld [vmem:[%s304 + $0xac] sm:$0x1]
      %v384 = vsel %vm291, 0, %v383
      %385 = vst [vmem:[%s304 + $0xac] sm:$0x1] %v384
      %v386 = vld [vmem:[%s304 + $0xbc] sm:$0x1]
      %v387 = vsel %vm291, 0, %v386
      %388 = vst [vmem:[%s304 + $0xbc] sm:$0x1] %v387
      %v389 = vld [vmem:[%s304 + $0xcc] sm:$0x1]
      %v390 = vsel %vm291, 0, %v389
      %391 = vst [vmem:[%s304 + $0xcc] sm:$0x1] %v390
      %v392 = vld [vmem:[%s304 + $0xdc] sm:$0x1]
      %v393 = vsel %vm291, 0, %v392
      %394 = vst [vmem:[%s304 + $0xdc] sm:$0x1] %v393
      %v395 = vld [vmem:[%s304 + $0xec] sm:$0x1]
      %v396 = vsel %vm291, 0, %v395
      %397 = vst [vmem:[%s304 + $0xec] sm:$0x1] %v396
      %v398 = vld [vmem:[%s304 + $0xfc] sm:$0x1]
      %v399 = vsel %vm291, 0, %v398
      %400 = vst [vmem:[%s304 + $0xfc] sm:$0x1] %v399
      %v401 = vld [vmem:[#allocation3] sm:$0x8]
      %v402 = vsel %vm282, 0, %v401
      %403 = vst [vmem:[#allocation3] sm:$0x8] %v402
      %404 = vst.msk [vmem:[#allocation3 + $0x4] sm:$0xf] %vm286, 0
      %405 = vst.msk [vmem:[#allocation3 + $0x8] sm:$0xf] %vm286, 0
      %v406 = vld [vmem:[#allocation3 + $0xc] sm:$0x1]
      %v407 = vsel %vm291, 0, %v406
      %408 = vst [vmem:[#allocation3 + $0xc] sm:$0x1] %v407
      %s409 = scalar_lea.vmem [#allocation3], 272
      %v410 = vld [vmem:[%s409] sm:$0x8]
      %v411 = vsel %vm282, 0, %v410
      %412 = vst [vmem:[%s409] sm:$0x8] %v411
      %413 = vst.msk [vmem:[%s409 + $0x4] sm:$0xf] %vm286, 0
      %414 = vst.msk [vmem:[%s409 + $0x8] sm:$0xf] %vm286, 0
      %v415 = vld [vmem:[%s409 + $0xc] sm:$0x1]
      %v416 = vsel %vm291, 0, %v415
      %417 = vst [vmem:[%s409 + $0xc] sm:$0x1] %v416
      %s418 = scalar_lea.vmem [#allocation3], 16
      %v419 = vld [vmem:[%s418] sm:$0x8]
      %v420 = vsel %vm282, 0, %v419
      %421 = vst [vmem:[%s418] sm:$0x8] %v420
      %v422 = vld [vmem:[%s418 + $0x10] sm:$0x8]
      %v423 = vsel %vm282, 0, %v422
      %424 = vst [vmem:[%s418 + $0x10] sm:$0x8] %v423
      %v425 = vld [vmem:[%s418 + $0x20] sm:$0x8]
      %v426 = vsel %vm282, 0, %v425
      %427 = vst [vmem:[%s418 + $0x20] sm:$0x8] %v426
      %v428 = vld [vmem:[%s418 + $0x30] sm:$0x8]
      %v429 = vsel %vm282, 0, %v428
      %430 = vst [vmem:[%s418 + $0x30] sm:$0x8] %v429
      %v431 = vld [vmem:[%s418 + $0x40] sm:$0x8]
      %v432 = vsel %vm282, 0, %v431
      %433 = vst [vmem:[%s418 + $0x40] sm:$0x8] %v432
      %v434 = vld [vmem:[%s418 + $0x50] sm:$0x8]
      %v435 = vsel %vm282, 0, %v434
      %436 = vst [vmem:[%s418 + $0x50] sm:$0x8] %v435
      %v437 = vld [vmem:[%s418 + $0x60] sm:$0x8]
      %v438 = vsel %vm282, 0, %v437
      %439 = vst [vmem:[%s418 + $0x60] sm:$0x8] %v438
      %v440 = vld [vmem:[%s418 + $0x70] sm:$0x8]
      %v441 = vsel %vm282, 0, %v440
      %442 = vst [vmem:[%s418 + $0x70] sm:$0x8] %v441
      %v443 = vld [vmem:[%s418 + $0x80] sm:$0x8]
      %v444 = vsel %vm282, 0, %v443
      %445 = vst [vmem:[%s418 + $0x80] sm:$0x8] %v444
      %v446 = vld [vmem:[%s418 + $0x90] sm:$0x8]
      %v447 = vsel %vm282, 0, %v446
      %448 = vst [vmem:[%s418 + $0x90] sm:$0x8] %v447
      %v449 = vld [vmem:[%s418 + $0xa0] sm:$0x8]
      %v450 = vsel %vm282, 0, %v449
      %451 = vst [vmem:[%s418 + $0xa0] sm:$0x8] %v450
      %v452 = vld [vmem:[%s418 + $0xb0] sm:$0x8]
      %v453 = vsel %vm282, 0, %v452
      %454 = vst [vmem:[%s418 + $0xb0] sm:$0x8] %v453
      %v455 = vld [vmem:[%s418 + $0xc0] sm:$0x8]
      %v456 = vsel %vm282, 0, %v455
      %457 = vst [vmem:[%s418 + $0xc0] sm:$0x8] %v456
      %v458 = vld [vmem:[%s418 + $0xd0] sm:$0x8]
      %v459 = vsel %vm282, 0, %v458
      %460 = vst [vmem:[%s418 + $0xd0] sm:$0x8] %v459
      %v461 = vld [vmem:[%s418 + $0xe0] sm:$0x8]
      %v462 = vsel %vm282, 0, %v461
      %463 = vst [vmem:[%s418 + $0xe0] sm:$0x8] %v462
      %v464 = vld [vmem:[%s418 + $0xf0] sm:$0x8]
      %v465 = vsel %vm282, 0, %v464
      %466 = vst [vmem:[%s418 + $0xf0] sm:$0x8] %v465
      %v467 = vld [vmem:[%s418 + $0xc] sm:$0x1]
      %v468 = vsel %vm291, 0, %v467
      %469 = vst [vmem:[%s418 + $0xc] sm:$0x1] %v468
      %v470 = vld [vmem:[%s418 + $0x1c] sm:$0x1]
      %v471 = vsel %vm291, 0, %v470
      %472 = vst [vmem:[%s418 + $0x1c] sm:$0x1] %v471
      %v473 = vld [vmem:[%s418 + $0x2c] sm:$0x1]
      %v474 = vsel %vm291, 0, %v473
      %475 = vst [vmem:[%s418 + $0x2c] sm:$0x1] %v474
      %v476 = vld [vmem:[%s418 + $0x3c] sm:$0x1]
      %v477 = vsel %vm291, 0, %v476
      %478 = vst [vmem:[%s418 + $0x3c] sm:$0x1] %v477
      %v479 = vld [vmem:[%s418 + $0x4c] sm:$0x1]
      %v480 = vsel %vm291, 0, %v479
      %481 = vst [vmem:[%s418 + $0x4c] sm:$0x1] %v480
      %v482 = vld [vmem:[%s418 + $0x5c] sm:$0x1]
      %v483 = vsel %vm291, 0, %v482
      %484 = vst [vmem:[%s418 + $0x5c] sm:$0x1] %v483
      %v485 = vld [vmem:[%s418 + $0x6c] sm:$0x1]
      %v486 = vsel %vm291, 0, %v485
      %487 = vst [vmem:[%s418 + $0x6c] sm:$0x1] %v486
      %v488 = vld [vmem:[%s418 + $0x7c] sm:$0x1]
      %v489 = vsel %vm291, 0, %v488
      %490 = vst [vmem:[%s418 + $0x7c] sm:$0x1] %v489
      %v491 = vld [vmem:[%s418 + $0x8c] sm:$0x1]
      %v492 = vsel %vm291, 0, %v491
      %493 = vst [vmem:[%s418 + $0x8c] sm:$0x1] %v492
      %v494 = vld [vmem:[%s418 + $0x9c] sm:$0x1]
      %v495 = vsel %vm291, 0, %v494
      %496 = vst [vmem:[%s418 + $0x9c] sm:$0x1] %v495
      %v497 = vld [vmem:[%s418 + $0xac] sm:$0x1]
      %v498 = vsel %vm291, 0, %v497
      %499 = vst [vmem:[%s418 + $0xac] sm:$0x1] %v498
      %v500 = vld [vmem:[%s418 + $0xbc] sm:$0x1]
      %v501 = vsel %vm291, 0, %v500
      %502 = vst [vmem:[%s418 + $0xbc] sm:$0x1] %v501
      %v503 = vld [vmem:[%s418 + $0xcc] sm:$0x1]
      %v504 = vsel %vm291, 0, %v503
      %505 = vst [vmem:[%s418 + $0xcc] sm:$0x1] %v504
      %v506 = vld [vmem:[%s418 + $0xdc] sm:$0x1]
      %v507 = vsel %vm291, 0, %v506
      %508 = vst [vmem:[%s418 + $0xdc] sm:$0x1] %v507
      %v509 = vld [vmem:[%s418 + $0xec] sm:$0x1]
      %v510 = vsel %vm291, 0, %v509
      %511 = vst [vmem:[%s418 + $0xec] sm:$0x1] %v510
      %v512 = vld [vmem:[%s418 + $0xfc] sm:$0x1]
      %v513 = vsel %vm291, 0, %v512
      %514 = vst [vmem:[%s418 + $0xfc] sm:$0x1] %v513
      %vm515 = vcmask 60448
      %516 = vst.msk [vmem:[%s304 + $0x4] sm:$0xf] %vm515, 0
      %517 = vst.msk [vmem:[%s304 + $0x8] sm:$0xf] %vm515, 0
      %518 = vst.msk [vmem:[%s304 + $0x14] sm:$0xf] %vm515, 0
      %519 = vst.msk [vmem:[%s304 + $0x18] sm:$0xf] %vm515, 0
      %520 = vst.msk [vmem:[%s304 + $0x24] sm:$0xf] %vm515, 0
      %521 = vst.msk [vmem:[%s304 + $0x28] sm:$0xf] %vm515, 0
      %522 = vst.msk [vmem:[%s304 + $0x34] sm:$0xf] %vm515, 0
      %523 = vst.msk [vmem:[%s304 + $0x38] sm:$0xf] %vm515, 0
      %524 = vst.msk [vmem:[%s304 + $0x44] sm:$0xf] %vm515, 0
      %525 = vst.msk [vmem:[%s304 + $0x48] sm:$0xf] %vm515, 0
      %526 = vst.msk [vmem:[%s304 + $0x54] sm:$0xf] %vm515, 0
      %527 = vst.msk [vmem:[%s304 + $0x58] sm:$0xf] %vm515, 0
      %528 = vst.msk [vmem:[%s304 + $0x64] sm:$0xf] %vm515, 0
      %529 = vst.msk [vmem:[%s304 + $0x68] sm:$0xf] %vm515, 0
      %530 = vst.msk [vmem:[%s304 + $0x74] sm:$0xf] %vm515, 0
      %531 = vst.msk [vmem:[%s304 + $0x78] sm:$0xf] %vm515, 0
      %532 = vst.msk [vmem:[%s304 + $0x84] sm:$0xf] %vm515, 0
      %533 = vst.msk [vmem:[%s304 + $0x88] sm:$0xf] %vm515, 0
      %534 = vst.msk [vmem:[%s304 + $0x94] sm:$0xf] %vm515, 0
      %535 = vst.msk [vmem:[%s304 + $0x98] sm:$0xf] %vm515, 0
      %536 = vst.msk [vmem:[%s304 + $0xa4] sm:$0xf] %vm515, 0
      %537 = vst.msk [vmem:[%s304 + $0xa8] sm:$0xf] %vm515, 0
      %538 = vst.msk [vmem:[%s304 + $0xb4] sm:$0xf] %vm515, 0
      %539 = vst.msk [vmem:[%s304 + $0xb8] sm:$0xf] %vm515, 0
      %540 = vst.msk [vmem:[%s304 + $0xc4] sm:$0xf] %vm515, 0
      %541 = vst.msk [vmem:[%s304 + $0xc8] sm:$0xf] %vm515, 0
      %542 = vst.msk [vmem:[%s304 + $0xd4] sm:$0xf] %vm515, 0
      %543 = vst.msk [vmem:[%s304 + $0xd8] sm:$0xf] %vm515, 0
      %544 = vst.msk [vmem:[%s304 + $0xe4] sm:$0xf] %vm515, 0
      %545 = vst.msk [vmem:[%s304 + $0xe8] sm:$0xf] %vm515, 0
      %546 = vst.msk [vmem:[%s304 + $0xf4] sm:$0xf] %vm515, 0
      %547 = vst.msk [vmem:[%s304 + $0xf8] sm:$0xf] %vm515, 0
      %v548 = vld [vmem:[%s273] sm:$0xf]
      %v549 = vld [vmem:[%s273 + $0x4] sm:$0xf]
      %v550 = vld [vmem:[%s273 + $0x8] sm:$0xf]
      %v551 = vld [vmem:[%s273 + $0xc] sm:$0xf]
      %v552 = vld [vmem:[%s273 + $0x10] sm:$0xf]
      %v553 = vld [vmem:[%s273 + $0x14] sm:$0xf]
      %v554 = vld [vmem:[%s273 + $0x18] sm:$0xf]
      %v555 = vld [vmem:[%s273 + $0x1c] sm:$0xf]
      %v556 = vld [vmem:[%s273 + $0x20] sm:$0xf]
      %v557 = vld [vmem:[%s273 + $0x24] sm:$0xf]
      %v558 = vld [vmem:[%s273 + $0x28] sm:$0xf]
      %v559 = vld [vmem:[%s273 + $0x2c] sm:$0xf]
      %v560 = vld [vmem:[%s273 + $0x30] sm:$0xf]
      %v561 = vld [vmem:[%s273 + $0x34] sm:$0xf]
      %v562 = vld [vmem:[%s273 + $0x38] sm:$0xf]
      %v563 = vld [vmem:[%s273 + $0x3c] sm:$0xf]
      %v564 = vld [vmem:[%s273 + $0x40] sm:$0xf]
      %v565 = vld [vmem:[%s273 + $0x44] sm:$0xf]
      %v566 = vld [vmem:[%s273 + $0x48] sm:$0xf]
      %v567 = vld [vmem:[%s273 + $0x4c] sm:$0xf]
      %v568 = vld [vmem:[%s273 + $0x50] sm:$0xf]
      %v569 = vld [vmem:[%s273 + $0x54] sm:$0xf]
      %v570 = vld [vmem:[%s273 + $0x58] sm:$0xf]
      %v571 = vld [vmem:[%s273 + $0x5c] sm:$0xf]
      %v572 = vld [vmem:[%s273 + $0x60] sm:$0xf]
      %v573 = vld [vmem:[%s273 + $0x64] sm:$0xf]
      %v574 = vld [vmem:[%s273 + $0x68] sm:$0xf]
      %v575 = vld [vmem:[%s273 + $0x6c] sm:$0xf]
      %v576 = vld [vmem:[%s273 + $0x70] sm:$0xf]
      %v577 = vld [vmem:[%s273 + $0x74] sm:$0xf]
      %v578 = vld [vmem:[%s273 + $0x78] sm:$0xf]
      %v579 = vld [vmem:[%s273 + $0x7c] sm:$0xf]
      %vm580 = vcmask 27648
      %581 = vst.msk [vmem:[%s304 + $0x4] sm:$0xf] %vm580, %v548
      %582 = vst.msk [vmem:[%s304 + $0x8] sm:$0xf] %vm580, %v549
      %583 = vst.msk [vmem:[%s304 + $0x14] sm:$0xf] %vm580, %v550
      %584 = vst.msk [vmem:[%s304 + $0x18] sm:$0xf] %vm580, %v551
      %585 = vst.msk [vmem:[%s304 + $0x24] sm:$0xf] %vm580, %v552
      %586 = vst.msk [vmem:[%s304 + $0x28] sm:$0xf] %vm580, %v553
      %587 = vst.msk [vmem:[%s304 + $0x34] sm:$0xf] %vm580, %v554
      %588 = vst.msk [vmem:[%s304 + $0x38] sm:$0xf] %vm580, %v555
      %589 = vst.msk [vmem:[%s304 + $0x44] sm:$0xf] %vm580, %v556
      %590 = vst.msk [vmem:[%s304 + $0x48] sm:$0xf] %vm580, %v557
      %591 = vst.msk [vmem:[%s304 + $0x54] sm:$0xf] %vm580, %v558
      %592 = vst.msk [vmem:[%s304 + $0x58] sm:$0xf] %vm580, %v559
      %593 = vst.msk [vmem:[%s304 + $0x64] sm:$0xf] %vm580, %v560
      %594 = vst.msk [vmem:[%s304 + $0x68] sm:$0xf] %vm580, %v561
      %595 = vst.msk [vmem:[%s304 + $0x74] sm:$0xf] %vm580, %v562
      %596 = vst.msk [vmem:[%s304 + $0x78] sm:$0xf] %vm580, %v563
      %597 = vst.msk [vmem:[%s304 + $0x84] sm:$0xf] %vm580, %v564
      %598 = vst.msk [vmem:[%s304 + $0x88] sm:$0xf] %vm580, %v565
      %599 = vst.msk [vmem:[%s304 + $0x94] sm:$0xf] %vm580, %v566
      %600 = vst.msk [vmem:[%s304 + $0x98] sm:$0xf] %vm580, %v567
      %601 = vst.msk [vmem:[%s304 + $0xa4] sm:$0xf] %vm580, %v568
      %602 = vst.msk [vmem:[%s304 + $0xa8] sm:$0xf] %vm580, %v569
      %603 = vst.msk [vmem:[%s304 + $0xb4] sm:$0xf] %vm580, %v570
      %604 = vst.msk [vmem:[%s304 + $0xb8] sm:$0xf] %vm580, %v571
      %605 = vst.msk [vmem:[%s304 + $0xc4] sm:$0xf] %vm580, %v572
      %606 = vst.msk [vmem:[%s304 + $0xc8] sm:$0xf] %vm580, %v573
      %607 = vst.msk [vmem:[%s304 + $0xd4] sm:$0xf] %vm580, %v574
      %608 = vst.msk [vmem:[%s304 + $0xd8] sm:$0xf] %vm580, %v575
      %609 = vst.msk [vmem:[%s304 + $0xe4] sm:$0xf] %vm580, %v576
      %610 = vst.msk [vmem:[%s304 + $0xe8] sm:$0xf] %vm580, %v577
      %611 = vst.msk [vmem:[%s304 + $0xf4] sm:$0xf] %vm580, %v578
      %612 = vst.msk [vmem:[%s304 + $0xf8] sm:$0xf] %vm580, %v579
      %v613 = vld [vmem:[#allocation2] sm:$0x8]
      %v614 = vld [vmem:[#allocation2 + $0x4] sm:$0xf]
      %v615 = vld [vmem:[#allocation2 + $0x8] sm:$0xf]
      %v616 = vld [vmem:[#allocation2 + $0x10] sm:$0x8]
      %v617 = vld [vmem:[#allocation2 + $0x14] sm:$0xf]
      %v618 = vld [vmem:[#allocation2 + $0x18] sm:$0xf]
      %v619 = vld [vmem:[#allocation2 + $0x20] sm:$0x8]
      %v620 = vld [vmem:[#allocation2 + $0x24] sm:$0xf]
      %v621 = vld [vmem:[#allocation2 + $0x28] sm:$0xf]
      %v622 = vld [vmem:[#allocation2 + $0x30] sm:$0x8]
      %v623 = vld [vmem:[#allocation2 + $0x34] sm:$0xf]
      %v624 = vld [vmem:[#allocation2 + $0x38] sm:$0xf]
      %v625 = vld [vmem:[#allocation2 + $0x40] sm:$0x8]
      %v626 = vld [vmem:[#allocation2 + $0x44] sm:$0xf]
      %v627 = vld [vmem:[#allocation2 + $0x48] sm:$0xf]
      %v628 = vld [vmem:[#allocation2 + $0x50] sm:$0x8]
      %v629 = vld [vmem:[#allocation2 + $0x54] sm:$0xf]
      %v630 = vld [vmem:[#allocation2 + $0x58] sm:$0xf]
      %v631 = vld [vmem:[#allocation2 + $0x60] sm:$0x8]
      %v632 = vld [vmem:[#allocation2 + $0x64] sm:$0xf]
      %v633 = vld [vmem:[#allocation2 + $0x68] sm:$0xf]
      %v634 = vld [vmem:[#allocation2 + $0x70] sm:$0x8]
      %v635 = vld [vmem:[#allocation2 + $0x74] sm:$0xf]
      %v636 = vld [vmem:[#allocation2 + $0x78] sm:$0xf]
      %v637 = vld [vmem:[#allocation2 + $0x80] sm:$0x8]
      %v638 = vld [vmem:[#allocation2 + $0x84] sm:$0xf]
      %v639 = vld [vmem:[#allocation2 + $0x88] sm:$0xf]
      %v640 = vld [vmem:[#allocation2 + $0x90] sm:$0x8]
      %v641 = vld [vmem:[#allocation2 + $0x94] sm:$0xf]
      %v642 = vld [vmem:[#allocation2 + $0x98] sm:$0xf]
      %v643 = vld [vmem:[#allocation2 + $0xa0] sm:$0x8]
      %v644 = vld [vmem:[#allocation2 + $0xa4] sm:$0xf]
      %v645 = vld [vmem:[#allocation2 + $0xa8] sm:$0xf]
      %v646 = vld [vmem:[#allocation2 + $0xb0] sm:$0x8]
      %v647 = vld [vmem:[#allocation2 + $0xb4] sm:$0xf]
      %v648 = vld [vmem:[#allocation2 + $0xb8] sm:$0xf]
      %v649 = vld [vmem:[#allocation2 + $0xc0] sm:$0x8]
      %v650 = vld [vmem:[#allocation2 + $0xc4] sm:$0xf]
      %v651 = vld [vmem:[#allocation2 + $0xc8] sm:$0xf]
      %v652 = vld [vmem:[#allocation2 + $0xd0] sm:$0x8]
      %v653 = vld [vmem:[#allocation2 + $0xd4] sm:$0xf]
      %v654 = vld [vmem:[#allocation2 + $0xd8] sm:$0xf]
      %v655 = vld [vmem:[#allocation2 + $0xe0] sm:$0x8]
      %v656 = vld [vmem:[#allocation2 + $0xe4] sm:$0xf]
      %v657 = vld [vmem:[#allocation2 + $0xe8] sm:$0xf]
      %v658 = vld [vmem:[#allocation2 + $0xf0] sm:$0x8]
      %v659 = vld [vmem:[#allocation2 + $0xf4] sm:$0xf]
      %v660 = vld [vmem:[#allocation2 + $0xf8] sm:$0xf]
      %vm661 = vsmask.f32 4368
      %vm662 = vmor %vm290, %vm661
      %v664 = vshrl.u32 %v613, 16
      %v666 = vrot.slane %v664, 7
      %v667 = vrot.slane %v666, 4
      %v669 = vshrl.u32 %v614, 16
      %v671 = vrot.slane %v669, 7
      %v672 = vshll.u32 %v614, 16
      %v674 = vor.u32 %v671, %v672
      %v675 = vsel %vm662, %v667, %v674
      %v676 = vrot.slane %v671, 4
      %v678 = vshrl.u32 %v615, 16
      %v680 = vrot.slane %v678, 7
      %v681 = vshll.u32 %v615, 16
      %v683 = vor.u32 %v680, %v681
      %v684 = vsel %vm662, %v676, %v683
      %v686 = vshrl.u32 %v616, 16
      %v688 = vrot.slane %v686, 7
      %v689 = vrot.slane %v688, 4
      %v691 = vshrl.u32 %v617, 16
      %v693 = vrot.slane %v691, 7
      %v694 = vshll.u32 %v617, 16
      %v696 = vor.u32 %v693, %v694
      %v697 = vsel %vm662, %v689, %v696
      %v698 = vrot.slane %v693, 4
      %v700 = vshrl.u32 %v618, 16
      %v702 = vrot.slane %v700, 7
      %v703 = vshll.u32 %v618, 16
      %v705 = vor.u32 %v702, %v703
      %v706 = vsel %vm662, %v698, %v705
      %v708 = vshrl.u32 %v619, 16
      %v710 = vrot.slane %v708, 7
      %v711 = vrot.slane %v710, 4
      %v713 = vshrl.u32 %v620, 16
      %v715 = vrot.slane %v713, 7
      %v716 = vshll.u32 %v620, 16
      %v718 = vor.u32 %v715, %v716
      %v719 = vsel %vm662, %v711, %v718
      %v720 = vrot.slane %v715, 4
      %v722 = vshrl.u32 %v621, 16
      %v724 = vrot.slane %v722, 7
      %v725 = vshll.u32 %v621, 16
      %v727 = vor.u32 %v724, %v725
      %v728 = vsel %vm662, %v720, %v727
      %v730 = vshrl.u32 %v622, 16
      %v732 = vrot.slane %v730, 7
      %v733 = vrot.slane %v732, 4
      %v735 = vshrl.u32 %v623, 16
      %v737 = vrot.slane %v735, 7
      %v738 = vshll.u32 %v623, 16
      %v740 = vor.u32 %v737, %v738
      %v741 = vsel %vm662, %v733, %v740
      %v742 = vrot.slane %v737, 4
      %v744 = vshrl.u32 %v624, 16
      %v746 = vrot.slane %v744, 7
      %v747 = vshll.u32 %v624, 16
      %v749 = vor.u32 %v746, %v747
      %v750 = vsel %vm662, %v742, %v749
      %v752 = vshrl.u32 %v625, 16
      %v754 = vrot.slane %v752, 7
      %v755 = vrot.slane %v754, 4
      %v757 = vshrl.u32 %v626, 16
      %v759 = vrot.slane %v757, 7
      %v760 = vshll.u32 %v626, 16
      %v762 = vor.u32 %v759, %v760
      %v763 = vsel %vm662, %v755, %v762
      %v764 = vrot.slane %v759, 4
      %v766 = vshrl.u32 %v627, 16
      %v768 = vrot.slane %v766, 7
      %v769 = vshll.u32 %v627, 16
      %v771 = vor.u32 %v768, %v769
      %v772 = vsel %vm662, %v764, %v771
      %v774 = vshrl.u32 %v628, 16
      %v776 = vrot.slane %v774, 7
      %v777 = vrot.slane %v776, 4
      %v779 = vshrl.u32 %v629, 16
      %v781 = vrot.slane %v779, 7
      %v782 = vshll.u32 %v629, 16
      %v784 = vor.u32 %v781, %v782
      %v785 = vsel %vm662, %v777, %v784
      %v786 = vrot.slane %v781, 4
      %v788 = vshrl.u32 %v630, 16
      %v790 = vrot.slane %v788, 7
      %v791 = vshll.u32 %v630, 16
      %v793 = vor.u32 %v790, %v791
      %v794 = vsel %vm662, %v786, %v793
      %v796 = vshrl.u32 %v631, 16
      %v798 = vrot.slane %v796, 7
      %v799 = vrot.slane %v798, 4
      %v801 = vshrl.u32 %v632, 16
      %v803 = vrot.slane %v801, 7
      %v804 = vshll.u32 %v632, 16
      %v806 = vor.u32 %v803, %v804
      %v807 = vsel %vm662, %v799, %v806
      %v808 = vrot.slane %v803, 4
      %v810 = vshrl.u32 %v633, 16
      %v812 = vrot.slane %v810, 7
      %v813 = vshll.u32 %v633, 16
      %v815 = vor.u32 %v812, %v813
      %v816 = vsel %vm662, %v808, %v815
      %v818 = vshrl.u32 %v634, 16
      %v820 = vrot.slane %v818, 7
      %v821 = vrot.slane %v820, 4
      %v823 = vshrl.u32 %v635, 16
      %v825 = vrot.slane %v823, 7
      %v826 = vshll.u32 %v635, 16
      %v828 = vor.u32 %v825, %v826
      %v829 = vsel %vm662, %v821, %v828
      %v830 = vrot.slane %v825, 4
      %v832 = vshrl.u32 %v636, 16
      %v834 = vrot.slane %v832, 7
      %v835 = vshll.u32 %v636, 16
      %v837 = vor.u32 %v834, %v835
      %v838 = vsel %vm662, %v830, %v837
      %v840 = vshrl.u32 %v637, 16
      %v842 = vrot.slane %v840, 7
      %v843 = vrot.slane %v842, 4
      %v845 = vshrl.u32 %v638, 16
      %v847 = vrot.slane %v845, 7
      %v848 = vshll.u32 %v638, 16
      %v850 = vor.u32 %v847, %v848
      %v851 = vsel %vm662, %v843, %v850
      %v852 = vrot.slane %v847, 4
      %v854 = vshrl.u32 %v639, 16
      %v856 = vrot.slane %v854, 7
      %v857 = vshll.u32 %v639, 16
      %v859 = vor.u32 %v856, %v857
      %v860 = vsel %vm662, %v852, %v859
      %v862 = vshrl.u32 %v640, 16
      %v864 = vrot.slane %v862, 7
      %v865 = vrot.slane %v864, 4
      %v867 = vshrl.u32 %v641, 16
      %v869 = vrot.slane %v867, 7
      %v870 = vshll.u32 %v641, 16
      %v872 = vor.u32 %v869, %v870
      %v873 = vsel %vm662, %v865, %v872
      %v874 = vrot.slane %v869, 4
      %v876 = vshrl.u32 %v642, 16
      %v878 = vrot.slane %v876, 7
      %v879 = vshll.u32 %v642, 16
      %v881 = vor.u32 %v878, %v879
      %v882 = vsel %vm662, %v874, %v881
      %v884 = vshrl.u32 %v643, 16
      %v886 = vrot.slane %v884, 7
      %v887 = vrot.slane %v886, 4
      %v889 = vshrl.u32 %v644, 16
      %v891 = vrot.slane %v889, 7
      %v892 = vshll.u32 %v644, 16
      %v894 = vor.u32 %v891, %v892
      %v895 = vsel %vm662, %v887, %v894
      %v896 = vrot.slane %v891, 4
      %v898 = vshrl.u32 %v645, 16
      %v900 = vrot.slane %v898, 7
      %v901 = vshll.u32 %v645, 16
      %v903 = vor.u32 %v900, %v901
      %v904 = vsel %vm662, %v896, %v903
      %v906 = vshrl.u32 %v646, 16
      %v908 = vrot.slane %v906, 7
      %v909 = vrot.slane %v908, 4
      %v911 = vshrl.u32 %v647, 16
      %v913 = vrot.slane %v911, 7
      %v914 = vshll.u32 %v647, 16
      %v916 = vor.u32 %v913, %v914
      %v917 = vsel %vm662, %v909, %v916
      %v918 = vrot.slane %v913, 4
      %v920 = vshrl.u32 %v648, 16
      %v922 = vrot.slane %v920, 7
      %v923 = vshll.u32 %v648, 16
      %v925 = vor.u32 %v922, %v923
      %v926 = vsel %vm662, %v918, %v925
      %v928 = vshrl.u32 %v649, 16
      %v930 = vrot.slane %v928, 7
      %v931 = vrot.slane %v930, 4
      %v933 = vshrl.u32 %v650, 16
      %v935 = vrot.slane %v933, 7
      %v936 = vshll.u32 %v650, 16
      %v938 = vor.u32 %v935, %v936
      %v939 = vsel %vm662, %v931, %v938
      %v940 = vrot.slane %v935, 4
      %v942 = vshrl.u32 %v651, 16
      %v944 = vrot.slane %v942, 7
      %v945 = vshll.u32 %v651, 16
      %v947 = vor.u32 %v944, %v945
      %v948 = vsel %vm662, %v940, %v947
      %v950 = vshrl.u32 %v652, 16
      %v952 = vrot.slane %v950, 7
      %v953 = vrot.slane %v952, 4
      %v955 = vshrl.u32 %v653, 16
      %v957 = vrot.slane %v955, 7
      %v958 = vshll.u32 %v653, 16
      %v960 = vor.u32 %v957, %v958
      %v961 = vsel %vm662, %v953, %v960
      %v962 = vrot.slane %v957, 4
      %v964 = vshrl.u32 %v654, 16
      %v966 = vrot.slane %v964, 7
      %v967 = vshll.u32 %v654, 16
      %v969 = vor.u32 %v966, %v967
      %v970 = vsel %vm662, %v962, %v969
      %v972 = vshrl.u32 %v655, 16
      %v974 = vrot.slane %v972, 7
      %v975 = vrot.slane %v974, 4
      %v977 = vshrl.u32 %v656, 16
      %v979 = vrot.slane %v977, 7
      %v980 = vshll.u32 %v656, 16
      %v982 = vor.u32 %v979, %v980
      %v983 = vsel %vm662, %v975, %v982
      %v984 = vrot.slane %v979, 4
      %v986 = vshrl.u32 %v657, 16
      %v988 = vrot.slane %v986, 7
      %v989 = vshll.u32 %v657, 16
      %v991 = vor.u32 %v988, %v989
      %v992 = vsel %vm662, %v984, %v991
      %v994 = vshrl.u32 %v658, 16
      %v996 = vrot.slane %v994, 7
      %v997 = vrot.slane %v996, 4
      %v999 = vshrl.u32 %v659, 16
      %v1001 = vrot.slane %v999, 7
      %v1002 = vshll.u32 %v659, 16
      %v1004 = vor.u32 %v1001, %v1002
      %v1005 = vsel %vm662, %v997, %v1004
      %v1006 = vrot.slane %v1001, 4
      %v1008 = vshrl.u32 %v660, 16
      %v1010 = vrot.slane %v1008, 7
      %v1011 = vshll.u32 %v660, 16
      %v1013 = vor.u32 %v1010, %v1011
      %v1014 = vsel %vm662, %v1006, %v1013
      %v1015 = vld [vmem:[%s1] sm:$0xf]
      %v1016 = vld [vmem:[%s1 + $0x4] sm:$0xf]
      %v1049 = vunpack.c.l.b16 %v614
      %v1050 = vunpack.c.l.b16 %v615
      %v1051 = vunpack.c.l.b16 %v617
      %v1052 = vunpack.c.l.b16 %v618
      %v1053 = vunpack.c.l.b16 %v620
      %v1054 = vunpack.c.l.b16 %v621
      %v1055 = vunpack.c.l.b16 %v623
      %v1056 = vunpack.c.l.b16 %v624
      %v1057 = vunpack.c.l.b16 %v626
      %v1058 = vunpack.c.l.b16 %v627
      %v1059 = vunpack.c.l.b16 %v629
      %v1060 = vunpack.c.l.b16 %v630
      %v1061 = vunpack.c.l.b16 %v632
      %v1062 = vunpack.c.l.b16 %v633
      %v1063 = vunpack.c.l.b16 %v635
      %v1064 = vunpack.c.l.b16 %v636
      %v1065 = vunpack.c.l.b16 %v638
      %v1066 = vunpack.c.l.b16 %v639
      %v1067 = vunpack.c.l.b16 %v641
      %v1068 = vunpack.c.l.b16 %v642
      %v1069 = vunpack.c.l.b16 %v644
      %v1070 = vunpack.c.l.b16 %v645
      %v1071 = vunpack.c.l.b16 %v647
      %v1072 = vunpack.c.l.b16 %v648
      %v1073 = vunpack.c.l.b16 %v650
      %v1074 = vunpack.c.l.b16 %v651
      %v1075 = vunpack.c.l.b16 %v653
      %v1076 = vunpack.c.l.b16 %v654
      %v1077 = vunpack.c.l.b16 %v656
      %v1078 = vunpack.c.l.b16 %v657
      %v1079 = vunpack.c.l.b16 %v659
      %v1080 = vunpack.c.l.b16 %v660
      %v1081 = vpack.c.b16 %v1050, %v1049
      %v1082 = vpack.c.b16 %v1052, %v1051
      %v1083 = vpack.c.b16 %v1054, %v1053
      %v1084 = vpack.c.b16 %v1056, %v1055
      %v1085 = vpack.c.b16 %v1058, %v1057
      %v1086 = vpack.c.b16 %v1060, %v1059
      %v1087 = vpack.c.b16 %v1062, %v1061
      %v1088 = vpack.c.b16 %v1064, %v1063
      %v1089 = vpack.c.b16 %v1066, %v1065
      %v1090 = vpack.c.b16 %v1068, %v1067
      %v1091 = vpack.c.b16 %v1070, %v1069
      %v1092 = vpack.c.b16 %v1072, %v1071
      %v1093 = vpack.c.b16 %v1074, %v1073
      %v1094 = vpack.c.b16 %v1076, %v1075
      %v1095 = vpack.c.b16 %v1078, %v1077
      %v1096 = vpack.c.b16 %v1080, %v1079
      %vm1097 = vcmask 64512
      %v1099 = vsel %vm1097, %v1081, 0
      %v1102 = vsel %vm1097, %v1082, 0
      %v1105 = vsel %vm1097, %v1083, 0
      %v1108 = vsel %vm1097, %v1084, 0
      %v1111 = vsel %vm1097, %v1085, 0
      %v1114 = vsel %vm1097, %v1086, 0
      %v1117 = vsel %vm1097, %v1087, 0
      %v1120 = vsel %vm1097, %v1088, 0
      %v1123 = vsel %vm1097, %v1089, 0
      %v1126 = vsel %vm1097, %v1090, 0
      %v1129 = vsel %vm1097, %v1091, 0
      %v1132 = vsel %vm1097, %v1092, 0
      %v1135 = vsel %vm1097, %v1093, 0
      %v1138 = vsel %vm1097, %v1094, 0
      %v1141 = vsel %vm1097, %v1095, 0
      %v1144 = vsel %vm1097, %v1096, 0
      %vm1146 = vcmask 1043456
      %v1148 = vsel %vm1146, %v1016, 0
      %1150 = vmatprep.subr.bf16.mxu0 0
      %1151 = vmatpush1.bf16.msra.mxu0 %v1148
      %1152 = vmatprep.subr.bf16.mxu0 0
      %1153 = vmatpush1.bf16.msra.mxu0 0
      %1154 = vmatprep.subr.bf16.mxu0 0
      %1155 = vmatpush1.bf16.msra.mxu0 0
      %1156 = vmatprep.subr.bf16.mxu0 0
      %1157 = vmatpush1.bf16.msra.mxu0 0
      %1158 = vmatprep.subr.bf16.mxu0 0
      %1159 = vmatpush1.bf16.msra.mxu0 0
      %1160 = vmatprep.subr.bf16.mxu0 0
      %1161 = vmatpush1.bf16.msra.mxu0 0
      %1162 = vmatprep.subr.bf16.mxu0 0
      %1163 = vmatpush1.bf16.msra.mxu0 0
      %1164 = vmatprep.subr.bf16.mxu0 0
      %1165 = vmatpush1.bf16.msra.mxu0 0
      %1166 = vmatprep.subr.bf16.mxu0 0
      %1167 = vmatpush1.bf16.msra.mxu0 0
      %1168 = vmatprep.subr.bf16.mxu0 0
      %1169 = vmatpush1.bf16.msra.mxu0 0
      %1170 = vmatprep.subr.bf16.mxu0 0
      %1171 = vmatpush1.bf16.msra.mxu0 0
      %1172 = vmatprep.subr.bf16.mxu0 0
      %1173 = vmatpush1.bf16.msra.mxu0 0
      %1174 = vmatprep.subr.bf16.mxu0 0
      %1175 = vmatpush1.bf16.msra.mxu0 0
      %1176 = vmatprep.subr.bf16.mxu0 0
      %1177 = vmatpush1.bf16.msra.mxu0 0
      %1178 = vmatprep.subr.bf16.mxu0 0
      %1179 = vmatpush1.bf16.msra.mxu0 0
      %1180 = vmatprep.subr.bf16.mxu0 0
      %1181 = vmatpush1.bf16.msra.mxu0 0
      %1182 = vmatprep.mubr.bf16.mxu0 0
      %1183 = vmatmul.mubr.bf16.gmra.mrb[0].mxu0 %v1099
      %v1184 = vpop.f32.mrb[0].mxu0
      %v1185 = vadd.f32 0.0, %v1184
      %v1186 = vpop.f32.mrb[0].mxu0
      %v1187 = vpop.f32.mrb[0].mxu0
      %v1188 = vadd.f32 0.0, %v1187
      %v1189 = vpop.f32.mrb[0].mxu0
      %1190 = vmatprep.mubr.bf16.mxu0 0
      %1191 = vmatmul.mubr.bf16.gmra.mrb[0].mxu0 %v1102
      %v1192 = vpop.f32.mrb[0].mxu0
      %v1193 = vadd.f32 0.0, %v1192
      %v1194 = vpop.f32.mrb[0].mxu0
      %v1195 = vpop.f32.mrb[0].mxu0
      %v1196 = vadd.f32 0.0, %v1195
      %v1197 = vpop.f32.mrb[0].mxu0
      %1198 = vmatprep.mubr.bf16.mxu0 0
      %1199 = vmatmul.mubr.bf16.gmra.mrb[0].mxu0 %v1105
      %v1200 = vpop.f32.mrb[0].mxu0
      %v1201 = vadd.f32 0.0, %v1200
      %v1202 = vpop.f32.mrb[0].mxu0
      %v1203 = vpop.f32.mrb[0].mxu0
      %v1204 = vadd.f32 0.0, %v1203
      %v1205 = vpop.f32.mrb[0].mxu0
      %1206 = vmatprep.mubr.bf16.mxu0 0
      %1207 = vmatmul.mubr.bf16.gmra.mrb[0].mxu0 %v1108
      %v1208 = vpop.f32.mrb[0].mxu0
      %v1209 = vadd.f32 0.0, %v1208
      %v1210 = vpop.f32.mrb[0].mxu0
      %v1211 = vpop.f32.mrb[0].mxu0
      %v1212 = vadd.f32 0.0, %v1211
      %v1213 = vpop.f32.mrb[0].mxu0
      %1214 = vmatprep.mubr.bf16.mxu0 0
      %1215 = vmatmul.mubr.bf16.gmra.mrb[0].mxu0 %v1111
      %v1216 = vpop.f32.mrb[0].mxu0
      %v1217 = vadd.f32 0.0, %v1216
      %v1218 = vpop.f32.mrb[0].mxu0
      %v1219 = vpop.f32.mrb[0].mxu0
      %v1220 = vadd.f32 0.0, %v1219
      %v1221 = vpop.f32.mrb[0].mxu0
      %1222 = vmatprep.mubr.bf16.mxu0 0
      %1223 = vmatmul.mubr.bf16.gmra.mrb[0].mxu0 %v1114
      %v1224 = vpop.f32.mrb[0].mxu0
      %v1225 = vadd.f32 0.0, %v1224
      %v1226 = vpop.f32.mrb[0].mxu0
      %v1227 = vpop.f32.mrb[0].mxu0
      %v1228 = vadd.f32 0.0, %v1227
      %v1229 = vpop.f32.mrb[0].mxu0
      %1230 = vmatprep.mubr.bf16.mxu0 0
      %1231 = vmatmul.mubr.bf16.gmra.mrb[0].mxu0 %v1117
      %v1232 = vpop.f32.mrb[0].mxu0
      %v1233 = vadd.f32 0.0, %v1232
      %v1234 = vpop.f32.mrb[0].mxu0
      %v1235 = vpop.f32.mrb[0].mxu0
      %v1236 = vadd.f32 0.0, %v1235
      %v1237 = vpop.f32.mrb[0].mxu0
      %1238 = vmatprep.mubr.bf16.mxu0 0
      %1239 = vmatmul.mubr.bf16.gmra.mrb[0].mxu0 %v1120
      %v1240 = vpop.f32.mrb[0].mxu0
      %v1241 = vadd.f32 0.0, %v1240
      %v1242 = vpop.f32.mrb[0].mxu0
      %v1243 = vpop.f32.mrb[0].mxu0
      %v1244 = vadd.f32 0.0, %v1243
      %v1245 = vpop.f32.mrb[0].mxu0
      %1246 = vmatprep.mubr.bf16.mxu0 0
      %1247 = vmatmul.mubr.bf16.gmra.mrb[0].mxu0 %v1123
      %v1248 = vpop.f32.mrb[0].mxu0
      %v1249 = vadd.f32 0.0, %v1248
      %v1250 = vpop.f32.mrb[0].mxu0
      %v1251 = vpop.f32.mrb[0].mxu0
      %v1252 = vadd.f32 0.0, %v1251
      %v1253 = vpop.f32.mrb[0].mxu0
      %1254 = vmatprep.mubr.bf16.mxu0 0
      %1255 = vmatmul.mubr.bf16.gmra.mrb[0].mxu0 %v1126
      %v1256 = vpop.f32.mrb[0].mxu0
      %v1257 = vadd.f32 0.0, %v1256
      %v1258 = vpop.f32.mrb[0].mxu0
      %v1259 = vpop.f32.mrb[0].mxu0
      %v1260 = vadd.f32 0.0, %v1259
      %v1261 = vpop.f32.mrb[0].mxu0
      %1262 = vmatprep.mubr.bf16.mxu0 0
      %1263 = vmatmul.mubr.bf16.gmra.mrb[0].mxu0 %v1129
      %v1264 = vpop.f32.mrb[0].mxu0
      %v1265 = vadd.f32 0.0, %v1264
      %v1266 = vpop.f32.mrb[0].mxu0
      %v1267 = vpop.f32.mrb[0].mxu0
      %v1268 = vadd.f32 0.0, %v1267
      %v1269 = vpop.f32.mrb[0].mxu0
      %1270 = vmatprep.mubr.bf16.mxu0 0
      %1271 = vmatmul.mubr.bf16.gmra.mrb[0].mxu0 %v1132
      %v1272 = vpop.f32.mrb[0].mxu0
      %v1273 = vadd.f32 0.0, %v1272
      %v1274 = vpop.f32.mrb[0].mxu0
      %v1275 = vpop.f32.mrb[0].mxu0
      %v1276 = vadd.f32 0.0, %v1275
      %v1277 = vpop.f32.mrb[0].mxu0
      %1278 = vmatprep.mubr.bf16.mxu0 0
      %1279 = vmatmul.mubr.bf16.gmra.mrb[0].mxu0 %v1135
      %v1280 = vpop.f32.mrb[0].mxu0
      %v1281 = vadd.f32 0.0, %v1280
      %v1282 = vpop.f32.mrb[0].mxu0
      %v1283 = vpop.f32.mrb[0].mxu0
      %v1284 = vadd.f32 0.0, %v1283
      %v1285 = vpop.f32.mrb[0].mxu0
      %1286 = vmatprep.mubr.bf16.mxu0 0
      %1287 = vmatmul.mubr.bf16.gmra.mrb[0].mxu0 %v1138
      %v1288 = vpop.f32.mrb[0].mxu0
      %v1289 = vadd.f32 0.0, %v1288
      %v1290 = vpop.f32.mrb[0].mxu0
      %v1291 = vpop.f32.mrb[0].mxu0
      %v1292 = vadd.f32 0.0, %v1291
      %v1293 = vpop.f32.mrb[0].mxu0
      %1294 = vmatprep.mubr.bf16.mxu0 0
      %1295 = vmatmul.mubr.bf16.gmra.mrb[0].mxu0 %v1141
      %v1296 = vpop.f32.mrb[0].mxu0
      %v1297 = vadd.f32 0.0, %v1296
      %v1298 = vpop.f32.mrb[0].mxu0
      %v1299 = vpop.f32.mrb[0].mxu0
      %v1300 = vadd.f32 0.0, %v1299
      %v1301 = vpop.f32.mrb[0].mxu0
      %1302 = vmatprep.mubr.bf16.mxu0 0
      %1303 = vmatmul.mubr.bf16.gmra.mrb[0].mxu0 %v1144
      %v1304 = vpop.f32.mrb[0].mxu0
      %v1305 = vadd.f32 0.0, %v1304
      %v1306 = vpop.f32.mrb[0].mxu0
      %v1307 = vpop.f32.mrb[0].mxu0
      %v1308 = vadd.f32 0.0, %v1307
      %v1309 = vpop.f32.mrb[0].mxu0
      %1310 = vdwg.mxu0
      %v1311 = vunpack.c.l.b16 %v675
      %v1312 = vunpack.c.l.b16 %v684
      %v1313 = vunpack.c.l.b16 %v697
      %v1314 = vunpack.c.l.b16 %v706
      %v1315 = vunpack.c.l.b16 %v719
      %v1316 = vunpack.c.l.b16 %v728
      %v1317 = vunpack.c.l.b16 %v741
      %v1318 = vunpack.c.l.b16 %v750
      %v1319 = vunpack.c.l.b16 %v763
      %v1320 = vunpack.c.l.b16 %v772
      %v1321 = vunpack.c.l.b16 %v785
      %v1322 = vunpack.c.l.b16 %v794
      %v1323 = vunpack.c.l.b16 %v807
      %v1324 = vunpack.c.l.b16 %v816
      %v1325 = vunpack.c.l.b16 %v829
      %v1326 = vunpack.c.l.b16 %v838
      %v1327 = vunpack.c.l.b16 %v851
      %v1328 = vunpack.c.l.b16 %v860
      %v1329 = vunpack.c.l.b16 %v873
      %v1330 = vunpack.c.l.b16 %v882
      %v1331 = vunpack.c.l.b16 %v895
      %v1332 = vunpack.c.l.b16 %v904
      %v1333 = vunpack.c.l.b16 %v917
      %v1334 = vunpack.c.l.b16 %v926
      %v1335 = vunpack.c.l.b16 %v939
      %v1336 = vunpack.c.l.b16 %v948
      %v1337 = vunpack.c.l.b16 %v961
      %v1338 = vunpack.c.l.b16 %v970
      %v1339 = vunpack.c.l.b16 %v983
      %v1340 = vunpack.c.l.b16 %v992
      %v1341 = vunpack.c.l.b16 %v1005
      %v1342 = vunpack.c.l.b16 %v1014
      %v1343 = vpack.c.b16 %v1312, %v1311
      %v1344 = vpack.c.b16 %v1314, %v1313
      %v1345 = vpack.c.b16 %v1316, %v1315
      %v1346 = vpack.c.b16 %v1318, %v1317
      %v1347 = vpack.c.b16 %v1320, %v1319
      %v1348 = vpack.c.b16 %v1322, %v1321
      %v1349 = vpack.c.b16 %v1324, %v1323
      %v1350 = vpack.c.b16 %v1326, %v1325
      %v1351 = vpack.c.b16 %v1328, %v1327
      %v1352 = vpack.c.b16 %v1330, %v1329
      %v1353 = vpack.c.b16 %v1332, %v1331
      %v1354 = vpack.c.b16 %v1334, %v1333
      %v1355 = vpack.c.b16 %v1336, %v1335
      %v1356 = vpack.c.b16 %v1338, %v1337
      %v1357 = vpack.c.b16 %v1340, %v1339
      %v1358 = vpack.c.b16 %v1342, %v1341
      %v1360 = vsel %vm1097, %v1343, 0
      %v1363 = vsel %vm1097, %v1344, 0
      %v1366 = vsel %vm1097, %v1345, 0
      %v1369 = vsel %vm1097, %v1346, 0
      %v1372 = vsel %vm1097, %v1347, 0
      %v1375 = vsel %vm1097, %v1348, 0
      %v1378 = vsel %vm1097, %v1349, 0
      %v1381 = vsel %vm1097, %v1350, 0
      %v1384 = vsel %vm1097, %v1351, 0
      %v1387 = vsel %vm1097, %v1352, 0
      %v1390 = vsel %vm1097, %v1353, 0
      %v1393 = vsel %vm1097, %v1354, 0
      %v1396 = vsel %vm1097, %v1355, 0
      %v1399 = vsel %vm1097, %v1356, 0
      %v1402 = vsel %vm1097, %v1357, 0
      %v1405 = vsel %vm1097, %v1358, 0
      %v1408 = vsel %vm1146, %v1015, 0
      %1410 = vmatprep.subr.bf16.mxu0 0
      %1411 = vmatpush1.bf16.msra.mxu0 %v1408
      %1412 = vmatprep.subr.bf16.mxu0 0
      %1413 = vmatpush1.bf16.msra.mxu0 0
      %1414 = vmatprep.subr.bf16.mxu0 0
      %1415 = vmatpush1.bf16.msra.mxu0 0
      %1416 = vmatprep.subr.bf16.mxu0 0
      %1417 = vmatpush1.bf16.msra.mxu0 0
      %1418 = vmatprep.subr.bf16.mxu0 0
      %1419 = vmatpush1.bf16.msra.mxu0 0
      %1420 = vmatprep.subr.bf16.mxu0 0
      %1421 = vmatpush1.bf16.msra.mxu0 0
      %1422 = vmatprep.subr.bf16.mxu0 0
      %1423 = vmatpush1.bf16.msra.mxu0 0
      %1424 = vmatprep.subr.bf16.mxu0 0
      %1425 = vmatpush1.bf16.msra.mxu0 0
      %1426 = vmatprep.subr.bf16.mxu0 0
      %1427 = vmatpush1.bf16.msra.mxu0 0
      %1428 = vmatprep.subr.bf16.mxu0 0
      %1429 = vmatpush1.bf16.msra.mxu0 0
      %1430 = vmatprep.subr.bf16.mxu0 0
      %1431 = vmatpush1.bf16.msra.mxu0 0
      %1432 = vmatprep.subr.bf16.mxu0 0
      %1433 = vmatpush1.bf16.msra.mxu0 0
      %1434 = vmatprep.subr.bf16.mxu0 0
      %1435 = vmatpush1.bf16.msra.mxu0 0
      %1436 = vmatprep.subr.bf16.mxu0 0
      %1437 = vmatpush1.bf16.msra.mxu0 0
      %1438 = vmatprep.subr.bf16.mxu0 0
      %1439 = vmatpush1.bf16.msra.mxu0 0
      %1440 = vmatprep.subr.bf16.mxu0 0
      %1441 = vmatpush1.bf16.msra.mxu0 0
      %1442 = vmatprep.mubr.bf16.mxu0 0
      %1443 = vmatmul.mubr.bf16.gmra.mrb[0].mxu0 %v1360
      %v1444 = vpop.f32.mrb[0].mxu0
      %v1445 = vadd.f32 %v1185, %v1444
      %v1446 = vpop.f32.mrb[0].mxu0
      %v1447 = vpop.f32.mrb[0].mxu0
      %v1448 = vadd.f32 %v1188, %v1447
      %v1449 = vpop.f32.mrb[0].mxu0
      %1450 = vmatprep.mubr.bf16.mxu0 0
      %1451 = vmatmul.mubr.bf16.gmra.mrb[0].mxu0 %v1363
      %v1452 = vpop.f32.mrb[0].mxu0
      %v1453 = vadd.f32 %v1193, %v1452
      %v1454 = vpop.f32.mrb[0].mxu0
      %v1455 = vpop.f32.mrb[0].mxu0
      %v1456 = vadd.f32 %v1196, %v1455
      %v1457 = vpop.f32.mrb[0].mxu0
      %1458 = vmatprep.mubr.bf16.mxu0 0
      %1459 = vmatmul.mubr.bf16.gmra.mrb[0].mxu0 %v1366
      %v1460 = vpop.f32.mrb[0].mxu0
      %v1461 = vadd.f32 %v1201, %v1460
      %v1462 = vpop.f32.mrb[0].mxu0
      %v1463 = vpop.f32.mrb[0].mxu0
      %v1464 = vadd.f32 %v1204, %v1463
      %v1465 = vpop.f32.mrb[0].mxu0
      %1466 = vmatprep.mubr.bf16.mxu0 0
      %1467 = vmatmul.mubr.bf16.gmra.mrb[0].mxu0 %v1369
      %v1468 = vpop.f32.mrb[0].mxu0
      %v1469 = vadd.f32 %v1209, %v1468
      %v1470 = vpop.f32.mrb[0].mxu0
      %v1471 = vpop.f32.mrb[0].mxu0
      %v1472 = vadd.f32 %v1212, %v1471
      %v1473 = vpop.f32.mrb[0].mxu0
      %1474 = vmatprep.mubr.bf16.mxu0 0
      %1475 = vmatmul.mubr.bf16.gmra.mrb[0].mxu0 %v1372
      %v1476 = vpop.f32.mrb[0].mxu0
      %v1477 = vadd.f32 %v1217, %v1476
      %v1478 = vpop.f32.mrb[0].mxu0
      %v1479 = vpop.f32.mrb[0].mxu0
      %v1480 = vadd.f32 %v1220, %v1479
      %v1481 = vpop.f32.mrb[0].mxu0
      %1482 = vmatprep.mubr.bf16.mxu0 0
      %1483 = vmatmul.mubr.bf16.gmra.mrb[0].mxu0 %v1375
      %v1484 = vpop.f32.mrb[0].mxu0
      %v1485 = vadd.f32 %v1225, %v1484
      %v1486 = vpop.f32.mrb[0].mxu0
      %v1487 = vpop.f32.mrb[0].mxu0
      %v1488 = vadd.f32 %v1228, %v1487
      %v1489 = vpop.f32.mrb[0].mxu0
      %1490 = vmatprep.mubr.bf16.mxu0 0
      %1491 = vmatmul.mubr.bf16.gmra.mrb[0].mxu0 %v1378
      %v1492 = vpop.f32.mrb[0].mxu0
      %v1493 = vadd.f32 %v1233, %v1492
      %v1494 = vpop.f32.mrb[0].mxu0
      %v1495 = vpop.f32.mrb[0].mxu0
      %v1496 = vadd.f32 %v1236, %v1495
      %v1497 = vpop.f32.mrb[0].mxu0
      %1498 = vmatprep.mubr.bf16.mxu0 0
      %1499 = vmatmul.mubr.bf16.gmra.mrb[0].mxu0 %v1381
      %v1500 = vpop.f32.mrb[0].mxu0
      %v1501 = vadd.f32 %v1241, %v1500
      %v1502 = vpop.f32.mrb[0].mxu0
      %v1503 = vpop.f32.mrb[0].mxu0
      %v1504 = vadd.f32 %v1244, %v1503
      %v1505 = vpop.f32.mrb[0].mxu0
      %1506 = vmatprep.mubr.bf16.mxu0 0
      %1507 = vmatmul.mubr.bf16.gmra.mrb[0].mxu0 %v1384
      %v1508 = vpop.f32.mrb[0].mxu0
      %v1509 = vadd.f32 %v1249, %v1508
      %v1510 = vpop.f32.mrb[0].mxu0
      %v1511 = vpop.f32.mrb[0].mxu0
      %v1512 = vadd.f32 %v1252, %v1511
      %v1513 = vpop.f32.mrb[0].mxu0
      %1514 = vmatprep.mubr.bf16.mxu0 0
      %1515 = vmatmul.mubr.bf16.gmra.mrb[0].mxu0 %v1387
      %v1516 = vpop.f32.mrb[0].mxu0
      %v1517 = vadd.f32 %v1257, %v1516
      %v1518 = vpop.f32.mrb[0].mxu0
      %v1519 = vpop.f32.mrb[0].mxu0
      %v1520 = vadd.f32 %v1260, %v1519
      %v1521 = vpop.f32.mrb[0].mxu0
      %1522 = vmatprep.mubr.bf16.mxu0 0
      %1523 = vmatmul.mubr.bf16.gmra.mrb[0].mxu0 %v1390
      %v1524 = vpop.f32.mrb[0].mxu0
      %v1525 = vadd.f32 %v1265, %v1524
      %v1526 = vpop.f32.mrb[0].mxu0
      %v1527 = vpop.f32.mrb[0].mxu0
      %v1528 = vadd.f32 %v1268, %v1527
      %v1529 = vpop.f32.mrb[0].mxu0
      %1530 = vmatprep.mubr.bf16.mxu0 0
      %1531 = vmatmul.mubr.bf16.gmra.mrb[0].mxu0 %v1393
      %v1532 = vpop.f32.mrb[0].mxu0
      %v1533 = vadd.f32 %v1273, %v1532
      %v1534 = vpop.f32.mrb[0].mxu0
      %v1535 = vpop.f32.mrb[0].mxu0
      %v1536 = vadd.f32 %v1276, %v1535
      %v1537 = vpop.f32.mrb[0].mxu0
      %1538 = vmatprep.mubr.bf16.mxu0 0
      %1539 = vmatmul.mubr.bf16.gmra.mrb[0].mxu0 %v1396
      %v1540 = vpop.f32.mrb[0].mxu0
      %v1541 = vadd.f32 %v1281, %v1540
      %v1542 = vpop.f32.mrb[0].mxu0
      %v1543 = vpop.f32.mrb[0].mxu0
      %v1544 = vadd.f32 %v1284, %v1543
      %v1545 = vpop.f32.mrb[0].mxu0
      %1546 = vmatprep.mubr.bf16.mxu0 0
      %1547 = vmatmul.mubr.bf16.gmra.mrb[0].mxu0 %v1399
      %v1548 = vpop.f32.mrb[0].mxu0
      %v1549 = vadd.f32 %v1289, %v1548
      %v1550 = vpop.f32.mrb[0].mxu0
      %v1551 = vpop.f32.mrb[0].mxu0
      %v1552 = vadd.f32 %v1292, %v1551
      %v1553 = vpop.f32.mrb[0].mxu0
      %1554 = vmatprep.mubr.bf16.mxu0 0
      %1555 = vmatmul.mubr.bf16.gmra.mrb[0].mxu0 %v1402
      %v1556 = vpop.f32.mrb[0].mxu0
      %v1557 = vadd.f32 %v1297, %v1556
      %v1558 = vpop.f32.mrb[0].mxu0
      %v1559 = vpop.f32.mrb[0].mxu0
      %v1560 = vadd.f32 %v1300, %v1559
      %v1561 = vpop.f32.mrb[0].mxu0
      %1562 = vmatprep.mubr.bf16.mxu0 0
      %1563 = vmatmul.mubr.bf16.gmra.mrb[0].mxu0 %v1405
      %v1564 = vpop.f32.mrb[0].mxu0
      %v1565 = vadd.f32 %v1305, %v1564
      %v1566 = vpop.f32.mrb[0].mxu0
      %v1567 = vpop.f32.mrb[0].mxu0
      %v1568 = vadd.f32 %v1308, %v1567
      %v1569 = vpop.f32.mrb[0].mxu0
      %1570 = vdwg.mxu0
      %v1571 = vld [vmem:[#allocation2 + $0x4] sm:$0xf]
      %v1572 = vld [vmem:[#allocation2 + $0x8] sm:$0xf]
      %v1573 = vld [vmem:[#allocation2 + $0xc] sm:$0x1]
      %v1574 = vld [vmem:[#allocation2 + $0x14] sm:$0xf]
      %v1575 = vld [vmem:[#allocation2 + $0x18] sm:$0xf]
      %v1576 = vld [vmem:[#allocation2 + $0x1c] sm:$0x1]
      %v1577 = vld [vmem:[#allocation2 + $0x24] sm:$0xf]
      %v1578 = vld [vmem:[#allocation2 + $0x28] sm:$0xf]
      %v1579 = vld [vmem:[#allocation2 + $0x2c] sm:$0x1]
      %v1580 = vld [vmem:[#allocation2 + $0x34] sm:$0xf]
      %v1581 = vld [vmem:[#allocation2 + $0x38] sm:$0xf]
      %v1582 = vld [vmem:[#allocation2 + $0x3c] sm:$0x1]
      %v1583 = vld [vmem:[#allocation2 + $0x44] sm:$0xf]
      %v1584 = vld [vmem:[#allocation2 + $0x48] sm:$0xf]
      %v1585 = vld [vmem:[#allocation2 + $0x4c] sm:$0x1]
      %v1586 = vld [vmem:[#allocation2 + $0x54] sm:$0xf]
      %v1587 = vld [vmem:[#allocation2 + $0x58] sm:$0xf]
      %v1588 = vld [vmem:[#allocation2 + $0x5c] sm:$0x1]
      %v1589 = vld [vmem:[#allocation2 + $0x64] sm:$0xf]
      %v1590 = vld [vmem:[#allocation2 + $0x68] sm:$0xf]
      %v1591 = vld [vmem:[#allocation2 + $0x6c] sm:$0x1]
      %v1592 = vld [vmem:[#allocation2 + $0x74] sm:$0xf]
      %v1593 = vld [vmem:[#allocation2 + $0x78] sm:$0xf]
      %v1594 = vld [vmem:[#allocation2 + $0x7c] sm:$0x1]
      %v1595 = vld [vmem:[#allocation2 + $0x84] sm:$0xf]
      %v1596 = vld [vmem:[#allocation2 + $0x88] sm:$0xf]
      %v1597 = vld [vmem:[#allocation2 + $0x8c] sm:$0x1]
      %v1598 = vld [vmem:[#allocation2 + $0x94] sm:$0xf]
      %v1599 = vld [vmem:[#allocation2 + $0x98] sm:$0xf]
      %v1600 = vld [vmem:[#allocation2 + $0x9c] sm:$0x1]
      %v1601 = vld [vmem:[#allocation2 + $0xa4] sm:$0xf]
      %v1602 = vld [vmem:[#allocation2 + $0xa8] sm:$0xf]
      %v1603 = vld [vmem:[#allocation2 + $0xac] sm:$0x1]
      %v1604 = vld [vmem:[#allocation2 + $0xb4] sm:$0xf]
      %v1605 = vld [vmem:[#allocation2 + $0xb8] sm:$0xf]
      %v1606 = vld [vmem:[#allocation2 + $0xbc] sm:$0x1]
      %v1607 = vld [vmem:[#allocation2 + $0xc4] sm:$0xf]
      %v1608 = vld [vmem:[#allocation2 + $0xc8] sm:$0xf]
      %v1609 = vld [vmem:[#allocation2 + $0xcc] sm:$0x1]
      %v1610 = vld [vmem:[#allocation2 + $0xd4] sm:$0xf]
      %v1611 = vld [vmem:[#allocation2 + $0xd8] sm:$0xf]
      %v1612 = vld [vmem:[#allocation2 + $0xdc] sm:$0x1]
      %v1613 = vld [vmem:[#allocation2 + $0xe4] sm:$0xf]
      %v1614 = vld [vmem:[#allocation2 + $0xe8] sm:$0xf]
      %v1615 = vld [vmem:[#allocation2 + $0xec] sm:$0x1]
      %v1616 = vld [vmem:[#allocation2 + $0xf4] sm:$0xf]
      %v1617 = vld [vmem:[#allocation2 + $0xf8] sm:$0xf]
      %v1618 = vld [vmem:[#allocation2 + $0xfc] sm:$0x1]
      %vm1619 = vsmask.f32 3328
      %vm1620 = vsmask.f32 7440
      %vm1621 = vmor %vm1619, %vm1620
      %v1623 = vshrl.u32 %v1571, 16
      %v1625 = vrot.slane %v1623, 4
      %v1626 = vshll.u32 %v1571, 16
      %v1628 = vrot.slane %v1626, 5
      %v1629 = vor.u32 %v1625, %v1628
      %v1630 = vrot.slane %v1629, 4
      %v1632 = vshll.u32 %v1572, 16
      %v1634 = vrot.slane %v1632, 5
      %v1635 = vsel %vm1621, %v1630, %v1634
      %v1636 = vshrl.u32 %v1572, 16
      %v1638 = vrot.slane %v1636, 4
      %v1639 = vor.u32 %v1638, %v1634
      %v1640 = vrot.slane %v1639, 4
      %v1642 = vshll.u32 %v1573, 16
      %v1644 = vrot.slane %v1642, 5
      %v1645 = vsel %vm1621, %v1640, %v1644
      %v1647 = vshrl.u32 %v1574, 16
      %v1649 = vrot.slane %v1647, 4
      %v1650 = vshll.u32 %v1574, 16
      %v1652 = vrot.slane %v1650, 5
      %v1653 = vor.u32 %v1649, %v1652
      %v1654 = vrot.slane %v1653, 4
      %v1656 = vshll.u32 %v1575, 16
      %v1658 = vrot.slane %v1656, 5
      %v1659 = vsel %vm1621, %v1654, %v1658
      %v1660 = vshrl.u32 %v1575, 16
      %v1662 = vrot.slane %v1660, 4
      %v1663 = vor.u32 %v1662, %v1658
      %v1664 = vrot.slane %v1663, 4
      %v1666 = vshll.u32 %v1576, 16
      %v1668 = vrot.slane %v1666, 5
      %v1669 = vsel %vm1621, %v1664, %v1668
      %v1671 = vshrl.u32 %v1577, 16
      %v1673 = vrot.slane %v1671, 4
      %v1674 = vshll.u32 %v1577, 16
      %v1676 = vrot.slane %v1674, 5
      %v1677 = vor.u32 %v1673, %v1676
      %v1678 = vrot.slane %v1677, 4
      %v1680 = vshll.u32 %v1578, 16
      %v1682 = vrot.slane %v1680, 5
      %v1683 = vsel %vm1621, %v1678, %v1682
      %v1684 = vshrl.u32 %v1578, 16
      %v1686 = vrot.slane %v1684, 4
      %v1687 = vor.u32 %v1686, %v1682
      %v1688 = vrot.slane %v1687, 4
      %v1690 = vshll.u32 %v1579, 16
      %v1692 = vrot.slane %v1690, 5
      %v1693 = vsel %vm1621, %v1688, %v1692
      %v1695 = vshrl.u32 %v1580, 16
      %v1697 = vrot.slane %v1695, 4
      %v1698 = vshll.u32 %v1580, 16
      %v1700 = vrot.slane %v1698, 5
      %v1701 = vor.u32 %v1697, %v1700
      %v1702 = vrot.slane %v1701, 4
      %v1704 = vshll.u32 %v1581, 16
      %v1706 = vrot.slane %v1704, 5
      %v1707 = vsel %vm1621, %v1702, %v1706
      %v1708 = vshrl.u32 %v1581, 16
      %v1710 = vrot.slane %v1708, 4
      %v1711 = vor.u32 %v1710, %v1706
      %v1712 = vrot.slane %v1711, 4
      %v1714 = vshll.u32 %v1582, 16
      %v1716 = vrot.slane %v1714, 5
      %v1717 = vsel %vm1621, %v1712, %v1716
      %v1719 = vshrl.u32 %v1583, 16
      %v1721 = vrot.slane %v1719, 4
      %v1722 = vshll.u32 %v1583, 16
      %v1724 = vrot.slane %v1722, 5
      %v1725 = vor.u32 %v1721, %v1724
      %v1726 = vrot.slane %v1725, 4
      %v1728 = vshll.u32 %v1584, 16
      %v1730 = vrot.slane %v1728, 5
      %v1731 = vsel %vm1621, %v1726, %v1730
      %v1732 = vshrl.u32 %v1584, 16
      %v1734 = vrot.slane %v1732, 4
      %v1735 = vor.u32 %v1734, %v1730
      %v1736 = vrot.slane %v1735, 4
      %v1738 = vshll.u32 %v1585, 16
      %v1740 = vrot.slane %v1738, 5
      %v1741 = vsel %vm1621, %v1736, %v1740
      %v1743 = vshrl.u32 %v1586, 16
      %v1745 = vrot.slane %v1743, 4
      %v1746 = vshll.u32 %v1586, 16
      %v1748 = vrot.slane %v1746, 5
      %v1749 = vor.u32 %v1745, %v1748
      %v1750 = vrot.slane %v1749, 4
      %v1752 = vshll.u32 %v1587, 16
      %v1754 = vrot.slane %v1752, 5
      %v1755 = vsel %vm1621, %v1750, %v1754
      %v1756 = vshrl.u32 %v1587, 16
      %v1758 = vrot.slane %v1756, 4
      %v1759 = vor.u32 %v1758, %v1754
      %v1760 = vrot.slane %v1759, 4
      %v1762 = vshll.u32 %v1588, 16
      %v1764 = vrot.slane %v1762, 5
      %v1765 = vsel %vm1621, %v1760, %v1764
      %v1767 = vshrl.u32 %v1589, 16
      %v1769 = vrot.slane %v1767, 4
      %v1770 = vshll.u32 %v1589, 16
      %v1772 = vrot.slane %v1770, 5
      %v1773 = vor.u32 %v1769, %v1772
      %v1774 = vrot.slane %v1773, 4
      %v1776 = vshll.u32 %v1590, 16
      %v1778 = vrot.slane %v1776, 5
      %v1779 = vsel %vm1621, %v1774, %v1778
      %v1780 = vshrl.u32 %v1590, 16
      %v1782 = vrot.slane %v1780, 4
      %v1783 = vor.u32 %v1782, %v1778
      %v1784 = vrot.slane %v1783, 4
      %v1786 = vshll.u32 %v1591, 16
      %v1788 = vrot.slane %v1786, 5
      %v1789 = vsel %vm1621, %v1784, %v1788
      %v1791 = vshrl.u32 %v1592, 16
      %v1793 = vrot.slane %v1791, 4
      %v1794 = vshll.u32 %v1592, 16
      %v1796 = vrot.slane %v1794, 5
      %v1797 = vor.u32 %v1793, %v1796
      %v1798 = vrot.slane %v1797, 4
      %v1800 = vshll.u32 %v1593, 16
      %v1802 = vrot.slane %v1800, 5
      %v1803 = vsel %vm1621, %v1798, %v1802
      %v1804 = vshrl.u32 %v1593, 16
      %v1806 = vrot.slane %v1804, 4
      %v1807 = vor.u32 %v1806, %v1802
      %v1808 = vrot.slane %v1807, 4
      %v1810 = vshll.u32 %v1594, 16
      %v1812 = vrot.slane %v1810, 5
      %v1813 = vsel %vm1621, %v1808, %v1812
      %v1815 = vshrl.u32 %v1595, 16
      %v1817 = vrot.slane %v1815, 4
      %v1818 = vshll.u32 %v1595, 16
      %v1820 = vrot.slane %v1818, 5
      %v1821 = vor.u32 %v1817, %v1820
      %v1822 = vrot.slane %v1821, 4
      %v1824 = vshll.u32 %v1596, 16
      %v1826 = vrot.slane %v1824, 5
      %v1827 = vsel %vm1621, %v1822, %v1826
      %v1828 = vshrl.u32 %v1596, 16
      %v1830 = vrot.slane %v1828, 4
      %v1831 = vor.u32 %v1830, %v1826
      %v1832 = vrot.slane %v1831, 4
      %v1834 = vshll.u32 %v1597, 16
      %v1836 = vrot.slane %v1834, 5
      %v1837 = vsel %vm1621, %v1832, %v1836
      %v1839 = vshrl.u32 %v1598, 16
      %v1841 = vrot.slane %v1839, 4
      %v1842 = vshll.u32 %v1598, 16
      %v1844 = vrot.slane %v1842, 5
      %v1845 = vor.u32 %v1841, %v1844
      %v1846 = vrot.slane %v1845, 4
      %v1848 = vshll.u32 %v1599, 16
      %v1850 = vrot.slane %v1848, 5
      %v1851 = vsel %vm1621, %v1846, %v1850
      %v1852 = vshrl.u32 %v1599, 16
      %v1854 = vrot.slane %v1852, 4
      %v1855 = vor.u32 %v1854, %v1850
      %v1856 = vrot.slane %v1855, 4
      %v1858 = vshll.u32 %v1600, 16
      %v1860 = vrot.slane %v1858, 5
      %v1861 = vsel %vm1621, %v1856, %v1860
      %v1863 = vshrl.u32 %v1601, 16
      %v1865 = vrot.slane %v1863, 4
      %v1866 = vshll.u32 %v1601, 16
      %v1868 = vrot.slane %v1866, 5
      %v1869 = vor.u32 %v1865, %v1868
      %v1870 = vrot.slane %v1869, 4
      %v1872 = vshll.u32 %v1602, 16
      %v1874 = vrot.slane %v1872, 5
      %v1875 = vsel %vm1621, %v1870, %v1874
      %v1876 = vshrl.u32 %v1602, 16
      %v1878 = vrot.slane %v1876, 4
      %v1879 = vor.u32 %v1878, %v1874
      %v1880 = vrot.slane %v1879, 4
      %v1882 = vshll.u32 %v1603, 16
      %v1884 = vrot.slane %v1882, 5
      %v1885 = vsel %vm1621, %v1880, %v1884
      %v1887 = vshrl.u32 %v1604, 16
      %v1889 = vrot.slane %v1887, 4
      %v1890 = vshll.u32 %v1604, 16
      %v1892 = vrot.slane %v1890, 5
      %v1893 = vor.u32 %v1889, %v1892
      %v1894 = vrot.slane %v1893, 4
      %v1896 = vshll.u32 %v1605, 16
      %v1898 = vrot.slane %v1896, 5
      %v1899 = vsel %vm1621, %v1894, %v1898
      %v1900 = vshrl.u32 %v1605, 16
      %v1902 = vrot.slane %v1900, 4
      %v1903 = vor.u32 %v1902, %v1898
      %v1904 = vrot.slane %v1903, 4
      %v1906 = vshll.u32 %v1606, 16
      %v1908 = vrot.slane %v1906, 5
      %v1909 = vsel %vm1621, %v1904, %v1908
      %v1911 = vshrl.u32 %v1607, 16
      %v1913 = vrot.slane %v1911, 4
      %v1914 = vshll.u32 %v1607, 16
      %v1916 = vrot.slane %v1914, 5
      %v1917 = vor.u32 %v1913, %v1916
      %v1918 = vrot.slane %v1917, 4
      %v1920 = vshll.u32 %v1608, 16
      %v1922 = vrot.slane %v1920, 5
      %v1923 = vsel %vm1621, %v1918, %v1922
      %v1924 = vshrl.u32 %v1608, 16
      %v1926 = vrot.slane %v1924, 4
      %v1927 = vor.u32 %v1926, %v1922
      %v1928 = vrot.slane %v1927, 4
      %v1930 = vshll.u32 %v1609, 16
      %v1932 = vrot.slane %v1930, 5
      %v1933 = vsel %vm1621, %v1928, %v1932
      %v1935 = vshrl.u32 %v1610, 16
      %v1937 = vrot.slane %v1935, 4
      %v1938 = vshll.u32 %v1610, 16
      %v1940 = vrot.slane %v1938, 5
      %v1941 = vor.u32 %v1937, %v1940
      %v1942 = vrot.slane %v1941, 4
      %v1944 = vshll.u32 %v1611, 16
      %v1946 = vrot.slane %v1944, 5
      %v1947 = vsel %vm1621, %v1942, %v1946
      %v1948 = vshrl.u32 %v1611, 16
      %v1950 = vrot.slane %v1948, 4
      %v1951 = vor.u32 %v1950, %v1946
      %v1952 = vrot.slane %v1951, 4
      %v1954 = vshll.u32 %v1612, 16
      %v1956 = vrot.slane %v1954, 5
      %v1957 = vsel %vm1621, %v1952, %v1956
      %v1959 = vshrl.u32 %v1613, 16
      %v1961 = vrot.slane %v1959, 4
      %v1962 = vshll.u32 %v1613, 16
      %v1964 = vrot.slane %v1962, 5
      %v1965 = vor.u32 %v1961, %v1964
      %v1966 = vrot.slane %v1965, 4
      %v1968 = vshll.u32 %v1614, 16
      %v1970 = vrot.slane %v1968, 5
      %v1971 = vsel %vm1621, %v1966, %v1970
      %v1972 = vshrl.u32 %v1614, 16
      %v1974 = vrot.slane %v1972, 4
      %v1975 = vor.u32 %v1974, %v1970
      %v1976 = vrot.slane %v1975, 4
      %v1978 = vshll.u32 %v1615, 16
      %v1980 = vrot.slane %v1978, 5
      %v1981 = vsel %vm1621, %v1976, %v1980
      %v1983 = vshrl.u32 %v1616, 16
      %v1985 = vrot.slane %v1983, 4
      %v1986 = vshll.u32 %v1616, 16
      %v1988 = vrot.slane %v1986, 5
      %v1989 = vor.u32 %v1985, %v1988
      %v1990 = vrot.slane %v1989, 4
      %v1992 = vshll.u32 %v1617, 16
      %v1994 = vrot.slane %v1992, 5
      %v1995 = vsel %vm1621, %v1990, %v1994
      %v1996 = vshrl.u32 %v1617, 16
      %v1998 = vrot.slane %v1996, 4
      %v1999 = vor.u32 %v1998, %v1994
      %v2000 = vrot.slane %v1999, 4
      %v2002 = vshll.u32 %v1618, 16
      %v2004 = vrot.slane %v2002, 5
      %v2005 = vsel %vm1621, %v2000, %v2004
      %v2006 = vld [vmem:[%s1 + $0x8] sm:$0xf]
      %v2007 = vunpack.c.l.b16 %v1635
      %v2008 = vunpack.c.l.b16 %v1645
      %v2009 = vunpack.c.l.b16 %v1659
      %v2010 = vunpack.c.l.b16 %v1669
      %v2011 = vunpack.c.l.b16 %v1683
      %v2012 = vunpack.c.l.b16 %v1693
      %v2013 = vunpack.c.l.b16 %v1707
      %v2014 = vunpack.c.l.b16 %v1717
      %v2015 = vunpack.c.l.b16 %v1731
      %v2016 = vunpack.c.l.b16 %v1741
      %v2017 = vunpack.c.l.b16 %v1755
      %v2018 = vunpack.c.l.b16 %v1765
      %v2019 = vunpack.c.l.b16 %v1779
      %v2020 = vunpack.c.l.b16 %v1789
      %v2021 = vunpack.c.l.b16 %v1803
      %v2022 = vunpack.c.l.b16 %v1813
      %v2023 = vunpack.c.l.b16 %v1827
      %v2024 = vunpack.c.l.b16 %v1837
      %v2025 = vunpack.c.l.b16 %v1851
      %v2026 = vunpack.c.l.b16 %v1861
      %v2027 = vunpack.c.l.b16 %v1875
      %v2028 = vunpack.c.l.b16 %v1885
      %v2029 = vunpack.c.l.b16 %v1899
      %v2030 = vunpack.c.l.b16 %v1909
      %v2031 = vunpack.c.l.b16 %v1923
      %v2032 = vunpack.c.l.b16 %v1933
      %v2033 = vunpack.c.l.b16 %v1947
      %v2034 = vunpack.c.l.b16 %v1957
      %v2035 = vunpack.c.l.b16 %v1971
      %v2036 = vunpack.c.l.b16 %v1981
      %v2037 = vunpack.c.l.b16 %v1995
      %v2038 = vunpack.c.l.b16 %v2005
      %v2039 = vpack.c.b16 %v2008, %v2007
      %v2040 = vpack.c.b16 %v2010, %v2009
      %v2041 = vpack.c.b16 %v2012, %v2011
      %v2042 = vpack.c.b16 %v2014, %v2013
      %v2043 = vpack.c.b16 %v2016, %v2015
      %v2044 = vpack.c.b16 %v2018, %v2017
      %v2045 = vpack.c.b16 %v2020, %v2019
      %v2046 = vpack.c.b16 %v2022, %v2021
      %v2047 = vpack.c.b16 %v2024, %v2023
      %v2048 = vpack.c.b16 %v2026, %v2025
      %v2049 = vpack.c.b16 %v2028, %v2027
      %v2050 = vpack.c.b16 %v2030, %v2029
      %v2051 = vpack.c.b16 %v2032, %v2031
      %v2052 = vpack.c.b16 %v2034, %v2033
      %v2053 = vpack.c.b16 %v2036, %v2035
      %v2054 = vpack.c.b16 %v2038, %v2037
      %v2056 = vsel %vm1097, %v2039, 0
      %v2059 = vsel %vm1097, %v2040, 0
      %v2062 = vsel %vm1097, %v2041, 0
      %v2065 = vsel %vm1097, %v2042, 0
      %v2068 = vsel %vm1097, %v2043, 0
      %v2071 = vsel %vm1097, %v2044, 0
      %v2074 = vsel %vm1097, %v2045, 0
      %v2077 = vsel %vm1097, %v2046, 0
      %v2080 = vsel %vm1097, %v2047, 0
      %v2083 = vsel %vm1097, %v2048, 0
      %v2086 = vsel %vm1097, %v2049, 0
      %v2089 = vsel %vm1097, %v2050, 0
      %v2092 = vsel %vm1097, %v2051, 0
      %v2095 = vsel %vm1097, %v2052, 0
      %v2098 = vsel %vm1097, %v2053, 0
      %v2101 = vsel %vm1097, %v2054, 0
      %v2104 = vsel %vm1146, %v2006, 0
      %2106 = vmatprep.subr.bf16.mxu0 0
      %2107 = vmatpush1.bf16.msra.mxu0 %v2104
      %2108 = vmatprep.subr.bf16.mxu0 0
      %2109 = vmatpush1.bf16.msra.mxu0 0
      %2110 = vmatprep.subr.bf16.mxu0 0
      %2111 = vmatpush1.bf16.msra.mxu0 0
      %2112 = vmatprep.subr.bf16.mxu0 0
      %2113 = vmatpush1.bf16.msra.mxu0 0
      %2114 = vmatprep.subr.bf16.mxu0 0
      %2115 = vmatpush1.bf16.msra.mxu0 0
      %2116 = vmatprep.subr.bf16.mxu0 0
      %2117 = vmatpush1.bf16.msra.mxu0 0
      %2118 = vmatprep.subr.bf16.mxu0 0
      %2119 = vmatpush1.bf16.msra.mxu0 0
      %2120 = vmatprep.subr.bf16.mxu0 0
      %2121 = vmatpush1.bf16.msra.mxu0 0
      %2122 = vmatprep.subr.bf16.mxu0 0
      %2123 = vmatpush1.bf16.msra.mxu0 0
      %2124 = vmatprep.subr.bf16.mxu0 0
      %2125 = vmatpush1.bf16.msra.mxu0 0
      %2126 = vmatprep.subr.bf16.mxu0 0
      %2127 = vmatpush1.bf16.msra.mxu0 0
      %2128 = vmatprep.subr.bf16.mxu0 0
      %2129 = vmatpush1.bf16.msra.mxu0 0
      %2130 = vmatprep.subr.bf16.mxu0 0
      %2131 = vmatpush1.bf16.msra.mxu0 0
      %2132 = vmatprep.subr.bf16.mxu0 0
      %2133 = vmatpush1.bf16.msra.mxu0 0
      %2134 = vmatprep.subr.bf16.mxu0 0
      %2135 = vmatpush1.bf16.msra.mxu0 0
      %2136 = vmatprep.subr.bf16.mxu0 0
      %2137 = vmatpush1.bf16.msra.mxu0 0
      %2138 = vmatprep.mubr.bf16.mxu0 0
      %2139 = vmatmul.mubr.bf16.gmra.mrb[0].mxu0 %v2056
      %v2140 = vpop.f32.mrb[0].mxu0
      %v2141 = vadd.f32 0.0, %v2140
      %v2142 = vpop.f32.mrb[0].mxu0
      %v2143 = vpop.f32.mrb[0].mxu0
      %v2144 = vadd.f32 0.0, %v2143
      %v2145 = vpop.f32.mrb[0].mxu0
      %2146 = vmatprep.mubr.bf16.mxu0 0
      %2147 = vmatmul.mubr.bf16.gmra.mrb[0].mxu0 %v2059
      %v2148 = vpop.f32.mrb[0].mxu0
      %v2149 = vadd.f32 0.0, %v2148
      %v2150 = vpop.f32.mrb[0].mxu0
      %v2151 = vpop.f32.mrb[0].mxu0
      %v2152 = vadd.f32 0.0, %v2151
      %v2153 = vpop.f32.mrb[0].mxu0
      %2154 = vmatprep.mubr.bf16.mxu0 0
      %2155 = vmatmul.mubr.bf16.gmra.mrb[0].mxu0 %v2062
      %v2156 = vpop.f32.mrb[0].mxu0
      %v2157 = vadd.f32 0.0, %v2156
      %v2158 = vpop.f32.mrb[0].mxu0
      %v2159 = vpop.f32.mrb[0].mxu0
      %v2160 = vadd.f32 0.0, %v2159
      %v2161 = vpop.f32.mrb[0].mxu0
      %2162 = vmatprep.mubr.bf16.mxu0 0
      %2163 = vmatmul.mubr.bf16.gmra.mrb[0].mxu0 %v2065
      %v2164 = vpop.f32.mrb[0].mxu0
      %v2165 = vadd.f32 0.0, %v2164
      %v2166 = vpop.f32.mrb[0].mxu0
      %v2167 = vpop.f32.mrb[0].mxu0
      %v2168 = vadd.f32 0.0, %v2167
      %v2169 = vpop.f32.mrb[0].mxu0
      %2170 = vmatprep.mubr.bf16.mxu0 0
      %2171 = vmatmul.mubr.bf16.gmra.mrb[0].mxu0 %v2068
      %v2172 = vpop.f32.mrb[0].mxu0
      %v2173 = vadd.f32 0.0, %v2172
      %v2174 = vpop.f32.mrb[0].mxu0
      %v2175 = vpop.f32.mrb[0].mxu0
      %v2176 = vadd.f32 0.0, %v2175
      %v2177 = vpop.f32.mrb[0].mxu0
      %2178 = vmatprep.mubr.bf16.mxu0 0
      %2179 = vmatmul.mubr.bf16.gmra.mrb[0].mxu0 %v2071
      %v2180 = vpop.f32.mrb[0].mxu0
      %v2181 = vadd.f32 0.0, %v2180
      %v2182 = vpop.f32.mrb[0].mxu0
      %v2183 = vpop.f32.mrb[0].mxu0
      %v2184 = vadd.f32 0.0, %v2183
      %v2185 = vpop.f32.mrb[0].mxu0
      %2186 = vmatprep.mubr.bf16.mxu0 0
      %2187 = vmatmul.mubr.bf16.gmra.mrb[0].mxu0 %v2074
      %v2188 = vpop.f32.mrb[0].mxu0
      %v2189 = vadd.f32 0.0, %v2188
      %v2190 = vpop.f32.mrb[0].mxu0
      %v2191 = vpop.f32.mrb[0].mxu0
      %v2192 = vadd.f32 0.0, %v2191
      %v2193 = vpop.f32.mrb[0].mxu0
      %2194 = vmatprep.mubr.bf16.mxu0 0
      %2195 = vmatmul.mubr.bf16.gmra.mrb[0].mxu0 %v2077
      %v2196 = vpop.f32.mrb[0].mxu0
      %v2197 = vadd.f32 0.0, %v2196
      %v2198 = vpop.f32.mrb[0].mxu0
      %v2199 = vpop.f32.mrb[0].mxu0
      %v2200 = vadd.f32 0.0, %v2199
      %v2201 = vpop.f32.mrb[0].mxu0
      %2202 = vmatprep.mubr.bf16.mxu0 0
      %2203 = vmatmul.mubr.bf16.gmra.mrb[0].mxu0 %v2080
      %v2204 = vpop.f32.mrb[0].mxu0
      %v2205 = vadd.f32 0.0, %v2204
      %v2206 = vpop.f32.mrb[0].mxu0
      %v2207 = vpop.f32.mrb[0].mxu0
      %v2208 = vadd.f32 0.0, %v2207
      %v2209 = vpop.f32.mrb[0].mxu0
      %2210 = vmatprep.mubr.bf16.mxu0 0
      %2211 = vmatmul.mubr.bf16.gmra.mrb[0].mxu0 %v2083
      %v2212 = vpop.f32.mrb[0].mxu0
      %v2213 = vadd.f32 0.0, %v2212
      %v2214 = vpop.f32.mrb[0].mxu0
      %v2215 = vpop.f32.mrb[0].mxu0
      %v2216 = vadd.f32 0.0, %v2215
      %v2217 = vpop.f32.mrb[0].mxu0
      %2218 = vmatprep.mubr.bf16.mxu0 0
      %2219 = vmatmul.mubr.bf16.gmra.mrb[0].mxu0 %v2086
      %v2220 = vpop.f32.mrb[0].mxu0
      %v2221 = vadd.f32 0.0, %v2220
      %v2222 = vpop.f32.mrb[0].mxu0
      %v2223 = vpop.f32.mrb[0].mxu0
      %v2224 = vadd.f32 0.0, %v2223
      %v2225 = vpop.f32.mrb[0].mxu0
      %2226 = vmatprep.mubr.bf16.mxu0 0
      %2227 = vmatmul.mubr.bf16.gmra.mrb[0].mxu0 %v2089
      %v2228 = vpop.f32.mrb[0].mxu0
      %v2229 = vadd.f32 0.0, %v2228
      %v2230 = vpop.f32.mrb[0].mxu0
      %v2231 = vpop.f32.mrb[0].mxu0
      %v2232 = vadd.f32 0.0, %v2231
      %v2233 = vpop.f32.mrb[0].mxu0
      %2234 = vmatprep.mubr.bf16.mxu0 0
      %2235 = vmatmul.mubr.bf16.gmra.mrb[0].mxu0 %v2092
      %v2236 = vpop.f32.mrb[0].mxu0
      %v2237 = vadd.f32 0.0, %v2236
      %v2238 = vpop.f32.mrb[0].mxu0
      %v2239 = vpop.f32.mrb[0].mxu0
      %v2240 = vadd.f32 0.0, %v2239
      %v2241 = vpop.f32.mrb[0].mxu0
      %2242 = vmatprep.mubr.bf16.mxu0 0
      %2243 = vmatmul.mubr.bf16.gmra.mrb[0].mxu0 %v2095
      %v2244 = vpop.f32.mrb[0].mxu0
      %v2245 = vadd.f32 0.0, %v2244
      %v2246 = vpop.f32.mrb[0].mxu0
      %v2247 = vpop.f32.mrb[0].mxu0
      %v2248 = vadd.f32 0.0, %v2247
      %v2249 = vpop.f32.mrb[0].mxu0
      %2250 = vmatprep.mubr.bf16.mxu0 0
      %2251 = vmatmul.mubr.bf16.gmra.mrb[0].mxu0 %v2098
      %v2252 = vpop.f32.mrb[0].mxu0
      %v2253 = vadd.f32 0.0, %v2252
      %v2254 = vpop.f32.mrb[0].mxu0
      %v2255 = vpop.f32.mrb[0].mxu0
      %v2256 = vadd.f32 0.0, %v2255
      %v2257 = vpop.f32.mrb[0].mxu0
      %2258 = vmatprep.mubr.bf16.mxu0 0
      %2259 = vmatmul.mubr.bf16.gmra.mrb[0].mxu0 %v2101
      %v2260 = vpop.f32.mrb[0].mxu0
      %v2261 = vadd.f32 0.0, %v2260
      %v2262 = vpop.f32.mrb[0].mxu0
      %v2263 = vpop.f32.mrb[0].mxu0
      %v2264 = vadd.f32 0.0, %v2263
      %v2265 = vpop.f32.mrb[0].mxu0
      %2266 = vdwg.mxu0
      %v2267 = vadd.f32 %v1445, %v2141
      %v2268 = vadd.f32 %v1448, %v2144
      %v2269 = vadd.f32 %v1453, %v2149
      %v2270 = vadd.f32 %v1456, %v2152
      %v2271 = vadd.f32 %v1461, %v2157
      %v2272 = vadd.f32 %v1464, %v2160
      %v2273 = vadd.f32 %v1469, %v2165
      %v2274 = vadd.f32 %v1472, %v2168
      %v2275 = vadd.f32 %v1477, %v2173
      %v2276 = vadd.f32 %v1480, %v2176
      %v2277 = vadd.f32 %v1485, %v2181
      %v2278 = vadd.f32 %v1488, %v2184
      %v2279 = vadd.f32 %v1493, %v2189
      %v2280 = vadd.f32 %v1496, %v2192
      %v2281 = vadd.f32 %v1501, %v2197
      %v2282 = vadd.f32 %v1504, %v2200
      %v2283 = vadd.f32 %v1509, %v2205
      %v2284 = vadd.f32 %v1512, %v2208
      %v2285 = vadd.f32 %v1517, %v2213
      %v2286 = vadd.f32 %v1520, %v2216
      %v2287 = vadd.f32 %v1525, %v2221
      %v2288 = vadd.f32 %v1528, %v2224
      %v2289 = vadd.f32 %v1533, %v2229
      %v2290 = vadd.f32 %v1536, %v2232
      %v2291 = vadd.f32 %v1541, %v2237
      %v2292 = vadd.f32 %v1544, %v2240
      %v2293 = vadd.f32 %v1549, %v2245
      %v2294 = vadd.f32 %v1552, %v2248
      %v2295 = vadd.f32 %v1557, %v2253
      %v2296 = vadd.f32 %v1560, %v2256
      %v2297 = vadd.f32 %v1565, %v2261
      %v2298 = vadd.f32 %v1568, %v2264
      %v2299 = vld [vmem:[%s304] sm:$0x8]
      %v2300 = vld [vmem:[%s304 + $0x4] sm:$0xf]
      %v2301 = vld [vmem:[%s304 + $0x8] sm:$0xf]
      %v2302 = vld [vmem:[%s304 + $0x10] sm:$0x8]
      %v2303 = vld [vmem:[%s304 + $0x14] sm:$0xf]
      %v2304 = vld [vmem:[%s304 + $0x18] sm:$0xf]
      %v2305 = vld [vmem:[%s304 + $0x20] sm:$0x8]
      %v2306 = vld [vmem:[%s304 + $0x24] sm:$0xf]
      %v2307 = vld [vmem:[%s304 + $0x28] sm:$0xf]
      %v2308 = vld [vmem:[%s304 + $0x30] sm:$0x8]
      %v2309 = vld [vmem:[%s304 + $0x34] sm:$0xf]
      %v2310 = vld [vmem:[%s304 + $0x38] sm:$0xf]
      %v2311 = vld [vmem:[%s304 + $0x40] sm:$0x8]
      %v2312 = vld [vmem:[%s304 + $0x44] sm:$0xf]
      %v2313 = vld [vmem:[%s304 + $0x48] sm:$0xf]
      %v2314 = vld [vmem:[%s304 + $0x50] sm:$0x8]
      %v2315 = vld [vmem:[%s304 + $0x54] sm:$0xf]
      %v2316 = vld [vmem:[%s304 + $0x58] sm:$0xf]
      %v2317 = vld [vmem:[%s304 + $0x60] sm:$0x8]
      %v2318 = vld [vmem:[%s304 + $0x64] sm:$0xf]
      %v2319 = vld [vmem:[%s304 + $0x68] sm:$0xf]
      %v2320 = vld [vmem:[%s304 + $0x70] sm:$0x8]
      %v2321 = vld [vmem:[%s304 + $0x74] sm:$0xf]
      %v2322 = vld [vmem:[%s304 + $0x78] sm:$0xf]
      %v2323 = vld [vmem:[%s304 + $0x80] sm:$0x8]
      %v2324 = vld [vmem:[%s304 + $0x84] sm:$0xf]
      %v2325 = vld [vmem:[%s304 + $0x88] sm:$0xf]
      %v2326 = vld [vmem:[%s304 + $0x90] sm:$0x8]
      %v2327 = vld [vmem:[%s304 + $0x94] sm:$0xf]
      %v2328 = vld [vmem:[%s304 + $0x98] sm:$0xf]
      %v2329 = vld [vmem:[%s304 + $0xa0] sm:$0x8]
      %v2330 = vld [vmem:[%s304 + $0xa4] sm:$0xf]
      %v2331 = vld [vmem:[%s304 + $0xa8] sm:$0xf]
      %v2332 = vld [vmem:[%s304 + $0xb0] sm:$0x8]
      %v2333 = vld [vmem:[%s304 + $0xb4] sm:$0xf]
      %v2334 = vld [vmem:[%s304 + $0xb8] sm:$0xf]
      %v2335 = vld [vmem:[%s304 + $0xc0] sm:$0x8]
      %v2336 = vld [vmem:[%s304 + $0xc4] sm:$0xf]
      %v2337 = vld [vmem:[%s304 + $0xc8] sm:$0xf]
      %v2338 = vld [vmem:[%s304 + $0xd0] sm:$0x8]
      %v2339 = vld [vmem:[%s304 + $0xd4] sm:$0xf]
      %v2340 = vld [vmem:[%s304 + $0xd8] sm:$0xf]
      %v2341 = vld [vmem:[%s304 + $0xe0] sm:$0x8]
      %v2342 = vld [vmem:[%s304 + $0xe4] sm:$0xf]
      %v2343 = vld [vmem:[%s304 + $0xe8] sm:$0xf]
      %v2344 = vld [vmem:[%s304 + $0xf0] sm:$0x8]
      %v2345 = vld [vmem:[%s304 + $0xf4] sm:$0xf]
      %v2346 = vld [vmem:[%s304 + $0xf8] sm:$0xf]
      %v2348 = vshrl.u32 %v2299, 16
      %v2350 = vrot.slane %v2348, 7
      %v2351 = vrot.slane %v2350, 4
      %v2353 = vshrl.u32 %v2300, 16
      %v2355 = vrot.slane %v2353, 7
      %v2356 = vshll.u32 %v2300, 16
      %v2358 = vor.u32 %v2355, %v2356
      %v2359 = vsel %vm662, %v2351, %v2358
      %v2360 = vrot.slane %v2355, 4
      %v2362 = vshrl.u32 %v2301, 16
      %v2364 = vrot.slane %v2362, 7
      %v2365 = vshll.u32 %v2301, 16
      %v2367 = vor.u32 %v2364, %v2365
      %v2368 = vsel %vm662, %v2360, %v2367
      %v2370 = vshrl.u32 %v2302, 16
      %v2372 = vrot.slane %v2370, 7
      %v2373 = vrot.slane %v2372, 4
      %v2375 = vshrl.u32 %v2303, 16
      %v2377 = vrot.slane %v2375, 7
      %v2378 = vshll.u32 %v2303, 16
      %v2380 = vor.u32 %v2377, %v2378
      %v2381 = vsel %vm662, %v2373, %v2380
      %v2382 = vrot.slane %v2377, 4
      %v2384 = vshrl.u32 %v2304, 16
      %v2386 = vrot.slane %v2384, 7
      %v2387 = vshll.u32 %v2304, 16
      %v2389 = vor.u32 %v2386, %v2387
      %v2390 = vsel %vm662, %v2382, %v2389
      %v2392 = vshrl.u32 %v2305, 16
      %v2394 = vrot.slane %v2392, 7
      %v2395 = vrot.slane %v2394, 4
      %v2397 = vshrl.u32 %v2306, 16
      %v2399 = vrot.slane %v2397, 7
      %v2400 = vshll.u32 %v2306, 16
      %v2402 = vor.u32 %v2399, %v2400
      %v2403 = vsel %vm662, %v2395, %v2402
      %v2404 = vrot.slane %v2399, 4
      %v2406 = vshrl.u32 %v2307, 16
      %v2408 = vrot.slane %v2406, 7
      %v2409 = vshll.u32 %v2307, 16
      %v2411 = vor.u32 %v2408, %v2409
      %v2412 = vsel %vm662, %v2404, %v2411
      %v2414 = vshrl.u32 %v2308, 16
      %v2416 = vrot.slane %v2414, 7
      %v2417 = vrot.slane %v2416, 4
      %v2419 = vshrl.u32 %v2309, 16
      %v2421 = vrot.slane %v2419, 7
      %v2422 = vshll.u32 %v2309, 16
      %v2424 = vor.u32 %v2421, %v2422
      %v2425 = vsel %vm662, %v2417, %v2424
      %v2426 = vrot.slane %v2421, 4
      %v2428 = vshrl.u32 %v2310, 16
      %v2430 = vrot.slane %v2428, 7
      %v2431 = vshll.u32 %v2310, 16
      %v2433 = vor.u32 %v2430, %v2431
      %v2434 = vsel %vm662, %v2426, %v2433
      %v2436 = vshrl.u32 %v2311, 16
      %v2438 = vrot.slane %v2436, 7
      %v2439 = vrot.slane %v2438, 4
      %v2441 = vshrl.u32 %v2312, 16
      %v2443 = vrot.slane %v2441, 7
      %v2444 = vshll.u32 %v2312, 16
      %v2446 = vor.u32 %v2443, %v2444
      %v2447 = vsel %vm662, %v2439, %v2446
      %v2448 = vrot.slane %v2443, 4
      %v2450 = vshrl.u32 %v2313, 16
      %v2452 = vrot.slane %v2450, 7
      %v2453 = vshll.u32 %v2313, 16
      %v2455 = vor.u32 %v2452, %v2453
      %v2456 = vsel %vm662, %v2448, %v2455
      %v2458 = vshrl.u32 %v2314, 16
      %v2460 = vrot.slane %v2458, 7
      %v2461 = vrot.slane %v2460, 4
      %v2463 = vshrl.u32 %v2315, 16
      %v2465 = vrot.slane %v2463, 7
      %v2466 = vshll.u32 %v2315, 16
      %v2468 = vor.u32 %v2465, %v2466
      %v2469 = vsel %vm662, %v2461, %v2468
      %v2470 = vrot.slane %v2465, 4
      %v2472 = vshrl.u32 %v2316, 16
      %v2474 = vrot.slane %v2472, 7
      %v2475 = vshll.u32 %v2316, 16
      %v2477 = vor.u32 %v2474, %v2475
      %v2478 = vsel %vm662, %v2470, %v2477
      %v2480 = vshrl.u32 %v2317, 16
      %v2482 = vrot.slane %v2480, 7
      %v2483 = vrot.slane %v2482, 4
      %v2485 = vshrl.u32 %v2318, 16
      %v2487 = vrot.slane %v2485, 7
      %v2488 = vshll.u32 %v2318, 16
      %v2490 = vor.u32 %v2487, %v2488
      %v2491 = vsel %vm662, %v2483, %v2490
      %v2492 = vrot.slane %v2487, 4
      %v2494 = vshrl.u32 %v2319, 16
      %v2496 = vrot.slane %v2494, 7
      %v2497 = vshll.u32 %v2319, 16
      %v2499 = vor.u32 %v2496, %v2497
      %v2500 = vsel %vm662, %v2492, %v2499
      %v2502 = vshrl.u32 %v2320, 16
      %v2504 = vrot.slane %v2502, 7
      %v2505 = vrot.slane %v2504, 4
      %v2507 = vshrl.u32 %v2321, 16
      %v2509 = vrot.slane %v2507, 7
      %v2510 = vshll.u32 %v2321, 16
      %v2512 = vor.u32 %v2509, %v2510
      %v2513 = vsel %vm662, %v2505, %v2512
      %v2514 = vrot.slane %v2509, 4
      %v2516 = vshrl.u32 %v2322, 16
      %v2518 = vrot.slane %v2516, 7
      %v2519 = vshll.u32 %v2322, 16
      %v2521 = vor.u32 %v2518, %v2519
      %v2522 = vsel %vm662, %v2514, %v2521
      %v2524 = vshrl.u32 %v2323, 16
      %v2526 = vrot.slane %v2524, 7
      %v2527 = vrot.slane %v2526, 4
      %v2529 = vshrl.u32 %v2324, 16
      %v2531 = vrot.slane %v2529, 7
      %v2532 = vshll.u32 %v2324, 16
      %v2534 = vor.u32 %v2531, %v2532
      %v2535 = vsel %vm662, %v2527, %v2534
      %v2536 = vrot.slane %v2531, 4
      %v2538 = vshrl.u32 %v2325, 16
      %v2540 = vrot.slane %v2538, 7
      %v2541 = vshll.u32 %v2325, 16
      %v2543 = vor.u32 %v2540, %v2541
      %v2544 = vsel %vm662, %v2536, %v2543
      %v2546 = vshrl.u32 %v2326, 16
      %v2548 = vrot.slane %v2546, 7
      %v2549 = vrot.slane %v2548, 4
      %v2551 = vshrl.u32 %v2327, 16
      %v2553 = vrot.slane %v2551, 7
      %v2554 = vshll.u32 %v2327, 16
      %v2556 = vor.u32 %v2553, %v2554
      %v2557 = vsel %vm662, %v2549, %v2556
      %v2558 = vrot.slane %v2553, 4
      %v2560 = vshrl.u32 %v2328, 16
      %v2562 = vrot.slane %v2560, 7
      %v2563 = vshll.u32 %v2328, 16
      %v2565 = vor.u32 %v2562, %v2563
      %v2566 = vsel %vm662, %v2558, %v2565
      %v2568 = vshrl.u32 %v2329, 16
      %v2570 = vrot.slane %v2568, 7
      %v2571 = vrot.slane %v2570, 4
      %v2573 = vshrl.u32 %v2330, 16
      %v2575 = vrot.slane %v2573, 7
      %v2576 = vshll.u32 %v2330, 16
      %v2578 = vor.u32 %v2575, %v2576
      %v2579 = vsel %vm662, %v2571, %v2578
      %v2580 = vrot.slane %v2575, 4
      %v2582 = vshrl.u32 %v2331, 16
      %v2584 = vrot.slane %v2582, 7
      %v2585 = vshll.u32 %v2331, 16
      %v2587 = vor.u32 %v2584, %v2585
      %v2588 = vsel %vm662, %v2580, %v2587
      %v2590 = vshrl.u32 %v2332, 16
      %v2592 = vrot.slane %v2590, 7
      %v2593 = vrot.slane %v2592, 4
      %v2595 = vshrl.u32 %v2333, 16
      %v2597 = vrot.slane %v2595, 7
      %v2598 = vshll.u32 %v2333, 16
      %v2600 = vor.u32 %v2597, %v2598
      %v2601 = vsel %vm662, %v2593, %v2600
      %v2602 = vrot.slane %v2597, 4
      %v2604 = vshrl.u32 %v2334, 16
      %v2606 = vrot.slane %v2604, 7
      %v2607 = vshll.u32 %v2334, 16
      %v2609 = vor.u32 %v2606, %v2607
      %v2610 = vsel %vm662, %v2602, %v2609
      %v2612 = vshrl.u32 %v2335, 16
      %v2614 = vrot.slane %v2612, 7
      %v2615 = vrot.slane %v2614, 4
      %v2617 = vshrl.u32 %v2336, 16
      %v2619 = vrot.slane %v2617, 7
      %v2620 = vshll.u32 %v2336, 16
      %v2622 = vor.u32 %v2619, %v2620
      %v2623 = vsel %vm662, %v2615, %v2622
      %v2624 = vrot.slane %v2619, 4
      %v2626 = vshrl.u32 %v2337, 16
      %v2628 = vrot.slane %v2626, 7
      %v2629 = vshll.u32 %v2337, 16
      %v2631 = vor.u32 %v2628, %v2629
      %v2632 = vsel %vm662, %v2624, %v2631
      %v2634 = vshrl.u32 %v2338, 16
      %v2636 = vrot.slane %v2634, 7
      %v2637 = vrot.slane %v2636, 4
      %v2639 = vshrl.u32 %v2339, 16
      %v2641 = vrot.slane %v2639, 7
      %v2642 = vshll.u32 %v2339, 16
      %v2644 = vor.u32 %v2641, %v2642
      %v2645 = vsel %vm662, %v2637, %v2644
      %v2646 = vrot.slane %v2641, 4
      %v2648 = vshrl.u32 %v2340, 16
      %v2650 = vrot.slane %v2648, 7
      %v2651 = vshll.u32 %v2340, 16
      %v2653 = vor.u32 %v2650, %v2651
      %v2654 = vsel %vm662, %v2646, %v2653
      %v2656 = vshrl.u32 %v2341, 16
      %v2658 = vrot.slane %v2656, 7
      %v2659 = vrot.slane %v2658, 4
      %v2661 = vshrl.u32 %v2342, 16
      %v2663 = vrot.slane %v2661, 7
      %v2664 = vshll.u32 %v2342, 16
      %v2666 = vor.u32 %v2663, %v2664
      %v2667 = vsel %vm662, %v2659, %v2666
      %v2668 = vrot.slane %v2663, 4
      %v2670 = vshrl.u32 %v2343, 16
      %v2672 = vrot.slane %v2670, 7
      %v2673 = vshll.u32 %v2343, 16
      %v2675 = vor.u32 %v2672, %v2673
      %v2676 = vsel %vm662, %v2668, %v2675
      %v2678 = vshrl.u32 %v2344, 16
      %v2680 = vrot.slane %v2678, 7
      %v2681 = vrot.slane %v2680, 4
      %v2683 = vshrl.u32 %v2345, 16
      %v2685 = vrot.slane %v2683, 7
      %v2686 = vshll.u32 %v2345, 16
      %v2688 = vor.u32 %v2685, %v2686
      %v2689 = vsel %vm662, %v2681, %v2688
      %v2690 = vrot.slane %v2685, 4
      %v2692 = vshrl.u32 %v2346, 16
      %v2694 = vrot.slane %v2692, 7
      %v2695 = vshll.u32 %v2346, 16
      %v2697 = vor.u32 %v2694, %v2695
      %v2698 = vsel %vm662, %v2690, %v2697
      %v2699 = vld [vmem:[%s1 + $0xc] sm:$0xf]
      %v2700 = vunpack.c.l.b16 %v2359
      %v2701 = vunpack.c.l.b16 %v2368
      %v2702 = vunpack.c.l.b16 %v2381
      %v2703 = vunpack.c.l.b16 %v2390
      %v2704 = vunpack.c.l.b16 %v2403
      %v2705 = vunpack.c.l.b16 %v2412
      %v2706 = vunpack.c.l.b16 %v2425
      %v2707 = vunpack.c.l.b16 %v2434
      %v2708 = vunpack.c.l.b16 %v2447
      %v2709 = vunpack.c.l.b16 %v2456
      %v2710 = vunpack.c.l.b16 %v2469
      %v2711 = vunpack.c.l.b16 %v2478
      %v2712 = vunpack.c.l.b16 %v2491
      %v2713 = vunpack.c.l.b16 %v2500
      %v2714 = vunpack.c.l.b16 %v2513
      %v2715 = vunpack.c.l.b16 %v2522
      %v2716 = vunpack.c.l.b16 %v2535
      %v2717 = vunpack.c.l.b16 %v2544
      %v2718 = vunpack.c.l.b16 %v2557
      %v2719 = vunpack.c.l.b16 %v2566
      %v2720 = vunpack.c.l.b16 %v2579
      %v2721 = vunpack.c.l.b16 %v2588
      %v2722 = vunpack.c.l.b16 %v2601
      %v2723 = vunpack.c.l.b16 %v2610
      %v2724 = vunpack.c.l.b16 %v2623
      %v2725 = vunpack.c.l.b16 %v2632
      %v2726 = vunpack.c.l.b16 %v2645
      %v2727 = vunpack.c.l.b16 %v2654
      %v2728 = vunpack.c.l.b16 %v2667
      %v2729 = vunpack.c.l.b16 %v2676
      %v2730 = vunpack.c.l.b16 %v2689
      %v2731 = vunpack.c.l.b16 %v2698
      %v2732 = vpack.c.b16 %v2701, %v2700
      %v2733 = vpack.c.b16 %v2703, %v2702
      %v2734 = vpack.c.b16 %v2705, %v2704
      %v2735 = vpack.c.b16 %v2707, %v2706
      %v2736 = vpack.c.b16 %v2709, %v2708
      %v2737 = vpack.c.b16 %v2711, %v2710
      %v2738 = vpack.c.b16 %v2713, %v2712
      %v2739 = vpack.c.b16 %v2715, %v2714
      %v2740 = vpack.c.b16 %v2717, %v2716
      %v2741 = vpack.c.b16 %v2719, %v2718
      %v2742 = vpack.c.b16 %v2721, %v2720
      %v2743 = vpack.c.b16 %v2723, %v2722
      %v2744 = vpack.c.b16 %v2725, %v2724
      %v2745 = vpack.c.b16 %v2727, %v2726
      %v2746 = vpack.c.b16 %v2729, %v2728
      %v2747 = vpack.c.b16 %v2731, %v2730
      %v2749 = vsel %vm1097, %v2732, 0
      %v2752 = vsel %vm1097, %v2733, 0
      %v2755 = vsel %vm1097, %v2734, 0
      %v2758 = vsel %vm1097, %v2735, 0
      %v2761 = vsel %vm1097, %v2736, 0
      %v2764 = vsel %vm1097, %v2737, 0
      %v2767 = vsel %vm1097, %v2738, 0
      %v2770 = vsel %vm1097, %v2739, 0
      %v2773 = vsel %vm1097, %v2740, 0
      %v2776 = vsel %vm1097, %v2741, 0
      %v2779 = vsel %vm1097, %v2742, 0
      %v2782 = vsel %vm1097, %v2743, 0
      %v2785 = vsel %vm1097, %v2744, 0
      %v2788 = vsel %vm1097, %v2745, 0
      %v2791 = vsel %vm1097, %v2746, 0
      %v2794 = vsel %vm1097, %v2747, 0
      %v2797 = vsel %vm1146, %v2699, 0
      %2799 = vmatprep.subr.bf16.mxu0 0
      %2800 = vmatpush1.bf16.msra.mxu0 %v2797
      %2801 = vmatprep.subr.bf16.mxu0 0
      %2802 = vmatpush1.bf16.msra.mxu0 0
      %2803 = vmatprep.subr.bf16.mxu0 0
      %2804 = vmatpush1.bf16.msra.mxu0 0
      %2805 = vmatprep.subr.bf16.mxu0 0
      %2806 = vmatpush1.bf16.msra.mxu0 0
      %2807 = vmatprep.subr.bf16.mxu0 0
      %2808 = vmatpush1.bf16.msra.mxu0 0
      %2809 = vmatprep.subr.bf16.mxu0 0
      %2810 = vmatpush1.bf16.msra.mxu0 0
      %2811 = vmatprep.subr.bf16.mxu0 0
      %2812 = vmatpush1.bf16.msra.mxu0 0
      %2813 = vmatprep.subr.bf16.mxu0 0
      %2814 = vmatpush1.bf16.msra.mxu0 0
      %2815 = vmatprep.subr.bf16.mxu0 0
      %2816 = vmatpush1.bf16.msra.mxu0 0
      %2817 = vmatprep.subr.bf16.mxu0 0
      %2818 = vmatpush1.bf16.msra.mxu0 0
      %2819 = vmatprep.subr.bf16.mxu0 0
      %2820 = vmatpush1.bf16.msra.mxu0 0
      %2821 = vmatprep.subr.bf16.mxu0 0
      %2822 = vmatpush1.bf16.msra.mxu0 0
      %2823 = vmatprep.subr.bf16.mxu0 0
      %2824 = vmatpush1.bf16.msra.mxu0 0
      %2825 = vmatprep.subr.bf16.mxu0 0
      %2826 = vmatpush1.bf16.msra.mxu0 0
      %2827 = vmatprep.subr.bf16.mxu0 0
      %2828 = vmatpush1.bf16.msra.mxu0 0
      %2829 = vmatprep.subr.bf16.mxu0 0
      %2830 = vmatpush1.bf16.msra.mxu0 0
      %2831 = vmatprep.mubr.bf16.mxu0 0
      %2832 = vmatmul.mubr.bf16.gmra.mrb[0].mxu0 %v2749
      %v2833 = vpop.f32.mrb[0].mxu0
      %v2834 = vadd.f32 0.0, %v2833
      %v2835 = vpop.f32.mrb[0].mxu0
      %v2836 = vpop.f32.mrb[0].mxu0
      %v2837 = vadd.f32 0.0, %v2836
      %v2838 = vpop.f32.mrb[0].mxu0
      %2839 = vmatprep.mubr.bf16.mxu0 0
      %2840 = vmatmul.mubr.bf16.gmra.mrb[0].mxu0 %v2752
      %v2841 = vpop.f32.mrb[0].mxu0
      %v2842 = vadd.f32 0.0, %v2841
      %v2843 = vpop.f32.mrb[0].mxu0
      %v2844 = vpop.f32.mrb[0].mxu0
      %v2845 = vadd.f32 0.0, %v2844
      %v2846 = vpop.f32.mrb[0].mxu0
      %2847 = vmatprep.mubr.bf16.mxu0 0
      %2848 = vmatmul.mubr.bf16.gmra.mrb[0].mxu0 %v2755
      %v2849 = vpop.f32.mrb[0].mxu0
      %v2850 = vadd.f32 0.0, %v2849
      %v2851 = vpop.f32.mrb[0].mxu0
      %v2852 = vpop.f32.mrb[0].mxu0
      %v2853 = vadd.f32 0.0, %v2852
      %v2854 = vpop.f32.mrb[0].mxu0
      %2855 = vmatprep.mubr.bf16.mxu0 0
      %2856 = vmatmul.mubr.bf16.gmra.mrb[0].mxu0 %v2758
      %v2857 = vpop.f32.mrb[0].mxu0
      %v2858 = vadd.f32 0.0, %v2857
      %v2859 = vpop.f32.mrb[0].mxu0
      %v2860 = vpop.f32.mrb[0].mxu0
      %v2861 = vadd.f32 0.0, %v2860
      %v2862 = vpop.f32.mrb[0].mxu0
      %2863 = vmatprep.mubr.bf16.mxu0 0
      %2864 = vmatmul.mubr.bf16.gmra.mrb[0].mxu0 %v2761
      %v2865 = vpop.f32.mrb[0].mxu0
      %v2866 = vadd.f32 0.0, %v2865
      %v2867 = vpop.f32.mrb[0].mxu0
      %v2868 = vpop.f32.mrb[0].mxu0
      %v2869 = vadd.f32 0.0, %v2868
      %v2870 = vpop.f32.mrb[0].mxu0
      %2871 = vmatprep.mubr.bf16.mxu0 0
      %2872 = vmatmul.mubr.bf16.gmra.mrb[0].mxu0 %v2764
      %v2873 = vpop.f32.mrb[0].mxu0
      %v2874 = vadd.f32 0.0, %v2873
      %v2875 = vpop.f32.mrb[0].mxu0
      %v2876 = vpop.f32.mrb[0].mxu0
      %v2877 = vadd.f32 0.0, %v2876
      %v2878 = vpop.f32.mrb[0].mxu0
      %2879 = vmatprep.mubr.bf16.mxu0 0
      %2880 = vmatmul.mubr.bf16.gmra.mrb[0].mxu0 %v2767
      %v2881 = vpop.f32.mrb[0].mxu0
      %v2882 = vadd.f32 0.0, %v2881
      %v2883 = vpop.f32.mrb[0].mxu0
      %v2884 = vpop.f32.mrb[0].mxu0
      %v2885 = vadd.f32 0.0, %v2884
      %v2886 = vpop.f32.mrb[0].mxu0
      %2887 = vmatprep.mubr.bf16.mxu0 0
      %2888 = vmatmul.mubr.bf16.gmra.mrb[0].mxu0 %v2770
      %v2889 = vpop.f32.mrb[0].mxu0
      %v2890 = vadd.f32 0.0, %v2889
      %v2891 = vpop.f32.mrb[0].mxu0
      %v2892 = vpop.f32.mrb[0].mxu0
      %v2893 = vadd.f32 0.0, %v2892
      %v2894 = vpop.f32.mrb[0].mxu0
      %2895 = vmatprep.mubr.bf16.mxu0 0
      %2896 = vmatmul.mubr.bf16.gmra.mrb[0].mxu0 %v2773
      %v2897 = vpop.f32.mrb[0].mxu0
      %v2898 = vadd.f32 0.0, %v2897
      %v2899 = vpop.f32.mrb[0].mxu0
      %v2900 = vpop.f32.mrb[0].mxu0
      %v2901 = vadd.f32 0.0, %v2900
      %v2902 = vpop.f32.mrb[0].mxu0
      %2903 = vmatprep.mubr.bf16.mxu0 0
      %2904 = vmatmul.mubr.bf16.gmra.mrb[0].mxu0 %v2776
      %v2905 = vpop.f32.mrb[0].mxu0
      %v2906 = vadd.f32 0.0, %v2905
      %v2907 = vpop.f32.mrb[0].mxu0
      %v2908 = vpop.f32.mrb[0].mxu0
      %v2909 = vadd.f32 0.0, %v2908
      %v2910 = vpop.f32.mrb[0].mxu0
      %2911 = vmatprep.mubr.bf16.mxu0 0
      %2912 = vmatmul.mubr.bf16.gmra.mrb[0].mxu0 %v2779
      %v2913 = vpop.f32.mrb[0].mxu0
      %v2914 = vadd.f32 0.0, %v2913
      %v2915 = vpop.f32.mrb[0].mxu0
      %v2916 = vpop.f32.mrb[0].mxu0
      %v2917 = vadd.f32 0.0, %v2916
      %v2918 = vpop.f32.mrb[0].mxu0
      %2919 = vmatprep.mubr.bf16.mxu0 0
      %2920 = vmatmul.mubr.bf16.gmra.mrb[0].mxu0 %v2782
      %v2921 = vpop.f32.mrb[0].mxu0
      %v2922 = vadd.f32 0.0, %v2921
      %v2923 = vpop.f32.mrb[0].mxu0
      %v2924 = vpop.f32.mrb[0].mxu0
      %v2925 = vadd.f32 0.0, %v2924
      %v2926 = vpop.f32.mrb[0].mxu0
      %2927 = vmatprep.mubr.bf16.mxu0 0
      %2928 = vmatmul.mubr.bf16.gmra.mrb[0].mxu0 %v2785
      %v2929 = vpop.f32.mrb[0].mxu0
      %v2930 = vadd.f32 0.0, %v2929
      %v2931 = vpop.f32.mrb[0].mxu0
      %v2932 = vpop.f32.mrb[0].mxu0
      %v2933 = vadd.f32 0.0, %v2932
      %v2934 = vpop.f32.mrb[0].mxu0
      %2935 = vmatprep.mubr.bf16.mxu0 0
      %2936 = vmatmul.mubr.bf16.gmra.mrb[0].mxu0 %v2788
      %v2937 = vpop.f32.mrb[0].mxu0
      %v2938 = vadd.f32 0.0, %v2937
      %v2939 = vpop.f32.mrb[0].mxu0
      %v2940 = vpop.f32.mrb[0].mxu0
      %v2941 = vadd.f32 0.0, %v2940
      %v2942 = vpop.f32.mrb[0].mxu0
      %2943 = vmatprep.mubr.bf16.mxu0 0
      %2944 = vmatmul.mubr.bf16.gmra.mrb[0].mxu0 %v2791
      %v2945 = vpop.f32.mrb[0].mxu0
      %v2946 = vadd.f32 0.0, %v2945
      %v2947 = vpop.f32.mrb[0].mxu0
      %v2948 = vpop.f32.mrb[0].mxu0
      %v2949 = vadd.f32 0.0, %v2948
      %v2950 = vpop.f32.mrb[0].mxu0
      %2951 = vmatprep.mubr.bf16.mxu0 0
      %2952 = vmatmul.mubr.bf16.gmra.mrb[0].mxu0 %v2794
      %v2953 = vpop.f32.mrb[0].mxu0
      %v2954 = vadd.f32 0.0, %v2953
      %v2955 = vpop.f32.mrb[0].mxu0
      %v2956 = vpop.f32.mrb[0].mxu0
      %v2957 = vadd.f32 0.0, %v2956
      %v2958 = vpop.f32.mrb[0].mxu0
      %2959 = vdwg.mxu0
      %v2960 = vadd.f32 %v2267, %v2834
      %v2961 = vadd.f32 %v2268, %v2837
      %v2962 = vadd.f32 %v2269, %v2842
      %v2963 = vadd.f32 %v2270, %v2845
      %v2964 = vadd.f32 %v2271, %v2850
      %v2965 = vadd.f32 %v2272, %v2853
      %v2966 = vadd.f32 %v2273, %v2858
      %v2967 = vadd.f32 %v2274, %v2861
      %v2968 = vadd.f32 %v2275, %v2866
      %v2969 = vadd.f32 %v2276, %v2869
      %v2970 = vadd.f32 %v2277, %v2874
      %v2971 = vadd.f32 %v2278, %v2877
      %v2972 = vadd.f32 %v2279, %v2882
      %v2973 = vadd.f32 %v2280, %v2885
      %v2974 = vadd.f32 %v2281, %v2890
      %v2975 = vadd.f32 %v2282, %v2893
      %v2976 = vadd.f32 %v2283, %v2898
      %v2977 = vadd.f32 %v2284, %v2901
      %v2978 = vadd.f32 %v2285, %v2906
      %v2979 = vadd.f32 %v2286, %v2909
      %v2980 = vadd.f32 %v2287, %v2914
      %v2981 = vadd.f32 %v2288, %v2917
      %v2982 = vadd.f32 %v2289, %v2922
      %v2983 = vadd.f32 %v2290, %v2925
      %v2984 = vadd.f32 %v2291, %v2930
      %v2985 = vadd.f32 %v2292, %v2933
      %v2986 = vadd.f32 %v2293, %v2938
      %v2987 = vadd.f32 %v2294, %v2941
      %v2988 = vadd.f32 %v2295, %v2946
      %v2989 = vadd.f32 %v2296, %v2949
      %v2990 = vadd.f32 %v2297, %v2954
      %v2991 = vadd.f32 %v2298, %v2957
      %v2992 = vld [vmem:[%s1 + $0x10] sm:$0xf]
      %v3025 = vunpack.c.l.b16 %v2300
      %v3026 = vunpack.c.l.b16 %v2301
      %v3027 = vunpack.c.l.b16 %v2303
      %v3028 = vunpack.c.l.b16 %v2304
      %v3029 = vunpack.c.l.b16 %v2306
      %v3030 = vunpack.c.l.b16 %v2307
      %v3031 = vunpack.c.l.b16 %v2309
      %v3032 = vunpack.c.l.b16 %v2310
      %v3033 = vunpack.c.l.b16 %v2312
      %v3034 = vunpack.c.l.b16 %v2313
      %v3035 = vunpack.c.l.b16 %v2315
      %v3036 = vunpack.c.l.b16 %v2316
      %v3037 = vunpack.c.l.b16 %v2318
      %v3038 = vunpack.c.l.b16 %v2319
      %v3039 = vunpack.c.l.b16 %v2321
      %v3040 = vunpack.c.l.b16 %v2322
      %v3041 = vunpack.c.l.b16 %v2324
      %v3042 = vunpack.c.l.b16 %v2325
      %v3043 = vunpack.c.l.b16 %v2327
      %v3044 = vunpack.c.l.b16 %v2328
      %v3045 = vunpack.c.l.b16 %v2330
      %v3046 = vunpack.c.l.b16 %v2331
      %v3047 = vunpack.c.l.b16 %v2333
      %v3048 = vunpack.c.l.b16 %v2334
      %v3049 = vunpack.c.l.b16 %v2336
      %v3050 = vunpack.c.l.b16 %v2337
      %v3051 = vunpack.c.l.b16 %v2339
      %v3052 = vunpack.c.l.b16 %v2340
      %v3053 = vunpack.c.l.b16 %v2342
      %v3054 = vunpack.c.l.b16 %v2343
      %v3055 = vunpack.c.l.b16 %v2345
      %v3056 = vunpack.c.l.b16 %v2346
      %v3057 = vpack.c.b16 %v3026, %v3025
      %v3058 = vpack.c.b16 %v3028, %v3027
      %v3059 = vpack.c.b16 %v3030, %v3029
      %v3060 = vpack.c.b16 %v3032, %v3031
      %v3061 = vpack.c.b16 %v3034, %v3033
      %v3062 = vpack.c.b16 %v3036, %v3035
      %v3063 = vpack.c.b16 %v3038, %v3037
      %v3064 = vpack.c.b16 %v3040, %v3039
      %v3065 = vpack.c.b16 %v3042, %v3041
      %v3066 = vpack.c.b16 %v3044, %v3043
      %v3067 = vpack.c.b16 %v3046, %v3045
      %v3068 = vpack.c.b16 %v3048, %v3047
      %v3069 = vpack.c.b16 %v3050, %v3049
      %v3070 = vpack.c.b16 %v3052, %v3051
      %v3071 = vpack.c.b16 %v3054, %v3053
      %v3072 = vpack.c.b16 %v3056, %v3055
      %v3074 = vsel %vm1097, %v3057, 0
      %v3077 = vsel %vm1097, %v3058, 0
      %v3080 = vsel %vm1097, %v3059, 0
      %v3083 = vsel %vm1097, %v3060, 0
      %v3086 = vsel %vm1097, %v3061, 0
      %v3089 = vsel %vm1097, %v3062, 0
      %v3092 = vsel %vm1097, %v3063, 0
      %v3095 = vsel %vm1097, %v3064, 0
      %v3098 = vsel %vm1097, %v3065, 0
      %v3101 = vsel %vm1097, %v3066, 0
      %v3104 = vsel %vm1097, %v3067, 0
      %v3107 = vsel %vm1097, %v3068, 0
      %v3110 = vsel %vm1097, %v3069, 0
      %v3113 = vsel %vm1097, %v3070, 0
      %v3116 = vsel %vm1097, %v3071, 0
      %v3119 = vsel %vm1097, %v3072, 0
      %v3122 = vsel %vm1146, %v2992, 0
      %3124 = vmatprep.subr.bf16.mxu0 0
      %3125 = vmatpush1.bf16.msra.mxu0 %v3122
      %3126 = vmatprep.subr.bf16.mxu0 0
      %3127 = vmatpush1.bf16.msra.mxu0 0
      %3128 = vmatprep.subr.bf16.mxu0 0
      %3129 = vmatpush1.bf16.msra.mxu0 0
      %3130 = vmatprep.subr.bf16.mxu0 0
      %3131 = vmatpush1.bf16.msra.mxu0 0
      %3132 = vmatprep.subr.bf16.mxu0 0
      %3133 = vmatpush1.bf16.msra.mxu0 0
      %3134 = vmatprep.subr.bf16.mxu0 0
      %3135 = vmatpush1.bf16.msra.mxu0 0
      %3136 = vmatprep.subr.bf16.mxu0 0
      %3137 = vmatpush1.bf16.msra.mxu0 0
      %3138 = vmatprep.subr.bf16.mxu0 0
      %3139 = vmatpush1.bf16.msra.mxu0 0
      %3140 = vmatprep.subr.bf16.mxu0 0
      %3141 = vmatpush1.bf16.msra.mxu0 0
      %3142 = vmatprep.subr.bf16.mxu0 0
      %3143 = vmatpush1.bf16.msra.mxu0 0
      %3144 = vmatprep.subr.bf16.mxu0 0
      %3145 = vmatpush1.bf16.msra.mxu0 0
      %3146 = vmatprep.subr.bf16.mxu0 0
      %3147 = vmatpush1.bf16.msra.mxu0 0
      %3148 = vmatprep.subr.bf16.mxu0 0
      %3149 = vmatpush1.bf16.msra.mxu0 0
      %3150 = vmatprep.subr.bf16.mxu0 0
      %3151 = vmatpush1.bf16.msra.mxu0 0
      %3152 = vmatprep.subr.bf16.mxu0 0
      %3153 = vmatpush1.bf16.msra.mxu0 0
      %3154 = vmatprep.subr.bf16.mxu0 0
      %3155 = vmatpush1.bf16.msra.mxu0 0
      %3156 = vmatprep.mubr.bf16.mxu0 0
      %3157 = vmatmul.mubr.bf16.gmra.mrb[0].mxu0 %v3074
      %v3158 = vpop.f32.mrb[0].mxu0
      %v3159 = vadd.f32 0.0, %v3158
      %v3160 = vpop.f32.mrb[0].mxu0
      %v3161 = vpop.f32.mrb[0].mxu0
      %v3162 = vadd.f32 0.0, %v3161
      %v3163 = vpop.f32.mrb[0].mxu0
      %3164 = vmatprep.mubr.bf16.mxu0 0
      %3165 = vmatmul.mubr.bf16.gmra.mrb[0].mxu0 %v3077
      %v3166 = vpop.f32.mrb[0].mxu0
      %v3167 = vadd.f32 0.0, %v3166
      %v3168 = vpop.f32.mrb[0].mxu0
      %v3169 = vpop.f32.mrb[0].mxu0
      %v3170 = vadd.f32 0.0, %v3169
      %v3171 = vpop.f32.mrb[0].mxu0
      %3172 = vmatprep.mubr.bf16.mxu0 0
      %3173 = vmatmul.mubr.bf16.gmra.mrb[0].mxu0 %v3080
      %v3174 = vpop.f32.mrb[0].mxu0
      %v3175 = vadd.f32 0.0, %v3174
      %v3176 = vpop.f32.mrb[0].mxu0
      %v3177 = vpop.f32.mrb[0].mxu0
      %v3178 = vadd.f32 0.0, %v3177
      %v3179 = vpop.f32.mrb[0].mxu0
      %3180 = vmatprep.mubr.bf16.mxu0 0
      %3181 = vmatmul.mubr.bf16.gmra.mrb[0].mxu0 %v3083
      %v3182 = vpop.f32.mrb[0].mxu0
      %v3183 = vadd.f32 0.0, %v3182
      %v3184 = vpop.f32.mrb[0].mxu0
      %v3185 = vpop.f32.mrb[0].mxu0
      %v3186 = vadd.f32 0.0, %v3185
      %v3187 = vpop.f32.mrb[0].mxu0
      %3188 = vmatprep.mubr.bf16.mxu0 0
      %3189 = vmatmul.mubr.bf16.gmra.mrb[0].mxu0 %v3086
      %v3190 = vpop.f32.mrb[0].mxu0
      %v3191 = vadd.f32 0.0, %v3190
      %v3192 = vpop.f32.mrb[0].mxu0
      %v3193 = vpop.f32.mrb[0].mxu0
      %v3194 = vadd.f32 0.0, %v3193
      %v3195 = vpop.f32.mrb[0].mxu0
      %3196 = vmatprep.mubr.bf16.mxu0 0
      %3197 = vmatmul.mubr.bf16.gmra.mrb[0].mxu0 %v3089
      %v3198 = vpop.f32.mrb[0].mxu0
      %v3199 = vadd.f32 0.0, %v3198
      %v3200 = vpop.f32.mrb[0].mxu0
      %v3201 = vpop.f32.mrb[0].mxu0
      %v3202 = vadd.f32 0.0, %v3201
      %v3203 = vpop.f32.mrb[0].mxu0
      %3204 = vmatprep.mubr.bf16.mxu0 0
      %3205 = vmatmul.mubr.bf16.gmra.mrb[0].mxu0 %v3092
      %v3206 = vpop.f32.mrb[0].mxu0
      %v3207 = vadd.f32 0.0, %v3206
      %v3208 = vpop.f32.mrb[0].mxu0
      %v3209 = vpop.f32.mrb[0].mxu0
      %v3210 = vadd.f32 0.0, %v3209
      %v3211 = vpop.f32.mrb[0].mxu0
      %3212 = vmatprep.mubr.bf16.mxu0 0
      %3213 = vmatmul.mubr.bf16.gmra.mrb[0].mxu0 %v3095
      %v3214 = vpop.f32.mrb[0].mxu0
      %v3215 = vadd.f32 0.0, %v3214
      %v3216 = vpop.f32.mrb[0].mxu0
      %v3217 = vpop.f32.mrb[0].mxu0
      %v3218 = vadd.f32 0.0, %v3217
      %v3219 = vpop.f32.mrb[0].mxu0
      %3220 = vmatprep.mubr.bf16.mxu0 0
      %3221 = vmatmul.mubr.bf16.gmra.mrb[0].mxu0 %v3098
      %v3222 = vpop.f32.mrb[0].mxu0
      %v3223 = vadd.f32 0.0, %v3222
      %v3224 = vpop.f32.mrb[0].mxu0
      %v3225 = vpop.f32.mrb[0].mxu0
      %v3226 = vadd.f32 0.0, %v3225
      %v3227 = vpop.f32.mrb[0].mxu0
      %3228 = vmatprep.mubr.bf16.mxu0 0
      %3229 = vmatmul.mubr.bf16.gmra.mrb[0].mxu0 %v3101
      %v3230 = vpop.f32.mrb[0].mxu0
      %v3231 = vadd.f32 0.0, %v3230
      %v3232 = vpop.f32.mrb[0].mxu0
      %v3233 = vpop.f32.mrb[0].mxu0
      %v3234 = vadd.f32 0.0, %v3233
      %v3235 = vpop.f32.mrb[0].mxu0
      %3236 = vmatprep.mubr.bf16.mxu0 0
      %3237 = vmatmul.mubr.bf16.gmra.mrb[0].mxu0 %v3104
      %v3238 = vpop.f32.mrb[0].mxu0
      %v3239 = vadd.f32 0.0, %v3238
      %v3240 = vpop.f32.mrb[0].mxu0
      %v3241 = vpop.f32.mrb[0].mxu0
      %v3242 = vadd.f32 0.0, %v3241
      %v3243 = vpop.f32.mrb[0].mxu0
      %3244 = vmatprep.mubr.bf16.mxu0 0
      %3245 = vmatmul.mubr.bf16.gmra.mrb[0].mxu0 %v3107
      %v3246 = vpop.f32.mrb[0].mxu0
      %v3247 = vadd.f32 0.0, %v3246
      %v3248 = vpop.f32.mrb[0].mxu0
      %v3249 = vpop.f32.mrb[0].mxu0
      %v3250 = vadd.f32 0.0, %v3249
      %v3251 = vpop.f32.mrb[0].mxu0
      %3252 = vmatprep.mubr.bf16.mxu0 0
      %3253 = vmatmul.mubr.bf16.gmra.mrb[0].mxu0 %v3110
      %v3254 = vpop.f32.mrb[0].mxu0
      %v3255 = vadd.f32 0.0, %v3254
      %v3256 = vpop.f32.mrb[0].mxu0
      %v3257 = vpop.f32.mrb[0].mxu0
      %v3258 = vadd.f32 0.0, %v3257
      %v3259 = vpop.f32.mrb[0].mxu0
      %3260 = vmatprep.mubr.bf16.mxu0 0
      %3261 = vmatmul.mubr.bf16.gmra.mrb[0].mxu0 %v3113
      %v3262 = vpop.f32.mrb[0].mxu0
      %v3263 = vadd.f32 0.0, %v3262
      %v3264 = vpop.f32.mrb[0].mxu0
      %v3265 = vpop.f32.mrb[0].mxu0
      %v3266 = vadd.f32 0.0, %v3265
      %v3267 = vpop.f32.mrb[0].mxu0
      %3268 = vmatprep.mubr.bf16.mxu0 0
      %3269 = vmatmul.mubr.bf16.gmra.mrb[0].mxu0 %v3116
      %v3270 = vpop.f32.mrb[0].mxu0
      %v3271 = vadd.f32 0.0, %v3270
      %v3272 = vpop.f32.mrb[0].mxu0
      %v3273 = vpop.f32.mrb[0].mxu0
      %v3274 = vadd.f32 0.0, %v3273
      %v3275 = vpop.f32.mrb[0].mxu0
      %3276 = vmatprep.mubr.bf16.mxu0 0
      %3277 = vmatmul.mubr.bf16.gmra.mrb[0].mxu0 %v3119
      %v3278 = vpop.f32.mrb[0].mxu0
      %v3279 = vadd.f32 0.0, %v3278
      %v3280 = vpop.f32.mrb[0].mxu0
      %v3281 = vpop.f32.mrb[0].mxu0
      %v3282 = vadd.f32 0.0, %v3281
      %v3283 = vpop.f32.mrb[0].mxu0
      %3284 = vdwg.mxu0
      %v3285 = vadd.f32 %v2960, %v3159
      %v3286 = vadd.f32 %v2961, %v3162
      %v3287 = vadd.f32 %v2962, %v3167
      %v3288 = vadd.f32 %v2963, %v3170
      %v3289 = vadd.f32 %v2964, %v3175
      %v3290 = vadd.f32 %v2965, %v3178
      %v3291 = vadd.f32 %v2966, %v3183
      %v3292 = vadd.f32 %v2967, %v3186
      %v3293 = vadd.f32 %v2968, %v3191
      %v3294 = vadd.f32 %v2969, %v3194
      %v3295 = vadd.f32 %v2970, %v3199
      %v3296 = vadd.f32 %v2971, %v3202
      %v3297 = vadd.f32 %v2972, %v3207
      %v3298 = vadd.f32 %v2973, %v3210
      %v3299 = vadd.f32 %v2974, %v3215
      %v3300 = vadd.f32 %v2975, %v3218
      %v3301 = vadd.f32 %v2976, %v3223
      %v3302 = vadd.f32 %v2977, %v3226
      %v3303 = vadd.f32 %v2978, %v3231
      %v3304 = vadd.f32 %v2979, %v3234
      %v3305 = vadd.f32 %v2980, %v3239
      %v3306 = vadd.f32 %v2981, %v3242
      %v3307 = vadd.f32 %v2982, %v3247
      %v3308 = vadd.f32 %v2983, %v3250
      %v3309 = vadd.f32 %v2984, %v3255
      %v3310 = vadd.f32 %v2985, %v3258
      %v3311 = vadd.f32 %v2986, %v3263
      %v3312 = vadd.f32 %v2987, %v3266
      %v3313 = vadd.f32 %v2988, %v3271
      %v3314 = vadd.f32 %v2989, %v3274
      %v3315 = vadd.f32 %v2990, %v3279
      %v3316 = vadd.f32 %v2991, %v3282
      %v3317 = vld [vmem:[%s304 + $0x4] sm:$0xf]
      %v3318 = vld [vmem:[%s304 + $0x8] sm:$0xf]
      %v3319 = vld [vmem:[%s304 + $0xc] sm:$0x1]
      %v3320 = vld [vmem:[%s304 + $0x14] sm:$0xf]
      %v3321 = vld [vmem:[%s304 + $0x18] sm:$0xf]
      %v3322 = vld [vmem:[%s304 + $0x1c] sm:$0x1]
      %v3323 = vld [vmem:[%s304 + $0x24] sm:$0xf]
      %v3324 = vld [vmem:[%s304 + $0x28] sm:$0xf]
      %v3325 = vld [vmem:[%s304 + $0x2c] sm:$0x1]
      %v3326 = vld [vmem:[%s304 + $0x34] sm:$0xf]
      %v3327 = vld [vmem:[%s304 + $0x38] sm:$0xf]
      %v3328 = vld [vmem:[%s304 + $0x3c] sm:$0x1]
      %v3329 = vld [vmem:[%s304 + $0x44] sm:$0xf]
      %v3330 = vld [vmem:[%s304 + $0x48] sm:$0xf]
      %v3331 = vld [vmem:[%s304 + $0x4c] sm:$0x1]
      %v3332 = vld [vmem:[%s304 + $0x54] sm:$0xf]
      %v3333 = vld [vmem:[%s304 + $0x58] sm:$0xf]
      %v3334 = vld [vmem:[%s304 + $0x5c] sm:$0x1]
      %v3335 = vld [vmem:[%s304 + $0x64] sm:$0xf]
      %v3336 = vld [vmem:[%s304 + $0x68] sm:$0xf]
      %v3337 = vld [vmem:[%s304 + $0x6c] sm:$0x1]
      %v3338 = vld [vmem:[%s304 + $0x74] sm:$0xf]
      %v3339 = vld [vmem:[%s304 + $0x78] sm:$0xf]
      %v3340 = vld [vmem:[%s304 + $0x7c] sm:$0x1]
      %v3341 = vld [vmem:[%s304 + $0x84] sm:$0xf]
      %v3342 = vld [vmem:[%s304 + $0x88] sm:$0xf]
      %v3343 = vld [vmem:[%s304 + $0x8c] sm:$0x1]
      %v3344 = vld [vmem:[%s304 + $0x94] sm:$0xf]
      %v3345 = vld [vmem:[%s304 + $0x98] sm:$0xf]
      %v3346 = vld [vmem:[%s304 + $0x9c] sm:$0x1]
      %v3347 = vld [vmem:[%s304 + $0xa4] sm:$0xf]
      %v3348 = vld [vmem:[%s304 + $0xa8] sm:$0xf]
      %v3349 = vld [vmem:[%s304 + $0xac] sm:$0x1]
      %v3350 = vld [vmem:[%s304 + $0xb4] sm:$0xf]
      %v3351 = vld [vmem:[%s304 + $0xb8] sm:$0xf]
      %v3352 = vld [vmem:[%s304 + $0xbc] sm:$0x1]
      %v3353 = vld [vmem:[%s304 + $0xc4] sm:$0xf]
      %v3354 = vld [vmem:[%s304 + $0xc8] sm:$0xf]
      %v3355 = vld [vmem:[%s304 + $0xcc] sm:$0x1]
      %v3356 = vld [vmem:[%s304 + $0xd4] sm:$0xf]
      %v3357 = vld [vmem:[%s304 + $0xd8] sm:$0xf]
      %v3358 = vld [vmem:[%s304 + $0xdc] sm:$0x1]
      %v3359 = vld [vmem:[%s304 + $0xe4] sm:$0xf]
      %v3360 = vld [vmem:[%s304 + $0xe8] sm:$0xf]
      %v3361 = vld [vmem:[%s304 + $0xec] sm:$0x1]
      %v3362 = vld [vmem:[%s304 + $0xf4] sm:$0xf]
      %v3363 = vld [vmem:[%s304 + $0xf8] sm:$0xf]
      %v3364 = vld [vmem:[%s304 + $0xfc] sm:$0x1]
      %v3366 = vshrl.u32 %v3317, 16
      %v3368 = vrot.slane %v3366, 4
      %v3369 = vshll.u32 %v3317, 16
      %v3371 = vrot.slane %v3369, 5
      %v3372 = vor.u32 %v3368, %v3371
      %v3373 = vrot.slane %v3372, 4
      %v3375 = vshll.u32 %v3318, 16
      %v3377 = vrot.slane %v3375, 5
      %v3378 = vsel %vm1621, %v3373, %v3377
      %v3379 = vshrl.u32 %v3318, 16
      %v3381 = vrot.slane %v3379, 4
      %v3382 = vor.u32 %v3381, %v3377
      %v3383 = vrot.slane %v3382, 4
      %v3385 = vshll.u32 %v3319, 16
      %v3387 = vrot.slane %v3385, 5
      %v3388 = vsel %vm1621, %v3383, %v3387
      %v3390 = vshrl.u32 %v3320, 16
      %v3392 = vrot.slane %v3390, 4
      %v3393 = vshll.u32 %v3320, 16
      %v3395 = vrot.slane %v3393, 5
      %v3396 = vor.u32 %v3392, %v3395
      %v3397 = vrot.slane %v3396, 4
      %v3399 = vshll.u32 %v3321, 16
      %v3401 = vrot.slane %v3399, 5
      %v3402 = vsel %vm1621, %v3397, %v3401
      %v3403 = vshrl.u32 %v3321, 16
      %v3405 = vrot.slane %v3403, 4
      %v3406 = vor.u32 %v3405, %v3401
      %v3407 = vrot.slane %v3406, 4
      %v3409 = vshll.u32 %v3322, 16
      %v3411 = vrot.slane %v3409, 5
      %v3412 = vsel %vm1621, %v3407, %v3411
      %v3414 = vshrl.u32 %v3323, 16
      %v3416 = vrot.slane %v3414, 4
      %v3417 = vshll.u32 %v3323, 16
      %v3419 = vrot.slane %v3417, 5
      %v3420 = vor.u32 %v3416, %v3419
      %v3421 = vrot.slane %v3420, 4
      %v3423 = vshll.u32 %v3324, 16
      %v3425 = vrot.slane %v3423, 5
      %v3426 = vsel %vm1621, %v3421, %v3425
      %v3427 = vshrl.u32 %v3324, 16
      %v3429 = vrot.slane %v3427, 4
      %v3430 = vor.u32 %v3429, %v3425
      %v3431 = vrot.slane %v3430, 4
      %v3433 = vshll.u32 %v3325, 16
      %v3435 = vrot.slane %v3433, 5
      %v3436 = vsel %vm1621, %v3431, %v3435
      %v3438 = vshrl.u32 %v3326, 16
      %v3440 = vrot.slane %v3438, 4
      %v3441 = vshll.u32 %v3326, 16
      %v3443 = vrot.slane %v3441, 5
      %v3444 = vor.u32 %v3440, %v3443
      %v3445 = vrot.slane %v3444, 4
      %v3447 = vshll.u32 %v3327, 16
      %v3449 = vrot.slane %v3447, 5
      %v3450 = vsel %vm1621, %v3445, %v3449
      %v3451 = vshrl.u32 %v3327, 16
      %v3453 = vrot.slane %v3451, 4
      %v3454 = vor.u32 %v3453, %v3449
      %v3455 = vrot.slane %v3454, 4
      %v3457 = vshll.u32 %v3328, 16
      %v3459 = vrot.slane %v3457, 5
      %v3460 = vsel %vm1621, %v3455, %v3459
      %v3462 = vshrl.u32 %v3329, 16
      %v3464 = vrot.slane %v3462, 4
      %v3465 = vshll.u32 %v3329, 16
      %v3467 = vrot.slane %v3465, 5
      %v3468 = vor.u32 %v3464, %v3467
      %v3469 = vrot.slane %v3468, 4
      %v3471 = vshll.u32 %v3330, 16
      %v3473 = vrot.slane %v3471, 5
      %v3474 = vsel %vm1621, %v3469, %v3473
      %v3475 = vshrl.u32 %v3330, 16
      %v3477 = vrot.slane %v3475, 4
      %v3478 = vor.u32 %v3477, %v3473
      %v3479 = vrot.slane %v3478, 4
      %v3481 = vshll.u32 %v3331, 16
      %v3483 = vrot.slane %v3481, 5
      %v3484 = vsel %vm1621, %v3479, %v3483
      %v3486 = vshrl.u32 %v3332, 16
      %v3488 = vrot.slane %v3486, 4
      %v3489 = vshll.u32 %v3332, 16
      %v3491 = vrot.slane %v3489, 5
      %v3492 = vor.u32 %v3488, %v3491
      %v3493 = vrot.slane %v3492, 4
      %v3495 = vshll.u32 %v3333, 16
      %v3497 = vrot.slane %v3495, 5
      %v3498 = vsel %vm1621, %v3493, %v3497
      %v3499 = vshrl.u32 %v3333, 16
      %v3501 = vrot.slane %v3499, 4
      %v3502 = vor.u32 %v3501, %v3497
      %v3503 = vrot.slane %v3502, 4
      %v3505 = vshll.u32 %v3334, 16
      %v3507 = vrot.slane %v3505, 5
      %v3508 = vsel %vm1621, %v3503, %v3507
      %v3510 = vshrl.u32 %v3335, 16
      %v3512 = vrot.slane %v3510, 4
      %v3513 = vshll.u32 %v3335, 16
      %v3515 = vrot.slane %v3513, 5
      %v3516 = vor.u32 %v3512, %v3515
      %v3517 = vrot.slane %v3516, 4
      %v3519 = vshll.u32 %v3336, 16
      %v3521 = vrot.slane %v3519, 5
      %v3522 = vsel %vm1621, %v3517, %v3521
      %v3523 = vshrl.u32 %v3336, 16
      %v3525 = vrot.slane %v3523, 4
      %v3526 = vor.u32 %v3525, %v3521
      %v3527 = vrot.slane %v3526, 4
      %v3529 = vshll.u32 %v3337, 16
      %v3531 = vrot.slane %v3529, 5
      %v3532 = vsel %vm1621, %v3527, %v3531
      %v3534 = vshrl.u32 %v3338, 16
      %v3536 = vrot.slane %v3534, 4
      %v3537 = vshll.u32 %v3338, 16
      %v3539 = vrot.slane %v3537, 5
      %v3540 = vor.u32 %v3536, %v3539
      %v3541 = vrot.slane %v3540, 4
      %v3543 = vshll.u32 %v3339, 16
      %v3545 = vrot.slane %v3543, 5
      %v3546 = vsel %vm1621, %v3541, %v3545
      %v3547 = vshrl.u32 %v3339, 16
      %v3549 = vrot.slane %v3547, 4
      %v3550 = vor.u32 %v3549, %v3545
      %v3551 = vrot.slane %v3550, 4
      %v3553 = vshll.u32 %v3340, 16
      %v3555 = vrot.slane %v3553, 5
      %v3556 = vsel %vm1621, %v3551, %v3555
      %v3558 = vshrl.u32 %v3341, 16
      %v3560 = vrot.slane %v3558, 4
      %v3561 = vshll.u32 %v3341, 16
      %v3563 = vrot.slane %v3561, 5
      %v3564 = vor.u32 %v3560, %v3563
      %v3565 = vrot.slane %v3564, 4
      %v3567 = vshll.u32 %v3342, 16
      %v3569 = vrot.slane %v3567, 5
      %v3570 = vsel %vm1621, %v3565, %v3569
      %v3571 = vshrl.u32 %v3342, 16
      %v3573 = vrot.slane %v3571, 4
      %v3574 = vor.u32 %v3573, %v3569
      %v3575 = vrot.slane %v3574, 4
      %v3577 = vshll.u32 %v3343, 16
      %v3579 = vrot.slane %v3577, 5
      %v3580 = vsel %vm1621, %v3575, %v3579
      %v3582 = vshrl.u32 %v3344, 16
      %v3584 = vrot.slane %v3582, 4
      %v3585 = vshll.u32 %v3344, 16
      %v3587 = vrot.slane %v3585, 5
      %v3588 = vor.u32 %v3584, %v3587
      %v3589 = vrot.slane %v3588, 4
      %v3591 = vshll.u32 %v3345, 16
      %v3593 = vrot.slane %v3591, 5
      %v3594 = vsel %vm1621, %v3589, %v3593
      %v3595 = vshrl.u32 %v3345, 16
      %v3597 = vrot.slane %v3595, 4
      %v3598 = vor.u32 %v3597, %v3593
      %v3599 = vrot.slane %v3598, 4
      %v3601 = vshll.u32 %v3346, 16
      %v3603 = vrot.slane %v3601, 5
      %v3604 = vsel %vm1621, %v3599, %v3603
      %v3606 = vshrl.u32 %v3347, 16
      %v3608 = vrot.slane %v3606, 4
      %v3609 = vshll.u32 %v3347, 16
      %v3611 = vrot.slane %v3609, 5
      %v3612 = vor.u32 %v3608, %v3611
      %v3613 = vrot.slane %v3612, 4
      %v3615 = vshll.u32 %v3348, 16
      %v3617 = vrot.slane %v3615, 5
      %v3618 = vsel %vm1621, %v3613, %v3617
      %v3619 = vshrl.u32 %v3348, 16
      %v3621 = vrot.slane %v3619, 4
      %v3622 = vor.u32 %v3621, %v3617
      %v3623 = vrot.slane %v3622, 4
      %v3625 = vshll.u32 %v3349, 16
      %v3627 = vrot.slane %v3625, 5
      %v3628 = vsel %vm1621, %v3623, %v3627
      %v3630 = vshrl.u32 %v3350, 16
      %v3632 = vrot.slane %v3630, 4
      %v3633 = vshll.u32 %v3350, 16
      %v3635 = vrot.slane %v3633, 5
      %v3636 = vor.u32 %v3632, %v3635
      %v3637 = vrot.slane %v3636, 4
      %v3639 = vshll.u32 %v3351, 16
      %v3641 = vrot.slane %v3639, 5
      %v3642 = vsel %vm1621, %v3637, %v3641
      %v3643 = vshrl.u32 %v3351, 16
      %v3645 = vrot.slane %v3643, 4
      %v3646 = vor.u32 %v3645, %v3641
      %v3647 = vrot.slane %v3646, 4
      %v3649 = vshll.u32 %v3352, 16
      %v3651 = vrot.slane %v3649, 5
      %v3652 = vsel %vm1621, %v3647, %v3651
      %v3654 = vshrl.u32 %v3353, 16
      %v3656 = vrot.slane %v3654, 4
      %v3657 = vshll.u32 %v3353, 16
      %v3659 = vrot.slane %v3657, 5
      %v3660 = vor.u32 %v3656, %v3659
      %v3661 = vrot.slane %v3660, 4
      %v3663 = vshll.u32 %v3354, 16
      %v3665 = vrot.slane %v3663, 5
      %v3666 = vsel %vm1621, %v3661, %v3665
      %v3667 = vshrl.u32 %v3354, 16
      %v3669 = vrot.slane %v3667, 4
      %v3670 = vor.u32 %v3669, %v3665
      %v3671 = vrot.slane %v3670, 4
      %v3673 = vshll.u32 %v3355, 16
      %v3675 = vrot.slane %v3673, 5
      %v3676 = vsel %vm1621, %v3671, %v3675
      %v3678 = vshrl.u32 %v3356, 16
      %v3680 = vrot.slane %v3678, 4
      %v3681 = vshll.u32 %v3356, 16
      %v3683 = vrot.slane %v3681, 5
      %v3684 = vor.u32 %v3680, %v3683
      %v3685 = vrot.slane %v3684, 4
      %v3687 = vshll.u32 %v3357, 16
      %v3689 = vrot.slane %v3687, 5
      %v3690 = vsel %vm1621, %v3685, %v3689
      %v3691 = vshrl.u32 %v3357, 16
      %v3693 = vrot.slane %v3691, 4
      %v3694 = vor.u32 %v3693, %v3689
      %v3695 = vrot.slane %v3694, 4
      %v3697 = vshll.u32 %v3358, 16
      %v3699 = vrot.slane %v3697, 5
      %v3700 = vsel %vm1621, %v3695, %v3699
      %v3702 = vshrl.u32 %v3359, 16
      %v3704 = vrot.slane %v3702, 4
      %v3705 = vshll.u32 %v3359, 16
      %v3707 = vrot.slane %v3705, 5
      %v3708 = vor.u32 %v3704, %v3707
      %v3709 = vrot.slane %v3708, 4
      %v3711 = vshll.u32 %v3360, 16
      %v3713 = vrot.slane %v3711, 5
      %v3714 = vsel %vm1621, %v3709, %v3713
      %v3715 = vshrl.u32 %v3360, 16
      %v3717 = vrot.slane %v3715, 4
      %v3718 = vor.u32 %v3717, %v3713
      %v3719 = vrot.slane %v3718, 4
      %v3721 = vshll.u32 %v3361, 16
      %v3723 = vrot.slane %v3721, 5
      %v3724 = vsel %vm1621, %v3719, %v3723
      %v3726 = vshrl.u32 %v3362, 16
      %v3728 = vrot.slane %v3726, 4
      %v3729 = vshll.u32 %v3362, 16
      %v3731 = vrot.slane %v3729, 5
      %v3732 = vor.u32 %v3728, %v3731
      %v3733 = vrot.slane %v3732, 4
      %v3735 = vshll.u32 %v3363, 16
      %v3737 = vrot.slane %v3735, 5
      %v3738 = vsel %vm1621, %v3733, %v3737
      %v3739 = vshrl.u32 %v3363, 16
      %v3741 = vrot.slane %v3739, 4
      %v3742 = vor.u32 %v3741, %v3737
      %v3743 = vrot.slane %v3742, 4
      %v3745 = vshll.u32 %v3364, 16
      %v3747 = vrot.slane %v3745, 5
      %v3748 = vsel %vm1621, %v3743, %v3747
      %v3749 = vld [vmem:[%s1 + $0x14] sm:$0xf]
      %v3750 = vunpack.c.l.b16 %v3378
      %v3751 = vunpack.c.l.b16 %v3388
      %v3752 = vunpack.c.l.b16 %v3402
      %v3753 = vunpack.c.l.b16 %v3412
      %v3754 = vunpack.c.l.b16 %v3426
      %v3755 = vunpack.c.l.b16 %v3436
      %v3756 = vunpack.c.l.b16 %v3450
      %v3757 = vunpack.c.l.b16 %v3460
      %v3758 = vunpack.c.l.b16 %v3474
      %v3759 = vunpack.c.l.b16 %v3484
      %v3760 = vunpack.c.l.b16 %v3498
      %v3761 = vunpack.c.l.b16 %v3508
      %v3762 = vunpack.c.l.b16 %v3522
      %v3763 = vunpack.c.l.b16 %v3532
      %v3764 = vunpack.c.l.b16 %v3546
      %v3765 = vunpack.c.l.b16 %v3556
      %v3766 = vunpack.c.l.b16 %v3570
      %v3767 = vunpack.c.l.b16 %v3580
      %v3768 = vunpack.c.l.b16 %v3594
      %v3769 = vunpack.c.l.b16 %v3604
      %v3770 = vunpack.c.l.b16 %v3618
      %v3771 = vunpack.c.l.b16 %v3628
      %v3772 = vunpack.c.l.b16 %v3642
      %v3773 = vunpack.c.l.b16 %v3652
      %v3774 = vunpack.c.l.b16 %v3666
      %v3775 = vunpack.c.l.b16 %v3676
      %v3776 = vunpack.c.l.b16 %v3690
      %v3777 = vunpack.c.l.b16 %v3700
      %v3778 = vunpack.c.l.b16 %v3714
      %v3779 = vunpack.c.l.b16 %v3724
      %v3780 = vunpack.c.l.b16 %v3738
      %v3781 = vunpack.c.l.b16 %v3748
      %v3782 = vpack.c.b16 %v3751, %v3750
      %v3783 = vpack.c.b16 %v3753, %v3752
      %v3784 = vpack.c.b16 %v3755, %v3754
      %v3785 = vpack.c.b16 %v3757, %v3756
      %v3786 = vpack.c.b16 %v3759, %v3758
      %v3787 = vpack.c.b16 %v3761, %v3760
      %v3788 = vpack.c.b16 %v3763, %v3762
      %v3789 = vpack.c.b16 %v3765, %v3764
      %v3790 = vpack.c.b16 %v3767, %v3766
      %v3791 = vpack.c.b16 %v3769, %v3768
      %v3792 = vpack.c.b16 %v3771, %v3770
      %v3793 = vpack.c.b16 %v3773, %v3772
      %v3794 = vpack.c.b16 %v3775, %v3774
      %v3795 = vpack.c.b16 %v3777, %v3776
      %v3796 = vpack.c.b16 %v3779, %v3778
      %v3797 = vpack.c.b16 %v3781, %v3780
      %v3799 = vsel %vm1097, %v3782, 0
      %v3802 = vsel %vm1097, %v3783, 0
      %v3805 = vsel %vm1097, %v3784, 0
      %v3808 = vsel %vm1097, %v3785, 0
      %v3811 = vsel %vm1097, %v3786, 0
      %v3814 = vsel %vm1097, %v3787, 0
      %v3817 = vsel %vm1097, %v3788, 0
      %v3820 = vsel %vm1097, %v3789, 0
      %v3823 = vsel %vm1097, %v3790, 0
      %v3826 = vsel %vm1097, %v3791, 0
      %v3829 = vsel %vm1097, %v3792, 0
      %v3832 = vsel %vm1097, %v3793, 0
      %v3835 = vsel %vm1097, %v3794, 0
      %v3838 = vsel %vm1097, %v3795, 0
      %v3841 = vsel %vm1097, %v3796, 0
      %v3844 = vsel %vm1097, %v3797, 0
      %v3847 = vsel %vm1146, %v3749, 0
      %3849 = vmatprep.subr.bf16.mxu0 0
      %3850 = vmatpush1.bf16.msra.mxu0 %v3847
      %3851 = vmatprep.subr.bf16.mxu0 0
      %3852 = vmatpush1.bf16.msra.mxu0 0
      %3853 = vmatprep.subr.bf16.mxu0 0
      %3854 = vmatpush1.bf16.msra.mxu0 0
      %3855 = vmatprep.subr.bf16.mxu0 0
      %3856 = vmatpush1.bf16.msra.mxu0 0
      %3857 = vmatprep.subr.bf16.mxu0 0
      %3858 = vmatpush1.bf16.msra.mxu0 0
      %3859 = vmatprep.subr.bf16.mxu0 0
      %3860 = vmatpush1.bf16.msra.mxu0 0
      %3861 = vmatprep.subr.bf16.mxu0 0
      %3862 = vmatpush1.bf16.msra.mxu0 0
      %3863 = vmatprep.subr.bf16.mxu0 0
      %3864 = vmatpush1.bf16.msra.mxu0 0
      %3865 = vmatprep.subr.bf16.mxu0 0
      %3866 = vmatpush1.bf16.msra.mxu0 0
      %3867 = vmatprep.subr.bf16.mxu0 0
      %3868 = vmatpush1.bf16.msra.mxu0 0
      %3869 = vmatprep.subr.bf16.mxu0 0
      %3870 = vmatpush1.bf16.msra.mxu0 0
      %3871 = vmatprep.subr.bf16.mxu0 0
      %3872 = vmatpush1.bf16.msra.mxu0 0
      %3873 = vmatprep.subr.bf16.mxu0 0
      %3874 = vmatpush1.bf16.msra.mxu0 0
      %3875 = vmatprep.subr.bf16.mxu0 0
      %3876 = vmatpush1.bf16.msra.mxu0 0
      %3877 = vmatprep.subr.bf16.mxu0 0
      %3878 = vmatpush1.bf16.msra.mxu0 0
      %3879 = vmatprep.subr.bf16.mxu0 0
      %3880 = vmatpush1.bf16.msra.mxu0 0
      %3881 = vmatprep.mubr.bf16.mxu0 0
      %3882 = vmatmul.mubr.bf16.gmra.mrb[0].mxu0 %v3799
      %v3883 = vpop.f32.mrb[0].mxu0
      %v3884 = vadd.f32 0.0, %v3883
      %v3885 = vpop.f32.mrb[0].mxu0
      %v3886 = vpop.f32.mrb[0].mxu0
      %v3887 = vadd.f32 0.0, %v3886
      %v3888 = vpop.f32.mrb[0].mxu0
      %3889 = vmatprep.mubr.bf16.mxu0 0
      %3890 = vmatmul.mubr.bf16.gmra.mrb[0].mxu0 %v3802
      %v3891 = vpop.f32.mrb[0].mxu0
      %v3892 = vadd.f32 0.0, %v3891
      %v3893 = vpop.f32.mrb[0].mxu0
      %v3894 = vpop.f32.mrb[0].mxu0
      %v3895 = vadd.f32 0.0, %v3894
      %v3896 = vpop.f32.mrb[0].mxu0
      %3897 = vmatprep.mubr.bf16.mxu0 0
      %3898 = vmatmul.mubr.bf16.gmra.mrb[0].mxu0 %v3805
      %v3899 = vpop.f32.mrb[0].mxu0
      %v3900 = vadd.f32 0.0, %v3899
      %v3901 = vpop.f32.mrb[0].mxu0
      %v3902 = vpop.f32.mrb[0].mxu0
      %v3903 = vadd.f32 0.0, %v3902
      %v3904 = vpop.f32.mrb[0].mxu0
      %3905 = vmatprep.mubr.bf16.mxu0 0
      %3906 = vmatmul.mubr.bf16.gmra.mrb[0].mxu0 %v3808
      %v3907 = vpop.f32.mrb[0].mxu0
      %v3908 = vadd.f32 0.0, %v3907
      %v3909 = vpop.f32.mrb[0].mxu0
      %v3910 = vpop.f32.mrb[0].mxu0
      %v3911 = vadd.f32 0.0, %v3910
      %v3912 = vpop.f32.mrb[0].mxu0
      %3913 = vmatprep.mubr.bf16.mxu0 0
      %3914 = vmatmul.mubr.bf16.gmra.mrb[0].mxu0 %v3811
      %v3915 = vpop.f32.mrb[0].mxu0
      %v3916 = vadd.f32 0.0, %v3915
      %v3917 = vpop.f32.mrb[0].mxu0
      %v3918 = vpop.f32.mrb[0].mxu0
      %v3919 = vadd.f32 0.0, %v3918
      %v3920 = vpop.f32.mrb[0].mxu0
      %3921 = vmatprep.mubr.bf16.mxu0 0
      %3922 = vmatmul.mubr.bf16.gmra.mrb[0].mxu0 %v3814
      %v3923 = vpop.f32.mrb[0].mxu0
      %v3924 = vadd.f32 0.0, %v3923
      %v3925 = vpop.f32.mrb[0].mxu0
      %v3926 = vpop.f32.mrb[0].mxu0
      %v3927 = vadd.f32 0.0, %v3926
      %v3928 = vpop.f32.mrb[0].mxu0
      %3929 = vmatprep.mubr.bf16.mxu0 0
      %3930 = vmatmul.mubr.bf16.gmra.mrb[0].mxu0 %v3817
      %v3931 = vpop.f32.mrb[0].mxu0
      %v3932 = vadd.f32 0.0, %v3931
      %v3933 = vpop.f32.mrb[0].mxu0
      %v3934 = vpop.f32.mrb[0].mxu0
      %v3935 = vadd.f32 0.0, %v3934
      %v3936 = vpop.f32.mrb[0].mxu0
      %3937 = vmatprep.mubr.bf16.mxu0 0
      %3938 = vmatmul.mubr.bf16.gmra.mrb[0].mxu0 %v3820
      %v3939 = vpop.f32.mrb[0].mxu0
      %v3940 = vadd.f32 0.0, %v3939
      %v3941 = vpop.f32.mrb[0].mxu0
      %v3942 = vpop.f32.mrb[0].mxu0
      %v3943 = vadd.f32 0.0, %v3942
      %v3944 = vpop.f32.mrb[0].mxu0
      %3945 = vmatprep.mubr.bf16.mxu0 0
      %3946 = vmatmul.mubr.bf16.gmra.mrb[0].mxu0 %v3823
      %v3947 = vpop.f32.mrb[0].mxu0
      %v3948 = vadd.f32 0.0, %v3947
      %v3949 = vpop.f32.mrb[0].mxu0
      %v3950 = vpop.f32.mrb[0].mxu0
      %v3951 = vadd.f32 0.0, %v3950
      %v3952 = vpop.f32.mrb[0].mxu0
      %3953 = vmatprep.mubr.bf16.mxu0 0
      %3954 = vmatmul.mubr.bf16.gmra.mrb[0].mxu0 %v3826
      %v3955 = vpop.f32.mrb[0].mxu0
      %v3956 = vadd.f32 0.0, %v3955
      %v3957 = vpop.f32.mrb[0].mxu0
      %v3958 = vpop.f32.mrb[0].mxu0
      %v3959 = vadd.f32 0.0, %v3958
      %v3960 = vpop.f32.mrb[0].mxu0
      %3961 = vmatprep.mubr.bf16.mxu0 0
      %3962 = vmatmul.mubr.bf16.gmra.mrb[0].mxu0 %v3829
      %v3963 = vpop.f32.mrb[0].mxu0
      %v3964 = vadd.f32 0.0, %v3963
      %v3965 = vpop.f32.mrb[0].mxu0
      %v3966 = vpop.f32.mrb[0].mxu0
      %v3967 = vadd.f32 0.0, %v3966
      %v3968 = vpop.f32.mrb[0].mxu0
      %3969 = vmatprep.mubr.bf16.mxu0 0
      %3970 = vmatmul.mubr.bf16.gmra.mrb[0].mxu0 %v3832
      %v3971 = vpop.f32.mrb[0].mxu0
      %v3972 = vadd.f32 0.0, %v3971
      %v3973 = vpop.f32.mrb[0].mxu0
      %v3974 = vpop.f32.mrb[0].mxu0
      %v3975 = vadd.f32 0.0, %v3974
      %v3976 = vpop.f32.mrb[0].mxu0
      %3977 = vmatprep.mubr.bf16.mxu0 0
      %3978 = vmatmul.mubr.bf16.gmra.mrb[0].mxu0 %v3835
      %v3979 = vpop.f32.mrb[0].mxu0
      %v3980 = vadd.f32 0.0, %v3979
      %v3981 = vpop.f32.mrb[0].mxu0
      %v3982 = vpop.f32.mrb[0].mxu0
      %v3983 = vadd.f32 0.0, %v3982
      %v3984 = vpop.f32.mrb[0].mxu0
      %3985 = vmatprep.mubr.bf16.mxu0 0
      %3986 = vmatmul.mubr.bf16.gmra.mrb[0].mxu0 %v3838
      %v3987 = vpop.f32.mrb[0].mxu0
      %v3988 = vadd.f32 0.0, %v3987
      %v3989 = vpop.f32.mrb[0].mxu0
      %v3990 = vpop.f32.mrb[0].mxu0
      %v3991 = vadd.f32 0.0, %v3990
      %v3992 = vpop.f32.mrb[0].mxu0
      %3993 = vmatprep.mubr.bf16.mxu0 0
      %3994 = vmatmul.mubr.bf16.gmra.mrb[0].mxu0 %v3841
      %v3995 = vpop.f32.mrb[0].mxu0
      %v3996 = vadd.f32 0.0, %v3995
      %v3997 = vpop.f32.mrb[0].mxu0
      %v3998 = vpop.f32.mrb[0].mxu0
      %v3999 = vadd.f32 0.0, %v3998
      %v4000 = vpop.f32.mrb[0].mxu0
      %4001 = vmatprep.mubr.bf16.mxu0 0
      %4002 = vmatmul.mubr.bf16.gmra.mrb[0].mxu0 %v3844
      %v4003 = vpop.f32.mrb[0].mxu0
      %v4004 = vadd.f32 0.0, %v4003
      %v4005 = vpop.f32.mrb[0].mxu0
      %v4006 = vpop.f32.mrb[0].mxu0
      %v4007 = vadd.f32 0.0, %v4006
      %v4008 = vpop.f32.mrb[0].mxu0
      %4009 = vdwg.mxu0
      %v4010 = vadd.f32 %v3285, %v3884
      %v4011 = vadd.f32 %v3286, %v3887
      %v4012 = vadd.f32 %v3287, %v3892
      %v4013 = vadd.f32 %v3288, %v3895
      %v4014 = vadd.f32 %v3289, %v3900
      %v4015 = vadd.f32 %v3290, %v3903
      %v4016 = vadd.f32 %v3291, %v3908
      %v4017 = vadd.f32 %v3292, %v3911
      %v4018 = vadd.f32 %v3293, %v3916
      %v4019 = vadd.f32 %v3294, %v3919
      %v4020 = vadd.f32 %v3295, %v3924
      %v4021 = vadd.f32 %v3296, %v3927
      %v4022 = vadd.f32 %v3297, %v3932
      %v4023 = vadd.f32 %v3298, %v3935
      %v4024 = vadd.f32 %v3299, %v3940
      %v4025 = vadd.f32 %v3300, %v3943
      %v4026 = vadd.f32 %v3301, %v3948
      %v4027 = vadd.f32 %v3302, %v3951
      %v4028 = vadd.f32 %v3303, %v3956
      %v4029 = vadd.f32 %v3304, %v3959
      %v4030 = vadd.f32 %v3305, %v3964
      %v4031 = vadd.f32 %v3306, %v3967
      %v4032 = vadd.f32 %v3307, %v3972
      %v4033 = vadd.f32 %v3308, %v3975
      %v4034 = vadd.f32 %v3309, %v3980
      %v4035 = vadd.f32 %v3310, %v3983
      %v4036 = vadd.f32 %v3311, %v3988
      %v4037 = vadd.f32 %v3312, %v3991
      %v4038 = vadd.f32 %v3313, %v3996
      %v4039 = vadd.f32 %v3314, %v3999
      %v4040 = vadd.f32 %v3315, %v4004
      %v4041 = vadd.f32 %v3316, %v4007
      %s4042 = scalar_lea.vmem [#allocation2], 32
      %v4043 = vld [vmem:[%s4042] sm:$0x8]
      %v4044 = vld [vmem:[%s4042 + $0x4] sm:$0xf]
      %v4045 = vld [vmem:[%s4042 + $0x8] sm:$0xf]
      %v4046 = vld [vmem:[%s4042 + $0x10] sm:$0x8]
      %v4047 = vld [vmem:[%s4042 + $0x14] sm:$0xf]
      %v4048 = vld [vmem:[%s4042 + $0x18] sm:$0xf]
      %v4049 = vld [vmem:[%s4042 + $0x20] sm:$0x8]
      %v4050 = vld [vmem:[%s4042 + $0x24] sm:$0xf]
      %v4051 = vld [vmem:[%s4042 + $0x28] sm:$0xf]
      %v4052 = vld [vmem:[%s4042 + $0x30] sm:$0x8]
      %v4053 = vld [vmem:[%s4042 + $0x34] sm:$0xf]
      %v4054 = vld [vmem:[%s4042 + $0x38] sm:$0xf]
      %v4055 = vld [vmem:[%s4042 + $0x40] sm:$0x8]
      %v4056 = vld [vmem:[%s4042 + $0x44] sm:$0xf]
      %v4057 = vld [vmem:[%s4042 + $0x48] sm:$0xf]
      %v4058 = vld [vmem:[%s4042 + $0x50] sm:$0x8]
      %v4059 = vld [vmem:[%s4042 + $0x54] sm:$0xf]
      %v4060 = vld [vmem:[%s4042 + $0x58] sm:$0xf]
      %v4061 = vld [vmem:[%s4042 + $0x60] sm:$0x8]
      %v4062 = vld [vmem:[%s4042 + $0x64] sm:$0xf]
      %v4063 = vld [vmem:[%s4042 + $0x68] sm:$0xf]
      %v4064 = vld [vmem:[%s4042 + $0x70] sm:$0x8]
      %v4065 = vld [vmem:[%s4042 + $0x74] sm:$0xf]
      %v4066 = vld [vmem:[%s4042 + $0x78] sm:$0xf]
      %v4067 = vld [vmem:[%s4042 + $0x80] sm:$0x8]
      %v4068 = vld [vmem:[%s4042 + $0x84] sm:$0xf]
      %v4069 = vld [vmem:[%s4042 + $0x88] sm:$0xf]
      %v4070 = vld [vmem:[%s4042 + $0x90] sm:$0x8]
      %v4071 = vld [vmem:[%s4042 + $0x94] sm:$0xf]
      %v4072 = vld [vmem:[%s4042 + $0x98] sm:$0xf]
      %v4073 = vld [vmem:[%s4042 + $0xa0] sm:$0x8]
      %v4074 = vld [vmem:[%s4042 + $0xa4] sm:$0xf]
      %v4075 = vld [vmem:[%s4042 + $0xa8] sm:$0xf]
      %v4076 = vld [vmem:[%s4042 + $0xb0] sm:$0x8]
      %v4077 = vld [vmem:[%s4042 + $0xb4] sm:$0xf]
      %v4078 = vld [vmem:[%s4042 + $0xb8] sm:$0xf]
      %v4079 = vld [vmem:[%s4042 + $0xc0] sm:$0x8]
      %v4080 = vld [vmem:[%s4042 + $0xc4] sm:$0xf]
      %v4081 = vld [vmem:[%s4042 + $0xc8] sm:$0xf]
      %v4082 = vld [vmem:[%s4042 + $0xd0] sm:$0x8]
      %v4083 = vld [vmem:[%s4042 + $0xd4] sm:$0xf]
      %v4084 = vld [vmem:[%s4042 + $0xd8] sm:$0xf]
      %v4085 = vld [vmem:[%s4042 + $0xe0] sm:$0x8]
      %v4086 = vld [vmem:[%s4042 + $0xe4] sm:$0xf]
      %v4087 = vld [vmem:[%s4042 + $0xe8] sm:$0xf]
      %v4088 = vld [vmem:[%s4042 + $0xf0] sm:$0x8]
      %v4089 = vld [vmem:[%s4042 + $0xf4] sm:$0xf]
      %v4090 = vld [vmem:[%s4042 + $0xf8] sm:$0xf]
      %v4092 = vshrl.u32 %v4043, 16
      %v4094 = vrot.slane %v4092, 7
      %v4095 = vrot.slane %v4094, 4
      %v4097 = vshrl.u32 %v4044, 16
      %v4099 = vrot.slane %v4097, 7
      %v4100 = vshll.u32 %v4044, 16
      %v4102 = vor.u32 %v4099, %v4100
      %v4103 = vsel %vm662, %v4095, %v4102
      %v4104 = vrot.slane %v4099, 4
      %v4106 = vshrl.u32 %v4045, 16
      %v4108 = vrot.slane %v4106, 7
      %v4109 = vshll.u32 %v4045, 16
      %v4111 = vor.u32 %v4108, %v4109
      %v4112 = vsel %vm662, %v4104, %v4111
      %v4114 = vshrl.u32 %v4046, 16
      %v4116 = vrot.slane %v4114, 7
      %v4117 = vrot.slane %v4116, 4
      %v4119 = vshrl.u32 %v4047, 16
      %v4121 = vrot.slane %v4119, 7
      %v4122 = vshll.u32 %v4047, 16
      %v4124 = vor.u32 %v4121, %v4122
      %v4125 = vsel %vm662, %v4117, %v4124
      %v4126 = vrot.slane %v4121, 4
      %v4128 = vshrl.u32 %v4048, 16
      %v4130 = vrot.slane %v4128, 7
      %v4131 = vshll.u32 %v4048, 16
      %v4133 = vor.u32 %v4130, %v4131
      %v4134 = vsel %vm662, %v4126, %v4133
      %v4136 = vshrl.u32 %v4049, 16
      %v4138 = vrot.slane %v4136, 7
      %v4139 = vrot.slane %v4138, 4
      %v4141 = vshrl.u32 %v4050, 16
      %v4143 = vrot.slane %v4141, 7
      %v4144 = vshll.u32 %v4050, 16
      %v4146 = vor.u32 %v4143, %v4144
      %v4147 = vsel %vm662, %v4139, %v4146
      %v4148 = vrot.slane %v4143, 4
      %v4150 = vshrl.u32 %v4051, 16
      %v4152 = vrot.slane %v4150, 7
      %v4153 = vshll.u32 %v4051, 16
      %v4155 = vor.u32 %v4152, %v4153
      %v4156 = vsel %vm662, %v4148, %v4155
      %v4158 = vshrl.u32 %v4052, 16
      %v4160 = vrot.slane %v4158, 7
      %v4161 = vrot.slane %v4160, 4
      %v4163 = vshrl.u32 %v4053, 16
      %v4165 = vrot.slane %v4163, 7
      %v4166 = vshll.u32 %v4053, 16
      %v4168 = vor.u32 %v4165, %v4166
      %v4169 = vsel %vm662, %v4161, %v4168
      %v4170 = vrot.slane %v4165, 4
      %v4172 = vshrl.u32 %v4054, 16
      %v4174 = vrot.slane %v4172, 7
      %v4175 = vshll.u32 %v4054, 16
      %v4177 = vor.u32 %v4174, %v4175
      %v4178 = vsel %vm662, %v4170, %v4177
      %v4180 = vshrl.u32 %v4055, 16
      %v4182 = vrot.slane %v4180, 7
      %v4183 = vrot.slane %v4182, 4
      %v4185 = vshrl.u32 %v4056, 16
      %v4187 = vrot.slane %v4185, 7
      %v4188 = vshll.u32 %v4056, 16
      %v4190 = vor.u32 %v4187, %v4188
      %v4191 = vsel %vm662, %v4183, %v4190
      %v4192 = vrot.slane %v4187, 4
      %v4194 = vshrl.u32 %v4057, 16
      %v4196 = vrot.slane %v4194, 7
      %v4197 = vshll.u32 %v4057, 16
      %v4199 = vor.u32 %v4196, %v4197
      %v4200 = vsel %vm662, %v4192, %v4199
      %v4202 = vshrl.u32 %v4058, 16
      %v4204 = vrot.slane %v4202, 7
      %v4205 = vrot.slane %v4204, 4
      %v4207 = vshrl.u32 %v4059, 16
      %v4209 = vrot.slane %v4207, 7
      %v4210 = vshll.u32 %v4059, 16
      %v4212 = vor.u32 %v4209, %v4210
      %v4213 = vsel %vm662, %v4205, %v4212
      %v4214 = vrot.slane %v4209, 4
      %v4216 = vshrl.u32 %v4060, 16
      %v4218 = vrot.slane %v4216, 7
      %v4219 = vshll.u32 %v4060, 16
      %v4221 = vor.u32 %v4218, %v4219
      %v4222 = vsel %vm662, %v4214, %v4221
      %v4224 = vshrl.u32 %v4061, 16
      %v4226 = vrot.slane %v4224, 7
      %v4227 = vrot.slane %v4226, 4
      %v4229 = vshrl.u32 %v4062, 16
      %v4231 = vrot.slane %v4229, 7
      %v4232 = vshll.u32 %v4062, 16
      %v4234 = vor.u32 %v4231, %v4232
      %v4235 = vsel %vm662, %v4227, %v4234
      %v4236 = vrot.slane %v4231, 4
      %v4238 = vshrl.u32 %v4063, 16
      %v4240 = vrot.slane %v4238, 7
      %v4241 = vshll.u32 %v4063, 16
      %v4243 = vor.u32 %v4240, %v4241
      %v4244 = vsel %vm662, %v4236, %v4243
      %v4246 = vshrl.u32 %v4064, 16
      %v4248 = vrot.slane %v4246, 7
      %v4249 = vrot.slane %v4248, 4
      %v4251 = vshrl.u32 %v4065, 16
      %v4253 = vrot.slane %v4251, 7
      %v4254 = vshll.u32 %v4065, 16
      %v4256 = vor.u32 %v4253, %v4254
      %v4257 = vsel %vm662, %v4249, %v4256
      %v4258 = vrot.slane %v4253, 4
      %v4260 = vshrl.u32 %v4066, 16
      %v4262 = vrot.slane %v4260, 7
      %v4263 = vshll.u32 %v4066, 16
      %v4265 = vor.u32 %v4262, %v4263
      %v4266 = vsel %vm662, %v4258, %v4265
      %v4268 = vshrl.u32 %v4067, 16
      %v4270 = vrot.slane %v4268, 7
      %v4271 = vrot.slane %v4270, 4
      %v4273 = vshrl.u32 %v4068, 16
      %v4275 = vrot.slane %v4273, 7
      %v4276 = vshll.u32 %v4068, 16
      %v4278 = vor.u32 %v4275, %v4276
      %v4279 = vsel %vm662, %v4271, %v4278
      %v4280 = vrot.slane %v4275, 4
      %v4282 = vshrl.u32 %v4069, 16
      %v4284 = vrot.slane %v4282, 7
      %v4285 = vshll.u32 %v4069, 16
      %v4287 = vor.u32 %v4284, %v4285
      %v4288 = vsel %vm662, %v4280, %v4287
      %v4290 = vshrl.u32 %v4070, 16
      %v4292 = vrot.slane %v4290, 7
      %v4293 = vrot.slane %v4292, 4
      %v4295 = vshrl.u32 %v4071, 16
      %v4297 = vrot.slane %v4295, 7
      %v4298 = vshll.u32 %v4071, 16
      %v4300 = vor.u32 %v4297, %v4298
      %v4301 = vsel %vm662, %v4293, %v4300
      %v4302 = vrot.slane %v4297, 4
      %v4304 = vshrl.u32 %v4072, 16
      %v4306 = vrot.slane %v4304, 7
      %v4307 = vshll.u32 %v4072, 16
      %v4309 = vor.u32 %v4306, %v4307
      %v4310 = vsel %vm662, %v4302, %v4309
      %v4312 = vshrl.u32 %v4073, 16
      %v4314 = vrot.slane %v4312, 7
      %v4315 = vrot.slane %v4314, 4
      %v4317 = vshrl.u32 %v4074, 16
      %v4319 = vrot.slane %v4317, 7
      %v4320 = vshll.u32 %v4074, 16
      %v4322 = vor.u32 %v4319, %v4320
      %v4323 = vsel %vm662, %v4315, %v4322
      %v4324 = vrot.slane %v4319, 4
      %v4326 = vshrl.u32 %v4075, 16
      %v4328 = vrot.slane %v4326, 7
      %v4329 = vshll.u32 %v4075, 16
      %v4331 = vor.u32 %v4328, %v4329
      %v4332 = vsel %vm662, %v4324, %v4331
      %v4334 = vshrl.u32 %v4076, 16
      %v4336 = vrot.slane %v4334, 7
      %v4337 = vrot.slane %v4336, 4
      %v4339 = vshrl.u32 %v4077, 16
      %v4341 = vrot.slane %v4339, 7
      %v4342 = vshll.u32 %v4077, 16
      %v4344 = vor.u32 %v4341, %v4342
      %v4345 = vsel %vm662, %v4337, %v4344
      %v4346 = vrot.slane %v4341, 4
      %v4348 = vshrl.u32 %v4078, 16
      %v4350 = vrot.slane %v4348, 7
      %v4351 = vshll.u32 %v4078, 16
      %v4353 = vor.u32 %v4350, %v4351
      %v4354 = vsel %vm662, %v4346, %v4353
      %v4356 = vshrl.u32 %v4079, 16
      %v4358 = vrot.slane %v4356, 7
      %v4359 = vrot.slane %v4358, 4
      %v4361 = vshrl.u32 %v4080, 16
      %v4363 = vrot.slane %v4361, 7
      %v4364 = vshll.u32 %v4080, 16
      %v4366 = vor.u32 %v4363, %v4364
      %v4367 = vsel %vm662, %v4359, %v4366
      %v4368 = vrot.slane %v4363, 4
      %v4370 = vshrl.u32 %v4081, 16
      %v4372 = vrot.slane %v4370, 7
      %v4373 = vshll.u32 %v4081, 16
      %v4375 = vor.u32 %v4372, %v4373
      %v4376 = vsel %vm662, %v4368, %v4375
      %v4378 = vshrl.u32 %v4082, 16
      %v4380 = vrot.slane %v4378, 7
      %v4381 = vrot.slane %v4380, 4
      %v4383 = vshrl.u32 %v4083, 16
      %v4385 = vrot.slane %v4383, 7
      %v4386 = vshll.u32 %v4083, 16
      %v4388 = vor.u32 %v4385, %v4386
      %v4389 = vsel %vm662, %v4381, %v4388
      %v4390 = vrot.slane %v4385, 4
      %v4392 = vshrl.u32 %v4084, 16
      %v4394 = vrot.slane %v4392, 7
      %v4395 = vshll.u32 %v4084, 16
      %v4397 = vor.u32 %v4394, %v4395
      %v4398 = vsel %vm662, %v4390, %v4397
      %v4400 = vshrl.u32 %v4085, 16
      %v4402 = vrot.slane %v4400, 7
      %v4403 = vrot.slane %v4402, 4
      %v4405 = vshrl.u32 %v4086, 16
      %v4407 = vrot.slane %v4405, 7
      %v4408 = vshll.u32 %v4086, 16
      %v4410 = vor.u32 %v4407, %v4408
      %v4411 = vsel %vm662, %v4403, %v4410
      %v4412 = vrot.slane %v4407, 4
      %v4414 = vshrl.u32 %v4087, 16
      %v4416 = vrot.slane %v4414, 7
      %v4417 = vshll.u32 %v4087, 16
      %v4419 = vor.u32 %v4416, %v4417
      %v4420 = vsel %vm662, %v4412, %v4419
      %v4422 = vshrl.u32 %v4088, 16
      %v4424 = vrot.slane %v4422, 7
      %v4425 = vrot.slane %v4424, 4
      %v4427 = vshrl.u32 %v4089, 16
      %v4429 = vrot.slane %v4427, 7
      %v4430 = vshll.u32 %v4089, 16
      %v4432 = vor.u32 %v4429, %v4430
      %v4433 = vsel %vm662, %v4425, %v4432
      %v4434 = vrot.slane %v4429, 4
      %v4436 = vshrl.u32 %v4090, 16
      %v4438 = vrot.slane %v4436, 7
      %v4439 = vshll.u32 %v4090, 16
      %v4441 = vor.u32 %v4438, %v4439
      %v4442 = vsel %vm662, %v4434, %v4441
      %v4443 = vld [vmem:[%s1 + $0x18] sm:$0xf]
      %v4444 = vunpack.c.l.b16 %v4103
      %v4445 = vunpack.c.l.b16 %v4112
      %v4446 = vunpack.c.l.b16 %v4125
      %v4447 = vunpack.c.l.b16 %v4134
      %v4448 = vunpack.c.l.b16 %v4147
      %v4449 = vunpack.c.l.b16 %v4156
      %v4450 = vunpack.c.l.b16 %v4169
      %v4451 = vunpack.c.l.b16 %v4178
      %v4452 = vunpack.c.l.b16 %v4191
      %v4453 = vunpack.c.l.b16 %v4200
      %v4454 = vunpack.c.l.b16 %v4213
      %v4455 = vunpack.c.l.b16 %v4222
      %v4456 = vunpack.c.l.b16 %v4235
      %v4457 = vunpack.c.l.b16 %v4244
      %v4458 = vunpack.c.l.b16 %v4257
      %v4459 = vunpack.c.l.b16 %v4266
      %v4460 = vunpack.c.l.b16 %v4279
      %v4461 = vunpack.c.l.b16 %v4288
      %v4462 = vunpack.c.l.b16 %v4301
      %v4463 = vunpack.c.l.b16 %v4310
      %v4464 = vunpack.c.l.b16 %v4323
      %v4465 = vunpack.c.l.b16 %v4332
      %v4466 = vunpack.c.l.b16 %v4345
      %v4467 = vunpack.c.l.b16 %v4354
      %v4468 = vunpack.c.l.b16 %v4367
      %v4469 = vunpack.c.l.b16 %v4376
      %v4470 = vunpack.c.l.b16 %v4389
      %v4471 = vunpack.c.l.b16 %v4398
      %v4472 = vunpack.c.l.b16 %v4411
      %v4473 = vunpack.c.l.b16 %v4420
      %v4474 = vunpack.c.l.b16 %v4433
      %v4475 = vunpack.c.l.b16 %v4442
      %v4476 = vpack.c.b16 %v4445, %v4444
      %v4477 = vpack.c.b16 %v4447, %v4446
      %v4478 = vpack.c.b16 %v4449, %v4448
      %v4479 = vpack.c.b16 %v4451, %v4450
      %v4480 = vpack.c.b16 %v4453, %v4452
      %v4481 = vpack.c.b16 %v4455, %v4454
      %v4482 = vpack.c.b16 %v4457, %v4456
      %v4483 = vpack.c.b16 %v4459, %v4458
      %v4484 = vpack.c.b16 %v4461, %v4460
      %v4485 = vpack.c.b16 %v4463, %v4462
      %v4486 = vpack.c.b16 %v4465, %v4464
      %v4487 = vpack.c.b16 %v4467, %v4466
      %v4488 = vpack.c.b16 %v4469, %v4468
      %v4489 = vpack.c.b16 %v4471, %v4470
      %v4490 = vpack.c.b16 %v4473, %v4472
      %v4491 = vpack.c.b16 %v4475, %v4474
      %v4493 = vsel %vm1097, %v4476, 0
      %v4496 = vsel %vm1097, %v4477, 0
      %v4499 = vsel %vm1097, %v4478, 0
      %v4502 = vsel %vm1097, %v4479, 0
      %v4505 = vsel %vm1097, %v4480, 0
      %v4508 = vsel %vm1097, %v4481, 0
      %v4511 = vsel %vm1097, %v4482, 0
      %v4514 = vsel %vm1097, %v4483, 0
      %v4517 = vsel %vm1097, %v4484, 0
      %v4520 = vsel %vm1097, %v4485, 0
      %v4523 = vsel %vm1097, %v4486, 0
      %v4526 = vsel %vm1097, %v4487, 0
      %v4529 = vsel %vm1097, %v4488, 0
      %v4532 = vsel %vm1097, %v4489, 0
      %v4535 = vsel %vm1097, %v4490, 0
      %v4538 = vsel %vm1097, %v4491, 0
      %v4541 = vsel %vm1146, %v4443, 0
      %4543 = vmatprep.subr.bf16.mxu0 0
      %4544 = vmatpush1.bf16.msra.mxu0 %v4541
      %4545 = vmatprep.subr.bf16.mxu0 0
      %4546 = vmatpush1.bf16.msra.mxu0 0
      %4547 = vmatprep.subr.bf16.mxu0 0
      %4548 = vmatpush1.bf16.msra.mxu0 0
      %4549 = vmatprep.subr.bf16.mxu0 0
      %4550 = vmatpush1.bf16.msra.mxu0 0
      %4551 = vmatprep.subr.bf16.mxu0 0
      %4552 = vmatpush1.bf16.msra.mxu0 0
      %4553 = vmatprep.subr.bf16.mxu0 0
      %4554 = vmatpush1.bf16.msra.mxu0 0
      %4555 = vmatprep.subr.bf16.mxu0 0
      %4556 = vmatpush1.bf16.msra.mxu0 0
      %4557 = vmatprep.subr.bf16.mxu0 0
      %4558 = vmatpush1.bf16.msra.mxu0 0
      %4559 = vmatprep.subr.bf16.mxu0 0
      %4560 = vmatpush1.bf16.msra.mxu0 0
      %4561 = vmatprep.subr.bf16.mxu0 0
      %4562 = vmatpush1.bf16.msra.mxu0 0
      %4563 = vmatprep.subr.bf16.mxu0 0
      %4564 = vmatpush1.bf16.msra.mxu0 0
      %4565 = vmatprep.subr.bf16.mxu0 0
      %4566 = vmatpush1.bf16.msra.mxu0 0
      %4567 = vmatprep.subr.bf16.mxu0 0
      %4568 = vmatpush1.bf16.msra.mxu0 0
      %4569 = vmatprep.subr.bf16.mxu0 0
      %4570 = vmatpush1.bf16.msra.mxu0 0
      %4571 = vmatprep.subr.bf16.mxu0 0
      %4572 = vmatpush1.bf16.msra.mxu0 0
      %4573 = vmatprep.subr.bf16.mxu0 0
      %4574 = vmatpush1.bf16.msra.mxu0 0
      %4575 = vmatprep.mubr.bf16.mxu0 0
      %4576 = vmatmul.mubr.bf16.gmra.mrb[0].mxu0 %v4493
      %v4577 = vpop.f32.mrb[0].mxu0
      %v4578 = vadd.f32 0.0, %v4577
      %v4579 = vpop.f32.mrb[0].mxu0
      %v4580 = vpop.f32.mrb[0].mxu0
      %v4581 = vadd.f32 0.0, %v4580
      %v4582 = vpop.f32.mrb[0].mxu0
      %4583 = vmatprep.mubr.bf16.mxu0 0
      %4584 = vmatmul.mubr.bf16.gmra.mrb[0].mxu0 %v4496
      %v4585 = vpop.f32.mrb[0].mxu0
      %v4586 = vadd.f32 0.0, %v4585
      %v4587 = vpop.f32.mrb[0].mxu0
      %v4588 = vpop.f32.mrb[0].mxu0
      %v4589 = vadd.f32 0.0, %v4588
      %v4590 = vpop.f32.mrb[0].mxu0
      %4591 = vmatprep.mubr.bf16.mxu0 0
      %4592 = vmatmul.mubr.bf16.gmra.mrb[0].mxu0 %v4499
      %v4593 = vpop.f32.mrb[0].mxu0
      %v4594 = vadd.f32 0.0, %v4593
      %v4595 = vpop.f32.mrb[0].mxu0
      %v4596 = vpop.f32.mrb[0].mxu0
      %v4597 = vadd.f32 0.0, %v4596
      %v4598 = vpop.f32.mrb[0].mxu0
      %4599 = vmatprep.mubr.bf16.mxu0 0
      %4600 = vmatmul.mubr.bf16.gmra.mrb[0].mxu0 %v4502
      %v4601 = vpop.f32.mrb[0].mxu0
      %v4602 = vadd.f32 0.0, %v4601
      %v4603 = vpop.f32.mrb[0].mxu0
      %v4604 = vpop.f32.mrb[0].mxu0
      %v4605 = vadd.f32 0.0, %v4604
      %v4606 = vpop.f32.mrb[0].mxu0
      %4607 = vmatprep.mubr.bf16.mxu0 0
      %4608 = vmatmul.mubr.bf16.gmra.mrb[0].mxu0 %v4505
      %v4609 = vpop.f32.mrb[0].mxu0
      %v4610 = vadd.f32 0.0, %v4609
      %v4611 = vpop.f32.mrb[0].mxu0
      %v4612 = vpop.f32.mrb[0].mxu0
      %v4613 = vadd.f32 0.0, %v4612
      %v4614 = vpop.f32.mrb[0].mxu0
      %4615 = vmatprep.mubr.bf16.mxu0 0
      %4616 = vmatmul.mubr.bf16.gmra.mrb[0].mxu0 %v4508
      %v4617 = vpop.f32.mrb[0].mxu0
      %v4618 = vadd.f32 0.0, %v4617
      %v4619 = vpop.f32.mrb[0].mxu0
      %v4620 = vpop.f32.mrb[0].mxu0
      %v4621 = vadd.f32 0.0, %v4620
      %v4622 = vpop.f32.mrb[0].mxu0
      %4623 = vmatprep.mubr.bf16.mxu0 0
      %4624 = vmatmul.mubr.bf16.gmra.mrb[0].mxu0 %v4511
      %v4625 = vpop.f32.mrb[0].mxu0
      %v4626 = vadd.f32 0.0, %v4625
      %v4627 = vpop.f32.mrb[0].mxu0
      %v4628 = vpop.f32.mrb[0].mxu0
      %v4629 = vadd.f32 0.0, %v4628
      %v4630 = vpop.f32.mrb[0].mxu0
      %4631 = vmatprep.mubr.bf16.mxu0 0
      %4632 = vmatmul.mubr.bf16.gmra.mrb[0].mxu0 %v4514
      %v4633 = vpop.f32.mrb[0].mxu0
      %v4634 = vadd.f32 0.0, %v4633
      %v4635 = vpop.f32.mrb[0].mxu0
      %v4636 = vpop.f32.mrb[0].mxu0
      %v4637 = vadd.f32 0.0, %v4636
      %v4638 = vpop.f32.mrb[0].mxu0
      %4639 = vmatprep.mubr.bf16.mxu0 0
      %4640 = vmatmul.mubr.bf16.gmra.mrb[0].mxu0 %v4517
      %v4641 = vpop.f32.mrb[0].mxu0
      %v4642 = vadd.f32 0.0, %v4641
      %v4643 = vpop.f32.mrb[0].mxu0
      %v4644 = vpop.f32.mrb[0].mxu0
      %v4645 = vadd.f32 0.0, %v4644
      %v4646 = vpop.f32.mrb[0].mxu0
      %4647 = vmatprep.mubr.bf16.mxu0 0
      %4648 = vmatmul.mubr.bf16.gmra.mrb[0].mxu0 %v4520
      %v4649 = vpop.f32.mrb[0].mxu0
      %v4650 = vadd.f32 0.0, %v4649
      %v4651 = vpop.f32.mrb[0].mxu0
      %v4652 = vpop.f32.mrb[0].mxu0
      %v4653 = vadd.f32 0.0, %v4652
      %v4654 = vpop.f32.mrb[0].mxu0
      %4655 = vmatprep.mubr.bf16.mxu0 0
      %4656 = vmatmul.mubr.bf16.gmra.mrb[0].mxu0 %v4523
      %v4657 = vpop.f32.mrb[0].mxu0
      %v4658 = vadd.f32 0.0, %v4657
      %v4659 = vpop.f32.mrb[0].mxu0
      %v4660 = vpop.f32.mrb[0].mxu0
      %v4661 = vadd.f32 0.0, %v4660
      %v4662 = vpop.f32.mrb[0].mxu0
      %4663 = vmatprep.mubr.bf16.mxu0 0
      %4664 = vmatmul.mubr.bf16.gmra.mrb[0].mxu0 %v4526
      %v4665 = vpop.f32.mrb[0].mxu0
      %v4666 = vadd.f32 0.0, %v4665
      %v4667 = vpop.f32.mrb[0].mxu0
      %v4668 = vpop.f32.mrb[0].mxu0
      %v4669 = vadd.f32 0.0, %v4668
      %v4670 = vpop.f32.mrb[0].mxu0
      %4671 = vmatprep.mubr.bf16.mxu0 0
      %4672 = vmatmul.mubr.bf16.gmra.mrb[0].mxu0 %v4529
      %v4673 = vpop.f32.mrb[0].mxu0
      %v4674 = vadd.f32 0.0, %v4673
      %v4675 = vpop.f32.mrb[0].mxu0
      %v4676 = vpop.f32.mrb[0].mxu0
      %v4677 = vadd.f32 0.0, %v4676
      %v4678 = vpop.f32.mrb[0].mxu0
      %4679 = vmatprep.mubr.bf16.mxu0 0
      %4680 = vmatmul.mubr.bf16.gmra.mrb[0].mxu0 %v4532
      %v4681 = vpop.f32.mrb[0].mxu0
      %v4682 = vadd.f32 0.0, %v4681
      %v4683 = vpop.f32.mrb[0].mxu0
      %v4684 = vpop.f32.mrb[0].mxu0
      %v4685 = vadd.f32 0.0, %v4684
      %v4686 = vpop.f32.mrb[0].mxu0
      %4687 = vmatprep.mubr.bf16.mxu0 0
      %4688 = vmatmul.mubr.bf16.gmra.mrb[0].mxu0 %v4535
      %v4689 = vpop.f32.mrb[0].mxu0
      %v4690 = vadd.f32 0.0, %v4689
      %v4691 = vpop.f32.mrb[0].mxu0
      %v4692 = vpop.f32.mrb[0].mxu0
      %v4693 = vadd.f32 0.0, %v4692
      %v4694 = vpop.f32.mrb[0].mxu0
      %4695 = vmatprep.mubr.bf16.mxu0 0
      %4696 = vmatmul.mubr.bf16.gmra.mrb[0].mxu0 %v4538
      %v4697 = vpop.f32.mrb[0].mxu0
      %v4698 = vadd.f32 0.0, %v4697
      %v4699 = vpop.f32.mrb[0].mxu0
      %v4700 = vpop.f32.mrb[0].mxu0
      %v4701 = vadd.f32 0.0, %v4700
      %v4702 = vpop.f32.mrb[0].mxu0
      %4703 = vdwg.mxu0
      %v4704 = vadd.f32 %v4010, %v4578
      %v4705 = vadd.f32 %v4011, %v4581
      %v4706 = vadd.f32 %v4012, %v4586
      %v4707 = vadd.f32 %v4013, %v4589
      %v4708 = vadd.f32 %v4014, %v4594
      %v4709 = vadd.f32 %v4015, %v4597
      %v4710 = vadd.f32 %v4016, %v4602
      %v4711 = vadd.f32 %v4017, %v4605
      %v4712 = vadd.f32 %v4018, %v4610
      %v4713 = vadd.f32 %v4019, %v4613
      %v4714 = vadd.f32 %v4020, %v4618
      %v4715 = vadd.f32 %v4021, %v4621
      %v4716 = vadd.f32 %v4022, %v4626
      %v4717 = vadd.f32 %v4023, %v4629
      %v4718 = vadd.f32 %v4024, %v4634
      %v4719 = vadd.f32 %v4025, %v4637
      %v4720 = vadd.f32 %v4026, %v4642
      %v4721 = vadd.f32 %v4027, %v4645
      %v4722 = vadd.f32 %v4028, %v4650
      %v4723 = vadd.f32 %v4029, %v4653
      %v4724 = vadd.f32 %v4030, %v4658
      %v4725 = vadd.f32 %v4031, %v4661
      %v4726 = vadd.f32 %v4032, %v4666
      %v4727 = vadd.f32 %v4033, %v4669
      %v4728 = vadd.f32 %v4034, %v4674
      %v4729 = vadd.f32 %v4035, %v4677
      %v4730 = vadd.f32 %v4036, %v4682
      %v4731 = vadd.f32 %v4037, %v4685
      %v4732 = vadd.f32 %v4038, %v4690
      %v4733 = vadd.f32 %v4039, %v4693
      %v4734 = vadd.f32 %v4040, %v4698
      %v4735 = vadd.f32 %v4041, %v4701
      %v4736 = vld [vmem:[%s1 + $0x1c] sm:$0xf]
      %v4769 = vunpack.c.l.b16 %v4044
      %v4770 = vunpack.c.l.b16 %v4045
      %v4771 = vunpack.c.l.b16 %v4047
      %v4772 = vunpack.c.l.b16 %v4048
      %v4773 = vunpack.c.l.b16 %v4050
      %v4774 = vunpack.c.l.b16 %v4051
      %v4775 = vunpack.c.l.b16 %v4053
      %v4776 = vunpack.c.l.b16 %v4054
      %v4777 = vunpack.c.l.b16 %v4056
      %v4778 = vunpack.c.l.b16 %v4057
      %v4779 = vunpack.c.l.b16 %v4059
      %v4780 = vunpack.c.l.b16 %v4060
      %v4781 = vunpack.c.l.b16 %v4062
      %v4782 = vunpack.c.l.b16 %v4063
      %v4783 = vunpack.c.l.b16 %v4065
      %v4784 = vunpack.c.l.b16 %v4066
      %v4785 = vunpack.c.l.b16 %v4068
      %v4786 = vunpack.c.l.b16 %v4069
      %v4787 = vunpack.c.l.b16 %v4071
      %v4788 = vunpack.c.l.b16 %v4072
      %v4789 = vunpack.c.l.b16 %v4074
      %v4790 = vunpack.c.l.b16 %v4075
      %v4791 = vunpack.c.l.b16 %v4077
      %v4792 = vunpack.c.l.b16 %v4078
      %v4793 = vunpack.c.l.b16 %v4080
      %v4794 = vunpack.c.l.b16 %v4081
      %v4795 = vunpack.c.l.b16 %v4083
      %v4796 = vunpack.c.l.b16 %v4084
      %v4797 = vunpack.c.l.b16 %v4086
      %v4798 = vunpack.c.l.b16 %v4087
      %v4799 = vunpack.c.l.b16 %v4089
      %v4800 = vunpack.c.l.b16 %v4090
      %v4801 = vpack.c.b16 %v4770, %v4769
      %v4802 = vpack.c.b16 %v4772, %v4771
      %v4803 = vpack.c.b16 %v4774, %v4773
      %v4804 = vpack.c.b16 %v4776, %v4775
      %v4805 = vpack.c.b16 %v4778, %v4777
      %v4806 = vpack.c.b16 %v4780, %v4779
      %v4807 = vpack.c.b16 %v4782, %v4781
      %v4808 = vpack.c.b16 %v4784, %v4783
      %v4809 = vpack.c.b16 %v4786, %v4785
      %v4810 = vpack.c.b16 %v4788, %v4787
      %v4811 = vpack.c.b16 %v4790, %v4789
      %v4812 = vpack.c.b16 %v4792, %v4791
      %v4813 = vpack.c.b16 %v4794, %v4793
      %v4814 = vpack.c.b16 %v4796, %v4795
      %v4815 = vpack.c.b16 %v4798, %v4797
      %v4816 = vpack.c.b16 %v4800, %v4799
      %v4818 = vsel %vm1097, %v4801, 0
      %v4821 = vsel %vm1097, %v4802, 0
      %v4824 = vsel %vm1097, %v4803, 0
      %v4827 = vsel %vm1097, %v4804, 0
      %v4830 = vsel %vm1097, %v4805, 0
      %v4833 = vsel %vm1097, %v4806, 0
      %v4836 = vsel %vm1097, %v4807, 0
      %v4839 = vsel %vm1097, %v4808, 0
      %v4842 = vsel %vm1097, %v4809, 0
      %v4845 = vsel %vm1097, %v4810, 0
      %v4848 = vsel %vm1097, %v4811, 0
      %v4851 = vsel %vm1097, %v4812, 0
      %v4854 = vsel %vm1097, %v4813, 0
      %v4857 = vsel %vm1097, %v4814, 0
      %v4860 = vsel %vm1097, %v4815, 0
      %v4863 = vsel %vm1097, %v4816, 0
      %v4866 = vsel %vm1146, %v4736, 0
      %4868 = vmatprep.subr.bf16.mxu0 0
      %4869 = vmatpush1.bf16.msra.mxu0 %v4866
      %4870 = vmatprep.subr.bf16.mxu0 0
      %4871 = vmatpush1.bf16.msra.mxu0 0
      %4872 = vmatprep.subr.bf16.mxu0 0
      %4873 = vmatpush1.bf16.msra.mxu0 0
      %4874 = vmatprep.subr.bf16.mxu0 0
      %4875 = vmatpush1.bf16.msra.mxu0 0
      %4876 = vmatprep.subr.bf16.mxu0 0
      %4877 = vmatpush1.bf16.msra.mxu0 0
      %4878 = vmatprep.subr.bf16.mxu0 0
      %4879 = vmatpush1.bf16.msra.mxu0 0
      %4880 = vmatprep.subr.bf16.mxu0 0
      %4881 = vmatpush1.bf16.msra.mxu0 0
      %4882 = vmatprep.subr.bf16.mxu0 0
      %4883 = vmatpush1.bf16.msra.mxu0 0
      %4884 = vmatprep.subr.bf16.mxu0 0
      %4885 = vmatpush1.bf16.msra.mxu0 0
      %4886 = vmatprep.subr.bf16.mxu0 0
      %4887 = vmatpush1.bf16.msra.mxu0 0
      %4888 = vmatprep.subr.bf16.mxu0 0
      %4889 = vmatpush1.bf16.msra.mxu0 0
      %4890 = vmatprep.subr.bf16.mxu0 0
      %4891 = vmatpush1.bf16.msra.mxu0 0
      %4892 = vmatprep.subr.bf16.mxu0 0
      %4893 = vmatpush1.bf16.msra.mxu0 0
      %4894 = vmatprep.subr.bf16.mxu0 0
      %4895 = vmatpush1.bf16.msra.mxu0 0
      %4896 = vmatprep.subr.bf16.mxu0 0
      %4897 = vmatpush1.bf16.msra.mxu0 0
      %4898 = vmatprep.subr.bf16.mxu0 0
      %4899 = vmatpush1.bf16.msra.mxu0 0
      %4900 = vmatprep.mubr.bf16.mxu0 0
      %4901 = vmatmul.mubr.bf16.gmra.mrb[0].mxu0 %v4818
      %v4902 = vpop.f32.mrb[0].mxu0
      %v4903 = vadd.f32 0.0, %v4902
      %v4904 = vpop.f32.mrb[0].mxu0
      %v4905 = vpop.f32.mrb[0].mxu0
      %v4906 = vadd.f32 0.0, %v4905
      %v4907 = vpop.f32.mrb[0].mxu0
      %4908 = vmatprep.mubr.bf16.mxu0 0
      %4909 = vmatmul.mubr.bf16.gmra.mrb[0].mxu0 %v4821
      %v4910 = vpop.f32.mrb[0].mxu0
      %v4911 = vadd.f32 0.0, %v4910
      %v4912 = vpop.f32.mrb[0].mxu0
      %v4913 = vpop.f32.mrb[0].mxu0
      %v4914 = vadd.f32 0.0, %v4913
      %v4915 = vpop.f32.mrb[0].mxu0
      %4916 = vmatprep.mubr.bf16.mxu0 0
      %4917 = vmatmul.mubr.bf16.gmra.mrb[0].mxu0 %v4824
      %v4918 = vpop.f32.mrb[0].mxu0
      %v4919 = vadd.f32 0.0, %v4918
      %v4920 = vpop.f32.mrb[0].mxu0
      %v4921 = vpop.f32.mrb[0].mxu0
      %v4922 = vadd.f32 0.0, %v4921
      %v4923 = vpop.f32.mrb[0].mxu0
      %4924 = vmatprep.mubr.bf16.mxu0 0
      %4925 = vmatmul.mubr.bf16.gmra.mrb[0].mxu0 %v4827
      %v4926 = vpop.f32.mrb[0].mxu0
      %v4927 = vadd.f32 0.0, %v4926
      %v4928 = vpop.f32.mrb[0].mxu0
      %v4929 = vpop.f32.mrb[0].mxu0
      %v4930 = vadd.f32 0.0, %v4929
      %v4931 = vpop.f32.mrb[0].mxu0
      %4932 = vmatprep.mubr.bf16.mxu0 0
      %4933 = vmatmul.mubr.bf16.gmra.mrb[0].mxu0 %v4830
      %v4934 = vpop.f32.mrb[0].mxu0
      %v4935 = vadd.f32 0.0, %v4934
      %v4936 = vpop.f32.mrb[0].mxu0
      %v4937 = vpop.f32.mrb[0].mxu0
      %v4938 = vadd.f32 0.0, %v4937
      %v4939 = vpop.f32.mrb[0].mxu0
      %4940 = vmatprep.mubr.bf16.mxu0 0
      %4941 = vmatmul.mubr.bf16.gmra.mrb[0].mxu0 %v4833
      %v4942 = vpop.f32.mrb[0].mxu0
      %v4943 = vadd.f32 0.0, %v4942
      %v4944 = vpop.f32.mrb[0].mxu0
      %v4945 = vpop.f32.mrb[0].mxu0
      %v4946 = vadd.f32 0.0, %v4945
      %v4947 = vpop.f32.mrb[0].mxu0
      %4948 = vmatprep.mubr.bf16.mxu0 0
      %4949 = vmatmul.mubr.bf16.gmra.mrb[0].mxu0 %v4836
      %v4950 = vpop.f32.mrb[0].mxu0
      %v4951 = vadd.f32 0.0, %v4950
      %v4952 = vpop.f32.mrb[0].mxu0
      %v4953 = vpop.f32.mrb[0].mxu0
      %v4954 = vadd.f32 0.0, %v4953
      %v4955 = vpop.f32.mrb[0].mxu0
      %4956 = vmatprep.mubr.bf16.mxu0 0
      %4957 = vmatmul.mubr.bf16.gmra.mrb[0].mxu0 %v4839
      %v4958 = vpop.f32.mrb[0].mxu0
      %v4959 = vadd.f32 0.0, %v4958
      %v4960 = vpop.f32.mrb[0].mxu0
      %v4961 = vpop.f32.mrb[0].mxu0
      %v4962 = vadd.f32 0.0, %v4961
      %v4963 = vpop.f32.mrb[0].mxu0
      %4964 = vmatprep.mubr.bf16.mxu0 0
      %4965 = vmatmul.mubr.bf16.gmra.mrb[0].mxu0 %v4842
      %v4966 = vpop.f32.mrb[0].mxu0
      %v4967 = vadd.f32 0.0, %v4966
      %v4968 = vpop.f32.mrb[0].mxu0
      %v4969 = vpop.f32.mrb[0].mxu0
      %v4970 = vadd.f32 0.0, %v4969
      %v4971 = vpop.f32.mrb[0].mxu0
      %4972 = vmatprep.mubr.bf16.mxu0 0
      %4973 = vmatmul.mubr.bf16.gmra.mrb[0].mxu0 %v4845
      %v4974 = vpop.f32.mrb[0].mxu0
      %v4975 = vadd.f32 0.0, %v4974
      %v4976 = vpop.f32.mrb[0].mxu0
      %v4977 = vpop.f32.mrb[0].mxu0
      %v4978 = vadd.f32 0.0, %v4977
      %v4979 = vpop.f32.mrb[0].mxu0
      %4980 = vmatprep.mubr.bf16.mxu0 0
      %4981 = vmatmul.mubr.bf16.gmra.mrb[0].mxu0 %v4848
      %v4982 = vpop.f32.mrb[0].mxu0
      %v4983 = vadd.f32 0.0, %v4982
      %v4984 = vpop.f32.mrb[0].mxu0
      %v4985 = vpop.f32.mrb[0].mxu0
      %v4986 = vadd.f32 0.0, %v4985
      %v4987 = vpop.f32.mrb[0].mxu0
      %4988 = vmatprep.mubr.bf16.mxu0 0
      %4989 = vmatmul.mubr.bf16.gmra.mrb[0].mxu0 %v4851
      %v4990 = vpop.f32.mrb[0].mxu0
      %v4991 = vadd.f32 0.0, %v4990
      %v4992 = vpop.f32.mrb[0].mxu0
      %v4993 = vpop.f32.mrb[0].mxu0
      %v4994 = vadd.f32 0.0, %v4993
      %v4995 = vpop.f32.mrb[0].mxu0
      %4996 = vmatprep.mubr.bf16.mxu0 0
      %4997 = vmatmul.mubr.bf16.gmra.mrb[0].mxu0 %v4854
      %v4998 = vpop.f32.mrb[0].mxu0
      %v4999 = vadd.f32 0.0, %v4998
      %v5000 = vpop.f32.mrb[0].mxu0
      %v5001 = vpop.f32.mrb[0].mxu0
      %v5002 = vadd.f32 0.0, %v5001
      %v5003 = vpop.f32.mrb[0].mxu0
      %5004 = vmatprep.mubr.bf16.mxu0 0
      %5005 = vmatmul.mubr.bf16.gmra.mrb[0].mxu0 %v4857
      %v5006 = vpop.f32.mrb[0].mxu0
      %v5007 = vadd.f32 0.0, %v5006
      %v5008 = vpop.f32.mrb[0].mxu0
      %v5009 = vpop.f32.mrb[0].mxu0
      %v5010 = vadd.f32 0.0, %v5009
      %v5011 = vpop.f32.mrb[0].mxu0
      %5012 = vmatprep.mubr.bf16.mxu0 0
      %5013 = vmatmul.mubr.bf16.gmra.mrb[0].mxu0 %v4860
      %v5014 = vpop.f32.mrb[0].mxu0
      %v5015 = vadd.f32 0.0, %v5014
      %v5016 = vpop.f32.mrb[0].mxu0
      %v5017 = vpop.f32.mrb[0].mxu0
      %v5018 = vadd.f32 0.0, %v5017
      %v5019 = vpop.f32.mrb[0].mxu0
      %5020 = vmatprep.mubr.bf16.mxu0 0
      %5021 = vmatmul.mubr.bf16.gmra.mrb[0].mxu0 %v4863
      %v5022 = vpop.f32.mrb[0].mxu0
      %v5023 = vadd.f32 0.0, %v5022
      %v5024 = vpop.f32.mrb[0].mxu0
      %v5025 = vpop.f32.mrb[0].mxu0
      %v5026 = vadd.f32 0.0, %v5025
      %v5027 = vpop.f32.mrb[0].mxu0
      %5028 = vdwg.mxu0
      %v5029 = vadd.f32 %v4704, %v4903
      %v5030 = vadd.f32 %v4705, %v4906
      %v5031 = vadd.f32 %v4706, %v4911
      %v5032 = vadd.f32 %v4707, %v4914
      %v5033 = vadd.f32 %v4708, %v4919
      %v5034 = vadd.f32 %v4709, %v4922
      %v5035 = vadd.f32 %v4710, %v4927
      %v5036 = vadd.f32 %v4711, %v4930
      %v5037 = vadd.f32 %v4712, %v4935
      %v5038 = vadd.f32 %v4713, %v4938
      %v5039 = vadd.f32 %v4714, %v4943
      %v5040 = vadd.f32 %v4715, %v4946
      %v5041 = vadd.f32 %v4716, %v4951
      %v5042 = vadd.f32 %v4717, %v4954
      %v5043 = vadd.f32 %v4718, %v4959
      %v5044 = vadd.f32 %v4719, %v4962
      %v5045 = vadd.f32 %v4720, %v4967
      %v5046 = vadd.f32 %v4721, %v4970
      %v5047 = vadd.f32 %v4722, %v4975
      %v5048 = vadd.f32 %v4723, %v4978
      %v5049 = vadd.f32 %v4724, %v4983
      %v5050 = vadd.f32 %v4725, %v4986
      %v5051 = vadd.f32 %v4726, %v4991
      %v5052 = vadd.f32 %v4727, %v4994
      %v5053 = vadd.f32 %v4728, %v4999
      %v5054 = vadd.f32 %v4729, %v5002
      %v5055 = vadd.f32 %v4730, %v5007
      %v5056 = vadd.f32 %v4731, %v5010
      %v5057 = vadd.f32 %v4732, %v5015
      %v5058 = vadd.f32 %v4733, %v5018
      %v5059 = vadd.f32 %v4734, %v5023
      %v5060 = vadd.f32 %v4735, %v5026
      %v5061 = vld [vmem:[%s4042 + $0x4] sm:$0xf]
      %v5062 = vld [vmem:[%s4042 + $0x8] sm:$0xf]
      %v5063 = vld [vmem:[%s4042 + $0xc] sm:$0x1]
      %v5064 = vld [vmem:[%s4042 + $0x14] sm:$0xf]
      %v5065 = vld [vmem:[%s4042 + $0x18] sm:$0xf]
      %v5066 = vld [vmem:[%s4042 + $0x1c] sm:$0x1]
      %v5067 = vld [vmem:[%s4042 + $0x24] sm:$0xf]
      %v5068 = vld [vmem:[%s4042 + $0x28] sm:$0xf]
      %v5069 = vld [vmem:[%s4042 + $0x2c] sm:$0x1]
      %v5070 = vld [vmem:[%s4042 + $0x34] sm:$0xf]
      %v5071 = vld [vmem:[%s4042 + $0x38] sm:$0xf]
      %v5072 = vld [vmem:[%s4042 + $0x3c] sm:$0x1]
      %v5073 = vld [vmem:[%s4042 + $0x44] sm:$0xf]
      %v5074 = vld [vmem:[%s4042 + $0x48] sm:$0xf]
      %v5075 = vld [vmem:[%s4042 + $0x4c] sm:$0x1]
      %v5076 = vld [vmem:[%s4042 + $0x54] sm:$0xf]
      %v5077 = vld [vmem:[%s4042 + $0x58] sm:$0xf]
      %v5078 = vld [vmem:[%s4042 + $0x5c] sm:$0x1]
      %v5079 = vld [vmem:[%s4042 + $0x64] sm:$0xf]
      %v5080 = vld [vmem:[%s4042 + $0x68] sm:$0xf]
      %v5081 = vld [vmem:[%s4042 + $0x6c] sm:$0x1]
      %v5082 = vld [vmem:[%s4042 + $0x74] sm:$0xf]
      %v5083 = vld [vmem:[%s4042 + $0x78] sm:$0xf]
      %v5084 = vld [vmem:[%s4042 + $0x7c] sm:$0x1]
      %v5085 = vld [vmem:[%s4042 + $0x84] sm:$0xf]
      %v5086 = vld [vmem:[%s4042 + $0x88] sm:$0xf]
      %v5087 = vld [vmem:[%s4042 + $0x8c] sm:$0x1]
      %v5088 = vld [vmem:[%s4042 + $0x94] sm:$0xf]
      %v5089 = vld [vmem:[%s4042 + $0x98] sm:$0xf]
      %v5090 = vld [vmem:[%s4042 + $0x9c] sm:$0x1]
      %v5091 = vld [vmem:[%s4042 + $0xa4] sm:$0xf]
      %v5092 = vld [vmem:[%s4042 + $0xa8] sm:$0xf]
      %v5093 = vld [vmem:[%s4042 + $0xac] sm:$0x1]
      %v5094 = vld [vmem:[%s4042 + $0xb4] sm:$0xf]
      %v5095 = vld [vmem:[%s4042 + $0xb8] sm:$0xf]
      %v5096 = vld [vmem:[%s4042 + $0xbc] sm:$0x1]
      %v5097 = vld [vmem:[%s4042 + $0xc4] sm:$0xf]
      %v5098 = vld [vmem:[%s4042 + $0xc8] sm:$0xf]
      %v5099 = vld [vmem:[%s4042 + $0xcc] sm:$0x1]
      %v5100 = vld [vmem:[%s4042 + $0xd4] sm:$0xf]
      %v5101 = vld [vmem:[%s4042 + $0xd8] sm:$0xf]
      %v5102 = vld [vmem:[%s4042 + $0xdc] sm:$0x1]
      %v5103 = vld [vmem:[%s4042 + $0xe4] sm:$0xf]
      %v5104 = vld [vmem:[%s4042 + $0xe8] sm:$0xf]
      %v5105 = vld [vmem:[%s4042 + $0xec] sm:$0x1]
      %v5106 = vld [vmem:[%s4042 + $0xf4] sm:$0xf]
      %v5107 = vld [vmem:[%s4042 + $0xf8] sm:$0xf]
      %v5108 = vld [vmem:[%s4042 + $0xfc] sm:$0x1]
      %v5110 = vshrl.u32 %v5061, 16
      %v5112 = vrot.slane %v5110, 4
      %v5113 = vshll.u32 %v5061, 16
      %v5115 = vrot.slane %v5113, 5
      %v5116 = vor.u32 %v5112, %v5115
      %v5117 = vrot.slane %v5116, 4
      %v5119 = vshll.u32 %v5062, 16
      %v5121 = vrot.slane %v5119, 5
      %v5122 = vsel %vm1621, %v5117, %v5121
      %v5123 = vshrl.u32 %v5062, 16
      %v5125 = vrot.slane %v5123, 4
      %v5126 = vor.u32 %v5125, %v5121
      %v5127 = vrot.slane %v5126, 4
      %v5129 = vshll.u32 %v5063, 16
      %v5131 = vrot.slane %v5129, 5
      %v5132 = vsel %vm1621, %v5127, %v5131
      %v5134 = vshrl.u32 %v5064, 16
      %v5136 = vrot.slane %v5134, 4
      %v5137 = vshll.u32 %v5064, 16
      %v5139 = vrot.slane %v5137, 5
      %v5140 = vor.u32 %v5136, %v5139
      %v5141 = vrot.slane %v5140, 4
      %v5143 = vshll.u32 %v5065, 16
      %v5145 = vrot.slane %v5143, 5
      %v5146 = vsel %vm1621, %v5141, %v5145
      %v5147 = vshrl.u32 %v5065, 16
      %v5149 = vrot.slane %v5147, 4
      %v5150 = vor.u32 %v5149, %v5145
      %v5151 = vrot.slane %v5150, 4
      %v5153 = vshll.u32 %v5066, 16
      %v5155 = vrot.slane %v5153, 5
      %v5156 = vsel %vm1621, %v5151, %v5155
      %v5158 = vshrl.u32 %v5067, 16
      %v5160 = vrot.slane %v5158, 4
      %v5161 = vshll.u32 %v5067, 16
      %v5163 = vrot.slane %v5161, 5
      %v5164 = vor.u32 %v5160, %v5163
      %v5165 = vrot.slane %v5164, 4
      %v5167 = vshll.u32 %v5068, 16
      %v5169 = vrot.slane %v5167, 5
      %v5170 = vsel %vm1621, %v5165, %v5169
      %v5171 = vshrl.u32 %v5068, 16
      %v5173 = vrot.slane %v5171, 4
      %v5174 = vor.u32 %v5173, %v5169
      %v5175 = vrot.slane %v5174, 4
      %v5177 = vshll.u32 %v5069, 16
      %v5179 = vrot.slane %v5177, 5
      %v5180 = vsel %vm1621, %v5175, %v5179
      %v5182 = vshrl.u32 %v5070, 16
      %v5184 = vrot.slane %v5182, 4
      %v5185 = vshll.u32 %v5070, 16
      %v5187 = vrot.slane %v5185, 5
      %v5188 = vor.u32 %v5184, %v5187
      %v5189 = vrot.slane %v5188, 4
      %v5191 = vshll.u32 %v5071, 16
      %v5193 = vrot.slane %v5191, 5
      %v5194 = vsel %vm1621, %v5189, %v5193
      %v5195 = vshrl.u32 %v5071, 16
      %v5197 = vrot.slane %v5195, 4
      %v5198 = vor.u32 %v5197, %v5193
      %v5199 = vrot.slane %v5198, 4
      %v5201 = vshll.u32 %v5072, 16
      %v5203 = vrot.slane %v5201, 5
      %v5204 = vsel %vm1621, %v5199, %v5203
      %v5206 = vshrl.u32 %v5073, 16
      %v5208 = vrot.slane %v5206, 4
      %v5209 = vshll.u32 %v5073, 16
      %v5211 = vrot.slane %v5209, 5
      %v5212 = vor.u32 %v5208, %v5211
      %v5213 = vrot.slane %v5212, 4
      %v5215 = vshll.u32 %v5074, 16
      %v5217 = vrot.slane %v5215, 5
      %v5218 = vsel %vm1621, %v5213, %v5217
      %v5219 = vshrl.u32 %v5074, 16
      %v5221 = vrot.slane %v5219, 4
      %v5222 = vor.u32 %v5221, %v5217
      %v5223 = vrot.slane %v5222, 4
      %v5225 = vshll.u32 %v5075, 16
      %v5227 = vrot.slane %v5225, 5
      %v5228 = vsel %vm1621, %v5223, %v5227
      %v5230 = vshrl.u32 %v5076, 16
      %v5232 = vrot.slane %v5230, 4
      %v5233 = vshll.u32 %v5076, 16
      %v5235 = vrot.slane %v5233, 5
      %v5236 = vor.u32 %v5232, %v5235
      %v5237 = vrot.slane %v5236, 4
      %v5239 = vshll.u32 %v5077, 16
      %v5241 = vrot.slane %v5239, 5
      %v5242 = vsel %vm1621, %v5237, %v5241
      %v5243 = vshrl.u32 %v5077, 16
      %v5245 = vrot.slane %v5243, 4
      %v5246 = vor.u32 %v5245, %v5241
      %v5247 = vrot.slane %v5246, 4
      %v5249 = vshll.u32 %v5078, 16
      %v5251 = vrot.slane %v5249, 5
      %v5252 = vsel %vm1621, %v5247, %v5251
      %v5254 = vshrl.u32 %v5079, 16
      %v5256 = vrot.slane %v5254, 4
      %v5257 = vshll.u32 %v5079, 16
      %v5259 = vrot.slane %v5257, 5
      %v5260 = vor.u32 %v5256, %v5259
      %v5261 = vrot.slane %v5260, 4
      %v5263 = vshll.u32 %v5080, 16
      %v5265 = vrot.slane %v5263, 5
      %v5266 = vsel %vm1621, %v5261, %v5265
      %v5267 = vshrl.u32 %v5080, 16
      %v5269 = vrot.slane %v5267, 4
      %v5270 = vor.u32 %v5269, %v5265
      %v5271 = vrot.slane %v5270, 4
      %v5273 = vshll.u32 %v5081, 16
      %v5275 = vrot.slane %v5273, 5
      %v5276 = vsel %vm1621, %v5271, %v5275
      %v5278 = vshrl.u32 %v5082, 16
      %v5280 = vrot.slane %v5278, 4
      %v5281 = vshll.u32 %v5082, 16
      %v5283 = vrot.slane %v5281, 5
      %v5284 = vor.u32 %v5280, %v5283
      %v5285 = vrot.slane %v5284, 4
      %v5287 = vshll.u32 %v5083, 16
      %v5289 = vrot.slane %v5287, 5
      %v5290 = vsel %vm1621, %v5285, %v5289
      %v5291 = vshrl.u32 %v5083, 16
      %v5293 = vrot.slane %v5291, 4
      %v5294 = vor.u32 %v5293, %v5289
      %v5295 = vrot.slane %v5294, 4
      %v5297 = vshll.u32 %v5084, 16
      %v5299 = vrot.slane %v5297, 5
      %v5300 = vsel %vm1621, %v5295, %v5299
      %v5302 = vshrl.u32 %v5085, 16
      %v5304 = vrot.slane %v5302, 4
      %v5305 = vshll.u32 %v5085, 16
      %v5307 = vrot.slane %v5305, 5
      %v5308 = vor.u32 %v5304, %v5307
      %v5309 = vrot.slane %v5308, 4
      %v5311 = vshll.u32 %v5086, 16
      %v5313 = vrot.slane %v5311, 5
      %v5314 = vsel %vm1621, %v5309, %v5313
      %v5315 = vshrl.u32 %v5086, 16
      %v5317 = vrot.slane %v5315, 4
      %v5318 = vor.u32 %v5317, %v5313
      %v5319 = vrot.slane %v5318, 4
      %v5321 = vshll.u32 %v5087, 16
      %v5323 = vrot.slane %v5321, 5
      %v5324 = vsel %vm1621, %v5319, %v5323
      %v5326 = vshrl.u32 %v5088, 16
      %v5328 = vrot.slane %v5326, 4
      %v5329 = vshll.u32 %v5088, 16
      %v5331 = vrot.slane %v5329, 5
      %v5332 = vor.u32 %v5328, %v5331
      %v5333 = vrot.slane %v5332, 4
      %v5335 = vshll.u32 %v5089, 16
      %v5337 = vrot.slane %v5335, 5
      %v5338 = vsel %vm1621, %v5333, %v5337
      %v5339 = vshrl.u32 %v5089, 16
      %v5341 = vrot.slane %v5339, 4
      %v5342 = vor.u32 %v5341, %v5337
      %v5343 = vrot.slane %v5342, 4
      %v5345 = vshll.u32 %v5090, 16
      %v5347 = vrot.slane %v5345, 5
      %v5348 = vsel %vm1621, %v5343, %v5347
      %v5350 = vshrl.u32 %v5091, 16
      %v5352 = vrot.slane %v5350, 4
      %v5353 = vshll.u32 %v5091, 16
      %v5355 = vrot.slane %v5353, 5
      %v5356 = vor.u32 %v5352, %v5355
      %v5357 = vrot.slane %v5356, 4
      %v5359 = vshll.u32 %v5092, 16
      %v5361 = vrot.slane %v5359, 5
      %v5362 = vsel %vm1621, %v5357, %v5361
      %v5363 = vshrl.u32 %v5092, 16
      %v5365 = vrot.slane %v5363, 4
      %v5366 = vor.u32 %v5365, %v5361
      %v5367 = vrot.slane %v5366, 4
      %v5369 = vshll.u32 %v5093, 16
      %v5371 = vrot.slane %v5369, 5
      %v5372 = vsel %vm1621, %v5367, %v5371
      %v5374 = vshrl.u32 %v5094, 16
      %v5376 = vrot.slane %v5374, 4
      %v5377 = vshll.u32 %v5094, 16
      %v5379 = vrot.slane %v5377, 5
      %v5380 = vor.u32 %v5376, %v5379
      %v5381 = vrot.slane %v5380, 4
      %v5383 = vshll.u32 %v5095, 16
      %v5385 = vrot.slane %v5383, 5
      %v5386 = vsel %vm1621, %v5381, %v5385
      %v5387 = vshrl.u32 %v5095, 16
      %v5389 = vrot.slane %v5387, 4
      %v5390 = vor.u32 %v5389, %v5385
      %v5391 = vrot.slane %v5390, 4
      %v5393 = vshll.u32 %v5096, 16
      %v5395 = vrot.slane %v5393, 5
      %v5396 = vsel %vm1621, %v5391, %v5395
      %v5398 = vshrl.u32 %v5097, 16
      %v5400 = vrot.slane %v5398, 4
      %v5401 = vshll.u32 %v5097, 16
      %v5403 = vrot.slane %v5401, 5
      %v5404 = vor.u32 %v5400, %v5403
      %v5405 = vrot.slane %v5404, 4
      %v5407 = vshll.u32 %v5098, 16
      %v5409 = vrot.slane %v5407, 5
      %v5410 = vsel %vm1621, %v5405, %v5409
      %v5411 = vshrl.u32 %v5098, 16
      %v5413 = vrot.slane %v5411, 4
      %v5414 = vor.u32 %v5413, %v5409
      %v5415 = vrot.slane %v5414, 4
      %v5417 = vshll.u32 %v5099, 16
      %v5419 = vrot.slane %v5417, 5
      %v5420 = vsel %vm1621, %v5415, %v5419
      %v5422 = vshrl.u32 %v5100, 16
      %v5424 = vrot.slane %v5422, 4
      %v5425 = vshll.u32 %v5100, 16
      %v5427 = vrot.slane %v5425, 5
      %v5428 = vor.u32 %v5424, %v5427
      %v5429 = vrot.slane %v5428, 4
      %v5431 = vshll.u32 %v5101, 16
      %v5433 = vrot.slane %v5431, 5
      %v5434 = vsel %vm1621, %v5429, %v5433
      %v5435 = vshrl.u32 %v5101, 16
      %v5437 = vrot.slane %v5435, 4
      %v5438 = vor.u32 %v5437, %v5433
      %v5439 = vrot.slane %v5438, 4
      %v5441 = vshll.u32 %v5102, 16
      %v5443 = vrot.slane %v5441, 5
      %v5444 = vsel %vm1621, %v5439, %v5443
      %v5446 = vshrl.u32 %v5103, 16
      %v5448 = vrot.slane %v5446, 4
      %v5449 = vshll.u32 %v5103, 16
      %v5451 = vrot.slane %v5449, 5
      %v5452 = vor.u32 %v5448, %v5451
      %v5453 = vrot.slane %v5452, 4
      %v5455 = vshll.u32 %v5104, 16
      %v5457 = vrot.slane %v5455, 5
      %v5458 = vsel %vm1621, %v5453, %v5457
      %v5459 = vshrl.u32 %v5104, 16
      %v5461 = vrot.slane %v5459, 4
      %v5462 = vor.u32 %v5461, %v5457
      %v5463 = vrot.slane %v5462, 4
      %v5465 = vshll.u32 %v5105, 16
      %v5467 = vrot.slane %v5465, 5
      %v5468 = vsel %vm1621, %v5463, %v5467
      %v5470 = vshrl.u32 %v5106, 16
      %v5472 = vrot.slane %v5470, 4
      %v5473 = vshll.u32 %v5106, 16
      %v5475 = vrot.slane %v5473, 5
      %v5476 = vor.u32 %v5472, %v5475
      %v5477 = vrot.slane %v5476, 4
      %v5479 = vshll.u32 %v5107, 16
      %v5481 = vrot.slane %v5479, 5
      %v5482 = vsel %vm1621, %v5477, %v5481
      %v5483 = vshrl.u32 %v5107, 16
      %v5485 = vrot.slane %v5483, 4
      %v5486 = vor.u32 %v5485, %v5481
      %v5487 = vrot.slane %v5486, 4
      %v5489 = vshll.u32 %v5108, 16
      %v5491 = vrot.slane %v5489, 5
      %v5492 = vsel %vm1621, %v5487, %v5491
      %v5493 = vld [vmem:[%s1 + $0x20] sm:$0xf]
      %v5494 = vunpack.c.l.b16 %v5122
      %v5495 = vunpack.c.l.b16 %v5132
      %v5496 = vunpack.c.l.b16 %v5146
      %v5497 = vunpack.c.l.b16 %v5156
      %v5498 = vunpack.c.l.b16 %v5170
      %v5499 = vunpack.c.l.b16 %v5180
      %v5500 = vunpack.c.l.b16 %v5194
      %v5501 = vunpack.c.l.b16 %v5204
      %v5502 = vunpack.c.l.b16 %v5218
      %v5503 = vunpack.c.l.b16 %v5228
      %v5504 = vunpack.c.l.b16 %v5242
      %v5505 = vunpack.c.l.b16 %v5252
      %v5506 = vunpack.c.l.b16 %v5266
      %v5507 = vunpack.c.l.b16 %v5276
      %v5508 = vunpack.c.l.b16 %v5290
      %v5509 = vunpack.c.l.b16 %v5300
      %v5510 = vunpack.c.l.b16 %v5314
      %v5511 = vunpack.c.l.b16 %v5324
      %v5512 = vunpack.c.l.b16 %v5338
      %v5513 = vunpack.c.l.b16 %v5348
      %v5514 = vunpack.c.l.b16 %v5362
      %v5515 = vunpack.c.l.b16 %v5372
      %v5516 = vunpack.c.l.b16 %v5386
      %v5517 = vunpack.c.l.b16 %v5396
      %v5518 = vunpack.c.l.b16 %v5410
      %v5519 = vunpack.c.l.b16 %v5420
      %v5520 = vunpack.c.l.b16 %v5434
      %v5521 = vunpack.c.l.b16 %v5444
      %v5522 = vunpack.c.l.b16 %v5458
      %v5523 = vunpack.c.l.b16 %v5468
      %v5524 = vunpack.c.l.b16 %v5482
      %v5525 = vunpack.c.l.b16 %v5492
      %v5526 = vpack.c.b16 %v5495, %v5494
      %v5527 = vpack.c.b16 %v5497, %v5496
      %v5528 = vpack.c.b16 %v5499, %v5498
      %v5529 = vpack.c.b16 %v5501, %v5500
      %v5530 = vpack.c.b16 %v5503, %v5502
      %v5531 = vpack.c.b16 %v5505, %v5504
      %v5532 = vpack.c.b16 %v5507, %v5506
      %v5533 = vpack.c.b16 %v5509, %v5508
      %v5534 = vpack.c.b16 %v5511, %v5510
      %v5535 = vpack.c.b16 %v5513, %v5512
      %v5536 = vpack.c.b16 %v5515, %v5514
      %v5537 = vpack.c.b16 %v5517, %v5516
      %v5538 = vpack.c.b16 %v5519, %v5518
      %v5539 = vpack.c.b16 %v5521, %v5520
      %v5540 = vpack.c.b16 %v5523, %v5522
      %v5541 = vpack.c.b16 %v5525, %v5524
      %v5543 = vsel %vm1097, %v5526, 0
      %v5546 = vsel %vm1097, %v5527, 0
      %v5549 = vsel %vm1097, %v5528, 0
      %v5552 = vsel %vm1097, %v5529, 0
      %v5555 = vsel %vm1097, %v5530, 0
      %v5558 = vsel %vm1097, %v5531, 0
      %v5561 = vsel %vm1097, %v5532, 0
      %v5564 = vsel %vm1097, %v5533, 0
      %v5567 = vsel %vm1097, %v5534, 0
      %v5570 = vsel %vm1097, %v5535, 0
      %v5573 = vsel %vm1097, %v5536, 0
      %v5576 = vsel %vm1097, %v5537, 0
      %v5579 = vsel %vm1097, %v5538, 0
      %v5582 = vsel %vm1097, %v5539, 0
      %v5585 = vsel %vm1097, %v5540, 0
      %v5588 = vsel %vm1097, %v5541, 0
      %v5591 = vsel %vm1146, %v5493, 0
      %5593 = vmatprep.subr.bf16.mxu0 0
      %5594 = vmatpush1.bf16.msra.mxu0 %v5591
      %5595 = vmatprep.subr.bf16.mxu0 0
      %5596 = vmatpush1.bf16.msra.mxu0 0
      %5597 = vmatprep.subr.bf16.mxu0 0
      %5598 = vmatpush1.bf16.msra.mxu0 0
      %5599 = vmatprep.subr.bf16.mxu0 0
      %5600 = vmatpush1.bf16.msra.mxu0 0
      %5601 = vmatprep.subr.bf16.mxu0 0
      %5602 = vmatpush1.bf16.msra.mxu0 0
      %5603 = vmatprep.subr.bf16.mxu0 0
      %5604 = vmatpush1.bf16.msra.mxu0 0
      %5605 = vmatprep.subr.bf16.mxu0 0
      %5606 = vmatpush1.bf16.msra.mxu0 0
      %5607 = vmatprep.subr.bf16.mxu0 0
      %5608 = vmatpush1.bf16.msra.mxu0 0
      %5609 = vmatprep.subr.bf16.mxu0 0
      %5610 = vmatpush1.bf16.msra.mxu0 0
      %5611 = vmatprep.subr.bf16.mxu0 0
      %5612 = vmatpush1.bf16.msra.mxu0 0
      %5613 = vmatprep.subr.bf16.mxu0 0
      %5614 = vmatpush1.bf16.msra.mxu0 0
      %5615 = vmatprep.subr.bf16.mxu0 0
      %5616 = vmatpush1.bf16.msra.mxu0 0
      %5617 = vmatprep.subr.bf16.mxu0 0
      %5618 = vmatpush1.bf16.msra.mxu0 0
      %5619 = vmatprep.subr.bf16.mxu0 0
      %5620 = vmatpush1.bf16.msra.mxu0 0
      %5621 = vmatprep.subr.bf16.mxu0 0
      %5622 = vmatpush1.bf16.msra.mxu0 0
      %5623 = vmatprep.subr.bf16.mxu0 0
      %5624 = vmatpush1.bf16.msra.mxu0 0
      %5625 = vmatprep.mubr.bf16.mxu0 0
      %5626 = vmatmul.mubr.bf16.gmra.mrb[0].mxu0 %v5543
      %v5627 = vpop.f32.mrb[0].mxu0
      %v5628 = vadd.f32 0.0, %v5627
      %v5629 = vpop.f32.mrb[0].mxu0
      %v5630 = vpop.f32.mrb[0].mxu0
      %v5631 = vadd.f32 0.0, %v5630
      %v5632 = vpop.f32.mrb[0].mxu0
      %5633 = vmatprep.mubr.bf16.mxu0 0
      %5634 = vmatmul.mubr.bf16.gmra.mrb[0].mxu0 %v5546
      %v5635 = vpop.f32.mrb[0].mxu0
      %v5636 = vadd.f32 0.0, %v5635
      %v5637 = vpop.f32.mrb[0].mxu0
      %v5638 = vpop.f32.mrb[0].mxu0
      %v5639 = vadd.f32 0.0, %v5638
      %v5640 = vpop.f32.mrb[0].mxu0
      %5641 = vmatprep.mubr.bf16.mxu0 0
      %5642 = vmatmul.mubr.bf16.gmra.mrb[0].mxu0 %v5549
      %v5643 = vpop.f32.mrb[0].mxu0
      %v5644 = vadd.f32 0.0, %v5643
      %v5645 = vpop.f32.mrb[0].mxu0
      %v5646 = vpop.f32.mrb[0].mxu0
      %v5647 = vadd.f32 0.0, %v5646
      %v5648 = vpop.f32.mrb[0].mxu0
      %5649 = vmatprep.mubr.bf16.mxu0 0
      %5650 = vmatmul.mubr.bf16.gmra.mrb[0].mxu0 %v5552
      %v5651 = vpop.f32.mrb[0].mxu0
      %v5652 = vadd.f32 0.0, %v5651
      %v5653 = vpop.f32.mrb[0].mxu0
      %v5654 = vpop.f32.mrb[0].mxu0
      %v5655 = vadd.f32 0.0, %v5654
      %v5656 = vpop.f32.mrb[0].mxu0
      %5657 = vmatprep.mubr.bf16.mxu0 0
      %5658 = vmatmul.mubr.bf16.gmra.mrb[0].mxu0 %v5555
      %v5659 = vpop.f32.mrb[0].mxu0
      %v5660 = vadd.f32 0.0, %v5659
      %v5661 = vpop.f32.mrb[0].mxu0
      %v5662 = vpop.f32.mrb[0].mxu0
      %v5663 = vadd.f32 0.0, %v5662
      %v5664 = vpop.f32.mrb[0].mxu0
      %5665 = vmatprep.mubr.bf16.mxu0 0
      %5666 = vmatmul.mubr.bf16.gmra.mrb[0].mxu0 %v5558
      %v5667 = vpop.f32.mrb[0].mxu0
      %v5668 = vadd.f32 0.0, %v5667
      %v5669 = vpop.f32.mrb[0].mxu0
      %v5670 = vpop.f32.mrb[0].mxu0
      %v5671 = vadd.f32 0.0, %v5670
      %v5672 = vpop.f32.mrb[0].mxu0
      %5673 = vmatprep.mubr.bf16.mxu0 0
      %5674 = vmatmul.mubr.bf16.gmra.mrb[0].mxu0 %v5561
      %v5675 = vpop.f32.mrb[0].mxu0
      %v5676 = vadd.f32 0.0, %v5675
      %v5677 = vpop.f32.mrb[0].mxu0
      %v5678 = vpop.f32.mrb[0].mxu0
      %v5679 = vadd.f32 0.0, %v5678
      %v5680 = vpop.f32.mrb[0].mxu0
      %5681 = vmatprep.mubr.bf16.mxu0 0
      %5682 = vmatmul.mubr.bf16.gmra.mrb[0].mxu0 %v5564
      %v5683 = vpop.f32.mrb[0].mxu0
      %v5684 = vadd.f32 0.0, %v5683
      %v5685 = vpop.f32.mrb[0].mxu0
      %v5686 = vpop.f32.mrb[0].mxu0
      %v5687 = vadd.f32 0.0, %v5686
      %v5688 = vpop.f32.mrb[0].mxu0
      %5689 = vmatprep.mubr.bf16.mxu0 0
      %5690 = vmatmul.mubr.bf16.gmra.mrb[0].mxu0 %v5567
      %v5691 = vpop.f32.mrb[0].mxu0
      %v5692 = vadd.f32 0.0, %v5691
      %v5693 = vpop.f32.mrb[0].mxu0
      %v5694 = vpop.f32.mrb[0].mxu0
      %v5695 = vadd.f32 0.0, %v5694
      %v5696 = vpop.f32.mrb[0].mxu0
      %5697 = vmatprep.mubr.bf16.mxu0 0
      %5698 = vmatmul.mubr.bf16.gmra.mrb[0].mxu0 %v5570
      %v5699 = vpop.f32.mrb[0].mxu0
      %v5700 = vadd.f32 0.0, %v5699
      %v5701 = vpop.f32.mrb[0].mxu0
      %v5702 = vpop.f32.mrb[0].mxu0
      %v5703 = vadd.f32 0.0, %v5702
      %v5704 = vpop.f32.mrb[0].mxu0
      %5705 = vmatprep.mubr.bf16.mxu0 0
      %5706 = vmatmul.mubr.bf16.gmra.mrb[0].mxu0 %v5573
      %v5707 = vpop.f32.mrb[0].mxu0
      %v5708 = vadd.f32 0.0, %v5707
      %v5709 = vpop.f32.mrb[0].mxu0
      %v5710 = vpop.f32.mrb[0].mxu0
      %v5711 = vadd.f32 0.0, %v5710
      %v5712 = vpop.f32.mrb[0].mxu0
      %5713 = vmatprep.mubr.bf16.mxu0 0
      %5714 = vmatmul.mubr.bf16.gmra.mrb[0].mxu0 %v5576
      %v5715 = vpop.f32.mrb[0].mxu0
      %v5716 = vadd.f32 0.0, %v5715
      %v5717 = vpop.f32.mrb[0].mxu0
      %v5718 = vpop.f32.mrb[0].mxu0
      %v5719 = vadd.f32 0.0, %v5718
      %v5720 = vpop.f32.mrb[0].mxu0
      %5721 = vmatprep.mubr.bf16.mxu0 0
      %5722 = vmatmul.mubr.bf16.gmra.mrb[0].mxu0 %v5579
      %v5723 = vpop.f32.mrb[0].mxu0
      %v5724 = vadd.f32 0.0, %v5723
      %v5725 = vpop.f32.mrb[0].mxu0
      %v5726 = vpop.f32.mrb[0].mxu0
      %v5727 = vadd.f32 0.0, %v5726
      %v5728 = vpop.f32.mrb[0].mxu0
      %5729 = vmatprep.mubr.bf16.mxu0 0
      %5730 = vmatmul.mubr.bf16.gmra.mrb[0].mxu0 %v5582
      %v5731 = vpop.f32.mrb[0].mxu0
      %v5732 = vadd.f32 0.0, %v5731
      %v5733 = vpop.f32.mrb[0].mxu0
      %v5734 = vpop.f32.mrb[0].mxu0
      %v5735 = vadd.f32 0.0, %v5734
      %v5736 = vpop.f32.mrb[0].mxu0
      %5737 = vmatprep.mubr.bf16.mxu0 0
      %5738 = vmatmul.mubr.bf16.gmra.mrb[0].mxu0 %v5585
      %v5739 = vpop.f32.mrb[0].mxu0
      %v5740 = vadd.f32 0.0, %v5739
      %v5741 = vpop.f32.mrb[0].mxu0
      %v5742 = vpop.f32.mrb[0].mxu0
      %v5743 = vadd.f32 0.0, %v5742
      %v5744 = vpop.f32.mrb[0].mxu0
      %5745 = vmatprep.mubr.bf16.mxu0 0
      %5746 = vmatmul.mubr.bf16.gmra.mrb[0].mxu0 %v5588
      %v5747 = vpop.f32.mrb[0].mxu0
      %v5748 = vadd.f32 0.0, %v5747
      %v5749 = vpop.f32.mrb[0].mxu0
      %v5750 = vpop.f32.mrb[0].mxu0
      %v5751 = vadd.f32 0.0, %v5750
      %v5752 = vpop.f32.mrb[0].mxu0
      %5753 = vdwg.mxu0
      %v5754 = vadd.f32 %v5029, %v5628
      %v5755 = vadd.f32 %v5030, %v5631
      %v5756 = vadd.f32 %v5031, %v5636
      %v5757 = vadd.f32 %v5032, %v5639
      %v5758 = vadd.f32 %v5033, %v5644
      %v5759 = vadd.f32 %v5034, %v5647
      %v5760 = vadd.f32 %v5035, %v5652
      %v5761 = vadd.f32 %v5036, %v5655
      %v5762 = vadd.f32 %v5037, %v5660
      %v5763 = vadd.f32 %v5038, %v5663
      %v5764 = vadd.f32 %v5039, %v5668
      %v5765 = vadd.f32 %v5040, %v5671
      %v5766 = vadd.f32 %v5041, %v5676
      %v5767 = vadd.f32 %v5042, %v5679
      %v5768 = vadd.f32 %v5043, %v5684
      %v5769 = vadd.f32 %v5044, %v5687
      %v5770 = vadd.f32 %v5045, %v5692
      %v5771 = vadd.f32 %v5046, %v5695
      %v5772 = vadd.f32 %v5047, %v5700
      %v5773 = vadd.f32 %v5048, %v5703
      %v5774 = vadd.f32 %v5049, %v5708
      %v5775 = vadd.f32 %v5050, %v5711
      %v5776 = vadd.f32 %v5051, %v5716
      %v5777 = vadd.f32 %v5052, %v5719
      %v5778 = vadd.f32 %v5053, %v5724
      %v5779 = vadd.f32 %v5054, %v5727
      %v5780 = vadd.f32 %v5055, %v5732
      %v5781 = vadd.f32 %v5056, %v5735
      %v5782 = vadd.f32 %v5057, %v5740
      %v5783 = vadd.f32 %v5058, %v5743
      %v5784 = vadd.f32 %v5059, %v5748
      %v5785 = vadd.f32 %v5060, %v5751
      %v5786 = vld [vmem:[%s2] sm:$0x1]
      %v5788 = vlaneseq
      %v5789 = vshrl.u32 %v5788, 7
      %v5790 = vsub.s32 0, %v5789
      %v5791 = vrot.slane %v5786, %v5790
      %v5793 = vmul.f32 %v5754, %v5791
      %v5794 = vmul.f32 %v5755, %v5791
      %v5795 = vmul.f32 %v5756, %v5791
      %v5796 = vmul.f32 %v5757, %v5791
      %v5797 = vmul.f32 %v5758, %v5791
      %v5798 = vmul.f32 %v5759, %v5791
      %v5799 = vmul.f32 %v5760, %v5791
      %v5800 = vmul.f32 %v5761, %v5791
      %v5801 = vmul.f32 %v5762, %v5791
      %v5802 = vmul.f32 %v5763, %v5791
      %v5803 = vmul.f32 %v5764, %v5791
      %v5804 = vmul.f32 %v5765, %v5791
      %v5805 = vmul.f32 %v5766, %v5791
      %v5806 = vmul.f32 %v5767, %v5791
      %v5807 = vmul.f32 %v5768, %v5791
      %v5808 = vmul.f32 %v5769, %v5791
      %v5809 = vmul.f32 %v5770, %v5791
      %v5810 = vmul.f32 %v5771, %v5791
      %v5811 = vmul.f32 %v5772, %v5791
      %v5812 = vmul.f32 %v5773, %v5791
      %v5813 = vmul.f32 %v5774, %v5791
      %v5814 = vmul.f32 %v5775, %v5791
      %v5815 = vmul.f32 %v5776, %v5791
      %v5816 = vmul.f32 %v5777, %v5791
      %v5817 = vmul.f32 %v5778, %v5791
      %v5818 = vmul.f32 %v5779, %v5791
      %v5819 = vmul.f32 %v5780, %v5791
      %v5820 = vmul.f32 %v5781, %v5791
      %v5821 = vmul.f32 %v5782, %v5791
      %v5822 = vmul.f32 %v5783, %v5791
      %v5823 = vmul.f32 %v5784, %v5791
      %v5824 = vmul.f32 %v5785, %v5791
      %v5825 = vld [vmem:[%s3] sm:$0x1]
      %v5827 = vlaneseq
      %v5828 = vshrl.u32 %v5827, 7
      %v5829 = vsub.s32 0, %v5828
      %v5830 = vrot.slane %v5825, %v5829
      %v5832 = vadd.f32 %v5793, %v5830
      %v5833 = vadd.f32 %v5794, %v5830
      %v5834 = vadd.f32 %v5795, %v5830
      %v5835 = vadd.f32 %v5796, %v5830
      %v5836 = vadd.f32 %v5797, %v5830
      %v5837 = vadd.f32 %v5798, %v5830
      %v5838 = vadd.f32 %v5799, %v5830
      %v5839 = vadd.f32 %v5800, %v5830
      %v5840 = vadd.f32 %v5801, %v5830
      %v5841 = vadd.f32 %v5802, %v5830
      %v5842 = vadd.f32 %v5803, %v5830
      %v5843 = vadd.f32 %v5804, %v5830
      %v5844 = vadd.f32 %v5805, %v5830
      %v5845 = vadd.f32 %v5806, %v5830
      %v5846 = vadd.f32 %v5807, %v5830
      %v5847 = vadd.f32 %v5808, %v5830
      %v5848 = vadd.f32 %v5809, %v5830
      %v5849 = vadd.f32 %v5810, %v5830
      %v5850 = vadd.f32 %v5811, %v5830
      %v5851 = vadd.f32 %v5812, %v5830
      %v5852 = vadd.f32 %v5813, %v5830
      %v5853 = vadd.f32 %v5814, %v5830
      %v5854 = vadd.f32 %v5815, %v5830
      %v5855 = vadd.f32 %v5816, %v5830
      %v5856 = vadd.f32 %v5817, %v5830
      %v5857 = vadd.f32 %v5818, %v5830
      %v5858 = vadd.f32 %v5819, %v5830
      %v5859 = vadd.f32 %v5820, %v5830
      %v5860 = vadd.f32 %v5821, %v5830
      %v5861 = vadd.f32 %v5822, %v5830
      %v5862 = vadd.f32 %v5823, %v5830
      %v5863 = vadd.f32 %v5824, %v5830
      %v5864 = vmax.f32 %v5832, 0.0
      %v5865 = vmax.f32 %v5833, 0.0
      %v5866 = vmax.f32 %v5834, 0.0
      %v5867 = vmax.f32 %v5835, 0.0
      %v5868 = vmax.f32 %v5836, 0.0
      %v5869 = vmax.f32 %v5837, 0.0
      %v5870 = vmax.f32 %v5838, 0.0
      %v5871 = vmax.f32 %v5839, 0.0
      %v5872 = vmax.f32 %v5840, 0.0
      %v5873 = vmax.f32 %v5841, 0.0
      %v5874 = vmax.f32 %v5842, 0.0
      %v5875 = vmax.f32 %v5843, 0.0
      %v5876 = vmax.f32 %v5844, 0.0
      %v5877 = vmax.f32 %v5845, 0.0
      %v5878 = vmax.f32 %v5846, 0.0
      %v5879 = vmax.f32 %v5847, 0.0
      %v5880 = vmax.f32 %v5848, 0.0
      %v5881 = vmax.f32 %v5849, 0.0
      %v5882 = vmax.f32 %v5850, 0.0
      %v5883 = vmax.f32 %v5851, 0.0
      %v5884 = vmax.f32 %v5852, 0.0
      %v5885 = vmax.f32 %v5853, 0.0
      %v5886 = vmax.f32 %v5854, 0.0
      %v5887 = vmax.f32 %v5855, 0.0
      %v5888 = vmax.f32 %v5856, 0.0
      %v5889 = vmax.f32 %v5857, 0.0
      %v5890 = vmax.f32 %v5858, 0.0
      %v5891 = vmax.f32 %v5859, 0.0
      %v5892 = vmax.f32 %v5860, 0.0
      %v5893 = vmax.f32 %v5861, 0.0
      %v5894 = vmax.f32 %v5862, 0.0
      %v5895 = vmax.f32 %v5863, 0.0
      %v5896 = vpack.c.bf16 %v5865, %v5864
      %v5897 = vpack.c.bf16 %v5867, %v5866
      %v5898 = vpack.c.bf16 %v5869, %v5868
      %v5899 = vpack.c.bf16 %v5871, %v5870
      %v5900 = vpack.c.bf16 %v5873, %v5872
      %v5901 = vpack.c.bf16 %v5875, %v5874
      %v5902 = vpack.c.bf16 %v5877, %v5876
      %v5903 = vpack.c.bf16 %v5879, %v5878
      %v5904 = vpack.c.bf16 %v5881, %v5880
      %v5905 = vpack.c.bf16 %v5883, %v5882
      %v5906 = vpack.c.bf16 %v5885, %v5884
      %v5907 = vpack.c.bf16 %v5887, %v5886
      %v5908 = vpack.c.bf16 %v5889, %v5888
      %v5909 = vpack.c.bf16 %v5891, %v5890
      %v5910 = vpack.c.bf16 %v5893, %v5892
      %v5911 = vpack.c.bf16 %v5895, %v5894
      %v5928 = vunpack.c.l.b16 %v5896
      %v5929 = vunpack.c.h.b16 %v5896
      %v5930 = vunpack.c.l.b16 %v5897
      %v5931 = vunpack.c.h.b16 %v5897
      %v5932 = vunpack.c.l.b16 %v5898
      %v5933 = vunpack.c.h.b16 %v5898
      %v5934 = vunpack.c.l.b16 %v5899
      %v5935 = vunpack.c.h.b16 %v5899
      %v5936 = vunpack.c.l.b16 %v5900
      %v5937 = vunpack.c.h.b16 %v5900
      %v5938 = vunpack.c.l.b16 %v5901
      %v5939 = vunpack.c.h.b16 %v5901
      %v5940 = vunpack.c.l.b16 %v5902
      %v5941 = vunpack.c.h.b16 %v5902
      %v5942 = vunpack.c.l.b16 %v5903
      %v5943 = vunpack.c.h.b16 %v5903
      %v5944 = vunpack.c.l.b16 %v5904
      %v5945 = vunpack.c.h.b16 %v5904
      %v5946 = vunpack.c.l.b16 %v5905
      %v5947 = vunpack.c.h.b16 %v5905
      %v5948 = vunpack.c.l.b16 %v5906
      %v5949 = vunpack.c.h.b16 %v5906
      %v5950 = vunpack.c.l.b16 %v5907
      %v5951 = vunpack.c.h.b16 %v5907
      %v5952 = vunpack.c.l.b16 %v5908
      %v5953 = vunpack.c.h.b16 %v5908
      %v5954 = vunpack.c.l.b16 %v5909
      %v5955 = vunpack.c.h.b16 %v5909
      %v5956 = vunpack.c.l.b16 %v5910
      %v5957 = vunpack.c.h.b16 %v5910
      %v5958 = vunpack.c.l.b16 %v5911
      %v5959 = vunpack.c.h.b16 %v5911
      %v5960 = vpack.c.b16 %v5928, %v5928
      %v5961 = vpack.c.b16 %v5929, %v5929
      %v5962 = vpack.c.b16 %v5930, %v5930
      %v5963 = vpack.c.b16 %v5931, %v5931
      %v5964 = vpack.c.b16 %v5932, %v5932
      %v5965 = vpack.c.b16 %v5933, %v5933
      %v5966 = vpack.c.b16 %v5934, %v5934
      %v5967 = vpack.c.b16 %v5935, %v5935
      %v5968 = vpack.c.b16 %v5936, %v5936
      %v5969 = vpack.c.b16 %v5937, %v5937
      %v5970 = vpack.c.b16 %v5938, %v5938
      %v5971 = vpack.c.b16 %v5939, %v5939
      %v5972 = vpack.c.b16 %v5940, %v5940
      %v5973 = vpack.c.b16 %v5941, %v5941
      %v5974 = vpack.c.b16 %v5942, %v5942
      %v5975 = vpack.c.b16 %v5943, %v5943
      %v5976 = vpack.c.b16 %v5944, %v5944
      %v5977 = vpack.c.b16 %v5945, %v5945
      %v5978 = vpack.c.b16 %v5946, %v5946
      %v5979 = vpack.c.b16 %v5947, %v5947
      %v5980 = vpack.c.b16 %v5948, %v5948
      %v5981 = vpack.c.b16 %v5949, %v5949
      %v5982 = vpack.c.b16 %v5950, %v5950
      %v5983 = vpack.c.b16 %v5951, %v5951
      %v5984 = vpack.c.b16 %v5952, %v5952
      %v5985 = vpack.c.b16 %v5953, %v5953
      %v5986 = vpack.c.b16 %v5954, %v5954
      %v5987 = vpack.c.b16 %v5955, %v5955
      %v5988 = vpack.c.b16 %v5956, %v5956
      %v5989 = vpack.c.b16 %v5957, %v5957
      %v5990 = vpack.c.b16 %v5958, %v5958
      %v5991 = vpack.c.b16 %v5959, %v5959
      %6024 = vst.msk [vmem:[%s418 + $0x4] sm:$0xf] %vm286, %v5960
      %6025 = vst.msk [vmem:[%s418 + $0x8] sm:$0xf] %vm286, %v5961
      %6026 = vst.msk [vmem:[%s418 + $0x14] sm:$0xf] %vm286, %v5962
      %6027 = vst.msk [vmem:[%s418 + $0x18] sm:$0xf] %vm286, %v5963
      %6028 = vst.msk [vmem:[%s418 + $0x24] sm:$0xf] %vm286, %v5964
      %6029 = vst.msk [vmem:[%s418 + $0x28] sm:$0xf] %vm286, %v5965
      %6030 = vst.msk [vmem:[%s418 + $0x34] sm:$0xf] %vm286, %v5966
      %6031 = vst.msk [vmem:[%s418 + $0x38] sm:$0xf] %vm286, %v5967
      %6032 = vst.msk [vmem:[%s418 + $0x44] sm:$0xf] %vm286, %v5968
      %6033 = vst.msk [vmem:[%s418 + $0x48] sm:$0xf] %vm286, %v5969
      %6034 = vst.msk [vmem:[%s418 + $0x54] sm:$0xf] %vm286, %v5970
      %6035 = vst.msk [vmem:[%s418 + $0x58] sm:$0xf] %vm286, %v5971
      %6036 = vst.msk [vmem:[%s418 + $0x64] sm:$0xf] %vm286, %v5972
      %6037 = vst.msk [vmem:[%s418 + $0x68] sm:$0xf] %vm286, %v5973
      %6038 = vst.msk [vmem:[%s418 + $0x74] sm:$0xf] %vm286, %v5974
      %6039 = vst.msk [vmem:[%s418 + $0x78] sm:$0xf] %vm286, %v5975
      %6040 = vst.msk [vmem:[%s418 + $0x84] sm:$0xf] %vm286, %v5976
      %6041 = vst.msk [vmem:[%s418 + $0x88] sm:$0xf] %vm286, %v5977
      %6042 = vst.msk [vmem:[%s418 + $0x94] sm:$0xf] %vm286, %v5978
      %6043 = vst.msk [vmem:[%s418 + $0x98] sm:$0xf] %vm286, %v5979
      %6044 = vst.msk [vmem:[%s418 + $0xa4] sm:$0xf] %vm286, %v5980
      %6045 = vst.msk [vmem:[%s418 + $0xa8] sm:$0xf] %vm286, %v5981
      %6046 = vst.msk [vmem:[%s418 + $0xb4] sm:$0xf] %vm286, %v5982
      %6047 = vst.msk [vmem:[%s418 + $0xb8] sm:$0xf] %vm286, %v5983
      %6048 = vst.msk [vmem:[%s418 + $0xc4] sm:$0xf] %vm286, %v5984
      %6049 = vst.msk [vmem:[%s418 + $0xc8] sm:$0xf] %vm286, %v5985
      %6050 = vst.msk [vmem:[%s418 + $0xd4] sm:$0xf] %vm286, %v5986
      %6051 = vst.msk [vmem:[%s418 + $0xd8] sm:$0xf] %vm286, %v5987
      %6052 = vst.msk [vmem:[%s418 + $0xe4] sm:$0xf] %vm286, %v5988
      %6053 = vst.msk [vmem:[%s418 + $0xe8] sm:$0xf] %vm286, %v5989
      %6054 = vst.msk [vmem:[%s418 + $0xf4] sm:$0xf] %vm286, %v5990
      %6055 = vst.msk [vmem:[%s418 + $0xf8] sm:$0xf] %vm286, %v5991
      %v6056 = vld [vmem:[#allocation3] sm:$0x8]
      %v6057 = vld [vmem:[#allocation3 + $0x4] sm:$0xf]
      %v6058 = vld [vmem:[#allocation3 + $0x8] sm:$0xf]
      %v6059 = vld [vmem:[#allocation3 + $0x10] sm:$0x8]
      %v6060 = vld [vmem:[#allocation3 + $0x14] sm:$0xf]
      %v6061 = vld [vmem:[#allocation3 + $0x18] sm:$0xf]
      %v6062 = vld [vmem:[#allocation3 + $0x20] sm:$0x8]
      %v6063 = vld [vmem:[#allocation3 + $0x24] sm:$0xf]
      %v6064 = vld [vmem:[#allocation3 + $0x28] sm:$0xf]
      %v6065 = vld [vmem:[#allocation3 + $0x30] sm:$0x8]
      %v6066 = vld [vmem:[#allocation3 + $0x34] sm:$0xf]
      %v6067 = vld [vmem:[#allocation3 + $0x38] sm:$0xf]
      %v6068 = vld [vmem:[#allocation3 + $0x40] sm:$0x8]
      %v6069 = vld [vmem:[#allocation3 + $0x44] sm:$0xf]
      %v6070 = vld [vmem:[#allocation3 + $0x48] sm:$0xf]
      %v6071 = vld [vmem:[#allocation3 + $0x50] sm:$0x8]
      %v6072 = vld [vmem:[#allocation3 + $0x54] sm:$0xf]
      %v6073 = vld [vmem:[#allocation3 + $0x58] sm:$0xf]
      %v6074 = vld [vmem:[#allocation3 + $0x60] sm:$0x8]
      %v6075 = vld [vmem:[#allocation3 + $0x64] sm:$0xf]
      %v6076 = vld [vmem:[#allocation3 + $0x68] sm:$0xf]
      %v6077 = vld [vmem:[#allocation3 + $0x70] sm:$0x8]
      %v6078 = vld [vmem:[#allocation3 + $0x74] sm:$0xf]
      %v6079 = vld [vmem:[#allocation3 + $0x78] sm:$0xf]
      %v6080 = vld [vmem:[#allocation3 + $0x80] sm:$0x8]
      %v6081 = vld [vmem:[#allocation3 + $0x84] sm:$0xf]
      %v6082 = vld [vmem:[#allocation3 + $0x88] sm:$0xf]
      %v6083 = vld [vmem:[#allocation3 + $0x90] sm:$0x8]
      %v6084 = vld [vmem:[#allocation3 + $0x94] sm:$0xf]
      %v6085 = vld [vmem:[#allocation3 + $0x98] sm:$0xf]
      %v6086 = vld [vmem:[#allocation3 + $0xa0] sm:$0x8]
      %v6087 = vld [vmem:[#allocation3 + $0xa4] sm:$0xf]
      %v6088 = vld [vmem:[#allocation3 + $0xa8] sm:$0xf]
      %v6089 = vld [vmem:[#allocation3 + $0xb0] sm:$0x8]
      %v6090 = vld [vmem:[#allocation3 + $0xb4] sm:$0xf]
      %v6091 = vld [vmem:[#allocation3 + $0xb8] sm:$0xf]
      %v6092 = vld [vmem:[#allocation3 + $0xc0] sm:$0x8]
      %v6093 = vld [vmem:[#allocation3 + $0xc4] sm:$0xf]
      %v6094 = vld [vmem:[#allocation3 + $0xc8] sm:$0xf]
      %v6095 = vld [vmem:[#allocation3 + $0xd0] sm:$0x8]
      %v6096 = vld [vmem:[#allocation3 + $0xd4] sm:$0xf]
      %v6097 = vld [vmem:[#allocation3 + $0xd8] sm:$0xf]
      %v6098 = vld [vmem:[#allocation3 + $0xe0] sm:$0x8]
      %v6099 = vld [vmem:[#allocation3 + $0xe4] sm:$0xf]
      %v6100 = vld [vmem:[#allocation3 + $0xe8] sm:$0xf]
      %v6101 = vld [vmem:[#allocation3 + $0xf0] sm:$0x8]
      %v6102 = vld [vmem:[#allocation3 + $0xf4] sm:$0xf]
      %v6103 = vld [vmem:[#allocation3 + $0xf8] sm:$0xf]
      %v6105 = vshrl.u32 %v6056, 16
      %v6107 = vrot.slane %v6105, 7
      %v6108 = vrot.slane %v6107, 4
      %v6110 = vshrl.u32 %v6057, 16
      %v6112 = vrot.slane %v6110, 7
      %v6113 = vshll.u32 %v6057, 16
      %v6115 = vor.u32 %v6112, %v6113
      %v6116 = vsel %vm662, %v6108, %v6115
      %v6117 = vrot.slane %v6112, 4
      %v6119 = vshrl.u32 %v6058, 16
      %v6121 = vrot.slane %v6119, 7
      %v6122 = vshll.u32 %v6058, 16
      %v6124 = vor.u32 %v6121, %v6122
      %v6125 = vsel %vm662, %v6117, %v6124
      %v6127 = vshrl.u32 %v6059, 16
      %v6129 = vrot.slane %v6127, 7
      %v6130 = vrot.slane %v6129, 4
      %v6132 = vshrl.u32 %v6060, 16
      %v6134 = vrot.slane %v6132, 7
      %v6135 = vshll.u32 %v6060, 16
      %v6137 = vor.u32 %v6134, %v6135
      %v6138 = vsel %vm662, %v6130, %v6137
      %v6139 = vrot.slane %v6134, 4
      %v6141 = vshrl.u32 %v6061, 16
      %v6143 = vrot.slane %v6141, 7
      %v6144 = vshll.u32 %v6061, 16
      %v6146 = vor.u32 %v6143, %v6144
      %v6147 = vsel %vm662, %v6139, %v6146
      %v6149 = vshrl.u32 %v6062, 16
      %v6151 = vrot.slane %v6149, 7
      %v6152 = vrot.slane %v6151, 4
      %v6154 = vshrl.u32 %v6063, 16
      %v6156 = vrot.slane %v6154, 7
      %v6157 = vshll.u32 %v6063, 16
      %v6159 = vor.u32 %v6156, %v6157
      %v6160 = vsel %vm662, %v6152, %v6159
      %v6161 = vrot.slane %v6156, 4
      %v6163 = vshrl.u32 %v6064, 16
      %v6165 = vrot.slane %v6163, 7
      %v6166 = vshll.u32 %v6064, 16
      %v6168 = vor.u32 %v6165, %v6166
      %v6169 = vsel %vm662, %v6161, %v6168
      %v6171 = vshrl.u32 %v6065, 16
      %v6173 = vrot.slane %v6171, 7
      %v6174 = vrot.slane %v6173, 4
      %v6176 = vshrl.u32 %v6066, 16
      %v6178 = vrot.slane %v6176, 7
      %v6179 = vshll.u32 %v6066, 16
      %v6181 = vor.u32 %v6178, %v6179
      %v6182 = vsel %vm662, %v6174, %v6181
      %v6183 = vrot.slane %v6178, 4
      %v6185 = vshrl.u32 %v6067, 16
      %v6187 = vrot.slane %v6185, 7
      %v6188 = vshll.u32 %v6067, 16
      %v6190 = vor.u32 %v6187, %v6188
      %v6191 = vsel %vm662, %v6183, %v6190
      %v6193 = vshrl.u32 %v6068, 16
      %v6195 = vrot.slane %v6193, 7
      %v6196 = vrot.slane %v6195, 4
      %v6198 = vshrl.u32 %v6069, 16
      %v6200 = vrot.slane %v6198, 7
      %v6201 = vshll.u32 %v6069, 16
      %v6203 = vor.u32 %v6200, %v6201
      %v6204 = vsel %vm662, %v6196, %v6203
      %v6205 = vrot.slane %v6200, 4
      %v6207 = vshrl.u32 %v6070, 16
      %v6209 = vrot.slane %v6207, 7
      %v6210 = vshll.u32 %v6070, 16
      %v6212 = vor.u32 %v6209, %v6210
      %v6213 = vsel %vm662, %v6205, %v6212
      %v6215 = vshrl.u32 %v6071, 16
      %v6217 = vrot.slane %v6215, 7
      %v6218 = vrot.slane %v6217, 4
      %v6220 = vshrl.u32 %v6072, 16
      %v6222 = vrot.slane %v6220, 7
      %v6223 = vshll.u32 %v6072, 16
      %v6225 = vor.u32 %v6222, %v6223
      %v6226 = vsel %vm662, %v6218, %v6225
      %v6227 = vrot.slane %v6222, 4
      %v6229 = vshrl.u32 %v6073, 16
      %v6231 = vrot.slane %v6229, 7
      %v6232 = vshll.u32 %v6073, 16
      %v6234 = vor.u32 %v6231, %v6232
      %v6235 = vsel %vm662, %v6227, %v6234
      %v6237 = vshrl.u32 %v6074, 16
      %v6239 = vrot.slane %v6237, 7
      %v6240 = vrot.slane %v6239, 4
      %v6242 = vshrl.u32 %v6075, 16
      %v6244 = vrot.slane %v6242, 7
      %v6245 = vshll.u32 %v6075, 16
      %v6247 = vor.u32 %v6244, %v6245
      %v6248 = vsel %vm662, %v6240, %v6247
      %v6249 = vrot.slane %v6244, 4
      %v6251 = vshrl.u32 %v6076, 16
      %v6253 = vrot.slane %v6251, 7
      %v6254 = vshll.u32 %v6076, 16
      %v6256 = vor.u32 %v6253, %v6254
      %v6257 = vsel %vm662, %v6249, %v6256
      %v6259 = vshrl.u32 %v6077, 16
      %v6261 = vrot.slane %v6259, 7
      %v6262 = vrot.slane %v6261, 4
      %v6264 = vshrl.u32 %v6078, 16
      %v6266 = vrot.slane %v6264, 7
      %v6267 = vshll.u32 %v6078, 16
      %v6269 = vor.u32 %v6266, %v6267
      %v6270 = vsel %vm662, %v6262, %v6269
      %v6271 = vrot.slane %v6266, 4
      %v6273 = vshrl.u32 %v6079, 16
      %v6275 = vrot.slane %v6273, 7
      %v6276 = vshll.u32 %v6079, 16
      %v6278 = vor.u32 %v6275, %v6276
      %v6279 = vsel %vm662, %v6271, %v6278
      %v6281 = vshrl.u32 %v6080, 16
      %v6283 = vrot.slane %v6281, 7
      %v6284 = vrot.slane %v6283, 4
      %v6286 = vshrl.u32 %v6081, 16
      %v6288 = vrot.slane %v6286, 7
      %v6289 = vshll.u32 %v6081, 16
      %v6291 = vor.u32 %v6288, %v6289
      %v6292 = vsel %vm662, %v6284, %v6291
      %v6293 = vrot.slane %v6288, 4
      %v6295 = vshrl.u32 %v6082, 16
      %v6297 = vrot.slane %v6295, 7
      %v6298 = vshll.u32 %v6082, 16
      %v6300 = vor.u32 %v6297, %v6298
      %v6301 = vsel %vm662, %v6293, %v6300
      %v6303 = vshrl.u32 %v6083, 16
      %v6305 = vrot.slane %v6303, 7
      %v6306 = vrot.slane %v6305, 4
      %v6308 = vshrl.u32 %v6084, 16
      %v6310 = vrot.slane %v6308, 7
      %v6311 = vshll.u32 %v6084, 16
      %v6313 = vor.u32 %v6310, %v6311
      %v6314 = vsel %vm662, %v6306, %v6313
      %v6315 = vrot.slane %v6310, 4
      %v6317 = vshrl.u32 %v6085, 16
      %v6319 = vrot.slane %v6317, 7
      %v6320 = vshll.u32 %v6085, 16
      %v6322 = vor.u32 %v6319, %v6320
      %v6323 = vsel %vm662, %v6315, %v6322
      %v6325 = vshrl.u32 %v6086, 16
      %v6327 = vrot.slane %v6325, 7
      %v6328 = vrot.slane %v6327, 4
      %v6330 = vshrl.u32 %v6087, 16
      %v6332 = vrot.slane %v6330, 7
      %v6333 = vshll.u32 %v6087, 16
      %v6335 = vor.u32 %v6332, %v6333
      %v6336 = vsel %vm662, %v6328, %v6335
      %v6337 = vrot.slane %v6332, 4
      %v6339 = vshrl.u32 %v6088, 16
      %v6341 = vrot.slane %v6339, 7
      %v6342 = vshll.u32 %v6088, 16
      %v6344 = vor.u32 %v6341, %v6342
      %v6345 = vsel %vm662, %v6337, %v6344
      %v6347 = vshrl.u32 %v6089, 16
      %v6349 = vrot.slane %v6347, 7
      %v6350 = vrot.slane %v6349, 4
      %v6352 = vshrl.u32 %v6090, 16
      %v6354 = vrot.slane %v6352, 7
      %v6355 = vshll.u32 %v6090, 16
      %v6357 = vor.u32 %v6354, %v6355
      %v6358 = vsel %vm662, %v6350, %v6357
      %v6359 = vrot.slane %v6354, 4
      %v6361 = vshrl.u32 %v6091, 16
      %v6363 = vrot.slane %v6361, 7
      %v6364 = vshll.u32 %v6091, 16
      %v6366 = vor.u32 %v6363, %v6364
      %v6367 = vsel %vm662, %v6359, %v6366
      %v6369 = vshrl.u32 %v6092, 16
      %v6371 = vrot.slane %v6369, 7
      %v6372 = vrot.slane %v6371, 4
      %v6374 = vshrl.u32 %v6093, 16
      %v6376 = vrot.slane %v6374, 7
      %v6377 = vshll.u32 %v6093, 16
      %v6379 = vor.u32 %v6376, %v6377
      %v6380 = vsel %vm662, %v6372, %v6379
      %v6381 = vrot.slane %v6376, 4
      %v6383 = vshrl.u32 %v6094, 16
      %v6385 = vrot.slane %v6383, 7
      %v6386 = vshll.u32 %v6094, 16
      %v6388 = vor.u32 %v6385, %v6386
      %v6389 = vsel %vm662, %v6381, %v6388
      %v6391 = vshrl.u32 %v6095, 16
      %v6393 = vrot.slane %v6391, 7
      %v6394 = vrot.slane %v6393, 4
      %v6396 = vshrl.u32 %v6096, 16
      %v6398 = vrot.slane %v6396, 7
      %v6399 = vshll.u32 %v6096, 16
      %v6401 = vor.u32 %v6398, %v6399
      %v6402 = vsel %vm662, %v6394, %v6401
      %v6403 = vrot.slane %v6398, 4
      %v6405 = vshrl.u32 %v6097, 16
      %v6407 = vrot.slane %v6405, 7
      %v6408 = vshll.u32 %v6097, 16
      %v6410 = vor.u32 %v6407, %v6408
      %v6411 = vsel %vm662, %v6403, %v6410
      %v6413 = vshrl.u32 %v6098, 16
      %v6415 = vrot.slane %v6413, 7
      %v6416 = vrot.slane %v6415, 4
      %v6418 = vshrl.u32 %v6099, 16
      %v6420 = vrot.slane %v6418, 7
      %v6421 = vshll.u32 %v6099, 16
      %v6423 = vor.u32 %v6420, %v6421
      %v6424 = vsel %vm662, %v6416, %v6423
      %v6425 = vrot.slane %v6420, 4
      %v6427 = vshrl.u32 %v6100, 16
      %v6429 = vrot.slane %v6427, 7
      %v6430 = vshll.u32 %v6100, 16
      %v6432 = vor.u32 %v6429, %v6430
      %v6433 = vsel %vm662, %v6425, %v6432
      %v6435 = vshrl.u32 %v6101, 16
      %v6437 = vrot.slane %v6435, 7
      %v6438 = vrot.slane %v6437, 4
      %v6440 = vshrl.u32 %v6102, 16
      %v6442 = vrot.slane %v6440, 7
      %v6443 = vshll.u32 %v6102, 16
      %v6445 = vor.u32 %v6442, %v6443
      %v6446 = vsel %vm662, %v6438, %v6445
      %v6447 = vrot.slane %v6442, 4
      %v6449 = vshrl.u32 %v6103, 16
      %v6451 = vrot.slane %v6449, 7
      %v6452 = vshll.u32 %v6103, 16
      %v6454 = vor.u32 %v6451, %v6452
      %v6455 = vsel %vm662, %v6447, %v6454
      %v6456 = vld [vmem:[%s4] sm:$0xf]
      %v6457 = vld [vmem:[%s4 + $0x4] sm:$0xf]
      %v6490 = vunpack.c.l.b16 %v6057
      %v6491 = vunpack.c.l.b16 %v6058
      %v6492 = vunpack.c.l.b16 %v6060
      %v6493 = vunpack.c.l.b16 %v6061
      %v6494 = vunpack.c.l.b16 %v6063
      %v6495 = vunpack.c.l.b16 %v6064
      %v6496 = vunpack.c.l.b16 %v6066
      %v6497 = vunpack.c.l.b16 %v6067
      %v6498 = vunpack.c.l.b16 %v6069
      %v6499 = vunpack.c.l.b16 %v6070
      %v6500 = vunpack.c.l.b16 %v6072
      %v6501 = vunpack.c.l.b16 %v6073
      %v6502 = vunpack.c.l.b16 %v6075
      %v6503 = vunpack.c.l.b16 %v6076
      %v6504 = vunpack.c.l.b16 %v6078
      %v6505 = vunpack.c.l.b16 %v6079
      %v6506 = vunpack.c.l.b16 %v6081
      %v6507 = vunpack.c.l.b16 %v6082
      %v6508 = vunpack.c.l.b16 %v6084
      %v6509 = vunpack.c.l.b16 %v6085
      %v6510 = vunpack.c.l.b16 %v6087
      %v6511 = vunpack.c.l.b16 %v6088
      %v6512 = vunpack.c.l.b16 %v6090
      %v6513 = vunpack.c.l.b16 %v6091
      %v6514 = vunpack.c.l.b16 %v6093
      %v6515 = vunpack.c.l.b16 %v6094
      %v6516 = vunpack.c.l.b16 %v6096
      %v6517 = vunpack.c.l.b16 %v6097
      %v6518 = vunpack.c.l.b16 %v6099
      %v6519 = vunpack.c.l.b16 %v6100
      %v6520 = vunpack.c.l.b16 %v6102
      %v6521 = vunpack.c.l.b16 %v6103
      %v6522 = vpack.c.b16 %v6491, %v6490
      %v6523 = vpack.c.b16 %v6493, %v6492
      %v6524 = vpack.c.b16 %v6495, %v6494
      %v6525 = vpack.c.b16 %v6497, %v6496
      %v6526 = vpack.c.b16 %v6499, %v6498
      %v6527 = vpack.c.b16 %v6501, %v6500
      %v6528 = vpack.c.b16 %v6503, %v6502
      %v6529 = vpack.c.b16 %v6505, %v6504
      %v6530 = vpack.c.b16 %v6507, %v6506
      %v6531 = vpack.c.b16 %v6509, %v6508
      %v6532 = vpack.c.b16 %v6511, %v6510
      %v6533 = vpack.c.b16 %v6513, %v6512
      %v6534 = vpack.c.b16 %v6515, %v6514
      %v6535 = vpack.c.b16 %v6517, %v6516
      %v6536 = vpack.c.b16 %v6519, %v6518
      %v6537 = vpack.c.b16 %v6521, %v6520
      %v6539 = vsel %vm1097, %v6522, 0
      %v6542 = vsel %vm1097, %v6523, 0
      %v6545 = vsel %vm1097, %v6524, 0
      %v6548 = vsel %vm1097, %v6525, 0
      %v6551 = vsel %vm1097, %v6526, 0
      %v6554 = vsel %vm1097, %v6527, 0
      %v6557 = vsel %vm1097, %v6528, 0
      %v6560 = vsel %vm1097, %v6529, 0
      %v6563 = vsel %vm1097, %v6530, 0
      %v6566 = vsel %vm1097, %v6531, 0
      %v6569 = vsel %vm1097, %v6532, 0
      %v6572 = vsel %vm1097, %v6533, 0
      %v6575 = vsel %vm1097, %v6534, 0
      %v6578 = vsel %vm1097, %v6535, 0
      %v6581 = vsel %vm1097, %v6536, 0
      %v6584 = vsel %vm1097, %v6537, 0
      %v6587 = vsel %vm1146, %v6457, 0
      %6589 = vmatprep.subr.bf16.mxu0 0
      %6590 = vmatpush1.bf16.msra.mxu0 %v6587
      %6591 = vmatprep.subr.bf16.mxu0 0
      %6592 = vmatpush1.bf16.msra.mxu0 0
      %6593 = vmatprep.subr.bf16.mxu0 0
      %6594 = vmatpush1.bf16.msra.mxu0 0
      %6595 = vmatprep.subr.bf16.mxu0 0
      %6596 = vmatpush1.bf16.msra.mxu0 0
      %6597 = vmatprep.subr.bf16.mxu0 0
      %6598 = vmatpush1.bf16.msra.mxu0 0
      %6599 = vmatprep.subr.bf16.mxu0 0
      %6600 = vmatpush1.bf16.msra.mxu0 0
      %6601 = vmatprep.subr.bf16.mxu0 0
      %6602 = vmatpush1.bf16.msra.mxu0 0
      %6603 = vmatprep.subr.bf16.mxu0 0
      %6604 = vmatpush1.bf16.msra.mxu0 0
      %6605 = vmatprep.subr.bf16.mxu0 0
      %6606 = vmatpush1.bf16.msra.mxu0 0
      %6607 = vmatprep.subr.bf16.mxu0 0
      %6608 = vmatpush1.bf16.msra.mxu0 0
      %6609 = vmatprep.subr.bf16.mxu0 0
      %6610 = vmatpush1.bf16.msra.mxu0 0
      %6611 = vmatprep.subr.bf16.mxu0 0
      %6612 = vmatpush1.bf16.msra.mxu0 0
      %6613 = vmatprep.subr.bf16.mxu0 0
      %6614 = vmatpush1.bf16.msra.mxu0 0
      %6615 = vmatprep.subr.bf16.mxu0 0
      %6616 = vmatpush1.bf16.msra.mxu0 0
      %6617 = vmatprep.subr.bf16.mxu0 0
      %6618 = vmatpush1.bf16.msra.mxu0 0
      %6619 = vmatprep.subr.bf16.mxu0 0
      %6620 = vmatpush1.bf16.msra.mxu0 0
      %6621 = vmatprep.mubr.bf16.mxu0 0
      %6622 = vmatmul.mubr.bf16.gmra.mrb[0].mxu0 %v6539
      %v6623 = vpop.f32.mrb[0].mxu0
      %v6624 = vadd.f32 0.0, %v6623
      %v6625 = vpop.f32.mrb[0].mxu0
      %v6626 = vpop.f32.mrb[0].mxu0
      %v6627 = vadd.f32 0.0, %v6626
      %v6628 = vpop.f32.mrb[0].mxu0
      %6629 = vmatprep.mubr.bf16.mxu0 0
      %6630 = vmatmul.mubr.bf16.gmra.mrb[0].mxu0 %v6542
      %v6631 = vpop.f32.mrb[0].mxu0
      %v6632 = vadd.f32 0.0, %v6631
      %v6633 = vpop.f32.mrb[0].mxu0
      %v6634 = vpop.f32.mrb[0].mxu0
      %v6635 = vadd.f32 0.0, %v6634
      %v6636 = vpop.f32.mrb[0].mxu0
      %6637 = vmatprep.mubr.bf16.mxu0 0
      %6638 = vmatmul.mubr.bf16.gmra.mrb[0].mxu0 %v6545
      %v6639 = vpop.f32.mrb[0].mxu0
      %v6640 = vadd.f32 0.0, %v6639
      %v6641 = vpop.f32.mrb[0].mxu0
      %v6642 = vpop.f32.mrb[0].mxu0
      %v6643 = vadd.f32 0.0, %v6642
      %v6644 = vpop.f32.mrb[0].mxu0
      %6645 = vmatprep.mubr.bf16.mxu0 0
      %6646 = vmatmul.mubr.bf16.gmra.mrb[0].mxu0 %v6548
      %v6647 = vpop.f32.mrb[0].mxu0
      %v6648 = vadd.f32 0.0, %v6647
      %v6649 = vpop.f32.mrb[0].mxu0
      %v6650 = vpop.f32.mrb[0].mxu0
      %v6651 = vadd.f32 0.0, %v6650
      %v6652 = vpop.f32.mrb[0].mxu0
      %6653 = vmatprep.mubr.bf16.mxu0 0
      %6654 = vmatmul.mubr.bf16.gmra.mrb[0].mxu0 %v6551
      %v6655 = vpop.f32.mrb[0].mxu0
      %v6656 = vadd.f32 0.0, %v6655
      %v6657 = vpop.f32.mrb[0].mxu0
      %v6658 = vpop.f32.mrb[0].mxu0
      %v6659 = vadd.f32 0.0, %v6658
      %v6660 = vpop.f32.mrb[0].mxu0
      %6661 = vmatprep.mubr.bf16.mxu0 0
      %6662 = vmatmul.mubr.bf16.gmra.mrb[0].mxu0 %v6554
      %v6663 = vpop.f32.mrb[0].mxu0
      %v6664 = vadd.f32 0.0, %v6663
      %v6665 = vpop.f32.mrb[0].mxu0
      %v6666 = vpop.f32.mrb[0].mxu0
      %v6667 = vadd.f32 0.0, %v6666
      %v6668 = vpop.f32.mrb[0].mxu0
      %6669 = vmatprep.mubr.bf16.mxu0 0
      %6670 = vmatmul.mubr.bf16.gmra.mrb[0].mxu0 %v6557
      %v6671 = vpop.f32.mrb[0].mxu0
      %v6672 = vadd.f32 0.0, %v6671
      %v6673 = vpop.f32.mrb[0].mxu0
      %v6674 = vpop.f32.mrb[0].mxu0
      %v6675 = vadd.f32 0.0, %v6674
      %v6676 = vpop.f32.mrb[0].mxu0
      %6677 = vmatprep.mubr.bf16.mxu0 0
      %6678 = vmatmul.mubr.bf16.gmra.mrb[0].mxu0 %v6560
      %v6679 = vpop.f32.mrb[0].mxu0
      %v6680 = vadd.f32 0.0, %v6679
      %v6681 = vpop.f32.mrb[0].mxu0
      %v6682 = vpop.f32.mrb[0].mxu0
      %v6683 = vadd.f32 0.0, %v6682
      %v6684 = vpop.f32.mrb[0].mxu0
      %6685 = vmatprep.mubr.bf16.mxu0 0
      %6686 = vmatmul.mubr.bf16.gmra.mrb[0].mxu0 %v6563
      %v6687 = vpop.f32.mrb[0].mxu0
      %v6688 = vadd.f32 0.0, %v6687
      %v6689 = vpop.f32.mrb[0].mxu0
      %v6690 = vpop.f32.mrb[0].mxu0
      %v6691 = vadd.f32 0.0, %v6690
      %v6692 = vpop.f32.mrb[0].mxu0
      %6693 = vmatprep.mubr.bf16.mxu0 0
      %6694 = vmatmul.mubr.bf16.gmra.mrb[0].mxu0 %v6566
      %v6695 = vpop.f32.mrb[0].mxu0
      %v6696 = vadd.f32 0.0, %v6695
      %v6697 = vpop.f32.mrb[0].mxu0
      %v6698 = vpop.f32.mrb[0].mxu0
      %v6699 = vadd.f32 0.0, %v6698
      %v6700 = vpop.f32.mrb[0].mxu0
      %6701 = vmatprep.mubr.bf16.mxu0 0
      %6702 = vmatmul.mubr.bf16.gmra.mrb[0].mxu0 %v6569
      %v6703 = vpop.f32.mrb[0].mxu0
      %v6704 = vadd.f32 0.0, %v6703
      %v6705 = vpop.f32.mrb[0].mxu0
      %v6706 = vpop.f32.mrb[0].mxu0
      %v6707 = vadd.f32 0.0, %v6706
      %v6708 = vpop.f32.mrb[0].mxu0
      %6709 = vmatprep.mubr.bf16.mxu0 0
      %6710 = vmatmul.mubr.bf16.gmra.mrb[0].mxu0 %v6572
      %v6711 = vpop.f32.mrb[0].mxu0
      %v6712 = vadd.f32 0.0, %v6711
      %v6713 = vpop.f32.mrb[0].mxu0
      %v6714 = vpop.f32.mrb[0].mxu0
      %v6715 = vadd.f32 0.0, %v6714
      %v6716 = vpop.f32.mrb[0].mxu0
      %6717 = vmatprep.mubr.bf16.mxu0 0
      %6718 = vmatmul.mubr.bf16.gmra.mrb[0].mxu0 %v6575
      %v6719 = vpop.f32.mrb[0].mxu0
      %v6720 = vadd.f32 0.0, %v6719
      %v6721 = vpop.f32.mrb[0].mxu0
      %v6722 = vpop.f32.mrb[0].mxu0
      %v6723 = vadd.f32 0.0, %v6722
      %v6724 = vpop.f32.mrb[0].mxu0
      %6725 = vmatprep.mubr.bf16.mxu0 0
      %6726 = vmatmul.mubr.bf16.gmra.mrb[0].mxu0 %v6578
      %v6727 = vpop.f32.mrb[0].mxu0
      %v6728 = vadd.f32 0.0, %v6727
      %v6729 = vpop.f32.mrb[0].mxu0
      %v6730 = vpop.f32.mrb[0].mxu0
      %v6731 = vadd.f32 0.0, %v6730
      %v6732 = vpop.f32.mrb[0].mxu0
      %6733 = vmatprep.mubr.bf16.mxu0 0
      %6734 = vmatmul.mubr.bf16.gmra.mrb[0].mxu0 %v6581
      %v6735 = vpop.f32.mrb[0].mxu0
      %v6736 = vadd.f32 0.0, %v6735
      %v6737 = vpop.f32.mrb[0].mxu0
      %v6738 = vpop.f32.mrb[0].mxu0
      %v6739 = vadd.f32 0.0, %v6738
      %v6740 = vpop.f32.mrb[0].mxu0
      %6741 = vmatprep.mubr.bf16.mxu0 0
      %6742 = vmatmul.mubr.bf16.gmra.mrb[0].mxu0 %v6584
      %v6743 = vpop.f32.mrb[0].mxu0
      %v6744 = vadd.f32 0.0, %v6743
      %v6745 = vpop.f32.mrb[0].mxu0
      %v6746 = vpop.f32.mrb[0].mxu0
      %v6747 = vadd.f32 0.0, %v6746
      %v6748 = vpop.f32.mrb[0].mxu0
      %6749 = vdwg.mxu0
      %v6750 = vunpack.c.l.b16 %v6116
      %v6751 = vunpack.c.l.b16 %v6125
      %v6752 = vunpack.c.l.b16 %v6138
      %v6753 = vunpack.c.l.b16 %v6147
      %v6754 = vunpack.c.l.b16 %v6160
      %v6755 = vunpack.c.l.b16 %v6169
      %v6756 = vunpack.c.l.b16 %v6182
      %v6757 = vunpack.c.l.b16 %v6191
      %v6758 = vunpack.c.l.b16 %v6204
      %v6759 = vunpack.c.l.b16 %v6213
      %v6760 = vunpack.c.l.b16 %v6226
      %v6761 = vunpack.c.l.b16 %v6235
      %v6762 = vunpack.c.l.b16 %v6248
      %v6763 = vunpack.c.l.b16 %v6257
      %v6764 = vunpack.c.l.b16 %v6270
      %v6765 = vunpack.c.l.b16 %v6279
      %v6766 = vunpack.c.l.b16 %v6292
      %v6767 = vunpack.c.l.b16 %v6301
      %v6768 = vunpack.c.l.b16 %v6314
      %v6769 = vunpack.c.l.b16 %v6323
      %v6770 = vunpack.c.l.b16 %v6336
      %v6771 = vunpack.c.l.b16 %v6345
      %v6772 = vunpack.c.l.b16 %v6358
      %v6773 = vunpack.c.l.b16 %v6367
      %v6774 = vunpack.c.l.b16 %v6380
      %v6775 = vunpack.c.l.b16 %v6389
      %v6776 = vunpack.c.l.b16 %v6402
      %v6777 = vunpack.c.l.b16 %v6411
      %v6778 = vunpack.c.l.b16 %v6424
      %v6779 = vunpack.c.l.b16 %v6433
      %v6780 = vunpack.c.l.b16 %v6446
      %v6781 = vunpack.c.l.b16 %v6455
      %v6782 = vpack.c.b16 %v6751, %v6750
      %v6783 = vpack.c.b16 %v6753, %v6752
      %v6784 = vpack.c.b16 %v6755, %v6754
      %v6785 = vpack.c.b16 %v6757, %v6756
      %v6786 = vpack.c.b16 %v6759, %v6758
      %v6787 = vpack.c.b16 %v6761, %v6760
      %v6788 = vpack.c.b16 %v6763, %v6762
      %v6789 = vpack.c.b16 %v6765, %v6764
      %v6790 = vpack.c.b16 %v6767, %v6766
      %v6791 = vpack.c.b16 %v6769, %v6768
      %v6792 = vpack.c.b16 %v6771, %v6770
      %v6793 = vpack.c.b16 %v6773, %v6772
      %v6794 = vpack.c.b16 %v6775, %v6774
      %v6795 = vpack.c.b16 %v6777, %v6776
      %v6796 = vpack.c.b16 %v6779, %v6778
      %v6797 = vpack.c.b16 %v6781, %v6780
      %v6799 = vsel %vm1097, %v6782, 0
      %v6802 = vsel %vm1097, %v6783, 0
      %v6805 = vsel %vm1097, %v6784, 0
      %v6808 = vsel %vm1097, %v6785, 0
      %v6811 = vsel %vm1097, %v6786, 0
      %v6814 = vsel %vm1097, %v6787, 0
      %v6817 = vsel %vm1097, %v6788, 0
      %v6820 = vsel %vm1097, %v6789, 0
      %v6823 = vsel %vm1097, %v6790, 0
      %v6826 = vsel %vm1097, %v6791, 0
      %v6829 = vsel %vm1097, %v6792, 0
      %v6832 = vsel %vm1097, %v6793, 0
      %v6835 = vsel %vm1097, %v6794, 0
      %v6838 = vsel %vm1097, %v6795, 0
      %v6841 = vsel %vm1097, %v6796, 0
      %v6844 = vsel %vm1097, %v6797, 0
      %v6847 = vsel %vm1146, %v6456, 0
      %6849 = vmatprep.subr.bf16.mxu0 0
      %6850 = vmatpush1.bf16.msra.mxu0 %v6847
      %6851 = vmatprep.subr.bf16.mxu0 0
      %6852 = vmatpush1.bf16.msra.mxu0 0
      %6853 = vmatprep.subr.bf16.mxu0 0
      %6854 = vmatpush1.bf16.msra.mxu0 0
      %6855 = vmatprep.subr.bf16.mxu0 0
      %6856 = vmatpush1.bf16.msra.mxu0 0
      %6857 = vmatprep.subr.bf16.mxu0 0
      %6858 = vmatpush1.bf16.msra.mxu0 0
      %6859 = vmatprep.subr.bf16.mxu0 0
      %6860 = vmatpush1.bf16.msra.mxu0 0
      %6861 = vmatprep.subr.bf16.mxu0 0
      %6862 = vmatpush1.bf16.msra.mxu0 0
      %6863 = vmatprep.subr.bf16.mxu0 0
      %6864 = vmatpush1.bf16.msra.mxu0 0
      %6865 = vmatprep.subr.bf16.mxu0 0
      %6866 = vmatpush1.bf16.msra.mxu0 0
      %6867 = vmatprep.subr.bf16.mxu0 0
      %6868 = vmatpush1.bf16.msra.mxu0 0
      %6869 = vmatprep.subr.bf16.mxu0 0
      %6870 = vmatpush1.bf16.msra.mxu0 0
      %6871 = vmatprep.subr.bf16.mxu0 0
      %6872 = vmatpush1.bf16.msra.mxu0 0
      %6873 = vmatprep.subr.bf16.mxu0 0
      %6874 = vmatpush1.bf16.msra.mxu0 0
      %6875 = vmatprep.subr.bf16.mxu0 0
      %6876 = vmatpush1.bf16.msra.mxu0 0
      %6877 = vmatprep.subr.bf16.mxu0 0
      %6878 = vmatpush1.bf16.msra.mxu0 0
      %6879 = vmatprep.subr.bf16.mxu0 0
      %6880 = vmatpush1.bf16.msra.mxu0 0
      %6881 = vmatprep.mubr.bf16.mxu0 0
      %6882 = vmatmul.mubr.bf16.gmra.mrb[0].mxu0 %v6799
      %v6883 = vpop.f32.mrb[0].mxu0
      %v6884 = vadd.f32 %v6624, %v6883
      %v6885 = vpop.f32.mrb[0].mxu0
      %v6886 = vpop.f32.mrb[0].mxu0
      %v6887 = vadd.f32 %v6627, %v6886
      %v6888 = vpop.f32.mrb[0].mxu0
      %6889 = vmatprep.mubr.bf16.mxu0 0
      %6890 = vmatmul.mubr.bf16.gmra.mrb[0].mxu0 %v6802
      %v6891 = vpop.f32.mrb[0].mxu0
      %v6892 = vadd.f32 %v6632, %v6891
      %v6893 = vpop.f32.mrb[0].mxu0
      %v6894 = vpop.f32.mrb[0].mxu0
      %v6895 = vadd.f32 %v6635, %v6894
      %v6896 = vpop.f32.mrb[0].mxu0
      %6897 = vmatprep.mubr.bf16.mxu0 0
      %6898 = vmatmul.mubr.bf16.gmra.mrb[0].mxu0 %v6805
      %v6899 = vpop.f32.mrb[0].mxu0
      %v6900 = vadd.f32 %v6640, %v6899
      %v6901 = vpop.f32.mrb[0].mxu0
      %v6902 = vpop.f32.mrb[0].mxu0
      %v6903 = vadd.f32 %v6643, %v6902
      %v6904 = vpop.f32.mrb[0].mxu0
      %6905 = vmatprep.mubr.bf16.mxu0 0
      %6906 = vmatmul.mubr.bf16.gmra.mrb[0].mxu0 %v6808
      %v6907 = vpop.f32.mrb[0].mxu0
      %v6908 = vadd.f32 %v6648, %v6907
      %v6909 = vpop.f32.mrb[0].mxu0
      %v6910 = vpop.f32.mrb[0].mxu0
      %v6911 = vadd.f32 %v6651, %v6910
      %v6912 = vpop.f32.mrb[0].mxu0
      %6913 = vmatprep.mubr.bf16.mxu0 0
      %6914 = vmatmul.mubr.bf16.gmra.mrb[0].mxu0 %v6811
      %v6915 = vpop.f32.mrb[0].mxu0
      %v6916 = vadd.f32 %v6656, %v6915
      %v6917 = vpop.f32.mrb[0].mxu0
      %v6918 = vpop.f32.mrb[0].mxu0
      %v6919 = vadd.f32 %v6659, %v6918
      %v6920 = vpop.f32.mrb[0].mxu0
      %6921 = vmatprep.mubr.bf16.mxu0 0
      %6922 = vmatmul.mubr.bf16.gmra.mrb[0].mxu0 %v6814
      %v6923 = vpop.f32.mrb[0].mxu0
      %v6924 = vadd.f32 %v6664, %v6923
      %v6925 = vpop.f32.mrb[0].mxu0
      %v6926 = vpop.f32.mrb[0].mxu0
      %v6927 = vadd.f32 %v6667, %v6926
      %v6928 = vpop.f32.mrb[0].mxu0
      %6929 = vmatprep.mubr.bf16.mxu0 0
      %6930 = vmatmul.mubr.bf16.gmra.mrb[0].mxu0 %v6817
      %v6931 = vpop.f32.mrb[0].mxu0
      %v6932 = vadd.f32 %v6672, %v6931
      %v6933 = vpop.f32.mrb[0].mxu0
      %v6934 = vpop.f32.mrb[0].mxu0
      %v6935 = vadd.f32 %v6675, %v6934
      %v6936 = vpop.f32.mrb[0].mxu0
      %6937 = vmatprep.mubr.bf16.mxu0 0
      %6938 = vmatmul.mubr.bf16.gmra.mrb[0].mxu0 %v6820
      %v6939 = vpop.f32.mrb[0].mxu0
      %v6940 = vadd.f32 %v6680, %v6939
      %v6941 = vpop.f32.mrb[0].mxu0
      %v6942 = vpop.f32.mrb[0].mxu0
      %v6943 = vadd.f32 %v6683, %v6942
      %v6944 = vpop.f32.mrb[0].mxu0
      %6945 = vmatprep.mubr.bf16.mxu0 0
      %6946 = vmatmul.mubr.bf16.gmra.mrb[0].mxu0 %v6823
      %v6947 = vpop.f32.mrb[0].mxu0
      %v6948 = vadd.f32 %v6688, %v6947
      %v6949 = vpop.f32.mrb[0].mxu0
      %v6950 = vpop.f32.mrb[0].mxu0
      %v6951 = vadd.f32 %v6691, %v6950
      %v6952 = vpop.f32.mrb[0].mxu0
      %6953 = vmatprep.mubr.bf16.mxu0 0
      %6954 = vmatmul.mubr.bf16.gmra.mrb[0].mxu0 %v6826
      %v6955 = vpop.f32.mrb[0].mxu0
      %v6956 = vadd.f32 %v6696, %v6955
      %v6957 = vpop.f32.mrb[0].mxu0
      %v6958 = vpop.f32.mrb[0].mxu0
      %v6959 = vadd.f32 %v6699, %v6958
      %v6960 = vpop.f32.mrb[0].mxu0
      %6961 = vmatprep.mubr.bf16.mxu0 0
      %6962 = vmatmul.mubr.bf16.gmra.mrb[0].mxu0 %v6829
      %v6963 = vpop.f32.mrb[0].mxu0
      %v6964 = vadd.f32 %v6704, %v6963
      %v6965 = vpop.f32.mrb[0].mxu0
      %v6966 = vpop.f32.mrb[0].mxu0
      %v6967 = vadd.f32 %v6707, %v6966
      %v6968 = vpop.f32.mrb[0].mxu0
      %6969 = vmatprep.mubr.bf16.mxu0 0
      %6970 = vmatmul.mubr.bf16.gmra.mrb[0].mxu0 %v6832
      %v6971 = vpop.f32.mrb[0].mxu0
      %v6972 = vadd.f32 %v6712, %v6971
      %v6973 = vpop.f32.mrb[0].mxu0
      %v6974 = vpop.f32.mrb[0].mxu0
      %v6975 = vadd.f32 %v6715, %v6974
      %v6976 = vpop.f32.mrb[0].mxu0
      %6977 = vmatprep.mubr.bf16.mxu0 0
      %6978 = vmatmul.mubr.bf16.gmra.mrb[0].mxu0 %v6835
      %v6979 = vpop.f32.mrb[0].mxu0
      %v6980 = vadd.f32 %v6720, %v6979
      %v6981 = vpop.f32.mrb[0].mxu0
      %v6982 = vpop.f32.mrb[0].mxu0
      %v6983 = vadd.f32 %v6723, %v6982
      %v6984 = vpop.f32.mrb[0].mxu0
      %6985 = vmatprep.mubr.bf16.mxu0 0
      %6986 = vmatmul.mubr.bf16.gmra.mrb[0].mxu0 %v6838
      %v6987 = vpop.f32.mrb[0].mxu0
      %v6988 = vadd.f32 %v6728, %v6987
      %v6989 = vpop.f32.mrb[0].mxu0
      %v6990 = vpop.f32.mrb[0].mxu0
      %v6991 = vadd.f32 %v6731, %v6990
      %v6992 = vpop.f32.mrb[0].mxu0
      %6993 = vmatprep.mubr.bf16.mxu0 0
      %6994 = vmatmul.mubr.bf16.gmra.mrb[0].mxu0 %v6841
      %v6995 = vpop.f32.mrb[0].mxu0
      %v6996 = vadd.f32 %v6736, %v6995
      %v6997 = vpop.f32.mrb[0].mxu0
      %v6998 = vpop.f32.mrb[0].mxu0
      %v6999 = vadd.f32 %v6739, %v6998
      %v7000 = vpop.f32.mrb[0].mxu0
      %7001 = vmatprep.mubr.bf16.mxu0 0
      %7002 = vmatmul.mubr.bf16.gmra.mrb[0].mxu0 %v6844
      %v7003 = vpop.f32.mrb[0].mxu0
      %v7004 = vadd.f32 %v6744, %v7003
      %v7005 = vpop.f32.mrb[0].mxu0
      %v7006 = vpop.f32.mrb[0].mxu0
      %v7007 = vadd.f32 %v6747, %v7006
      %v7008 = vpop.f32.mrb[0].mxu0
      %7009 = vdwg.mxu0
      %v7010 = vld [vmem:[#allocation3 + $0x4] sm:$0xf]
      %v7011 = vld [vmem:[#allocation3 + $0x8] sm:$0xf]
      %v7012 = vld [vmem:[#allocation3 + $0xc] sm:$0x1]
      %v7013 = vld [vmem:[#allocation3 + $0x14] sm:$0xf]
      %v7014 = vld [vmem:[#allocation3 + $0x18] sm:$0xf]
      %v7015 = vld [vmem:[#allocation3 + $0x1c] sm:$0x1]
      %v7016 = vld [vmem:[#allocation3 + $0x24] sm:$0xf]
      %v7017 = vld [vmem:[#allocation3 + $0x28] sm:$0xf]
      %v7018 = vld [vmem:[#allocation3 + $0x2c] sm:$0x1]
      %v7019 = vld [vmem:[#allocation3 + $0x34] sm:$0xf]
      %v7020 = vld [vmem:[#allocation3 + $0x38] sm:$0xf]
      %v7021 = vld [vmem:[#allocation3 + $0x3c] sm:$0x1]
      %v7022 = vld [vmem:[#allocation3 + $0x44] sm:$0xf]
      %v7023 = vld [vmem:[#allocation3 + $0x48] sm:$0xf]
      %v7024 = vld [vmem:[#allocation3 + $0x4c] sm:$0x1]
      %v7025 = vld [vmem:[#allocation3 + $0x54] sm:$0xf]
      %v7026 = vld [vmem:[#allocation3 + $0x58] sm:$0xf]
      %v7027 = vld [vmem:[#allocation3 + $0x5c] sm:$0x1]
      %v7028 = vld [vmem:[#allocation3 + $0x64] sm:$0xf]
      %v7029 = vld [vmem:[#allocation3 + $0x68] sm:$0xf]
      %v7030 = vld [vmem:[#allocation3 + $0x6c] sm:$0x1]
      %v7031 = vld [vmem:[#allocation3 + $0x74] sm:$0xf]
      %v7032 = vld [vmem:[#allocation3 + $0x78] sm:$0xf]
      %v7033 = vld [vmem:[#allocation3 + $0x7c] sm:$0x1]
      %v7034 = vld [vmem:[#allocation3 + $0x84] sm:$0xf]
      %v7035 = vld [vmem:[#allocation3 + $0x88] sm:$0xf]
      %v7036 = vld [vmem:[#allocation3 + $0x8c] sm:$0x1]
      %v7037 = vld [vmem:[#allocation3 + $0x94] sm:$0xf]
      %v7038 = vld [vmem:[#allocation3 + $0x98] sm:$0xf]
      %v7039 = vld [vmem:[#allocation3 + $0x9c] sm:$0x1]
      %v7040 = vld [vmem:[#allocation3 + $0xa4] sm:$0xf]
      %v7041 = vld [vmem:[#allocation3 + $0xa8] sm:$0xf]
      %v7042 = vld [vmem:[#allocation3 + $0xac] sm:$0x1]
      %v7043 = vld [vmem:[#allocation3 + $0xb4] sm:$0xf]
      %v7044 = vld [vmem:[#allocation3 + $0xb8] sm:$0xf]
      %v7045 = vld [vmem:[#allocation3 + $0xbc] sm:$0x1]
      %v7046 = vld [vmem:[#allocation3 + $0xc4] sm:$0xf]
      %v7047 = vld [vmem:[#allocation3 + $0xc8] sm:$0xf]
      %v7048 = vld [vmem:[#allocation3 + $0xcc] sm:$0x1]
      %v7049 = vld [vmem:[#allocation3 + $0xd4] sm:$0xf]
      %v7050 = vld [vmem:[#allocation3 + $0xd8] sm:$0xf]
      %v7051 = vld [vmem:[#allocation3 + $0xdc] sm:$0x1]
      %v7052 = vld [vmem:[#allocation3 + $0xe4] sm:$0xf]
      %v7053 = vld [vmem:[#allocation3 + $0xe8] sm:$0xf]
      %v7054 = vld [vmem:[#allocation3 + $0xec] sm:$0x1]
      %v7055 = vld [vmem:[#allocation3 + $0xf4] sm:$0xf]
      %v7056 = vld [vmem:[#allocation3 + $0xf8] sm:$0xf]
      %v7057 = vld [vmem:[#allocation3 + $0xfc] sm:$0x1]
      %v7059 = vshrl.u32 %v7010, 16
      %v7061 = vrot.slane %v7059, 4
      %v7062 = vshll.u32 %v7010, 16
      %v7064 = vrot.slane %v7062, 5
      %v7065 = vor.u32 %v7061, %v7064
      %v7066 = vrot.slane %v7065, 4
      %v7068 = vshll.u32 %v7011, 16
      %v7070 = vrot.slane %v7068, 5
      %v7071 = vsel %vm1621, %v7066, %v7070
      %v7072 = vshrl.u32 %v7011, 16
      %v7074 = vrot.slane %v7072, 4
      %v7075 = vor.u32 %v7074, %v7070
      %v7076 = vrot.slane %v7075, 4
      %v7078 = vshll.u32 %v7012, 16
      %v7080 = vrot.slane %v7078, 5
      %v7081 = vsel %vm1621, %v7076, %v7080
      %v7083 = vshrl.u32 %v7013, 16
      %v7085 = vrot.slane %v7083, 4
      %v7086 = vshll.u32 %v7013, 16
      %v7088 = vrot.slane %v7086, 5
      %v7089 = vor.u32 %v7085, %v7088
      %v7090 = vrot.slane %v7089, 4
      %v7092 = vshll.u32 %v7014, 16
      %v7094 = vrot.slane %v7092, 5
      %v7095 = vsel %vm1621, %v7090, %v7094
      %v7096 = vshrl.u32 %v7014, 16
      %v7098 = vrot.slane %v7096, 4
      %v7099 = vor.u32 %v7098, %v7094
      %v7100 = vrot.slane %v7099, 4
      %v7102 = vshll.u32 %v7015, 16
      %v7104 = vrot.slane %v7102, 5
      %v7105 = vsel %vm1621, %v7100, %v7104
      %v7107 = vshrl.u32 %v7016, 16
      %v7109 = vrot.slane %v7107, 4
      %v7110 = vshll.u32 %v7016, 16
      %v7112 = vrot.slane %v7110, 5
      %v7113 = vor.u32 %v7109, %v7112
      %v7114 = vrot.slane %v7113, 4
      %v7116 = vshll.u32 %v7017, 16
      %v7118 = vrot.slane %v7116, 5
      %v7119 = vsel %vm1621, %v7114, %v7118
      %v7120 = vshrl.u32 %v7017, 16
      %v7122 = vrot.slane %v7120, 4
      %v7123 = vor.u32 %v7122, %v7118
      %v7124 = vrot.slane %v7123, 4
      %v7126 = vshll.u32 %v7018, 16
      %v7128 = vrot.slane %v7126, 5
      %v7129 = vsel %vm1621, %v7124, %v7128
      %v7131 = vshrl.u32 %v7019, 16
      %v7133 = vrot.slane %v7131, 4
      %v7134 = vshll.u32 %v7019, 16
      %v7136 = vrot.slane %v7134, 5
      %v7137 = vor.u32 %v7133, %v7136
      %v7138 = vrot.slane %v7137, 4
      %v7140 = vshll.u32 %v7020, 16
      %v7142 = vrot.slane %v7140, 5
      %v7143 = vsel %vm1621, %v7138, %v7142
      %v7144 = vshrl.u32 %v7020, 16
      %v7146 = vrot.slane %v7144, 4
      %v7147 = vor.u32 %v7146, %v7142
      %v7148 = vrot.slane %v7147, 4
      %v7150 = vshll.u32 %v7021, 16
      %v7152 = vrot.slane %v7150, 5
      %v7153 = vsel %vm1621, %v7148, %v7152
      %v7155 = vshrl.u32 %v7022, 16
      %v7157 = vrot.slane %v7155, 4
      %v7158 = vshll.u32 %v7022, 16
      %v7160 = vrot.slane %v7158, 5
      %v7161 = vor.u32 %v7157, %v7160
      %v7162 = vrot.slane %v7161, 4
      %v7164 = vshll.u32 %v7023, 16
      %v7166 = vrot.slane %v7164, 5
      %v7167 = vsel %vm1621, %v7162, %v7166
      %v7168 = vshrl.u32 %v7023, 16
      %v7170 = vrot.slane %v7168, 4
      %v7171 = vor.u32 %v7170, %v7166
      %v7172 = vrot.slane %v7171, 4
      %v7174 = vshll.u32 %v7024, 16
      %v7176 = vrot.slane %v7174, 5
      %v7177 = vsel %vm1621, %v7172, %v7176
      %v7179 = vshrl.u32 %v7025, 16
      %v7181 = vrot.slane %v7179, 4
      %v7182 = vshll.u32 %v7025, 16
      %v7184 = vrot.slane %v7182, 5
      %v7185 = vor.u32 %v7181, %v7184
      %v7186 = vrot.slane %v7185, 4
      %v7188 = vshll.u32 %v7026, 16
      %v7190 = vrot.slane %v7188, 5
      %v7191 = vsel %vm1621, %v7186, %v7190
      %v7192 = vshrl.u32 %v7026, 16
      %v7194 = vrot.slane %v7192, 4
      %v7195 = vor.u32 %v7194, %v7190
      %v7196 = vrot.slane %v7195, 4
      %v7198 = vshll.u32 %v7027, 16
      %v7200 = vrot.slane %v7198, 5
      %v7201 = vsel %vm1621, %v7196, %v7200
      %v7203 = vshrl.u32 %v7028, 16
      %v7205 = vrot.slane %v7203, 4
      %v7206 = vshll.u32 %v7028, 16
      %v7208 = vrot.slane %v7206, 5
      %v7209 = vor.u32 %v7205, %v7208
      %v7210 = vrot.slane %v7209, 4
      %v7212 = vshll.u32 %v7029, 16
      %v7214 = vrot.slane %v7212, 5
      %v7215 = vsel %vm1621, %v7210, %v7214
      %v7216 = vshrl.u32 %v7029, 16
      %v7218 = vrot.slane %v7216, 4
      %v7219 = vor.u32 %v7218, %v7214
      %v7220 = vrot.slane %v7219, 4
      %v7222 = vshll.u32 %v7030, 16
      %v7224 = vrot.slane %v7222, 5
      %v7225 = vsel %vm1621, %v7220, %v7224
      %v7227 = vshrl.u32 %v7031, 16
      %v7229 = vrot.slane %v7227, 4
      %v7230 = vshll.u32 %v7031, 16
      %v7232 = vrot.slane %v7230, 5
      %v7233 = vor.u32 %v7229, %v7232
      %v7234 = vrot.slane %v7233, 4
      %v7236 = vshll.u32 %v7032, 16
      %v7238 = vrot.slane %v7236, 5
      %v7239 = vsel %vm1621, %v7234, %v7238
      %v7240 = vshrl.u32 %v7032, 16
      %v7242 = vrot.slane %v7240, 4
      %v7243 = vor.u32 %v7242, %v7238
      %v7244 = vrot.slane %v7243, 4
      %v7246 = vshll.u32 %v7033, 16
      %v7248 = vrot.slane %v7246, 5
      %v7249 = vsel %vm1621, %v7244, %v7248
      %v7251 = vshrl.u32 %v7034, 16
      %v7253 = vrot.slane %v7251, 4
      %v7254 = vshll.u32 %v7034, 16
      %v7256 = vrot.slane %v7254, 5
      %v7257 = vor.u32 %v7253, %v7256
      %v7258 = vrot.slane %v7257, 4
      %v7260 = vshll.u32 %v7035, 16
      %v7262 = vrot.slane %v7260, 5
      %v7263 = vsel %vm1621, %v7258, %v7262
      %v7264 = vshrl.u32 %v7035, 16
      %v7266 = vrot.slane %v7264, 4
      %v7267 = vor.u32 %v7266, %v7262
      %v7268 = vrot.slane %v7267, 4
      %v7270 = vshll.u32 %v7036, 16
      %v7272 = vrot.slane %v7270, 5
      %v7273 = vsel %vm1621, %v7268, %v7272
      %v7275 = vshrl.u32 %v7037, 16
      %v7277 = vrot.slane %v7275, 4
      %v7278 = vshll.u32 %v7037, 16
      %v7280 = vrot.slane %v7278, 5
      %v7281 = vor.u32 %v7277, %v7280
      %v7282 = vrot.slane %v7281, 4
      %v7284 = vshll.u32 %v7038, 16
      %v7286 = vrot.slane %v7284, 5
      %v7287 = vsel %vm1621, %v7282, %v7286
      %v7288 = vshrl.u32 %v7038, 16
      %v7290 = vrot.slane %v7288, 4
      %v7291 = vor.u32 %v7290, %v7286
      %v7292 = vrot.slane %v7291, 4
      %v7294 = vshll.u32 %v7039, 16
      %v7296 = vrot.slane %v7294, 5
      %v7297 = vsel %vm1621, %v7292, %v7296
      %v7299 = vshrl.u32 %v7040, 16
      %v7301 = vrot.slane %v7299, 4
      %v7302 = vshll.u32 %v7040, 16
      %v7304 = vrot.slane %v7302, 5
      %v7305 = vor.u32 %v7301, %v7304
      %v7306 = vrot.slane %v7305, 4
      %v7308 = vshll.u32 %v7041, 16
      %v7310 = vrot.slane %v7308, 5
      %v7311 = vsel %vm1621, %v7306, %v7310
      %v7312 = vshrl.u32 %v7041, 16
      %v7314 = vrot.slane %v7312, 4
      %v7315 = vor.u32 %v7314, %v7310
      %v7316 = vrot.slane %v7315, 4
      %v7318 = vshll.u32 %v7042, 16
      %v7320 = vrot.slane %v7318, 5
      %v7321 = vsel %vm1621, %v7316, %v7320
      %v7323 = vshrl.u32 %v7043, 16
      %v7325 = vrot.slane %v7323, 4
      %v7326 = vshll.u32 %v7043, 16
      %v7328 = vrot.slane %v7326, 5
      %v7329 = vor.u32 %v7325, %v7328
      %v7330 = vrot.slane %v7329, 4
      %v7332 = vshll.u32 %v7044, 16
      %v7334 = vrot.slane %v7332, 5
      %v7335 = vsel %vm1621, %v7330, %v7334
      %v7336 = vshrl.u32 %v7044, 16
      %v7338 = vrot.slane %v7336, 4
      %v7339 = vor.u32 %v7338, %v7334
      %v7340 = vrot.slane %v7339, 4
      %v7342 = vshll.u32 %v7045, 16
      %v7344 = vrot.slane %v7342, 5
      %v7345 = vsel %vm1621, %v7340, %v7344
      %v7347 = vshrl.u32 %v7046, 16
      %v7349 = vrot.slane %v7347, 4
      %v7350 = vshll.u32 %v7046, 16
      %v7352 = vrot.slane %v7350, 5
      %v7353 = vor.u32 %v7349, %v7352
      %v7354 = vrot.slane %v7353, 4
      %v7356 = vshll.u32 %v7047, 16
      %v7358 = vrot.slane %v7356, 5
      %v7359 = vsel %vm1621, %v7354, %v7358
      %v7360 = vshrl.u32 %v7047, 16
      %v7362 = vrot.slane %v7360, 4
      %v7363 = vor.u32 %v7362, %v7358
      %v7364 = vrot.slane %v7363, 4
      %v7366 = vshll.u32 %v7048, 16
      %v7368 = vrot.slane %v7366, 5
      %v7369 = vsel %vm1621, %v7364, %v7368
      %v7371 = vshrl.u32 %v7049, 16
      %v7373 = vrot.slane %v7371, 4
      %v7374 = vshll.u32 %v7049, 16
      %v7376 = vrot.slane %v7374, 5
      %v7377 = vor.u32 %v7373, %v7376
      %v7378 = vrot.slane %v7377, 4
      %v7380 = vshll.u32 %v7050, 16
      %v7382 = vrot.slane %v7380, 5
      %v7383 = vsel %vm1621, %v7378, %v7382
      %v7384 = vshrl.u32 %v7050, 16
      %v7386 = vrot.slane %v7384, 4
      %v7387 = vor.u32 %v7386, %v7382
      %v7388 = vrot.slane %v7387, 4
      %v7390 = vshll.u32 %v7051, 16
      %v7392 = vrot.slane %v7390, 5
      %v7393 = vsel %vm1621, %v7388, %v7392
      %v7395 = vshrl.u32 %v7052, 16
      %v7397 = vrot.slane %v7395, 4
      %v7398 = vshll.u32 %v7052, 16
      %v7400 = vrot.slane %v7398, 5
      %v7401 = vor.u32 %v7397, %v7400
      %v7402 = vrot.slane %v7401, 4
      %v7404 = vshll.u32 %v7053, 16
      %v7406 = vrot.slane %v7404, 5
      %v7407 = vsel %vm1621, %v7402, %v7406
      %v7408 = vshrl.u32 %v7053, 16
      %v7410 = vrot.slane %v7408, 4
      %v7411 = vor.u32 %v7410, %v7406
      %v7412 = vrot.slane %v7411, 4
      %v7414 = vshll.u32 %v7054, 16
      %v7416 = vrot.slane %v7414, 5
      %v7417 = vsel %vm1621, %v7412, %v7416
      %v7419 = vshrl.u32 %v7055, 16
      %v7421 = vrot.slane %v7419, 4
      %v7422 = vshll.u32 %v7055, 16
      %v7424 = vrot.slane %v7422, 5
      %v7425 = vor.u32 %v7421, %v7424
      %v7426 = vrot.slane %v7425, 4
      %v7428 = vshll.u32 %v7056, 16
      %v7430 = vrot.slane %v7428, 5
      %v7431 = vsel %vm1621, %v7426, %v7430
      %v7432 = vshrl.u32 %v7056, 16
      %v7434 = vrot.slane %v7432, 4
      %v7435 = vor.u32 %v7434, %v7430
      %v7436 = vrot.slane %v7435, 4
      %v7438 = vshll.u32 %v7057, 16
      %v7440 = vrot.slane %v7438, 5
      %v7441 = vsel %vm1621, %v7436, %v7440
      %v7442 = vld [vmem:[%s4 + $0x8] sm:$0xf]
      %v7443 = vunpack.c.l.b16 %v7071
      %v7444 = vunpack.c.l.b16 %v7081
      %v7445 = vunpack.c.l.b16 %v7095
      %v7446 = vunpack.c.l.b16 %v7105
      %v7447 = vunpack.c.l.b16 %v7119
      %v7448 = vunpack.c.l.b16 %v7129
      %v7449 = vunpack.c.l.b16 %v7143
      %v7450 = vunpack.c.l.b16 %v7153
      %v7451 = vunpack.c.l.b16 %v7167
      %v7452 = vunpack.c.l.b16 %v7177
      %v7453 = vunpack.c.l.b16 %v7191
      %v7454 = vunpack.c.l.b16 %v7201
      %v7455 = vunpack.c.l.b16 %v7215
      %v7456 = vunpack.c.l.b16 %v7225
      %v7457 = vunpack.c.l.b16 %v7239
      %v7458 = vunpack.c.l.b16 %v7249
      %v7459 = vunpack.c.l.b16 %v7263
      %v7460 = vunpack.c.l.b16 %v7273
      %v7461 = vunpack.c.l.b16 %v7287
      %v7462 = vunpack.c.l.b16 %v7297
      %v7463 = vunpack.c.l.b16 %v7311
      %v7464 = vunpack.c.l.b16 %v7321
      %v7465 = vunpack.c.l.b16 %v7335
      %v7466 = vunpack.c.l.b16 %v7345
      %v7467 = vunpack.c.l.b16 %v7359
      %v7468 = vunpack.c.l.b16 %v7369
      %v7469 = vunpack.c.l.b16 %v7383
      %v7470 = vunpack.c.l.b16 %v7393
      %v7471 = vunpack.c.l.b16 %v7407
      %v7472 = vunpack.c.l.b16 %v7417
      %v7473 = vunpack.c.l.b16 %v7431
      %v7474 = vunpack.c.l.b16 %v7441
      %v7475 = vpack.c.b16 %v7444, %v7443
      %v7476 = vpack.c.b16 %v7446, %v7445
      %v7477 = vpack.c.b16 %v7448, %v7447
      %v7478 = vpack.c.b16 %v7450, %v7449
      %v7479 = vpack.c.b16 %v7452, %v7451
      %v7480 = vpack.c.b16 %v7454, %v7453
      %v7481 = vpack.c.b16 %v7456, %v7455
      %v7482 = vpack.c.b16 %v7458, %v7457
      %v7483 = vpack.c.b16 %v7460, %v7459
      %v7484 = vpack.c.b16 %v7462, %v7461
      %v7485 = vpack.c.b16 %v7464, %v7463
      %v7486 = vpack.c.b16 %v7466, %v7465
      %v7487 = vpack.c.b16 %v7468, %v7467
      %v7488 = vpack.c.b16 %v7470, %v7469
      %v7489 = vpack.c.b16 %v7472, %v7471
      %v7490 = vpack.c.b16 %v7474, %v7473
      %v7492 = vsel %vm1097, %v7475, 0
      %v7495 = vsel %vm1097, %v7476, 0
      %v7498 = vsel %vm1097, %v7477, 0
      %v7501 = vsel %vm1097, %v7478, 0
      %v7504 = vsel %vm1097, %v7479, 0
      %v7507 = vsel %vm1097, %v7480, 0
      %v7510 = vsel %vm1097, %v7481, 0
      %v7513 = vsel %vm1097, %v7482, 0
      %v7516 = vsel %vm1097, %v7483, 0
      %v7519 = vsel %vm1097, %v7484, 0
      %v7522 = vsel %vm1097, %v7485, 0
      %v7525 = vsel %vm1097, %v7486, 0
      %v7528 = vsel %vm1097, %v7487, 0
      %v7531 = vsel %vm1097, %v7488, 0
      %v7534 = vsel %vm1097, %v7489, 0
      %v7537 = vsel %vm1097, %v7490, 0
      %v7540 = vsel %vm1146, %v7442, 0
      %7542 = vmatprep.subr.bf16.mxu0 0
      %7543 = vmatpush1.bf16.msra.mxu0 %v7540
      %7544 = vmatprep.subr.bf16.mxu0 0
      %7545 = vmatpush1.bf16.msra.mxu0 0
      %7546 = vmatprep.subr.bf16.mxu0 0
      %7547 = vmatpush1.bf16.msra.mxu0 0
      %7548 = vmatprep.subr.bf16.mxu0 0
      %7549 = vmatpush1.bf16.msra.mxu0 0
      %7550 = vmatprep.subr.bf16.mxu0 0
      %7551 = vmatpush1.bf16.msra.mxu0 0
      %7552 = vmatprep.subr.bf16.mxu0 0
      %7553 = vmatpush1.bf16.msra.mxu0 0
      %7554 = vmatprep.subr.bf16.mxu0 0
      %7555 = vmatpush1.bf16.msra.mxu0 0
      %7556 = vmatprep.subr.bf16.mxu0 0
      %7557 = vmatpush1.bf16.msra.mxu0 0
      %7558 = vmatprep.subr.bf16.mxu0 0
      %7559 = vmatpush1.bf16.msra.mxu0 0
      %7560 = vmatprep.subr.bf16.mxu0 0
      %7561 = vmatpush1.bf16.msra.mxu0 0
      %7562 = vmatprep.subr.bf16.mxu0 0
      %7563 = vmatpush1.bf16.msra.mxu0 0
      %7564 = vmatprep.subr.bf16.mxu0 0
      %7565 = vmatpush1.bf16.msra.mxu0 0
      %7566 = vmatprep.subr.bf16.mxu0 0
      %7567 = vmatpush1.bf16.msra.mxu0 0
      %7568 = vmatprep.subr.bf16.mxu0 0
      %7569 = vmatpush1.bf16.msra.mxu0 0
      %7570 = vmatprep.subr.bf16.mxu0 0
      %7571 = vmatpush1.bf16.msra.mxu0 0
      %7572 = vmatprep.subr.bf16.mxu0 0
      %7573 = vmatpush1.bf16.msra.mxu0 0
      %7574 = vmatprep.mubr.bf16.mxu0 0
      %7575 = vmatmul.mubr.bf16.gmra.mrb[0].mxu0 %v7492
      %v7576 = vpop.f32.mrb[0].mxu0
      %v7577 = vadd.f32 0.0, %v7576
      %v7578 = vpop.f32.mrb[0].mxu0
      %v7579 = vpop.f32.mrb[0].mxu0
      %v7580 = vadd.f32 0.0, %v7579
      %v7581 = vpop.f32.mrb[0].mxu0
      %7582 = vmatprep.mubr.bf16.mxu0 0
      %7583 = vmatmul.mubr.bf16.gmra.mrb[0].mxu0 %v7495
      %v7584 = vpop.f32.mrb[0].mxu0
      %v7585 = vadd.f32 0.0, %v7584
      %v7586 = vpop.f32.mrb[0].mxu0
      %v7587 = vpop.f32.mrb[0].mxu0
      %v7588 = vadd.f32 0.0, %v7587
      %v7589 = vpop.f32.mrb[0].mxu0
      %7590 = vmatprep.mubr.bf16.mxu0 0
      %7591 = vmatmul.mubr.bf16.gmra.mrb[0].mxu0 %v7498
      %v7592 = vpop.f32.mrb[0].mxu0
      %v7593 = vadd.f32 0.0, %v7592
      %v7594 = vpop.f32.mrb[0].mxu0
      %v7595 = vpop.f32.mrb[0].mxu0
      %v7596 = vadd.f32 0.0, %v7595
      %v7597 = vpop.f32.mrb[0].mxu0
      %7598 = vmatprep.mubr.bf16.mxu0 0
      %7599 = vmatmul.mubr.bf16.gmra.mrb[0].mxu0 %v7501
      %v7600 = vpop.f32.mrb[0].mxu0
      %v7601 = vadd.f32 0.0, %v7600
      %v7602 = vpop.f32.mrb[0].mxu0
      %v7603 = vpop.f32.mrb[0].mxu0
      %v7604 = vadd.f32 0.0, %v7603
      %v7605 = vpop.f32.mrb[0].mxu0
      %7606 = vmatprep.mubr.bf16.mxu0 0
      %7607 = vmatmul.mubr.bf16.gmra.mrb[0].mxu0 %v7504
      %v7608 = vpop.f32.mrb[0].mxu0
      %v7609 = vadd.f32 0.0, %v7608
      %v7610 = vpop.f32.mrb[0].mxu0
      %v7611 = vpop.f32.mrb[0].mxu0
      %v7612 = vadd.f32 0.0, %v7611
      %v7613 = vpop.f32.mrb[0].mxu0
      %7614 = vmatprep.mubr.bf16.mxu0 0
      %7615 = vmatmul.mubr.bf16.gmra.mrb[0].mxu0 %v7507
      %v7616 = vpop.f32.mrb[0].mxu0
      %v7617 = vadd.f32 0.0, %v7616
      %v7618 = vpop.f32.mrb[0].mxu0
      %v7619 = vpop.f32.mrb[0].mxu0
      %v7620 = vadd.f32 0.0, %v7619
      %v7621 = vpop.f32.mrb[0].mxu0
      %7622 = vmatprep.mubr.bf16.mxu0 0
      %7623 = vmatmul.mubr.bf16.gmra.mrb[0].mxu0 %v7510
      %v7624 = vpop.f32.mrb[0].mxu0
      %v7625 = vadd.f32 0.0, %v7624
      %v7626 = vpop.f32.mrb[0].mxu0
      %v7627 = vpop.f32.mrb[0].mxu0
      %v7628 = vadd.f32 0.0, %v7627
      %v7629 = vpop.f32.mrb[0].mxu0
      %7630 = vmatprep.mubr.bf16.mxu0 0
      %7631 = vmatmul.mubr.bf16.gmra.mrb[0].mxu0 %v7513
      %v7632 = vpop.f32.mrb[0].mxu0
      %v7633 = vadd.f32 0.0, %v7632
      %v7634 = vpop.f32.mrb[0].mxu0
      %v7635 = vpop.f32.mrb[0].mxu0
      %v7636 = vadd.f32 0.0, %v7635
      %v7637 = vpop.f32.mrb[0].mxu0
      %7638 = vmatprep.mubr.bf16.mxu0 0
      %7639 = vmatmul.mubr.bf16.gmra.mrb[0].mxu0 %v7516
      %v7640 = vpop.f32.mrb[0].mxu0
      %v7641 = vadd.f32 0.0, %v7640
      %v7642 = vpop.f32.mrb[0].mxu0
      %v7643 = vpop.f32.mrb[0].mxu0
      %v7644 = vadd.f32 0.0, %v7643
      %v7645 = vpop.f32.mrb[0].mxu0
      %7646 = vmatprep.mubr.bf16.mxu0 0
      %7647 = vmatmul.mubr.bf16.gmra.mrb[0].mxu0 %v7519
      %v7648 = vpop.f32.mrb[0].mxu0
      %v7649 = vadd.f32 0.0, %v7648
      %v7650 = vpop.f32.mrb[0].mxu0
      %v7651 = vpop.f32.mrb[0].mxu0
      %v7652 = vadd.f32 0.0, %v7651
      %v7653 = vpop.f32.mrb[0].mxu0
      %7654 = vmatprep.mubr.bf16.mxu0 0
      %7655 = vmatmul.mubr.bf16.gmra.mrb[0].mxu0 %v7522
      %v7656 = vpop.f32.mrb[0].mxu0
      %v7657 = vadd.f32 0.0, %v7656
      %v7658 = vpop.f32.mrb[0].mxu0
      %v7659 = vpop.f32.mrb[0].mxu0
      %v7660 = vadd.f32 0.0, %v7659
      %v7661 = vpop.f32.mrb[0].mxu0
      %7662 = vmatprep.mubr.bf16.mxu0 0
      %7663 = vmatmul.mubr.bf16.gmra.mrb[0].mxu0 %v7525
      %v7664 = vpop.f32.mrb[0].mxu0
      %v7665 = vadd.f32 0.0, %v7664
      %v7666 = vpop.f32.mrb[0].mxu0
      %v7667 = vpop.f32.mrb[0].mxu0
      %v7668 = vadd.f32 0.0, %v7667
      %v7669 = vpop.f32.mrb[0].mxu0
      %7670 = vmatprep.mubr.bf16.mxu0 0
      %7671 = vmatmul.mubr.bf16.gmra.mrb[0].mxu0 %v7528
      %v7672 = vpop.f32.mrb[0].mxu0
      %v7673 = vadd.f32 0.0, %v7672
      %v7674 = vpop.f32.mrb[0].mxu0
      %v7675 = vpop.f32.mrb[0].mxu0
      %v7676 = vadd.f32 0.0, %v7675
      %v7677 = vpop.f32.mrb[0].mxu0
      %7678 = vmatprep.mubr.bf16.mxu0 0
      %7679 = vmatmul.mubr.bf16.gmra.mrb[0].mxu0 %v7531
      %v7680 = vpop.f32.mrb[0].mxu0
      %v7681 = vadd.f32 0.0, %v7680
      %v7682 = vpop.f32.mrb[0].mxu0
      %v7683 = vpop.f32.mrb[0].mxu0
      %v7684 = vadd.f32 0.0, %v7683
      %v7685 = vpop.f32.mrb[0].mxu0
      %7686 = vmatprep.mubr.bf16.mxu0 0
      %7687 = vmatmul.mubr.bf16.gmra.mrb[0].mxu0 %v7534
      %v7688 = vpop.f32.mrb[0].mxu0
      %v7689 = vadd.f32 0.0, %v7688
      %v7690 = vpop.f32.mrb[0].mxu0
      %v7691 = vpop.f32.mrb[0].mxu0
      %v7692 = vadd.f32 0.0, %v7691
      %v7693 = vpop.f32.mrb[0].mxu0
      %7694 = vmatprep.mubr.bf16.mxu0 0
      %7695 = vmatmul.mubr.bf16.gmra.mrb[0].mxu0 %v7537
      %v7696 = vpop.f32.mrb[0].mxu0
      %v7697 = vadd.f32 0.0, %v7696
      %v7698 = vpop.f32.mrb[0].mxu0
      %v7699 = vpop.f32.mrb[0].mxu0
      %v7700 = vadd.f32 0.0, %v7699
      %v7701 = vpop.f32.mrb[0].mxu0
      %7702 = vdwg.mxu0
      %v7703 = vadd.f32 %v6884, %v7577
      %v7704 = vadd.f32 %v6887, %v7580
      %v7705 = vadd.f32 %v6892, %v7585
      %v7706 = vadd.f32 %v6895, %v7588
      %v7707 = vadd.f32 %v6900, %v7593
      %v7708 = vadd.f32 %v6903, %v7596
      %v7709 = vadd.f32 %v6908, %v7601
      %v7710 = vadd.f32 %v6911, %v7604
      %v7711 = vadd.f32 %v6916, %v7609
      %v7712 = vadd.f32 %v6919, %v7612
      %v7713 = vadd.f32 %v6924, %v7617
      %v7714 = vadd.f32 %v6927, %v7620
      %v7715 = vadd.f32 %v6932, %v7625
      %v7716 = vadd.f32 %v6935, %v7628
      %v7717 = vadd.f32 %v6940, %v7633
      %v7718 = vadd.f32 %v6943, %v7636
      %v7719 = vadd.f32 %v6948, %v7641
      %v7720 = vadd.f32 %v6951, %v7644
      %v7721 = vadd.f32 %v6956, %v7649
      %v7722 = vadd.f32 %v6959, %v7652
      %v7723 = vadd.f32 %v6964, %v7657
      %v7724 = vadd.f32 %v6967, %v7660
      %v7725 = vadd.f32 %v6972, %v7665
      %v7726 = vadd.f32 %v6975, %v7668
      %v7727 = vadd.f32 %v6980, %v7673
      %v7728 = vadd.f32 %v6983, %v7676
      %v7729 = vadd.f32 %v6988, %v7681
      %v7730 = vadd.f32 %v6991, %v7684
      %v7731 = vadd.f32 %v6996, %v7689
      %v7732 = vadd.f32 %v6999, %v7692
      %v7733 = vadd.f32 %v7004, %v7697
      %v7734 = vadd.f32 %v7007, %v7700
      %v7735 = vld [vmem:[%s418] sm:$0x8]
      %v7736 = vld [vmem:[%s418 + $0x4] sm:$0xf]
      %v7737 = vld [vmem:[%s418 + $0x8] sm:$0xf]
      %v7738 = vld [vmem:[%s418 + $0x10] sm:$0x8]
      %v7739 = vld [vmem:[%s418 + $0x14] sm:$0xf]
      %v7740 = vld [vmem:[%s418 + $0x18] sm:$0xf]
      %v7741 = vld [vmem:[%s418 + $0x20] sm:$0x8]
      %v7742 = vld [vmem:[%s418 + $0x24] sm:$0xf]
      %v7743 = vld [vmem:[%s418 + $0x28] sm:$0xf]
      %v7744 = vld [vmem:[%s418 + $0x30] sm:$0x8]
      %v7745 = vld [vmem:[%s418 + $0x34] sm:$0xf]
      %v7746 = vld [vmem:[%s418 + $0x38] sm:$0xf]
      %v7747 = vld [vmem:[%s418 + $0x40] sm:$0x8]
      %v7748 = vld [vmem:[%s418 + $0x44] sm:$0xf]
      %v7749 = vld [vmem:[%s418 + $0x48] sm:$0xf]
      %v7750 = vld [vmem:[%s418 + $0x50] sm:$0x8]
      %v7751 = vld [vmem:[%s418 + $0x54] sm:$0xf]
      %v7752 = vld [vmem:[%s418 + $0x58] sm:$0xf]
      %v7753 = vld [vmem:[%s418 + $0x60] sm:$0x8]
      %v7754 = vld [vmem:[%s418 + $0x64] sm:$0xf]
      %v7755 = vld [vmem:[%s418 + $0x68] sm:$0xf]
      %v7756 = vld [vmem:[%s418 + $0x70] sm:$0x8]
      %v7757 = vld [vmem:[%s418 + $0x74] sm:$0xf]
      %v7758 = vld [vmem:[%s418 + $0x78] sm:$0xf]
      %v7759 = vld [vmem:[%s418 + $0x80] sm:$0x8]
      %v7760 = vld [vmem:[%s418 + $0x84] sm:$0xf]
      %v7761 = vld [vmem:[%s418 + $0x88] sm:$0xf]
      %v7762 = vld [vmem:[%s418 + $0x90] sm:$0x8]
      %v7763 = vld [vmem:[%s418 + $0x94] sm:$0xf]
      %v7764 = vld [vmem:[%s418 + $0x98] sm:$0xf]
      %v7765 = vld [vmem:[%s418 + $0xa0] sm:$0x8]
      %v7766 = vld [vmem:[%s418 + $0xa4] sm:$0xf]
      %v7767 = vld [vmem:[%s418 + $0xa8] sm:$0xf]
      %v7768 = vld [vmem:[%s418 + $0xb0] sm:$0x8]
      %v7769 = vld [vmem:[%s418 + $0xb4] sm:$0xf]
      %v7770 = vld [vmem:[%s418 + $0xb8] sm:$0xf]
      %v7771 = vld [vmem:[%s418 + $0xc0] sm:$0x8]
      %v7772 = vld [vmem:[%s418 + $0xc4] sm:$0xf]
      %v7773 = vld [vmem:[%s418 + $0xc8] sm:$0xf]
      %v7774 = vld [vmem:[%s418 + $0xd0] sm:$0x8]
      %v7775 = vld [vmem:[%s418 + $0xd4] sm:$0xf]
      %v7776 = vld [vmem:[%s418 + $0xd8] sm:$0xf]
      %v7777 = vld [vmem:[%s418 + $0xe0] sm:$0x8]
      %v7778 = vld [vmem:[%s418 + $0xe4] sm:$0xf]
      %v7779 = vld [vmem:[%s418 + $0xe8] sm:$0xf]
      %v7780 = vld [vmem:[%s418 + $0xf0] sm:$0x8]
      %v7781 = vld [vmem:[%s418 + $0xf4] sm:$0xf]
      %v7782 = vld [vmem:[%s418 + $0xf8] sm:$0xf]
      %v7784 = vshrl.u32 %v7735, 16
      %v7786 = vrot.slane %v7784, 7
      %v7787 = vrot.slane %v7786, 4
      %v7789 = vshrl.u32 %v7736, 16
      %v7791 = vrot.slane %v7789, 7
      %v7792 = vshll.u32 %v7736, 16
      %v7794 = vor.u32 %v7791, %v7792
      %v7795 = vsel %vm662, %v7787, %v7794
      %v7796 = vrot.slane %v7791, 4
      %v7798 = vshrl.u32 %v7737, 16
      %v7800 = vrot.slane %v7798, 7
      %v7801 = vshll.u32 %v7737, 16
      %v7803 = vor.u32 %v7800, %v7801
      %v7804 = vsel %vm662, %v7796, %v7803
      %v7806 = vshrl.u32 %v7738, 16
      %v7808 = vrot.slane %v7806, 7
      %v7809 = vrot.slane %v7808, 4
      %v7811 = vshrl.u32 %v7739, 16
      %v7813 = vrot.slane %v7811, 7
      %v7814 = vshll.u32 %v7739, 16
      %v7816 = vor.u32 %v7813, %v7814
      %v7817 = vsel %vm662, %v7809, %v7816
      %v7818 = vrot.slane %v7813, 4
      %v7820 = vshrl.u32 %v7740, 16
      %v7822 = vrot.slane %v7820, 7
      %v7823 = vshll.u32 %v7740, 16
      %v7825 = vor.u32 %v7822, %v7823
      %v7826 = vsel %vm662, %v7818, %v7825
      %v7828 = vshrl.u32 %v7741, 16
      %v7830 = vrot.slane %v7828, 7
      %v7831 = vrot.slane %v7830, 4
      %v7833 = vshrl.u32 %v7742, 16
      %v7835 = vrot.slane %v7833, 7
      %v7836 = vshll.u32 %v7742, 16
      %v7838 = vor.u32 %v7835, %v7836
      %v7839 = vsel %vm662, %v7831, %v7838
      %v7840 = vrot.slane %v7835, 4
      %v7842 = vshrl.u32 %v7743, 16
      %v7844 = vrot.slane %v7842, 7
      %v7845 = vshll.u32 %v7743, 16
      %v7847 = vor.u32 %v7844, %v7845
      %v7848 = vsel %vm662, %v7840, %v7847
      %v7850 = vshrl.u32 %v7744, 16
      %v7852 = vrot.slane %v7850, 7
      %v7853 = vrot.slane %v7852, 4
      %v7855 = vshrl.u32 %v7745, 16
      %v7857 = vrot.slane %v7855, 7
      %v7858 = vshll.u32 %v7745, 16
      %v7860 = vor.u32 %v7857, %v7858
      %v7861 = vsel %vm662, %v7853, %v7860
      %v7862 = vrot.slane %v7857, 4
      %v7864 = vshrl.u32 %v7746, 16
      %v7866 = vrot.slane %v7864, 7
      %v7867 = vshll.u32 %v7746, 16
      %v7869 = vor.u32 %v7866, %v7867
      %v7870 = vsel %vm662, %v7862, %v7869
      %v7872 = vshrl.u32 %v7747, 16
      %v7874 = vrot.slane %v7872, 7
      %v7875 = vrot.slane %v7874, 4
      %v7877 = vshrl.u32 %v7748, 16
      %v7879 = vrot.slane %v7877, 7
      %v7880 = vshll.u32 %v7748, 16
      %v7882 = vor.u32 %v7879, %v7880
      %v7883 = vsel %vm662, %v7875, %v7882
      %v7884 = vrot.slane %v7879, 4
      %v7886 = vshrl.u32 %v7749, 16
      %v7888 = vrot.slane %v7886, 7
      %v7889 = vshll.u32 %v7749, 16
      %v7891 = vor.u32 %v7888, %v7889
      %v7892 = vsel %vm662, %v7884, %v7891
      %v7894 = vshrl.u32 %v7750, 16
      %v7896 = vrot.slane %v7894, 7
      %v7897 = vrot.slane %v7896, 4
      %v7899 = vshrl.u32 %v7751, 16
      %v7901 = vrot.slane %v7899, 7
      %v7902 = vshll.u32 %v7751, 16
      %v7904 = vor.u32 %v7901, %v7902
      %v7905 = vsel %vm662, %v7897, %v7904
      %v7906 = vrot.slane %v7901, 4
      %v7908 = vshrl.u32 %v7752, 16
      %v7910 = vrot.slane %v7908, 7
      %v7911 = vshll.u32 %v7752, 16
      %v7913 = vor.u32 %v7910, %v7911
      %v7914 = vsel %vm662, %v7906, %v7913
      %v7916 = vshrl.u32 %v7753, 16
      %v7918 = vrot.slane %v7916, 7
      %v7919 = vrot.slane %v7918, 4
      %v7921 = vshrl.u32 %v7754, 16
      %v7923 = vrot.slane %v7921, 7
      %v7924 = vshll.u32 %v7754, 16
      %v7926 = vor.u32 %v7923, %v7924
      %v7927 = vsel %vm662, %v7919, %v7926
      %v7928 = vrot.slane %v7923, 4
      %v7930 = vshrl.u32 %v7755, 16
      %v7932 = vrot.slane %v7930, 7
      %v7933 = vshll.u32 %v7755, 16
      %v7935 = vor.u32 %v7932, %v7933
      %v7936 = vsel %vm662, %v7928, %v7935
      %v7938 = vshrl.u32 %v7756, 16
      %v7940 = vrot.slane %v7938, 7
      %v7941 = vrot.slane %v7940, 4
      %v7943 = vshrl.u32 %v7757, 16
      %v7945 = vrot.slane %v7943, 7
      %v7946 = vshll.u32 %v7757, 16
      %v7948 = vor.u32 %v7945, %v7946
      %v7949 = vsel %vm662, %v7941, %v7948
      %v7950 = vrot.slane %v7945, 4
      %v7952 = vshrl.u32 %v7758, 16
      %v7954 = vrot.slane %v7952, 7
      %v7955 = vshll.u32 %v7758, 16
      %v7957 = vor.u32 %v7954, %v7955
      %v7958 = vsel %vm662, %v7950, %v7957
      %v7960 = vshrl.u32 %v7759, 16
      %v7962 = vrot.slane %v7960, 7
      %v7963 = vrot.slane %v7962, 4
      %v7965 = vshrl.u32 %v7760, 16
      %v7967 = vrot.slane %v7965, 7
      %v7968 = vshll.u32 %v7760, 16
      %v7970 = vor.u32 %v7967, %v7968
      %v7971 = vsel %vm662, %v7963, %v7970
      %v7972 = vrot.slane %v7967, 4
      %v7974 = vshrl.u32 %v7761, 16
      %v7976 = vrot.slane %v7974, 7
      %v7977 = vshll.u32 %v7761, 16
      %v7979 = vor.u32 %v7976, %v7977
      %v7980 = vsel %vm662, %v7972, %v7979
      %v7982 = vshrl.u32 %v7762, 16
      %v7984 = vrot.slane %v7982, 7
      %v7985 = vrot.slane %v7984, 4
      %v7987 = vshrl.u32 %v7763, 16
      %v7989 = vrot.slane %v7987, 7
      %v7990 = vshll.u32 %v7763, 16
      %v7992 = vor.u32 %v7989, %v7990
      %v7993 = vsel %vm662, %v7985, %v7992
      %v7994 = vrot.slane %v7989, 4
      %v7996 = vshrl.u32 %v7764, 16
      %v7998 = vrot.slane %v7996, 7
      %v7999 = vshll.u32 %v7764, 16
      %v8001 = vor.u32 %v7998, %v7999
      %v8002 = vsel %vm662, %v7994, %v8001
      %v8004 = vshrl.u32 %v7765, 16
      %v8006 = vrot.slane %v8004, 7
      %v8007 = vrot.slane %v8006, 4
      %v8009 = vshrl.u32 %v7766, 16
      %v8011 = vrot.slane %v8009, 7
      %v8012 = vshll.u32 %v7766, 16
      %v8014 = vor.u32 %v8011, %v8012
      %v8015 = vsel %vm662, %v8007, %v8014
      %v8016 = vrot.slane %v8011, 4
      %v8018 = vshrl.u32 %v7767, 16
      %v8020 = vrot.slane %v8018, 7
      %v8021 = vshll.u32 %v7767, 16
      %v8023 = vor.u32 %v8020, %v8021
      %v8024 = vsel %vm662, %v8016, %v8023
      %v8026 = vshrl.u32 %v7768, 16
      %v8028 = vrot.slane %v8026, 7
      %v8029 = vrot.slane %v8028, 4
      %v8031 = vshrl.u32 %v7769, 16
      %v8033 = vrot.slane %v8031, 7
      %v8034 = vshll.u32 %v7769, 16
      %v8036 = vor.u32 %v8033, %v8034
      %v8037 = vsel %vm662, %v8029, %v8036
      %v8038 = vrot.slane %v8033, 4
      %v8040 = vshrl.u32 %v7770, 16
      %v8042 = vrot.slane %v8040, 7
      %v8043 = vshll.u32 %v7770, 16
      %v8045 = vor.u32 %v8042, %v8043
      %v8046 = vsel %vm662, %v8038, %v8045
      %v8048 = vshrl.u32 %v7771, 16
      %v8050 = vrot.slane %v8048, 7
      %v8051 = vrot.slane %v8050, 4
      %v8053 = vshrl.u32 %v7772, 16
      %v8055 = vrot.slane %v8053, 7
      %v8056 = vshll.u32 %v7772, 16
      %v8058 = vor.u32 %v8055, %v8056
      %v8059 = vsel %vm662, %v8051, %v8058
      %v8060 = vrot.slane %v8055, 4
      %v8062 = vshrl.u32 %v7773, 16
      %v8064 = vrot.slane %v8062, 7
      %v8065 = vshll.u32 %v7773, 16
      %v8067 = vor.u32 %v8064, %v8065
      %v8068 = vsel %vm662, %v8060, %v8067
      %v8070 = vshrl.u32 %v7774, 16
      %v8072 = vrot.slane %v8070, 7
      %v8073 = vrot.slane %v8072, 4
      %v8075 = vshrl.u32 %v7775, 16
      %v8077 = vrot.slane %v8075, 7
      %v8078 = vshll.u32 %v7775, 16
      %v8080 = vor.u32 %v8077, %v8078
      %v8081 = vsel %vm662, %v8073, %v8080
      %v8082 = vrot.slane %v8077, 4
      %v8084 = vshrl.u32 %v7776, 16
      %v8086 = vrot.slane %v8084, 7
      %v8087 = vshll.u32 %v7776, 16
      %v8089 = vor.u32 %v8086, %v8087
      %v8090 = vsel %vm662, %v8082, %v8089
      %v8092 = vshrl.u32 %v7777, 16
      %v8094 = vrot.slane %v8092, 7
      %v8095 = vrot.slane %v8094, 4
      %v8097 = vshrl.u32 %v7778, 16
      %v8099 = vrot.slane %v8097, 7
      %v8100 = vshll.u32 %v7778, 16
      %v8102 = vor.u32 %v8099, %v8100
      %v8103 = vsel %vm662, %v8095, %v8102
      %v8104 = vrot.slane %v8099, 4
      %v8106 = vshrl.u32 %v7779, 16
      %v8108 = vrot.slane %v8106, 7
      %v8109 = vshll.u32 %v7779, 16
      %v8111 = vor.u32 %v8108, %v8109
      %v8112 = vsel %vm662, %v8104, %v8111
      %v8114 = vshrl.u32 %v7780, 16
      %v8116 = vrot.slane %v8114, 7
      %v8117 = vrot.slane %v8116, 4
      %v8119 = vshrl.u32 %v7781, 16
      %v8121 = vrot.slane %v8119, 7
      %v8122 = vshll.u32 %v7781, 16
      %v8124 = vor.u32 %v8121, %v8122
      %v8125 = vsel %vm662, %v8117, %v8124
      %v8126 = vrot.slane %v8121, 4
      %v8128 = vshrl.u32 %v7782, 16
      %v8130 = vrot.slane %v8128, 7
      %v8131 = vshll.u32 %v7782, 16
      %v8133 = vor.u32 %v8130, %v8131
      %v8134 = vsel %vm662, %v8126, %v8133
      %v8135 = vld [vmem:[%s4 + $0xc] sm:$0xf]
      %v8136 = vunpack.c.l.b16 %v7795
      %v8137 = vunpack.c.l.b16 %v7804
      %v8138 = vunpack.c.l.b16 %v7817
      %v8139 = vunpack.c.l.b16 %v7826
      %v8140 = vunpack.c.l.b16 %v7839
      %v8141 = vunpack.c.l.b16 %v7848
      %v8142 = vunpack.c.l.b16 %v7861
      %v8143 = vunpack.c.l.b16 %v7870
      %v8144 = vunpack.c.l.b16 %v7883
      %v8145 = vunpack.c.l.b16 %v7892
      %v8146 = vunpack.c.l.b16 %v7905
      %v8147 = vunpack.c.l.b16 %v7914
      %v8148 = vunpack.c.l.b16 %v7927
      %v8149 = vunpack.c.l.b16 %v7936
      %v8150 = vunpack.c.l.b16 %v7949
      %v8151 = vunpack.c.l.b16 %v7958
      %v8152 = vunpack.c.l.b16 %v7971
      %v8153 = vunpack.c.l.b16 %v7980
      %v8154 = vunpack.c.l.b16 %v7993
      %v8155 = vunpack.c.l.b16 %v8002
      %v8156 = vunpack.c.l.b16 %v8015
      %v8157 = vunpack.c.l.b16 %v8024
      %v8158 = vunpack.c.l.b16 %v8037
      %v8159 = vunpack.c.l.b16 %v8046
      %v8160 = vunpack.c.l.b16 %v8059
      %v8161 = vunpack.c.l.b16 %v8068
      %v8162 = vunpack.c.l.b16 %v8081
      %v8163 = vunpack.c.l.b16 %v8090
      %v8164 = vunpack.c.l.b16 %v8103
      %v8165 = vunpack.c.l.b16 %v8112
      %v8166 = vunpack.c.l.b16 %v8125
      %v8167 = vunpack.c.l.b16 %v8134
      %v8168 = vpack.c.b16 %v8137, %v8136
      %v8169 = vpack.c.b16 %v8139, %v8138
      %v8170 = vpack.c.b16 %v8141, %v8140
      %v8171 = vpack.c.b16 %v8143, %v8142
      %v8172 = vpack.c.b16 %v8145, %v8144
      %v8173 = vpack.c.b16 %v8147, %v8146
      %v8174 = vpack.c.b16 %v8149, %v8148
      %v8175 = vpack.c.b16 %v8151, %v8150
      %v8176 = vpack.c.b16 %v8153, %v8152
      %v8177 = vpack.c.b16 %v8155, %v8154
      %v8178 = vpack.c.b16 %v8157, %v8156
      %v8179 = vpack.c.b16 %v8159, %v8158
      %v8180 = vpack.c.b16 %v8161, %v8160
      %v8181 = vpack.c.b16 %v8163, %v8162
      %v8182 = vpack.c.b16 %v8165, %v8164
      %v8183 = vpack.c.b16 %v8167, %v8166
      %v8185 = vsel %vm1097, %v8168, 0
      %v8188 = vsel %vm1097, %v8169, 0
      %v8191 = vsel %vm1097, %v8170, 0
      %v8194 = vsel %vm1097, %v8171, 0
      %v8197 = vsel %vm1097, %v8172, 0
      %v8200 = vsel %vm1097, %v8173, 0
      %v8203 = vsel %vm1097, %v8174, 0
      %v8206 = vsel %vm1097, %v8175, 0
      %v8209 = vsel %vm1097, %v8176, 0
      %v8212 = vsel %vm1097, %v8177, 0
      %v8215 = vsel %vm1097, %v8178, 0
      %v8218 = vsel %vm1097, %v8179, 0
      %v8221 = vsel %vm1097, %v8180, 0
      %v8224 = vsel %vm1097, %v8181, 0
      %v8227 = vsel %vm1097, %v8182, 0
      %v8230 = vsel %vm1097, %v8183, 0
      %v8233 = vsel %vm1146, %v8135, 0
      %8235 = vmatprep.subr.bf16.mxu0 0
      %8236 = vmatpush1.bf16.msra.mxu0 %v8233
      %8237 = vmatprep.subr.bf16.mxu0 0
      %8238 = vmatpush1.bf16.msra.mxu0 0
      %8239 = vmatprep.subr.bf16.mxu0 0
      %8240 = vmatpush1.bf16.msra.mxu0 0
      %8241 = vmatprep.subr.bf16.mxu0 0
      %8242 = vmatpush1.bf16.msra.mxu0 0
      %8243 = vmatprep.subr.bf16.mxu0 0
      %8244 = vmatpush1.bf16.msra.mxu0 0
      %8245 = vmatprep.subr.bf16.mxu0 0
      %8246 = vmatpush1.bf16.msra.mxu0 0
      %8247 = vmatprep.subr.bf16.mxu0 0
      %8248 = vmatpush1.bf16.msra.mxu0 0
      %8249 = vmatprep.subr.bf16.mxu0 0
      %8250 = vmatpush1.bf16.msra.mxu0 0
      %8251 = vmatprep.subr.bf16.mxu0 0
      %8252 = vmatpush1.bf16.msra.mxu0 0
      %8253 = vmatprep.subr.bf16.mxu0 0
      %8254 = vmatpush1.bf16.msra.mxu0 0
      %8255 = vmatprep.subr.bf16.mxu0 0
      %8256 = vmatpush1.bf16.msra.mxu0 0
      %8257 = vmatprep.subr.bf16.mxu0 0
      %8258 = vmatpush1.bf16.msra.mxu0 0
      %8259 = vmatprep.subr.bf16.mxu0 0
      %8260 = vmatpush1.bf16.msra.mxu0 0
      %8261 = vmatprep.subr.bf16.mxu0 0
      %8262 = vmatpush1.bf16.msra.mxu0 0
      %8263 = vmatprep.subr.bf16.mxu0 0
      %8264 = vmatpush1.bf16.msra.mxu0 0
      %8265 = vmatprep.subr.bf16.mxu0 0
      %8266 = vmatpush1.bf16.msra.mxu0 0
      %8267 = vmatprep.mubr.bf16.mxu0 0
      %8268 = vmatmul.mubr.bf16.gmra.mrb[0].mxu0 %v8185
      %v8269 = vpop.f32.mrb[0].mxu0
      %v8270 = vadd.f32 0.0, %v8269
      %v8271 = vpop.f32.mrb[0].mxu0
      %v8272 = vpop.f32.mrb[0].mxu0
      %v8273 = vadd.f32 0.0, %v8272
      %v8274 = vpop.f32.mrb[0].mxu0
      %8275 = vmatprep.mubr.bf16.mxu0 0
      %8276 = vmatmul.mubr.bf16.gmra.mrb[0].mxu0 %v8188
      %v8277 = vpop.f32.mrb[0].mxu0
      %v8278 = vadd.f32 0.0, %v8277
      %v8279 = vpop.f32.mrb[0].mxu0
      %v8280 = vpop.f32.mrb[0].mxu0
      %v8281 = vadd.f32 0.0, %v8280
      %v8282 = vpop.f32.mrb[0].mxu0
      %8283 = vmatprep.mubr.bf16.mxu0 0
      %8284 = vmatmul.mubr.bf16.gmra.mrb[0].mxu0 %v8191
      %v8285 = vpop.f32.mrb[0].mxu0
      %v8286 = vadd.f32 0.0, %v8285
      %v8287 = vpop.f32.mrb[0].mxu0
      %v8288 = vpop.f32.mrb[0].mxu0
      %v8289 = vadd.f32 0.0, %v8288
      %v8290 = vpop.f32.mrb[0].mxu0
      %8291 = vmatprep.mubr.bf16.mxu0 0
      %8292 = vmatmul.mubr.bf16.gmra.mrb[0].mxu0 %v8194
      %v8293 = vpop.f32.mrb[0].mxu0
      %v8294 = vadd.f32 0.0, %v8293
      %v8295 = vpop.f32.mrb[0].mxu0
      %v8296 = vpop.f32.mrb[0].mxu0
      %v8297 = vadd.f32 0.0, %v8296
      %v8298 = vpop.f32.mrb[0].mxu0
      %8299 = vmatprep.mubr.bf16.mxu0 0
      %8300 = vmatmul.mubr.bf16.gmra.mrb[0].mxu0 %v8197
      %v8301 = vpop.f32.mrb[0].mxu0
      %v8302 = vadd.f32 0.0, %v8301
      %v8303 = vpop.f32.mrb[0].mxu0
      %v8304 = vpop.f32.mrb[0].mxu0
      %v8305 = vadd.f32 0.0, %v8304
      %v8306 = vpop.f32.mrb[0].mxu0
      %8307 = vmatprep.mubr.bf16.mxu0 0
      %8308 = vmatmul.mubr.bf16.gmra.mrb[0].mxu0 %v8200
      %v8309 = vpop.f32.mrb[0].mxu0
      %v8310 = vadd.f32 0.0, %v8309
      %v8311 = vpop.f32.mrb[0].mxu0
      %v8312 = vpop.f32.mrb[0].mxu0
      %v8313 = vadd.f32 0.0, %v8312
      %v8314 = vpop.f32.mrb[0].mxu0
      %8315 = vmatprep.mubr.bf16.mxu0 0
      %8316 = vmatmul.mubr.bf16.gmra.mrb[0].mxu0 %v8203
      %v8317 = vpop.f32.mrb[0].mxu0
      %v8318 = vadd.f32 0.0, %v8317
      %v8319 = vpop.f32.mrb[0].mxu0
      %v8320 = vpop.f32.mrb[0].mxu0
      %v8321 = vadd.f32 0.0, %v8320
      %v8322 = vpop.f32.mrb[0].mxu0
      %8323 = vmatprep.mubr.bf16.mxu0 0
      %8324 = vmatmul.mubr.bf16.gmra.mrb[0].mxu0 %v8206
      %v8325 = vpop.f32.mrb[0].mxu0
      %v8326 = vadd.f32 0.0, %v8325
      %v8327 = vpop.f32.mrb[0].mxu0
      %v8328 = vpop.f32.mrb[0].mxu0
      %v8329 = vadd.f32 0.0, %v8328
      %v8330 = vpop.f32.mrb[0].mxu0
      %8331 = vmatprep.mubr.bf16.mxu0 0
      %8332 = vmatmul.mubr.bf16.gmra.mrb[0].mxu0 %v8209
      %v8333 = vpop.f32.mrb[0].mxu0
      %v8334 = vadd.f32 0.0, %v8333
      %v8335 = vpop.f32.mrb[0].mxu0
      %v8336 = vpop.f32.mrb[0].mxu0
      %v8337 = vadd.f32 0.0, %v8336
      %v8338 = vpop.f32.mrb[0].mxu0
      %8339 = vmatprep.mubr.bf16.mxu0 0
      %8340 = vmatmul.mubr.bf16.gmra.mrb[0].mxu0 %v8212
      %v8341 = vpop.f32.mrb[0].mxu0
      %v8342 = vadd.f32 0.0, %v8341
      %v8343 = vpop.f32.mrb[0].mxu0
      %v8344 = vpop.f32.mrb[0].mxu0
      %v8345 = vadd.f32 0.0, %v8344
      %v8346 = vpop.f32.mrb[0].mxu0
      %8347 = vmatprep.mubr.bf16.mxu0 0
      %8348 = vmatmul.mubr.bf16.gmra.mrb[0].mxu0 %v8215
      %v8349 = vpop.f32.mrb[0].mxu0
      %v8350 = vadd.f32 0.0, %v8349
      %v8351 = vpop.f32.mrb[0].mxu0
      %v8352 = vpop.f32.mrb[0].mxu0
      %v8353 = vadd.f32 0.0, %v8352
      %v8354 = vpop.f32.mrb[0].mxu0
      %8355 = vmatprep.mubr.bf16.mxu0 0
      %8356 = vmatmul.mubr.bf16.gmra.mrb[0].mxu0 %v8218
      %v8357 = vpop.f32.mrb[0].mxu0
      %v8358 = vadd.f32 0.0, %v8357
      %v8359 = vpop.f32.mrb[0].mxu0
      %v8360 = vpop.f32.mrb[0].mxu0
      %v8361 = vadd.f32 0.0, %v8360
      %v8362 = vpop.f32.mrb[0].mxu0
      %8363 = vmatprep.mubr.bf16.mxu0 0
      %8364 = vmatmul.mubr.bf16.gmra.mrb[0].mxu0 %v8221
      %v8365 = vpop.f32.mrb[0].mxu0
      %v8366 = vadd.f32 0.0, %v8365
      %v8367 = vpop.f32.mrb[0].mxu0
      %v8368 = vpop.f32.mrb[0].mxu0
      %v8369 = vadd.f32 0.0, %v8368
      %v8370 = vpop.f32.mrb[0].mxu0
      %8371 = vmatprep.mubr.bf16.mxu0 0
      %8372 = vmatmul.mubr.bf16.gmra.mrb[0].mxu0 %v8224
      %v8373 = vpop.f32.mrb[0].mxu0
      %v8374 = vadd.f32 0.0, %v8373
      %v8375 = vpop.f32.mrb[0].mxu0
      %v8376 = vpop.f32.mrb[0].mxu0
      %v8377 = vadd.f32 0.0, %v8376
      %v8378 = vpop.f32.mrb[0].mxu0
      %8379 = vmatprep.mubr.bf16.mxu0 0
      %8380 = vmatmul.mubr.bf16.gmra.mrb[0].mxu0 %v8227
      %v8381 = vpop.f32.mrb[0].mxu0
      %v8382 = vadd.f32 0.0, %v8381
      %v8383 = vpop.f32.mrb[0].mxu0
      %v8384 = vpop.f32.mrb[0].mxu0
      %v8385 = vadd.f32 0.0, %v8384
      %v8386 = vpop.f32.mrb[0].mxu0
      %8387 = vmatprep.mubr.bf16.mxu0 0
      %8388 = vmatmul.mubr.bf16.gmra.mrb[0].mxu0 %v8230
      %v8389 = vpop.f32.mrb[0].mxu0
      %v8390 = vadd.f32 0.0, %v8389
      %v8391 = vpop.f32.mrb[0].mxu0
      %v8392 = vpop.f32.mrb[0].mxu0
      %v8393 = vadd.f32 0.0, %v8392
      %v8394 = vpop.f32.mrb[0].mxu0
      %8395 = vdwg.mxu0
      %v8396 = vadd.f32 %v7703, %v8270
      %v8397 = vadd.f32 %v7704, %v8273
      %v8398 = vadd.f32 %v7705, %v8278
      %v8399 = vadd.f32 %v7706, %v8281
      %v8400 = vadd.f32 %v7707, %v8286
      %v8401 = vadd.f32 %v7708, %v8289
      %v8402 = vadd.f32 %v7709, %v8294
      %v8403 = vadd.f32 %v7710, %v8297
      %v8404 = vadd.f32 %v7711, %v8302
      %v8405 = vadd.f32 %v7712, %v8305
      %v8406 = vadd.f32 %v7713, %v8310
      %v8407 = vadd.f32 %v7714, %v8313
      %v8408 = vadd.f32 %v7715, %v8318
      %v8409 = vadd.f32 %v7716, %v8321
      %v8410 = vadd.f32 %v7717, %v8326
      %v8411 = vadd.f32 %v7718, %v8329
      %v8412 = vadd.f32 %v7719, %v8334
      %v8413 = vadd.f32 %v7720, %v8337
      %v8414 = vadd.f32 %v7721, %v8342
      %v8415 = vadd.f32 %v7722, %v8345
      %v8416 = vadd.f32 %v7723, %v8350
      %v8417 = vadd.f32 %v7724, %v8353
      %v8418 = vadd.f32 %v7725, %v8358
      %v8419 = vadd.f32 %v7726, %v8361
      %v8420 = vadd.f32 %v7727, %v8366
      %v8421 = vadd.f32 %v7728, %v8369
      %v8422 = vadd.f32 %v7729, %v8374
      %v8423 = vadd.f32 %v7730, %v8377
      %v8424 = vadd.f32 %v7731, %v8382
      %v8425 = vadd.f32 %v7732, %v8385
      %v8426 = vadd.f32 %v7733, %v8390
      %v8427 = vadd.f32 %v7734, %v8393
      %v8428 = vld [vmem:[%s4 + $0x10] sm:$0xf]
      %v8461 = vunpack.c.l.b16 %v7736
      %v8462 = vunpack.c.l.b16 %v7737
      %v8463 = vunpack.c.l.b16 %v7739
      %v8464 = vunpack.c.l.b16 %v7740
      %v8465 = vunpack.c.l.b16 %v7742
      %v8466 = vunpack.c.l.b16 %v7743
      %v8467 = vunpack.c.l.b16 %v7745
      %v8468 = vunpack.c.l.b16 %v7746
      %v8469 = vunpack.c.l.b16 %v7748
      %v8470 = vunpack.c.l.b16 %v7749
      %v8471 = vunpack.c.l.b16 %v7751
      %v8472 = vunpack.c.l.b16 %v7752
      %v8473 = vunpack.c.l.b16 %v7754
      %v8474 = vunpack.c.l.b16 %v7755
      %v8475 = vunpack.c.l.b16 %v7757
      %v8476 = vunpack.c.l.b16 %v7758
      %v8477 = vunpack.c.l.b16 %v7760
      %v8478 = vunpack.c.l.b16 %v7761
      %v8479 = vunpack.c.l.b16 %v7763
      %v8480 = vunpack.c.l.b16 %v7764
      %v8481 = vunpack.c.l.b16 %v7766
      %v8482 = vunpack.c.l.b16 %v7767
      %v8483 = vunpack.c.l.b16 %v7769
      %v8484 = vunpack.c.l.b16 %v7770
      %v8485 = vunpack.c.l.b16 %v7772
      %v8486 = vunpack.c.l.b16 %v7773
      %v8487 = vunpack.c.l.b16 %v7775
      %v8488 = vunpack.c.l.b16 %v7776
      %v8489 = vunpack.c.l.b16 %v7778
      %v8490 = vunpack.c.l.b16 %v7779
      %v8491 = vunpack.c.l.b16 %v7781
      %v8492 = vunpack.c.l.b16 %v7782
      %v8493 = vpack.c.b16 %v8462, %v8461
      %v8494 = vpack.c.b16 %v8464, %v8463
      %v8495 = vpack.c.b16 %v8466, %v8465
      %v8496 = vpack.c.b16 %v8468, %v8467
      %v8497 = vpack.c.b16 %v8470, %v8469
      %v8498 = vpack.c.b16 %v8472, %v8471
      %v8499 = vpack.c.b16 %v8474, %v8473
      %v8500 = vpack.c.b16 %v8476, %v8475
      %v8501 = vpack.c.b16 %v8478, %v8477
      %v8502 = vpack.c.b16 %v8480, %v8479
      %v8503 = vpack.c.b16 %v8482, %v8481
      %v8504 = vpack.c.b16 %v8484, %v8483
      %v8505 = vpack.c.b16 %v8486, %v8485
      %v8506 = vpack.c.b16 %v8488, %v8487
      %v8507 = vpack.c.b16 %v8490, %v8489
      %v8508 = vpack.c.b16 %v8492, %v8491
      %v8510 = vsel %vm1097, %v8493, 0
      %v8513 = vsel %vm1097, %v8494, 0
      %v8516 = vsel %vm1097, %v8495, 0
      %v8519 = vsel %vm1097, %v8496, 0
      %v8522 = vsel %vm1097, %v8497, 0
      %v8525 = vsel %vm1097, %v8498, 0
      %v8528 = vsel %vm1097, %v8499, 0
      %v8531 = vsel %vm1097, %v8500, 0
      %v8534 = vsel %vm1097, %v8501, 0
      %v8537 = vsel %vm1097, %v8502, 0
      %v8540 = vsel %vm1097, %v8503, 0
      %v8543 = vsel %vm1097, %v8504, 0
      %v8546 = vsel %vm1097, %v8505, 0
      %v8549 = vsel %vm1097, %v8506, 0
      %v8552 = vsel %vm1097, %v8507, 0
      %v8555 = vsel %vm1097, %v8508, 0
      %v8558 = vsel %vm1146, %v8428, 0
      %8560 = vmatprep.subr.bf16.mxu0 0
      %8561 = vmatpush1.bf16.msra.mxu0 %v8558
      %8562 = vmatprep.subr.bf16.mxu0 0
      %8563 = vmatpush1.bf16.msra.mxu0 0
      %8564 = vmatprep.subr.bf16.mxu0 0
      %8565 = vmatpush1.bf16.msra.mxu0 0
      %8566 = vmatprep.subr.bf16.mxu0 0
      %8567 = vmatpush1.bf16.msra.mxu0 0
      %8568 = vmatprep.subr.bf16.mxu0 0
      %8569 = vmatpush1.bf16.msra.mxu0 0
      %8570 = vmatprep.subr.bf16.mxu0 0
      %8571 = vmatpush1.bf16.msra.mxu0 0
      %8572 = vmatprep.subr.bf16.mxu0 0
      %8573 = vmatpush1.bf16.msra.mxu0 0
      %8574 = vmatprep.subr.bf16.mxu0 0
      %8575 = vmatpush1.bf16.msra.mxu0 0
      %8576 = vmatprep.subr.bf16.mxu0 0
      %8577 = vmatpush1.bf16.msra.mxu0 0
      %8578 = vmatprep.subr.bf16.mxu0 0
      %8579 = vmatpush1.bf16.msra.mxu0 0
      %8580 = vmatprep.subr.bf16.mxu0 0
      %8581 = vmatpush1.bf16.msra.mxu0 0
      %8582 = vmatprep.subr.bf16.mxu0 0
      %8583 = vmatpush1.bf16.msra.mxu0 0
      %8584 = vmatprep.subr.bf16.mxu0 0
      %8585 = vmatpush1.bf16.msra.mxu0 0
      %8586 = vmatprep.subr.bf16.mxu0 0
      %8587 = vmatpush1.bf16.msra.mxu0 0
      %8588 = vmatprep.subr.bf16.mxu0 0
      %8589 = vmatpush1.bf16.msra.mxu0 0
      %8590 = vmatprep.subr.bf16.mxu0 0
      %8591 = vmatpush1.bf16.msra.mxu0 0
      %8592 = vmatprep.mubr.bf16.mxu0 0
      %8593 = vmatmul.mubr.bf16.gmra.mrb[0].mxu0 %v8510
      %v8594 = vpop.f32.mrb[0].mxu0
      %v8595 = vadd.f32 0.0, %v8594
      %v8596 = vpop.f32.mrb[0].mxu0
      %v8597 = vpop.f32.mrb[0].mxu0
      %v8598 = vadd.f32 0.0, %v8597
      %v8599 = vpop.f32.mrb[0].mxu0
      %8600 = vmatprep.mubr.bf16.mxu0 0
      %8601 = vmatmul.mubr.bf16.gmra.mrb[0].mxu0 %v8513
      %v8602 = vpop.f32.mrb[0].mxu0
      %v8603 = vadd.f32 0.0, %v8602
      %v8604 = vpop.f32.mrb[0].mxu0
      %v8605 = vpop.f32.mrb[0].mxu0
      %v8606 = vadd.f32 0.0, %v8605
      %v8607 = vpop.f32.mrb[0].mxu0
      %8608 = vmatprep.mubr.bf16.mxu0 0
      %8609 = vmatmul.mubr.bf16.gmra.mrb[0].mxu0 %v8516
      %v8610 = vpop.f32.mrb[0].mxu0
      %v8611 = vadd.f32 0.0, %v8610
      %v8612 = vpop.f32.mrb[0].mxu0
      %v8613 = vpop.f32.mrb[0].mxu0
      %v8614 = vadd.f32 0.0, %v8613
      %v8615 = vpop.f32.mrb[0].mxu0
      %8616 = vmatprep.mubr.bf16.mxu0 0
      %8617 = vmatmul.mubr.bf16.gmra.mrb[0].mxu0 %v8519
      %v8618 = vpop.f32.mrb[0].mxu0
      %v8619 = vadd.f32 0.0, %v8618
      %v8620 = vpop.f32.mrb[0].mxu0
      %v8621 = vpop.f32.mrb[0].mxu0
      %v8622 = vadd.f32 0.0, %v8621
      %v8623 = vpop.f32.mrb[0].mxu0
      %8624 = vmatprep.mubr.bf16.mxu0 0
      %8625 = vmatmul.mubr.bf16.gmra.mrb[0].mxu0 %v8522
      %v8626 = vpop.f32.mrb[0].mxu0
      %v8627 = vadd.f32 0.0, %v8626
      %v8628 = vpop.f32.mrb[0].mxu0
      %v8629 = vpop.f32.mrb[0].mxu0
      %v8630 = vadd.f32 0.0, %v8629
      %v8631 = vpop.f32.mrb[0].mxu0
      %8632 = vmatprep.mubr.bf16.mxu0 0
      %8633 = vmatmul.mubr.bf16.gmra.mrb[0].mxu0 %v8525
      %v8634 = vpop.f32.mrb[0].mxu0
      %v8635 = vadd.f32 0.0, %v8634
      %v8636 = vpop.f32.mrb[0].mxu0
      %v8637 = vpop.f32.mrb[0].mxu0
      %v8638 = vadd.f32 0.0, %v8637
      %v8639 = vpop.f32.mrb[0].mxu0
      %8640 = vmatprep.mubr.bf16.mxu0 0
      %8641 = vmatmul.mubr.bf16.gmra.mrb[0].mxu0 %v8528
      %v8642 = vpop.f32.mrb[0].mxu0
      %v8643 = vadd.f32 0.0, %v8642
      %v8644 = vpop.f32.mrb[0].mxu0
      %v8645 = vpop.f32.mrb[0].mxu0
      %v8646 = vadd.f32 0.0, %v8645
      %v8647 = vpop.f32.mrb[0].mxu0
      %8648 = vmatprep.mubr.bf16.mxu0 0
      %8649 = vmatmul.mubr.bf16.gmra.mrb[0].mxu0 %v8531
      %v8650 = vpop.f32.mrb[0].mxu0
      %v8651 = vadd.f32 0.0, %v8650
      %v8652 = vpop.f32.mrb[0].mxu0
      %v8653 = vpop.f32.mrb[0].mxu0
      %v8654 = vadd.f32 0.0, %v8653
      %v8655 = vpop.f32.mrb[0].mxu0
      %8656 = vmatprep.mubr.bf16.mxu0 0
      %8657 = vmatmul.mubr.bf16.gmra.mrb[0].mxu0 %v8534
      %v8658 = vpop.f32.mrb[0].mxu0
      %v8659 = vadd.f32 0.0, %v8658
      %v8660 = vpop.f32.mrb[0].mxu0
      %v8661 = vpop.f32.mrb[0].mxu0
      %v8662 = vadd.f32 0.0, %v8661
      %v8663 = vpop.f32.mrb[0].mxu0
      %8664 = vmatprep.mubr.bf16.mxu0 0
      %8665 = vmatmul.mubr.bf16.gmra.mrb[0].mxu0 %v8537
      %v8666 = vpop.f32.mrb[0].mxu0
      %v8667 = vadd.f32 0.0, %v8666
      %v8668 = vpop.f32.mrb[0].mxu0
      %v8669 = vpop.f32.mrb[0].mxu0
      %v8670 = vadd.f32 0.0, %v8669
      %v8671 = vpop.f32.mrb[0].mxu0
      %8672 = vmatprep.mubr.bf16.mxu0 0
      %8673 = vmatmul.mubr.bf16.gmra.mrb[0].mxu0 %v8540
      %v8674 = vpop.f32.mrb[0].mxu0
      %v8675 = vadd.f32 0.0, %v8674
      %v8676 = vpop.f32.mrb[0].mxu0
      %v8677 = vpop.f32.mrb[0].mxu0
      %v8678 = vadd.f32 0.0, %v8677
      %v8679 = vpop.f32.mrb[0].mxu0
      %8680 = vmatprep.mubr.bf16.mxu0 0
      %8681 = vmatmul.mubr.bf16.gmra.mrb[0].mxu0 %v8543
      %v8682 = vpop.f32.mrb[0].mxu0
      %v8683 = vadd.f32 0.0, %v8682
      %v8684 = vpop.f32.mrb[0].mxu0
      %v8685 = vpop.f32.mrb[0].mxu0
      %v8686 = vadd.f32 0.0, %v8685
      %v8687 = vpop.f32.mrb[0].mxu0
      %8688 = vmatprep.mubr.bf16.mxu0 0
      %8689 = vmatmul.mubr.bf16.gmra.mrb[0].mxu0 %v8546
      %v8690 = vpop.f32.mrb[0].mxu0
      %v8691 = vadd.f32 0.0, %v8690
      %v8692 = vpop.f32.mrb[0].mxu0
      %v8693 = vpop.f32.mrb[0].mxu0
      %v8694 = vadd.f32 0.0, %v8693
      %v8695 = vpop.f32.mrb[0].mxu0
      %8696 = vmatprep.mubr.bf16.mxu0 0
      %8697 = vmatmul.mubr.bf16.gmra.mrb[0].mxu0 %v8549
      %v8698 = vpop.f32.mrb[0].mxu0
      %v8699 = vadd.f32 0.0, %v8698
      %v8700 = vpop.f32.mrb[0].mxu0
      %v8701 = vpop.f32.mrb[0].mxu0
      %v8702 = vadd.f32 0.0, %v8701
      %v8703 = vpop.f32.mrb[0].mxu0
      %8704 = vmatprep.mubr.bf16.mxu0 0
      %8705 = vmatmul.mubr.bf16.gmra.mrb[0].mxu0 %v8552
      %v8706 = vpop.f32.mrb[0].mxu0
      %v8707 = vadd.f32 0.0, %v8706
      %v8708 = vpop.f32.mrb[0].mxu0
      %v8709 = vpop.f32.mrb[0].mxu0
      %v8710 = vadd.f32 0.0, %v8709
      %v8711 = vpop.f32.mrb[0].mxu0
      %8712 = vmatprep.mubr.bf16.mxu0 0
      %8713 = vmatmul.mubr.bf16.gmra.mrb[0].mxu0 %v8555
      %v8714 = vpop.f32.mrb[0].mxu0
      %v8715 = vadd.f32 0.0, %v8714
      %v8716 = vpop.f32.mrb[0].mxu0
      %v8717 = vpop.f32.mrb[0].mxu0
      %v8718 = vadd.f32 0.0, %v8717
      %v8719 = vpop.f32.mrb[0].mxu0
      %8720 = vdwg.mxu0
      %v8721 = vadd.f32 %v8396, %v8595
      %v8722 = vadd.f32 %v8397, %v8598
      %v8723 = vadd.f32 %v8398, %v8603
      %v8724 = vadd.f32 %v8399, %v8606
      %v8725 = vadd.f32 %v8400, %v8611
      %v8726 = vadd.f32 %v8401, %v8614
      %v8727 = vadd.f32 %v8402, %v8619
      %v8728 = vadd.f32 %v8403, %v8622
      %v8729 = vadd.f32 %v8404, %v8627
      %v8730 = vadd.f32 %v8405, %v8630
      %v8731 = vadd.f32 %v8406, %v8635
      %v8732 = vadd.f32 %v8407, %v8638
      %v8733 = vadd.f32 %v8408, %v8643
      %v8734 = vadd.f32 %v8409, %v8646
      %v8735 = vadd.f32 %v8410, %v8651
      %v8736 = vadd.f32 %v8411, %v8654
      %v8737 = vadd.f32 %v8412, %v8659
      %v8738 = vadd.f32 %v8413, %v8662
      %v8739 = vadd.f32 %v8414, %v8667
      %v8740 = vadd.f32 %v8415, %v8670
      %v8741 = vadd.f32 %v8416, %v8675
      %v8742 = vadd.f32 %v8417, %v8678
      %v8743 = vadd.f32 %v8418, %v8683
      %v8744 = vadd.f32 %v8419, %v8686
      %v8745 = vadd.f32 %v8420, %v8691
      %v8746 = vadd.f32 %v8421, %v8694
      %v8747 = vadd.f32 %v8422, %v8699
      %v8748 = vadd.f32 %v8423, %v8702
      %v8749 = vadd.f32 %v8424, %v8707
      %v8750 = vadd.f32 %v8425, %v8710
      %v8751 = vadd.f32 %v8426, %v8715
      %v8752 = vadd.f32 %v8427, %v8718
      %v8753 = vld [vmem:[%s418 + $0x4] sm:$0xf]
      %v8754 = vld [vmem:[%s418 + $0x8] sm:$0xf]
      %v8755 = vld [vmem:[%s418 + $0xc] sm:$0x1]
      %v8756 = vld [vmem:[%s418 + $0x14] sm:$0xf]
      %v8757 = vld [vmem:[%s418 + $0x18] sm:$0xf]
      %v8758 = vld [vmem:[%s418 + $0x1c] sm:$0x1]
      %v8759 = vld [vmem:[%s418 + $0x24] sm:$0xf]
      %v8760 = vld [vmem:[%s418 + $0x28] sm:$0xf]
      %v8761 = vld [vmem:[%s418 + $0x2c] sm:$0x1]
      %v8762 = vld [vmem:[%s418 + $0x34] sm:$0xf]
      %v8763 = vld [vmem:[%s418 + $0x38] sm:$0xf]
      %v8764 = vld [vmem:[%s418 + $0x3c] sm:$0x1]
      %v8765 = vld [vmem:[%s418 + $0x44] sm:$0xf]
      %v8766 = vld [vmem:[%s418 + $0x48] sm:$0xf]
      %v8767 = vld [vmem:[%s418 + $0x4c] sm:$0x1]
      %v8768 = vld [vmem:[%s418 + $0x54] sm:$0xf]
      %v8769 = vld [vmem:[%s418 + $0x58] sm:$0xf]
      %v8770 = vld [vmem:[%s418 + $0x5c] sm:$0x1]
      %v8771 = vld [vmem:[%s418 + $0x64] sm:$0xf]
      %v8772 = vld [vmem:[%s418 + $0x68] sm:$0xf]
      %v8773 = vld [vmem:[%s418 + $0x6c] sm:$0x1]
      %v8774 = vld [vmem:[%s418 + $0x74] sm:$0xf]
      %v8775 = vld [vmem:[%s418 + $0x78] sm:$0xf]
      %v8776 = vld [vmem:[%s418 + $0x7c] sm:$0x1]
      %v8777 = vld [vmem:[%s418 + $0x84] sm:$0xf]
      %v8778 = vld [vmem:[%s418 + $0x88] sm:$0xf]
      %v8779 = vld [vmem:[%s418 + $0x8c] sm:$0x1]
      %v8780 = vld [vmem:[%s418 + $0x94] sm:$0xf]
      %v8781 = vld [vmem:[%s418 + $0x98] sm:$0xf]
      %v8782 = vld [vmem:[%s418 + $0x9c] sm:$0x1]
      %v8783 = vld [vmem:[%s418 + $0xa4] sm:$0xf]
      %v8784 = vld [vmem:[%s418 + $0xa8] sm:$0xf]
      %v8785 = vld [vmem:[%s418 + $0xac] sm:$0x1]
      %v8786 = vld [vmem:[%s418 + $0xb4] sm:$0xf]
      %v8787 = vld [vmem:[%s418 + $0xb8] sm:$0xf]
      %v8788 = vld [vmem:[%s418 + $0xbc] sm:$0x1]
      %v8789 = vld [vmem:[%s418 + $0xc4] sm:$0xf]
      %v8790 = vld [vmem:[%s418 + $0xc8] sm:$0xf]
      %v8791 = vld [vmem:[%s418 + $0xcc] sm:$0x1]
      %v8792 = vld [vmem:[%s418 + $0xd4] sm:$0xf]
      %v8793 = vld [vmem:[%s418 + $0xd8] sm:$0xf]
      %v8794 = vld [vmem:[%s418 + $0xdc] sm:$0x1]
      %v8795 = vld [vmem:[%s418 + $0xe4] sm:$0xf]
      %v8796 = vld [vmem:[%s418 + $0xe8] sm:$0xf]
      %v8797 = vld [vmem:[%s418 + $0xec] sm:$0x1]
      %v8798 = vld [vmem:[%s418 + $0xf4] sm:$0xf]
      %v8799 = vld [vmem:[%s418 + $0xf8] sm:$0xf]
      %v8800 = vld [vmem:[%s418 + $0xfc] sm:$0x1]
      %v8802 = vshrl.u32 %v8753, 16
      %v8804 = vrot.slane %v8802, 4
      %v8805 = vshll.u32 %v8753, 16
      %v8807 = vrot.slane %v8805, 5
      %v8808 = vor.u32 %v8804, %v8807
      %v8809 = vrot.slane %v8808, 4
      %v8811 = vshll.u32 %v8754, 16
      %v8813 = vrot.slane %v8811, 5
      %v8814 = vsel %vm1621, %v8809, %v8813
      %v8815 = vshrl.u32 %v8754, 16
      %v8817 = vrot.slane %v8815, 4
      %v8818 = vor.u32 %v8817, %v8813
      %v8819 = vrot.slane %v8818, 4
      %v8821 = vshll.u32 %v8755, 16
      %v8823 = vrot.slane %v8821, 5
      %v8824 = vsel %vm1621, %v8819, %v8823
      %v8826 = vshrl.u32 %v8756, 16
      %v8828 = vrot.slane %v8826, 4
      %v8829 = vshll.u32 %v8756, 16
      %v8831 = vrot.slane %v8829, 5
      %v8832 = vor.u32 %v8828, %v8831
      %v8833 = vrot.slane %v8832, 4
      %v8835 = vshll.u32 %v8757, 16
      %v8837 = vrot.slane %v8835, 5
      %v8838 = vsel %vm1621, %v8833, %v8837
      %v8839 = vshrl.u32 %v8757, 16
      %v8841 = vrot.slane %v8839, 4
      %v8842 = vor.u32 %v8841, %v8837
      %v8843 = vrot.slane %v8842, 4
      %v8845 = vshll.u32 %v8758, 16
      %v8847 = vrot.slane %v8845, 5
      %v8848 = vsel %vm1621, %v8843, %v8847
      %v8850 = vshrl.u32 %v8759, 16
      %v8852 = vrot.slane %v8850, 4
      %v8853 = vshll.u32 %v8759, 16
      %v8855 = vrot.slane %v8853, 5
      %v8856 = vor.u32 %v8852, %v8855
      %v8857 = vrot.slane %v8856, 4
      %v8859 = vshll.u32 %v8760, 16
      %v8861 = vrot.slane %v8859, 5
      %v8862 = vsel %vm1621, %v8857, %v8861
      %v8863 = vshrl.u32 %v8760, 16
      %v8865 = vrot.slane %v8863, 4
      %v8866 = vor.u32 %v8865, %v8861
      %v8867 = vrot.slane %v8866, 4
      %v8869 = vshll.u32 %v8761, 16
      %v8871 = vrot.slane %v8869, 5
      %v8872 = vsel %vm1621, %v8867, %v8871
      %v8874 = vshrl.u32 %v8762, 16
      %v8876 = vrot.slane %v8874, 4
      %v8877 = vshll.u32 %v8762, 16
      %v8879 = vrot.slane %v8877, 5
      %v8880 = vor.u32 %v8876, %v8879
      %v8881 = vrot.slane %v8880, 4
      %v8883 = vshll.u32 %v8763, 16
      %v8885 = vrot.slane %v8883, 5
      %v8886 = vsel %vm1621, %v8881, %v8885
      %v8887 = vshrl.u32 %v8763, 16
      %v8889 = vrot.slane %v8887, 4
      %v8890 = vor.u32 %v8889, %v8885
      %v8891 = vrot.slane %v8890, 4
      %v8893 = vshll.u32 %v8764, 16
      %v8895 = vrot.slane %v8893, 5
      %v8896 = vsel %vm1621, %v8891, %v8895
      %v8898 = vshrl.u32 %v8765, 16
      %v8900 = vrot.slane %v8898, 4
      %v8901 = vshll.u32 %v8765, 16
      %v8903 = vrot.slane %v8901, 5
      %v8904 = vor.u32 %v8900, %v8903
      %v8905 = vrot.slane %v8904, 4
      %v8907 = vshll.u32 %v8766, 16
      %v8909 = vrot.slane %v8907, 5
      %v8910 = vsel %vm1621, %v8905, %v8909
      %v8911 = vshrl.u32 %v8766, 16
      %v8913 = vrot.slane %v8911, 4
      %v8914 = vor.u32 %v8913, %v8909
      %v8915 = vrot.slane %v8914, 4
      %v8917 = vshll.u32 %v8767, 16
      %v8919 = vrot.slane %v8917, 5
      %v8920 = vsel %vm1621, %v8915, %v8919
      %v8922 = vshrl.u32 %v8768, 16
      %v8924 = vrot.slane %v8922, 4
      %v8925 = vshll.u32 %v8768, 16
      %v8927 = vrot.slane %v8925, 5
      %v8928 = vor.u32 %v8924, %v8927
      %v8929 = vrot.slane %v8928, 4
      %v8931 = vshll.u32 %v8769, 16
      %v8933 = vrot.slane %v8931, 5
      %v8934 = vsel %vm1621, %v8929, %v8933
      %v8935 = vshrl.u32 %v8769, 16
      %v8937 = vrot.slane %v8935, 4
      %v8938 = vor.u32 %v8937, %v8933
      %v8939 = vrot.slane %v8938, 4
      %v8941 = vshll.u32 %v8770, 16
      %v8943 = vrot.slane %v8941, 5
      %v8944 = vsel %vm1621, %v8939, %v8943
      %v8946 = vshrl.u32 %v8771, 16
      %v8948 = vrot.slane %v8946, 4
      %v8949 = vshll.u32 %v8771, 16
      %v8951 = vrot.slane %v8949, 5
      %v8952 = vor.u32 %v8948, %v8951
      %v8953 = vrot.slane %v8952, 4
      %v8955 = vshll.u32 %v8772, 16
      %v8957 = vrot.slane %v8955, 5
      %v8958 = vsel %vm1621, %v8953, %v8957
      %v8959 = vshrl.u32 %v8772, 16
      %v8961 = vrot.slane %v8959, 4
      %v8962 = vor.u32 %v8961, %v8957
      %v8963 = vrot.slane %v8962, 4
      %v8965 = vshll.u32 %v8773, 16
      %v8967 = vrot.slane %v8965, 5
      %v8968 = vsel %vm1621, %v8963, %v8967
      %v8970 = vshrl.u32 %v8774, 16
      %v8972 = vrot.slane %v8970, 4
      %v8973 = vshll.u32 %v8774, 16
      %v8975 = vrot.slane %v8973, 5
      %v8976 = vor.u32 %v8972, %v8975
      %v8977 = vrot.slane %v8976, 4
      %v8979 = vshll.u32 %v8775, 16
      %v8981 = vrot.slane %v8979, 5
      %v8982 = vsel %vm1621, %v8977, %v8981
      %v8983 = vshrl.u32 %v8775, 16
      %v8985 = vrot.slane %v8983, 4
      %v8986 = vor.u32 %v8985, %v8981
      %v8987 = vrot.slane %v8986, 4
      %v8989 = vshll.u32 %v8776, 16
      %v8991 = vrot.slane %v8989, 5
      %v8992 = vsel %vm1621, %v8987, %v8991
      %v8994 = vshrl.u32 %v8777, 16
      %v8996 = vrot.slane %v8994, 4
      %v8997 = vshll.u32 %v8777, 16
      %v8999 = vrot.slane %v8997, 5
      %v9000 = vor.u32 %v8996, %v8999
      %v9001 = vrot.slane %v9000, 4
      %v9003 = vshll.u32 %v8778, 16
      %v9005 = vrot.slane %v9003, 5
      %v9006 = vsel %vm1621, %v9001, %v9005
      %v9007 = vshrl.u32 %v8778, 16
      %v9009 = vrot.slane %v9007, 4
      %v9010 = vor.u32 %v9009, %v9005
      %v9011 = vrot.slane %v9010, 4
      %v9013 = vshll.u32 %v8779, 16
      %v9015 = vrot.slane %v9013, 5
      %v9016 = vsel %vm1621, %v9011, %v9015
      %v9018 = vshrl.u32 %v8780, 16
      %v9020 = vrot.slane %v9018, 4
      %v9021 = vshll.u32 %v8780, 16
      %v9023 = vrot.slane %v9021, 5
      %v9024 = vor.u32 %v9020, %v9023
      %v9025 = vrot.slane %v9024, 4
      %v9027 = vshll.u32 %v8781, 16
      %v9029 = vrot.slane %v9027, 5
      %v9030 = vsel %vm1621, %v9025, %v9029
      %v9031 = vshrl.u32 %v8781, 16
      %v9033 = vrot.slane %v9031, 4
      %v9034 = vor.u32 %v9033, %v9029
      %v9035 = vrot.slane %v9034, 4
      %v9037 = vshll.u32 %v8782, 16
      %v9039 = vrot.slane %v9037, 5
      %v9040 = vsel %vm1621, %v9035, %v9039
      %v9042 = vshrl.u32 %v8783, 16
      %v9044 = vrot.slane %v9042, 4
      %v9045 = vshll.u32 %v8783, 16
      %v9047 = vrot.slane %v9045, 5
      %v9048 = vor.u32 %v9044, %v9047
      %v9049 = vrot.slane %v9048, 4
      %v9051 = vshll.u32 %v8784, 16
      %v9053 = vrot.slane %v9051, 5
      %v9054 = vsel %vm1621, %v9049, %v9053
      %v9055 = vshrl.u32 %v8784, 16
      %v9057 = vrot.slane %v9055, 4
      %v9058 = vor.u32 %v9057, %v9053
      %v9059 = vrot.slane %v9058, 4
      %v9061 = vshll.u32 %v8785, 16
      %v9063 = vrot.slane %v9061, 5
      %v9064 = vsel %vm1621, %v9059, %v9063
      %v9066 = vshrl.u32 %v8786, 16
      %v9068 = vrot.slane %v9066, 4
      %v9069 = vshll.u32 %v8786, 16
      %v9071 = vrot.slane %v9069, 5
      %v9072 = vor.u32 %v9068, %v9071
      %v9073 = vrot.slane %v9072, 4
      %v9075 = vshll.u32 %v8787, 16
      %v9077 = vrot.slane %v9075, 5
      %v9078 = vsel %vm1621, %v9073, %v9077
      %v9079 = vshrl.u32 %v8787, 16
      %v9081 = vrot.slane %v9079, 4
      %v9082 = vor.u32 %v9081, %v9077
      %v9083 = vrot.slane %v9082, 4
      %v9085 = vshll.u32 %v8788, 16
      %v9087 = vrot.slane %v9085, 5
      %v9088 = vsel %vm1621, %v9083, %v9087
      %v9090 = vshrl.u32 %v8789, 16
      %v9092 = vrot.slane %v9090, 4
      %v9093 = vshll.u32 %v8789, 16
      %v9095 = vrot.slane %v9093, 5
      %v9096 = vor.u32 %v9092, %v9095
      %v9097 = vrot.slane %v9096, 4
      %v9099 = vshll.u32 %v8790, 16
      %v9101 = vrot.slane %v9099, 5
      %v9102 = vsel %vm1621, %v9097, %v9101
      %v9103 = vshrl.u32 %v8790, 16
      %v9105 = vrot.slane %v9103, 4
      %v9106 = vor.u32 %v9105, %v9101
      %v9107 = vrot.slane %v9106, 4
      %v9109 = vshll.u32 %v8791, 16
      %v9111 = vrot.slane %v9109, 5
      %v9112 = vsel %vm1621, %v9107, %v9111
      %v9114 = vshrl.u32 %v8792, 16
      %v9116 = vrot.slane %v9114, 4
      %v9117 = vshll.u32 %v8792, 16
      %v9119 = vrot.slane %v9117, 5
      %v9120 = vor.u32 %v9116, %v9119
      %v9121 = vrot.slane %v9120, 4
      %v9123 = vshll.u32 %v8793, 16
      %v9125 = vrot.slane %v9123, 5
      %v9126 = vsel %vm1621, %v9121, %v9125
      %v9127 = vshrl.u32 %v8793, 16
      %v9129 = vrot.slane %v9127, 4
      %v9130 = vor.u32 %v9129, %v9125
      %v9131 = vrot.slane %v9130, 4
      %v9133 = vshll.u32 %v8794, 16
      %v9135 = vrot.slane %v9133, 5
      %v9136 = vsel %vm1621, %v9131, %v9135
      %v9138 = vshrl.u32 %v8795, 16
      %v9140 = vrot.slane %v9138, 4
      %v9141 = vshll.u32 %v8795, 16
      %v9143 = vrot.slane %v9141, 5
      %v9144 = vor.u32 %v9140, %v9143
      %v9145 = vrot.slane %v9144, 4
      %v9147 = vshll.u32 %v8796, 16
      %v9149 = vrot.slane %v9147, 5
      %v9150 = vsel %vm1621, %v9145, %v9149
      %v9151 = vshrl.u32 %v8796, 16
      %v9153 = vrot.slane %v9151, 4
      %v9154 = vor.u32 %v9153, %v9149
      %v9155 = vrot.slane %v9154, 4
      %v9157 = vshll.u32 %v8797, 16
      %v9159 = vrot.slane %v9157, 5
      %v9160 = vsel %vm1621, %v9155, %v9159
      %v9162 = vshrl.u32 %v8798, 16
      %v9164 = vrot.slane %v9162, 4
      %v9165 = vshll.u32 %v8798, 16
      %v9167 = vrot.slane %v9165, 5
      %v9168 = vor.u32 %v9164, %v9167
      %v9169 = vrot.slane %v9168, 4
      %v9171 = vshll.u32 %v8799, 16
      %v9173 = vrot.slane %v9171, 5
      %v9174 = vsel %vm1621, %v9169, %v9173
      %v9175 = vshrl.u32 %v8799, 16
      %v9177 = vrot.slane %v9175, 4
      %v9178 = vor.u32 %v9177, %v9173
      %v9179 = vrot.slane %v9178, 4
      %v9181 = vshll.u32 %v8800, 16
      %v9183 = vrot.slane %v9181, 5
      %v9184 = vsel %vm1621, %v9179, %v9183
      %v9185 = vld [vmem:[%s4 + $0x14] sm:$0xf]
      %v9186 = vunpack.c.l.b16 %v8814
      %v9187 = vunpack.c.l.b16 %v8824
      %v9188 = vunpack.c.l.b16 %v8838
      %v9189 = vunpack.c.l.b16 %v8848
      %v9190 = vunpack.c.l.b16 %v8862
      %v9191 = vunpack.c.l.b16 %v8872
      %v9192 = vunpack.c.l.b16 %v8886
      %v9193 = vunpack.c.l.b16 %v8896
      %v9194 = vunpack.c.l.b16 %v8910
      %v9195 = vunpack.c.l.b16 %v8920
      %v9196 = vunpack.c.l.b16 %v8934
      %v9197 = vunpack.c.l.b16 %v8944
      %v9198 = vunpack.c.l.b16 %v8958
      %v9199 = vunpack.c.l.b16 %v8968
      %v9200 = vunpack.c.l.b16 %v8982
      %v9201 = vunpack.c.l.b16 %v8992
      %v9202 = vunpack.c.l.b16 %v9006
      %v9203 = vunpack.c.l.b16 %v9016
      %v9204 = vunpack.c.l.b16 %v9030
      %v9205 = vunpack.c.l.b16 %v9040
      %v9206 = vunpack.c.l.b16 %v9054
      %v9207 = vunpack.c.l.b16 %v9064
      %v9208 = vunpack.c.l.b16 %v9078
      %v9209 = vunpack.c.l.b16 %v9088
      %v9210 = vunpack.c.l.b16 %v9102
      %v9211 = vunpack.c.l.b16 %v9112
      %v9212 = vunpack.c.l.b16 %v9126
      %v9213 = vunpack.c.l.b16 %v9136
      %v9214 = vunpack.c.l.b16 %v9150
      %v9215 = vunpack.c.l.b16 %v9160
      %v9216 = vunpack.c.l.b16 %v9174
      %v9217 = vunpack.c.l.b16 %v9184
      %v9218 = vpack.c.b16 %v9187, %v9186
      %v9219 = vpack.c.b16 %v9189, %v9188
      %v9220 = vpack.c.b16 %v9191, %v9190
      %v9221 = vpack.c.b16 %v9193, %v9192
      %v9222 = vpack.c.b16 %v9195, %v9194
      %v9223 = vpack.c.b16 %v9197, %v9196
      %v9224 = vpack.c.b16 %v9199, %v9198
      %v9225 = vpack.c.b16 %v9201, %v9200
      %v9226 = vpack.c.b16 %v9203, %v9202
      %v9227 = vpack.c.b16 %v9205, %v9204
      %v9228 = vpack.c.b16 %v9207, %v9206
      %v9229 = vpack.c.b16 %v9209, %v9208
      %v9230 = vpack.c.b16 %v9211, %v9210
      %v9231 = vpack.c.b16 %v9213, %v9212
      %v9232 = vpack.c.b16 %v9215, %v9214
      %v9233 = vpack.c.b16 %v9217, %v9216
      %v9235 = vsel %vm1097, %v9218, 0
      %v9238 = vsel %vm1097, %v9219, 0
      %v9241 = vsel %vm1097, %v9220, 0
      %v9244 = vsel %vm1097, %v9221, 0
      %v9247 = vsel %vm1097, %v9222, 0
      %v9250 = vsel %vm1097, %v9223, 0
      %v9253 = vsel %vm1097, %v9224, 0
      %v9256 = vsel %vm1097, %v9225, 0
      %v9259 = vsel %vm1097, %v9226, 0
      %v9262 = vsel %vm1097, %v9227, 0
      %v9265 = vsel %vm1097, %v9228, 0
      %v9268 = vsel %vm1097, %v9229, 0
      %v9271 = vsel %vm1097, %v9230, 0
      %v9274 = vsel %vm1097, %v9231, 0
      %v9277 = vsel %vm1097, %v9232, 0
      %v9280 = vsel %vm1097, %v9233, 0
      %v9283 = vsel %vm1146, %v9185, 0
      %9285 = vmatprep.subr.bf16.mxu0 0
      %9286 = vmatpush1.bf16.msra.mxu0 %v9283
      %9287 = vmatprep.subr.bf16.mxu0 0
      %9288 = vmatpush1.bf16.msra.mxu0 0
      %9289 = vmatprep.subr.bf16.mxu0 0
      %9290 = vmatpush1.bf16.msra.mxu0 0
      %9291 = vmatprep.subr.bf16.mxu0 0
      %9292 = vmatpush1.bf16.msra.mxu0 0
      %9293 = vmatprep.subr.bf16.mxu0 0
      %9294 = vmatpush1.bf16.msra.mxu0 0
      %9295 = vmatprep.subr.bf16.mxu0 0
      %9296 = vmatpush1.bf16.msra.mxu0 0
      %9297 = vmatprep.subr.bf16.mxu0 0
      %9298 = vmatpush1.bf16.msra.mxu0 0
      %9299 = vmatprep.subr.bf16.mxu0 0
      %9300 = vmatpush1.bf16.msra.mxu0 0
      %9301 = vmatprep.subr.bf16.mxu0 0
      %9302 = vmatpush1.bf16.msra.mxu0 0
      %9303 = vmatprep.subr.bf16.mxu0 0
      %9304 = vmatpush1.bf16.msra.mxu0 0
      %9305 = vmatprep.subr.bf16.mxu0 0
      %9306 = vmatpush1.bf16.msra.mxu0 0
      %9307 = vmatprep.subr.bf16.mxu0 0
      %9308 = vmatpush1.bf16.msra.mxu0 0
      %9309 = vmatprep.subr.bf16.mxu0 0
      %9310 = vmatpush1.bf16.msra.mxu0 0
      %9311 = vmatprep.subr.bf16.mxu0 0
      %9312 = vmatpush1.bf16.msra.mxu0 0
      %9313 = vmatprep.subr.bf16.mxu0 0
      %9314 = vmatpush1.bf16.msra.mxu0 0
      %9315 = vmatprep.subr.bf16.mxu0 0
      %9316 = vmatpush1.bf16.msra.mxu0 0
      %9317 = vmatprep.mubr.bf16.mxu0 0
      %9318 = vmatmul.mubr.bf16.gmra.mrb[0].mxu0 %v9235
      %v9319 = vpop.f32.mrb[0].mxu0
      %v9320 = vadd.f32 0.0, %v9319
      %v9321 = vpop.f32.mrb[0].mxu0
      %v9322 = vpop.f32.mrb[0].mxu0
      %v9323 = vadd.f32 0.0, %v9322
      %v9324 = vpop.f32.mrb[0].mxu0
      %9325 = vmatprep.mubr.bf16.mxu0 0
      %9326 = vmatmul.mubr.bf16.gmra.mrb[0].mxu0 %v9238
      %v9327 = vpop.f32.mrb[0].mxu0
      %v9328 = vadd.f32 0.0, %v9327
      %v9329 = vpop.f32.mrb[0].mxu0
      %v9330 = vpop.f32.mrb[0].mxu0
      %v9331 = vadd.f32 0.0, %v9330
      %v9332 = vpop.f32.mrb[0].mxu0
      %9333 = vmatprep.mubr.bf16.mxu0 0
      %9334 = vmatmul.mubr.bf16.gmra.mrb[0].mxu0 %v9241
      %v9335 = vpop.f32.mrb[0].mxu0
      %v9336 = vadd.f32 0.0, %v9335
      %v9337 = vpop.f32.mrb[0].mxu0
      %v9338 = vpop.f32.mrb[0].mxu0
      %v9339 = vadd.f32 0.0, %v9338
      %v9340 = vpop.f32.mrb[0].mxu0
      %9341 = vmatprep.mubr.bf16.mxu0 0
      %9342 = vmatmul.mubr.bf16.gmra.mrb[0].mxu0 %v9244
      %v9343 = vpop.f32.mrb[0].mxu0
      %v9344 = vadd.f32 0.0, %v9343
      %v9345 = vpop.f32.mrb[0].mxu0
      %v9346 = vpop.f32.mrb[0].mxu0
      %v9347 = vadd.f32 0.0, %v9346
      %v9348 = vpop.f32.mrb[0].mxu0
      %9349 = vmatprep.mubr.bf16.mxu0 0
      %9350 = vmatmul.mubr.bf16.gmra.mrb[0].mxu0 %v9247
      %v9351 = vpop.f32.mrb[0].mxu0
      %v9352 = vadd.f32 0.0, %v9351
      %v9353 = vpop.f32.mrb[0].mxu0
      %v9354 = vpop.f32.mrb[0].mxu0
      %v9355 = vadd.f32 0.0, %v9354
      %v9356 = vpop.f32.mrb[0].mxu0
      %9357 = vmatprep.mubr.bf16.mxu0 0
      %9358 = vmatmul.mubr.bf16.gmra.mrb[0].mxu0 %v9250
      %v9359 = vpop.f32.mrb[0].mxu0
      %v9360 = vadd.f32 0.0, %v9359
      %v9361 = vpop.f32.mrb[0].mxu0
      %v9362 = vpop.f32.mrb[0].mxu0
      %v9363 = vadd.f32 0.0, %v9362
      %v9364 = vpop.f32.mrb[0].mxu0
      %9365 = vmatprep.mubr.bf16.mxu0 0
      %9366 = vmatmul.mubr.bf16.gmra.mrb[0].mxu0 %v9253
      %v9367 = vpop.f32.mrb[0].mxu0
      %v9368 = vadd.f32 0.0, %v9367
      %v9369 = vpop.f32.mrb[0].mxu0
      %v9370 = vpop.f32.mrb[0].mxu0
      %v9371 = vadd.f32 0.0, %v9370
      %v9372 = vpop.f32.mrb[0].mxu0
      %9373 = vmatprep.mubr.bf16.mxu0 0
      %9374 = vmatmul.mubr.bf16.gmra.mrb[0].mxu0 %v9256
      %v9375 = vpop.f32.mrb[0].mxu0
      %v9376 = vadd.f32 0.0, %v9375
      %v9377 = vpop.f32.mrb[0].mxu0
      %v9378 = vpop.f32.mrb[0].mxu0
      %v9379 = vadd.f32 0.0, %v9378
      %v9380 = vpop.f32.mrb[0].mxu0
      %9381 = vmatprep.mubr.bf16.mxu0 0
      %9382 = vmatmul.mubr.bf16.gmra.mrb[0].mxu0 %v9259
      %v9383 = vpop.f32.mrb[0].mxu0
      %v9384 = vadd.f32 0.0, %v9383
      %v9385 = vpop.f32.mrb[0].mxu0
      %v9386 = vpop.f32.mrb[0].mxu0
      %v9387 = vadd.f32 0.0, %v9386
      %v9388 = vpop.f32.mrb[0].mxu0
      %9389 = vmatprep.mubr.bf16.mxu0 0
      %9390 = vmatmul.mubr.bf16.gmra.mrb[0].mxu0 %v9262
      %v9391 = vpop.f32.mrb[0].mxu0
      %v9392 = vadd.f32 0.0, %v9391
      %v9393 = vpop.f32.mrb[0].mxu0
      %v9394 = vpop.f32.mrb[0].mxu0
      %v9395 = vadd.f32 0.0, %v9394
      %v9396 = vpop.f32.mrb[0].mxu0
      %9397 = vmatprep.mubr.bf16.mxu0 0
      %9398 = vmatmul.mubr.bf16.gmra.mrb[0].mxu0 %v9265
      %v9399 = vpop.f32.mrb[0].mxu0
      %v9400 = vadd.f32 0.0, %v9399
      %v9401 = vpop.f32.mrb[0].mxu0
      %v9402 = vpop.f32.mrb[0].mxu0
      %v9403 = vadd.f32 0.0, %v9402
      %v9404 = vpop.f32.mrb[0].mxu0
      %9405 = vmatprep.mubr.bf16.mxu0 0
      %9406 = vmatmul.mubr.bf16.gmra.mrb[0].mxu0 %v9268
      %v9407 = vpop.f32.mrb[0].mxu0
      %v9408 = vadd.f32 0.0, %v9407
      %v9409 = vpop.f32.mrb[0].mxu0
      %v9410 = vpop.f32.mrb[0].mxu0
      %v9411 = vadd.f32 0.0, %v9410
      %v9412 = vpop.f32.mrb[0].mxu0
      %9413 = vmatprep.mubr.bf16.mxu0 0
      %9414 = vmatmul.mubr.bf16.gmra.mrb[0].mxu0 %v9271
      %v9415 = vpop.f32.mrb[0].mxu0
      %v9416 = vadd.f32 0.0, %v9415
      %v9417 = vpop.f32.mrb[0].mxu0
      %v9418 = vpop.f32.mrb[0].mxu0
      %v9419 = vadd.f32 0.0, %v9418
      %v9420 = vpop.f32.mrb[0].mxu0
      %9421 = vmatprep.mubr.bf16.mxu0 0
      %9422 = vmatmul.mubr.bf16.gmra.mrb[0].mxu0 %v9274
      %v9423 = vpop.f32.mrb[0].mxu0
      %v9424 = vadd.f32 0.0, %v9423
      %v9425 = vpop.f32.mrb[0].mxu0
      %v9426 = vpop.f32.mrb[0].mxu0
      %v9427 = vadd.f32 0.0, %v9426
      %v9428 = vpop.f32.mrb[0].mxu0
      %9429 = vmatprep.mubr.bf16.mxu0 0
      %9430 = vmatmul.mubr.bf16.gmra.mrb[0].mxu0 %v9277
      %v9431 = vpop.f32.mrb[0].mxu0
      %v9432 = vadd.f32 0.0, %v9431
      %v9433 = vpop.f32.mrb[0].mxu0
      %v9434 = vpop.f32.mrb[0].mxu0
      %v9435 = vadd.f32 0.0, %v9434
      %v9436 = vpop.f32.mrb[0].mxu0
      %9437 = vmatprep.mubr.bf16.mxu0 0
      %9438 = vmatmul.mubr.bf16.gmra.mrb[0].mxu0 %v9280
      %v9439 = vpop.f32.mrb[0].mxu0
      %v9440 = vadd.f32 0.0, %v9439
      %v9441 = vpop.f32.mrb[0].mxu0
      %v9442 = vpop.f32.mrb[0].mxu0
      %v9443 = vadd.f32 0.0, %v9442
      %v9444 = vpop.f32.mrb[0].mxu0
      %9445 = vdwg.mxu0
      %v9446 = vadd.f32 %v8721, %v9320
      %v9447 = vadd.f32 %v8722, %v9323
      %v9448 = vadd.f32 %v8723, %v9328
      %v9449 = vadd.f32 %v8724, %v9331
      %v9450 = vadd.f32 %v8725, %v9336
      %v9451 = vadd.f32 %v8726, %v9339
      %v9452 = vadd.f32 %v8727, %v9344
      %v9453 = vadd.f32 %v8728, %v9347
      %v9454 = vadd.f32 %v8729, %v9352
      %v9455 = vadd.f32 %v8730, %v9355
      %v9456 = vadd.f32 %v8731, %v9360
      %v9457 = vadd.f32 %v8732, %v9363
      %v9458 = vadd.f32 %v8733, %v9368
      %v9459 = vadd.f32 %v8734, %v9371
      %v9460 = vadd.f32 %v8735, %v9376
      %v9461 = vadd.f32 %v8736, %v9379
      %v9462 = vadd.f32 %v8737, %v9384
      %v9463 = vadd.f32 %v8738, %v9387
      %v9464 = vadd.f32 %v8739, %v9392
      %v9465 = vadd.f32 %v8740, %v9395
      %v9466 = vadd.f32 %v8741, %v9400
      %v9467 = vadd.f32 %v8742, %v9403
      %v9468 = vadd.f32 %v8743, %v9408
      %v9469 = vadd.f32 %v8744, %v9411
      %v9470 = vadd.f32 %v8745, %v9416
      %v9471 = vadd.f32 %v8746, %v9419
      %v9472 = vadd.f32 %v8747, %v9424
      %v9473 = vadd.f32 %v8748, %v9427
      %v9474 = vadd.f32 %v8749, %v9432
      %v9475 = vadd.f32 %v8750, %v9435
      %v9476 = vadd.f32 %v8751, %v9440
      %v9477 = vadd.f32 %v8752, %v9443
      %s9478 = scalar_lea.vmem [#allocation3], 32
      %v9479 = vld [vmem:[%s9478] sm:$0x8]
      %v9480 = vld [vmem:[%s9478 + $0x4] sm:$0xf]
      %v9481 = vld [vmem:[%s9478 + $0x8] sm:$0xf]
      %v9482 = vld [vmem:[%s9478 + $0x10] sm:$0x8]
      %v9483 = vld [vmem:[%s9478 + $0x14] sm:$0xf]
      %v9484 = vld [vmem:[%s9478 + $0x18] sm:$0xf]
      %v9485 = vld [vmem:[%s9478 + $0x20] sm:$0x8]
      %v9486 = vld [vmem:[%s9478 + $0x24] sm:$0xf]
      %v9487 = vld [vmem:[%s9478 + $0x28] sm:$0xf]
      %v9488 = vld [vmem:[%s9478 + $0x30] sm:$0x8]
      %v9489 = vld [vmem:[%s9478 + $0x34] sm:$0xf]
      %v9490 = vld [vmem:[%s9478 + $0x38] sm:$0xf]
      %v9491 = vld [vmem:[%s9478 + $0x40] sm:$0x8]
      %v9492 = vld [vmem:[%s9478 + $0x44] sm:$0xf]
      %v9493 = vld [vmem:[%s9478 + $0x48] sm:$0xf]
      %v9494 = vld [vmem:[%s9478 + $0x50] sm:$0x8]
      %v9495 = vld [vmem:[%s9478 + $0x54] sm:$0xf]
      %v9496 = vld [vmem:[%s9478 + $0x58] sm:$0xf]
      %v9497 = vld [vmem:[%s9478 + $0x60] sm:$0x8]
      %v9498 = vld [vmem:[%s9478 + $0x64] sm:$0xf]
      %v9499 = vld [vmem:[%s9478 + $0x68] sm:$0xf]
      %v9500 = vld [vmem:[%s9478 + $0x70] sm:$0x8]
      %v9501 = vld [vmem:[%s9478 + $0x74] sm:$0xf]
      %v9502 = vld [vmem:[%s9478 + $0x78] sm:$0xf]
      %v9503 = vld [vmem:[%s9478 + $0x80] sm:$0x8]
      %v9504 = vld [vmem:[%s9478 + $0x84] sm:$0xf]
      %v9505 = vld [vmem:[%s9478 + $0x88] sm:$0xf]
      %v9506 = vld [vmem:[%s9478 + $0x90] sm:$0x8]
      %v9507 = vld [vmem:[%s9478 + $0x94] sm:$0xf]
      %v9508 = vld [vmem:[%s9478 + $0x98] sm:$0xf]
      %v9509 = vld [vmem:[%s9478 + $0xa0] sm:$0x8]
      %v9510 = vld [vmem:[%s9478 + $0xa4] sm:$0xf]
      %v9511 = vld [vmem:[%s9478 + $0xa8] sm:$0xf]
      %v9512 = vld [vmem:[%s9478 + $0xb0] sm:$0x8]
      %v9513 = vld [vmem:[%s9478 + $0xb4] sm:$0xf]
      %v9514 = vld [vmem:[%s9478 + $0xb8] sm:$0xf]
      %v9515 = vld [vmem:[%s9478 + $0xc0] sm:$0x8]
      %v9516 = vld [vmem:[%s9478 + $0xc4] sm:$0xf]
      %v9517 = vld [vmem:[%s9478 + $0xc8] sm:$0xf]
      %v9518 = vld [vmem:[%s9478 + $0xd0] sm:$0x8]
      %v9519 = vld [vmem:[%s9478 + $0xd4] sm:$0xf]
      %v9520 = vld [vmem:[%s9478 + $0xd8] sm:$0xf]
      %v9521 = vld [vmem:[%s9478 + $0xe0] sm:$0x8]
      %v9522 = vld [vmem:[%s9478 + $0xe4] sm:$0xf]
      %v9523 = vld [vmem:[%s9478 + $0xe8] sm:$0xf]
      %v9524 = vld [vmem:[%s9478 + $0xf0] sm:$0x8]
      %v9525 = vld [vmem:[%s9478 + $0xf4] sm:$0xf]
      %v9526 = vld [vmem:[%s9478 + $0xf8] sm:$0xf]
      %v9528 = vshrl.u32 %v9479, 16
      %v9530 = vrot.slane %v9528, 7
      %v9531 = vrot.slane %v9530, 4
      %v9533 = vshrl.u32 %v9480, 16
      %v9535 = vrot.slane %v9533, 7
      %v9536 = vshll.u32 %v9480, 16
      %v9538 = vor.u32 %v9535, %v9536
      %v9539 = vsel %vm662, %v9531, %v9538
      %v9540 = vrot.slane %v9535, 4
      %v9542 = vshrl.u32 %v9481, 16
      %v9544 = vrot.slane %v9542, 7
      %v9545 = vshll.u32 %v9481, 16
      %v9547 = vor.u32 %v9544, %v9545
      %v9548 = vsel %vm662, %v9540, %v9547
      %v9550 = vshrl.u32 %v9482, 16
      %v9552 = vrot.slane %v9550, 7
      %v9553 = vrot.slane %v9552, 4
      %v9555 = vshrl.u32 %v9483, 16
      %v9557 = vrot.slane %v9555, 7
      %v9558 = vshll.u32 %v9483, 16
      %v9560 = vor.u32 %v9557, %v9558
      %v9561 = vsel %vm662, %v9553, %v9560
      %v9562 = vrot.slane %v9557, 4
      %v9564 = vshrl.u32 %v9484, 16
      %v9566 = vrot.slane %v9564, 7
      %v9567 = vshll.u32 %v9484, 16
      %v9569 = vor.u32 %v9566, %v9567
      %v9570 = vsel %vm662, %v9562, %v9569
      %v9572 = vshrl.u32 %v9485, 16
      %v9574 = vrot.slane %v9572, 7
      %v9575 = vrot.slane %v9574, 4
      %v9577 = vshrl.u32 %v9486, 16
      %v9579 = vrot.slane %v9577, 7
      %v9580 = vshll.u32 %v9486, 16
      %v9582 = vor.u32 %v9579, %v9580
      %v9583 = vsel %vm662, %v9575, %v9582
      %v9584 = vrot.slane %v9579, 4
      %v9586 = vshrl.u32 %v9487, 16
      %v9588 = vrot.slane %v9586, 7
      %v9589 = vshll.u32 %v9487, 16
      %v9591 = vor.u32 %v9588, %v9589
      %v9592 = vsel %vm662, %v9584, %v9591
      %v9594 = vshrl.u32 %v9488, 16
      %v9596 = vrot.slane %v9594, 7
      %v9597 = vrot.slane %v9596, 4
      %v9599 = vshrl.u32 %v9489, 16
      %v9601 = vrot.slane %v9599, 7
      %v9602 = vshll.u32 %v9489, 16
      %v9604 = vor.u32 %v9601, %v9602
      %v9605 = vsel %vm662, %v9597, %v9604
      %v9606 = vrot.slane %v9601, 4
      %v9608 = vshrl.u32 %v9490, 16
      %v9610 = vrot.slane %v9608, 7
      %v9611 = vshll.u32 %v9490, 16
      %v9613 = vor.u32 %v9610, %v9611
      %v9614 = vsel %vm662, %v9606, %v9613
      %v9616 = vshrl.u32 %v9491, 16
      %v9618 = vrot.slane %v9616, 7
      %v9619 = vrot.slane %v9618, 4
      %v9621 = vshrl.u32 %v9492, 16
      %v9623 = vrot.slane %v9621, 7
      %v9624 = vshll.u32 %v9492, 16
      %v9626 = vor.u32 %v9623, %v9624
      %v9627 = vsel %vm662, %v9619, %v9626
      %v9628 = vrot.slane %v9623, 4
      %v9630 = vshrl.u32 %v9493, 16
      %v9632 = vrot.slane %v9630, 7
      %v9633 = vshll.u32 %v9493, 16
      %v9635 = vor.u32 %v9632, %v9633
      %v9636 = vsel %vm662, %v9628, %v9635
      %v9638 = vshrl.u32 %v9494, 16
      %v9640 = vrot.slane %v9638, 7
      %v9641 = vrot.slane %v9640, 4
      %v9643 = vshrl.u32 %v9495, 16
      %v9645 = vrot.slane %v9643, 7
      %v9646 = vshll.u32 %v9495, 16
      %v9648 = vor.u32 %v9645, %v9646
      %v9649 = vsel %vm662, %v9641, %v9648
      %v9650 = vrot.slane %v9645, 4
      %v9652 = vshrl.u32 %v9496, 16
      %v9654 = vrot.slane %v9652, 7
      %v9655 = vshll.u32 %v9496, 16
      %v9657 = vor.u32 %v9654, %v9655
      %v9658 = vsel %vm662, %v9650, %v9657
      %v9660 = vshrl.u32 %v9497, 16
      %v9662 = vrot.slane %v9660, 7
      %v9663 = vrot.slane %v9662, 4
      %v9665 = vshrl.u32 %v9498, 16
      %v9667 = vrot.slane %v9665, 7
      %v9668 = vshll.u32 %v9498, 16
      %v9670 = vor.u32 %v9667, %v9668
      %v9671 = vsel %vm662, %v9663, %v9670
      %v9672 = vrot.slane %v9667, 4
      %v9674 = vshrl.u32 %v9499, 16
      %v9676 = vrot.slane %v9674, 7
      %v9677 = vshll.u32 %v9499, 16
      %v9679 = vor.u32 %v9676, %v9677
      %v9680 = vsel %vm662, %v9672, %v9679
      %v9682 = vshrl.u32 %v9500, 16
      %v9684 = vrot.slane %v9682, 7
      %v9685 = vrot.slane %v9684, 4
      %v9687 = vshrl.u32 %v9501, 16
      %v9689 = vrot.slane %v9687, 7
      %v9690 = vshll.u32 %v9501, 16
      %v9692 = vor.u32 %v9689, %v9690
      %v9693 = vsel %vm662, %v9685, %v9692
      %v9694 = vrot.slane %v9689, 4
      %v9696 = vshrl.u32 %v9502, 16
      %v9698 = vrot.slane %v9696, 7
      %v9699 = vshll.u32 %v9502, 16
      %v9701 = vor.u32 %v9698, %v9699
      %v9702 = vsel %vm662, %v9694, %v9701
      %v9704 = vshrl.u32 %v9503, 16
      %v9706 = vrot.slane %v9704, 7
      %v9707 = vrot.slane %v9706, 4
      %v9709 = vshrl.u32 %v9504, 16
      %v9711 = vrot.slane %v9709, 7
      %v9712 = vshll.u32 %v9504, 16
      %v9714 = vor.u32 %v9711, %v9712
      %v9715 = vsel %vm662, %v9707, %v9714
      %v9716 = vrot.slane %v9711, 4
      %v9718 = vshrl.u32 %v9505, 16
      %v9720 = vrot.slane %v9718, 7
      %v9721 = vshll.u32 %v9505, 16
      %v9723 = vor.u32 %v9720, %v9721
      %v9724 = vsel %vm662, %v9716, %v9723
      %v9726 = vshrl.u32 %v9506, 16
      %v9728 = vrot.slane %v9726, 7
      %v9729 = vrot.slane %v9728, 4
      %v9731 = vshrl.u32 %v9507, 16
      %v9733 = vrot.slane %v9731, 7
      %v9734 = vshll.u32 %v9507, 16
      %v9736 = vor.u32 %v9733, %v9734
      %v9737 = vsel %vm662, %v9729, %v9736
      %v9738 = vrot.slane %v9733, 4
      %v9740 = vshrl.u32 %v9508, 16
      %v9742 = vrot.slane %v9740, 7
      %v9743 = vshll.u32 %v9508, 16
      %v9745 = vor.u32 %v9742, %v9743
      %v9746 = vsel %vm662, %v9738, %v9745
      %v9748 = vshrl.u32 %v9509, 16
      %v9750 = vrot.slane %v9748, 7
      %v9751 = vrot.slane %v9750, 4
      %v9753 = vshrl.u32 %v9510, 16
      %v9755 = vrot.slane %v9753, 7
      %v9756 = vshll.u32 %v9510, 16
      %v9758 = vor.u32 %v9755, %v9756
      %v9759 = vsel %vm662, %v9751, %v9758
      %v9760 = vrot.slane %v9755, 4
      %v9762 = vshrl.u32 %v9511, 16
      %v9764 = vrot.slane %v9762, 7
      %v9765 = vshll.u32 %v9511, 16
      %v9767 = vor.u32 %v9764, %v9765
      %v9768 = vsel %vm662, %v9760, %v9767
      %v9770 = vshrl.u32 %v9512, 16
      %v9772 = vrot.slane %v9770, 7
      %v9773 = vrot.slane %v9772, 4
      %v9775 = vshrl.u32 %v9513, 16
      %v9777 = vrot.slane %v9775, 7
      %v9778 = vshll.u32 %v9513, 16
      %v9780 = vor.u32 %v9777, %v9778
      %v9781 = vsel %vm662, %v9773, %v9780
      %v9782 = vrot.slane %v9777, 4
      %v9784 = vshrl.u32 %v9514, 16
      %v9786 = vrot.slane %v9784, 7
      %v9787 = vshll.u32 %v9514, 16
      %v9789 = vor.u32 %v9786, %v9787
      %v9790 = vsel %vm662, %v9782, %v9789
      %v9792 = vshrl.u32 %v9515, 16
      %v9794 = vrot.slane %v9792, 7
      %v9795 = vrot.slane %v9794, 4
      %v9797 = vshrl.u32 %v9516, 16
      %v9799 = vrot.slane %v9797, 7
      %v9800 = vshll.u32 %v9516, 16
      %v9802 = vor.u32 %v9799, %v9800
      %v9803 = vsel %vm662, %v9795, %v9802
      %v9804 = vrot.slane %v9799, 4
      %v9806 = vshrl.u32 %v9517, 16
      %v9808 = vrot.slane %v9806, 7
      %v9809 = vshll.u32 %v9517, 16
      %v9811 = vor.u32 %v9808, %v9809
      %v9812 = vsel %vm662, %v9804, %v9811
      %v9814 = vshrl.u32 %v9518, 16
      %v9816 = vrot.slane %v9814, 7
      %v9817 = vrot.slane %v9816, 4
      %v9819 = vshrl.u32 %v9519, 16
      %v9821 = vrot.slane %v9819, 7
      %v9822 = vshll.u32 %v9519, 16
      %v9824 = vor.u32 %v9821, %v9822
      %v9825 = vsel %vm662, %v9817, %v9824
      %v9826 = vrot.slane %v9821, 4
      %v9828 = vshrl.u32 %v9520, 16
      %v9830 = vrot.slane %v9828, 7
      %v9831 = vshll.u32 %v9520, 16
      %v9833 = vor.u32 %v9830, %v9831
      %v9834 = vsel %vm662, %v9826, %v9833
      %v9836 = vshrl.u32 %v9521, 16
      %v9838 = vrot.slane %v9836, 7
      %v9839 = vrot.slane %v9838, 4
      %v9841 = vshrl.u32 %v9522, 16
      %v9843 = vrot.slane %v9841, 7
      %v9844 = vshll.u32 %v9522, 16
      %v9846 = vor.u32 %v9843, %v9844
      %v9847 = vsel %vm662, %v9839, %v9846
      %v9848 = vrot.slane %v9843, 4
      %v9850 = vshrl.u32 %v9523, 16
      %v9852 = vrot.slane %v9850, 7
      %v9853 = vshll.u32 %v9523, 16
      %v9855 = vor.u32 %v9852, %v9853
      %v9856 = vsel %vm662, %v9848, %v9855
      %v9858 = vshrl.u32 %v9524, 16
      %v9860 = vrot.slane %v9858, 7
      %v9861 = vrot.slane %v9860, 4
      %v9863 = vshrl.u32 %v9525, 16
      %v9865 = vrot.slane %v9863, 7
      %v9866 = vshll.u32 %v9525, 16
      %v9868 = vor.u32 %v9865, %v9866
      %v9869 = vsel %vm662, %v9861, %v9868
      %v9870 = vrot.slane %v9865, 4
      %v9872 = vshrl.u32 %v9526, 16
      %v9874 = vrot.slane %v9872, 7
      %v9875 = vshll.u32 %v9526, 16
      %v9877 = vor.u32 %v9874, %v9875
      %v9878 = vsel %vm662, %v9870, %v9877
      %v9879 = vld [vmem:[%s4 + $0x18] sm:$0xf]
      %v9880 = vunpack.c.l.b16 %v9539
      %v9881 = vunpack.c.l.b16 %v9548
      %v9882 = vunpack.c.l.b16 %v9561
      %v9883 = vunpack.c.l.b16 %v9570
      %v9884 = vunpack.c.l.b16 %v9583
      %v9885 = vunpack.c.l.b16 %v9592
      %v9886 = vunpack.c.l.b16 %v9605
      %v9887 = vunpack.c.l.b16 %v9614
      %v9888 = vunpack.c.l.b16 %v9627
      %v9889 = vunpack.c.l.b16 %v9636
      %v9890 = vunpack.c.l.b16 %v9649
      %v9891 = vunpack.c.l.b16 %v9658
      %v9892 = vunpack.c.l.b16 %v9671
      %v9893 = vunpack.c.l.b16 %v9680
      %v9894 = vunpack.c.l.b16 %v9693
      %v9895 = vunpack.c.l.b16 %v9702
      %v9896 = vunpack.c.l.b16 %v9715
      %v9897 = vunpack.c.l.b16 %v9724
      %v9898 = vunpack.c.l.b16 %v9737
      %v9899 = vunpack.c.l.b16 %v9746
      %v9900 = vunpack.c.l.b16 %v9759
      %v9901 = vunpack.c.l.b16 %v9768
      %v9902 = vunpack.c.l.b16 %v9781
      %v9903 = vunpack.c.l.b16 %v9790
      %v9904 = vunpack.c.l.b16 %v9803
      %v9905 = vunpack.c.l.b16 %v9812
      %v9906 = vunpack.c.l.b16 %v9825
      %v9907 = vunpack.c.l.b16 %v9834
      %v9908 = vunpack.c.l.b16 %v9847
      %v9909 = vunpack.c.l.b16 %v9856
      %v9910 = vunpack.c.l.b16 %v9869
      %v9911 = vunpack.c.l.b16 %v9878
      %v9912 = vpack.c.b16 %v9881, %v9880
      %v9913 = vpack.c.b16 %v9883, %v9882
      %v9914 = vpack.c.b16 %v9885, %v9884
      %v9915 = vpack.c.b16 %v9887, %v9886
      %v9916 = vpack.c.b16 %v9889, %v9888
      %v9917 = vpack.c.b16 %v9891, %v9890
      %v9918 = vpack.c.b16 %v9893, %v9892
      %v9919 = vpack.c.b16 %v9895, %v9894
      %v9920 = vpack.c.b16 %v9897, %v9896
      %v9921 = vpack.c.b16 %v9899, %v9898
      %v9922 = vpack.c.b16 %v9901, %v9900
      %v9923 = vpack.c.b16 %v9903, %v9902
      %v9924 = vpack.c.b16 %v9905, %v9904
      %v9925 = vpack.c.b16 %v9907, %v9906
      %v9926 = vpack.c.b16 %v9909, %v9908
      %v9927 = vpack.c.b16 %v9911, %v9910
      %v9929 = vsel %vm1097, %v9912, 0
      %v9932 = vsel %vm1097, %v9913, 0
      %v9935 = vsel %vm1097, %v9914, 0
      %v9938 = vsel %vm1097, %v9915, 0
      %v9941 = vsel %vm1097, %v9916, 0
      %v9944 = vsel %vm1097, %v9917, 0
      %v9947 = vsel %vm1097, %v9918, 0
      %v9950 = vsel %vm1097, %v9919, 0
      %v9953 = vsel %vm1097, %v9920, 0
      %v9956 = vsel %vm1097, %v9921, 0
      %v9959 = vsel %vm1097, %v9922, 0
      %v9962 = vsel %vm1097, %v9923, 0
      %v9965 = vsel %vm1097, %v9924, 0
      %v9968 = vsel %vm1097, %v9925, 0
      %v9971 = vsel %vm1097, %v9926, 0
      %v9974 = vsel %vm1097, %v9927, 0
      %v9977 = vsel %vm1146, %v9879, 0
      %9979 = vmatprep.subr.bf16.mxu0 0
      %9980 = vmatpush1.bf16.msra.mxu0 %v9977
      %9981 = vmatprep.subr.bf16.mxu0 0
      %9982 = vmatpush1.bf16.msra.mxu0 0
      %9983 = vmatprep.subr.bf16.mxu0 0
      %9984 = vmatpush1.bf16.msra.mxu0 0
      %9985 = vmatprep.subr.bf16.mxu0 0
      %9986 = vmatpush1.bf16.msra.mxu0 0
      %9987 = vmatprep.subr.bf16.mxu0 0
      %9988 = vmatpush1.bf16.msra.mxu0 0
      %9989 = vmatprep.subr.bf16.mxu0 0
      %9990 = vmatpush1.bf16.msra.mxu0 0
      %9991 = vmatprep.subr.bf16.mxu0 0
      %9992 = vmatpush1.bf16.msra.mxu0 0
      %9993 = vmatprep.subr.bf16.mxu0 0
      %9994 = vmatpush1.bf16.msra.mxu0 0
      %9995 = vmatprep.subr.bf16.mxu0 0
      %9996 = vmatpush1.bf16.msra.mxu0 0
      %9997 = vmatprep.subr.bf16.mxu0 0
      %9998 = vmatpush1.bf16.msra.mxu0 0
      %9999 = vmatprep.subr.bf16.mxu0 0
      %10000 = vmatpush1.bf16.msra.mxu0 0
      %10001 = vmatprep.subr.bf16.mxu0 0
      %10002 = vmatpush1.bf16.msra.mxu0 0
      %10003 = vmatprep.subr.bf16.mxu0 0
      %10004 = vmatpush1.bf16.msra.mxu0 0
      %10005 = vmatprep.subr.bf16.mxu0 0
      %10006 = vmatpush1.bf16.msra.mxu0 0
      %10007 = vmatprep.subr.bf16.mxu0 0
      %10008 = vmatpush1.bf16.msra.mxu0 0
      %10009 = vmatprep.subr.bf16.mxu0 0
      %10010 = vmatpush1.bf16.msra.mxu0 0
      %10011 = vmatprep.mubr.bf16.mxu0 0
      %10012 = vmatmul.mubr.bf16.gmra.mrb[0].mxu0 %v9929
      %v10013 = vpop.f32.mrb[0].mxu0
      %v10014 = vadd.f32 0.0, %v10013
      %v10015 = vpop.f32.mrb[0].mxu0
      %v10016 = vpop.f32.mrb[0].mxu0
      %v10017 = vadd.f32 0.0, %v10016
      %v10018 = vpop.f32.mrb[0].mxu0
      %10019 = vmatprep.mubr.bf16.mxu0 0
      %10020 = vmatmul.mubr.bf16.gmra.mrb[0].mxu0 %v9932
      %v10021 = vpop.f32.mrb[0].mxu0
      %v10022 = vadd.f32 0.0, %v10021
      %v10023 = vpop.f32.mrb[0].mxu0
      %v10024 = vpop.f32.mrb[0].mxu0
      %v10025 = vadd.f32 0.0, %v10024
      %v10026 = vpop.f32.mrb[0].mxu0
      %10027 = vmatprep.mubr.bf16.mxu0 0
      %10028 = vmatmul.mubr.bf16.gmra.mrb[0].mxu0 %v9935
      %v10029 = vpop.f32.mrb[0].mxu0
      %v10030 = vadd.f32 0.0, %v10029
      %v10031 = vpop.f32.mrb[0].mxu0
      %v10032 = vpop.f32.mrb[0].mxu0
      %v10033 = vadd.f32 0.0, %v10032
      %v10034 = vpop.f32.mrb[0].mxu0
      %10035 = vmatprep.mubr.bf16.mxu0 0
      %10036 = vmatmul.mubr.bf16.gmra.mrb[0].mxu0 %v9938
      %v10037 = vpop.f32.mrb[0].mxu0
      %v10038 = vadd.f32 0.0, %v10037
      %v10039 = vpop.f32.mrb[0].mxu0
      %v10040 = vpop.f32.mrb[0].mxu0
      %v10041 = vadd.f32 0.0, %v10040
      %v10042 = vpop.f32.mrb[0].mxu0
      %10043 = vmatprep.mubr.bf16.mxu0 0
      %10044 = vmatmul.mubr.bf16.gmra.mrb[0].mxu0 %v9941
      %v10045 = vpop.f32.mrb[0].mxu0
      %v10046 = vadd.f32 0.0, %v10045
      %v10047 = vpop.f32.mrb[0].mxu0
      %v10048 = vpop.f32.mrb[0].mxu0
      %v10049 = vadd.f32 0.0, %v10048
      %v10050 = vpop.f32.mrb[0].mxu0
      %10051 = vmatprep.mubr.bf16.mxu0 0
      %10052 = vmatmul.mubr.bf16.gmra.mrb[0].mxu0 %v9944
      %v10053 = vpop.f32.mrb[0].mxu0
      %v10054 = vadd.f32 0.0, %v10053
      %v10055 = vpop.f32.mrb[0].mxu0
      %v10056 = vpop.f32.mrb[0].mxu0
      %v10057 = vadd.f32 0.0, %v10056
      %v10058 = vpop.f32.mrb[0].mxu0
      %10059 = vmatprep.mubr.bf16.mxu0 0
      %10060 = vmatmul.mubr.bf16.gmra.mrb[0].mxu0 %v9947
      %v10061 = vpop.f32.mrb[0].mxu0
      %v10062 = vadd.f32 0.0, %v10061
      %v10063 = vpop.f32.mrb[0].mxu0
      %v10064 = vpop.f32.mrb[0].mxu0
      %v10065 = vadd.f32 0.0, %v10064
      %v10066 = vpop.f32.mrb[0].mxu0
      %10067 = vmatprep.mubr.bf16.mxu0 0
      %10068 = vmatmul.mubr.bf16.gmra.mrb[0].mxu0 %v9950
      %v10069 = vpop.f32.mrb[0].mxu0
      %v10070 = vadd.f32 0.0, %v10069
      %v10071 = vpop.f32.mrb[0].mxu0
      %v10072 = vpop.f32.mrb[0].mxu0
      %v10073 = vadd.f32 0.0, %v10072
      %v10074 = vpop.f32.mrb[0].mxu0
      %10075 = vmatprep.mubr.bf16.mxu0 0
      %10076 = vmatmul.mubr.bf16.gmra.mrb[0].mxu0 %v9953
      %v10077 = vpop.f32.mrb[0].mxu0
      %v10078 = vadd.f32 0.0, %v10077
      %v10079 = vpop.f32.mrb[0].mxu0
      %v10080 = vpop.f32.mrb[0].mxu0
      %v10081 = vadd.f32 0.0, %v10080
      %v10082 = vpop.f32.mrb[0].mxu0
      %10083 = vmatprep.mubr.bf16.mxu0 0
      %10084 = vmatmul.mubr.bf16.gmra.mrb[0].mxu0 %v9956
      %v10085 = vpop.f32.mrb[0].mxu0
      %v10086 = vadd.f32 0.0, %v10085
      %v10087 = vpop.f32.mrb[0].mxu0
      %v10088 = vpop.f32.mrb[0].mxu0
      %v10089 = vadd.f32 0.0, %v10088
      %v10090 = vpop.f32.mrb[0].mxu0
      %10091 = vmatprep.mubr.bf16.mxu0 0
      %10092 = vmatmul.mubr.bf16.gmra.mrb[0].mxu0 %v9959
      %v10093 = vpop.f32.mrb[0].mxu0
      %v10094 = vadd.f32 0.0, %v10093
      %v10095 = vpop.f32.mrb[0].mxu0
      %v10096 = vpop.f32.mrb[0].mxu0
      %v10097 = vadd.f32 0.0, %v10096
      %v10098 = vpop.f32.mrb[0].mxu0
      %10099 = vmatprep.mubr.bf16.mxu0 0
      %10100 = vmatmul.mubr.bf16.gmra.mrb[0].mxu0 %v9962
      %v10101 = vpop.f32.mrb[0].mxu0
      %v10102 = vadd.f32 0.0, %v10101
      %v10103 = vpop.f32.mrb[0].mxu0
      %v10104 = vpop.f32.mrb[0].mxu0
      %v10105 = vadd.f32 0.0, %v10104
      %v10106 = vpop.f32.mrb[0].mxu0
      %10107 = vmatprep.mubr.bf16.mxu0 0
      %10108 = vmatmul.mubr.bf16.gmra.mrb[0].mxu0 %v9965
      %v10109 = vpop.f32.mrb[0].mxu0
      %v10110 = vadd.f32 0.0, %v10109
      %v10111 = vpop.f32.mrb[0].mxu0
      %v10112 = vpop.f32.mrb[0].mxu0
      %v10113 = vadd.f32 0.0, %v10112
      %v10114 = vpop.f32.mrb[0].mxu0
      %10115 = vmatprep.mubr.bf16.mxu0 0
      %10116 = vmatmul.mubr.bf16.gmra.mrb[0].mxu0 %v9968
      %v10117 = vpop.f32.mrb[0].mxu0
      %v10118 = vadd.f32 0.0, %v10117
      %v10119 = vpop.f32.mrb[0].mxu0
      %v10120 = vpop.f32.mrb[0].mxu0
      %v10121 = vadd.f32 0.0, %v10120
      %v10122 = vpop.f32.mrb[0].mxu0
      %10123 = vmatprep.mubr.bf16.mxu0 0
      %10124 = vmatmul.mubr.bf16.gmra.mrb[0].mxu0 %v9971
      %v10125 = vpop.f32.mrb[0].mxu0
      %v10126 = vadd.f32 0.0, %v10125
      %v10127 = vpop.f32.mrb[0].mxu0
      %v10128 = vpop.f32.mrb[0].mxu0
      %v10129 = vadd.f32 0.0, %v10128
      %v10130 = vpop.f32.mrb[0].mxu0
      %10131 = vmatprep.mubr.bf16.mxu0 0
      %10132 = vmatmul.mubr.bf16.gmra.mrb[0].mxu0 %v9974
      %v10133 = vpop.f32.mrb[0].mxu0
      %v10134 = vadd.f32 0.0, %v10133
      %v10135 = vpop.f32.mrb[0].mxu0
      %v10136 = vpop.f32.mrb[0].mxu0
      %v10137 = vadd.f32 0.0, %v10136
      %v10138 = vpop.f32.mrb[0].mxu0
      %10139 = vdwg.mxu0
      %v10140 = vadd.f32 %v9446, %v10014
      %v10141 = vadd.f32 %v9447, %v10017
      %v10142 = vadd.f32 %v9448, %v10022
      %v10143 = vadd.f32 %v9449, %v10025
      %v10144 = vadd.f32 %v9450, %v10030
      %v10145 = vadd.f32 %v9451, %v10033
      %v10146 = vadd.f32 %v9452, %v10038
      %v10147 = vadd.f32 %v9453, %v10041
      %v10148 = vadd.f32 %v9454, %v10046
      %v10149 = vadd.f32 %v9455, %v10049
      %v10150 = vadd.f32 %v9456, %v10054
      %v10151 = vadd.f32 %v9457, %v10057
      %v10152 = vadd.f32 %v9458, %v10062
      %v10153 = vadd.f32 %v9459, %v10065
      %v10154 = vadd.f32 %v9460, %v10070
      %v10155 = vadd.f32 %v9461, %v10073
      %v10156 = vadd.f32 %v9462, %v10078
      %v10157 = vadd.f32 %v9463, %v10081
      %v10158 = vadd.f32 %v9464, %v10086
      %v10159 = vadd.f32 %v9465, %v10089
      %v10160 = vadd.f32 %v9466, %v10094
      %v10161 = vadd.f32 %v9467, %v10097
      %v10162 = vadd.f32 %v9468, %v10102
      %v10163 = vadd.f32 %v9469, %v10105
      %v10164 = vadd.f32 %v9470, %v10110
      %v10165 = vadd.f32 %v9471, %v10113
      %v10166 = vadd.f32 %v9472, %v10118
      %v10167 = vadd.f32 %v9473, %v10121
      %v10168 = vadd.f32 %v9474, %v10126
      %v10169 = vadd.f32 %v9475, %v10129
      %v10170 = vadd.f32 %v9476, %v10134
      %v10171 = vadd.f32 %v9477, %v10137
      %v10172 = vld [vmem:[%s4 + $0x1c] sm:$0xf]
      %v10205 = vunpack.c.l.b16 %v9480
      %v10206 = vunpack.c.l.b16 %v9481
      %v10207 = vunpack.c.l.b16 %v9483
      %v10208 = vunpack.c.l.b16 %v9484
      %v10209 = vunpack.c.l.b16 %v9486
      %v10210 = vunpack.c.l.b16 %v9487
      %v10211 = vunpack.c.l.b16 %v9489
      %v10212 = vunpack.c.l.b16 %v9490
      %v10213 = vunpack.c.l.b16 %v9492
      %v10214 = vunpack.c.l.b16 %v9493
      %v10215 = vunpack.c.l.b16 %v9495
      %v10216 = vunpack.c.l.b16 %v9496
      %v10217 = vunpack.c.l.b16 %v9498
      %v10218 = vunpack.c.l.b16 %v9499
      %v10219 = vunpack.c.l.b16 %v9501
      %v10220 = vunpack.c.l.b16 %v9502
      %v10221 = vunpack.c.l.b16 %v9504
      %v10222 = vunpack.c.l.b16 %v9505
      %v10223 = vunpack.c.l.b16 %v9507
      %v10224 = vunpack.c.l.b16 %v9508
      %v10225 = vunpack.c.l.b16 %v9510
      %v10226 = vunpack.c.l.b16 %v9511
      %v10227 = vunpack.c.l.b16 %v9513
      %v10228 = vunpack.c.l.b16 %v9514
      %v10229 = vunpack.c.l.b16 %v9516
      %v10230 = vunpack.c.l.b16 %v9517
      %v10231 = vunpack.c.l.b16 %v9519
      %v10232 = vunpack.c.l.b16 %v9520
      %v10233 = vunpack.c.l.b16 %v9522
      %v10234 = vunpack.c.l.b16 %v9523
      %v10235 = vunpack.c.l.b16 %v9525
      %v10236 = vunpack.c.l.b16 %v9526
      %v10237 = vpack.c.b16 %v10206, %v10205
      %v10238 = vpack.c.b16 %v10208, %v10207
      %v10239 = vpack.c.b16 %v10210, %v10209
      %v10240 = vpack.c.b16 %v10212, %v10211
      %v10241 = vpack.c.b16 %v10214, %v10213
      %v10242 = vpack.c.b16 %v10216, %v10215
      %v10243 = vpack.c.b16 %v10218, %v10217
      %v10244 = vpack.c.b16 %v10220, %v10219
      %v10245 = vpack.c.b16 %v10222, %v10221
      %v10246 = vpack.c.b16 %v10224, %v10223
      %v10247 = vpack.c.b16 %v10226, %v10225
      %v10248 = vpack.c.b16 %v10228, %v10227
      %v10249 = vpack.c.b16 %v10230, %v10229
      %v10250 = vpack.c.b16 %v10232, %v10231
      %v10251 = vpack.c.b16 %v10234, %v10233
      %v10252 = vpack.c.b16 %v10236, %v10235
      %v10254 = vsel %vm1097, %v10237, 0
      %v10257 = vsel %vm1097, %v10238, 0
      %v10260 = vsel %vm1097, %v10239, 0
      %v10263 = vsel %vm1097, %v10240, 0
      %v10266 = vsel %vm1097, %v10241, 0
      %v10269 = vsel %vm1097, %v10242, 0
      %v10272 = vsel %vm1097, %v10243, 0
      %v10275 = vsel %vm1097, %v10244, 0
      %v10278 = vsel %vm1097, %v10245, 0
      %v10281 = vsel %vm1097, %v10246, 0
      %v10284 = vsel %vm1097, %v10247, 0
      %v10287 = vsel %vm1097, %v10248, 0
      %v10290 = vsel %vm1097, %v10249, 0
      %v10293 = vsel %vm1097, %v10250, 0
      %v10296 = vsel %vm1097, %v10251, 0
      %v10299 = vsel %vm1097, %v10252, 0
      %v10302 = vsel %vm1146, %v10172, 0
      %10304 = vmatprep.subr.bf16.mxu0 0
      %10305 = vmatpush1.bf16.msra.mxu0 %v10302
      %10306 = vmatprep.subr.bf16.mxu0 0
      %10307 = vmatpush1.bf16.msra.mxu0 0
      %10308 = vmatprep.subr.bf16.mxu0 0
      %10309 = vmatpush1.bf16.msra.mxu0 0
      %10310 = vmatprep.subr.bf16.mxu0 0
      %10311 = vmatpush1.bf16.msra.mxu0 0
      %10312 = vmatprep.subr.bf16.mxu0 0
      %10313 = vmatpush1.bf16.msra.mxu0 0
      %10314 = vmatprep.subr.bf16.mxu0 0
      %10315 = vmatpush1.bf16.msra.mxu0 0
      %10316 = vmatprep.subr.bf16.mxu0 0
      %10317 = vmatpush1.bf16.msra.mxu0 0
      %10318 = vmatprep.subr.bf16.mxu0 0
      %10319 = vmatpush1.bf16.msra.mxu0 0
      %10320 = vmatprep.subr.bf16.mxu0 0
      %10321 = vmatpush1.bf16.msra.mxu0 0
      %10322 = vmatprep.subr.bf16.mxu0 0
      %10323 = vmatpush1.bf16.msra.mxu0 0
      %10324 = vmatprep.subr.bf16.mxu0 0
      %10325 = vmatpush1.bf16.msra.mxu0 0
      %10326 = vmatprep.subr.bf16.mxu0 0
      %10327 = vmatpush1.bf16.msra.mxu0 0
      %10328 = vmatprep.subr.bf16.mxu0 0
      %10329 = vmatpush1.bf16.msra.mxu0 0
      %10330 = vmatprep.subr.bf16.mxu0 0
      %10331 = vmatpush1.bf16.msra.mxu0 0
      %10332 = vmatprep.subr.bf16.mxu0 0
      %10333 = vmatpush1.bf16.msra.mxu0 0
      %10334 = vmatprep.subr.bf16.mxu0 0
      %10335 = vmatpush1.bf16.msra.mxu0 0
      %10336 = vmatprep.mubr.bf16.mxu0 0
      %10337 = vmatmul.mubr.bf16.gmra.mrb[0].mxu0 %v10254
      %v10338 = vpop.f32.mrb[0].mxu0
      %v10339 = vadd.f32 0.0, %v10338
      %v10340 = vpop.f32.mrb[0].mxu0
      %v10341 = vpop.f32.mrb[0].mxu0
      %v10342 = vadd.f32 0.0, %v10341
      %v10343 = vpop.f32.mrb[0].mxu0
      %10344 = vmatprep.mubr.bf16.mxu0 0
      %10345 = vmatmul.mubr.bf16.gmra.mrb[0].mxu0 %v10257
      %v10346 = vpop.f32.mrb[0].mxu0
      %v10347 = vadd.f32 0.0, %v10346
      %v10348 = vpop.f32.mrb[0].mxu0
      %v10349 = vpop.f32.mrb[0].mxu0
      %v10350 = vadd.f32 0.0, %v10349
      %v10351 = vpop.f32.mrb[0].mxu0
      %10352 = vmatprep.mubr.bf16.mxu0 0
      %10353 = vmatmul.mubr.bf16.gmra.mrb[0].mxu0 %v10260
      %v10354 = vpop.f32.mrb[0].mxu0
      %v10355 = vadd.f32 0.0, %v10354
      %v10356 = vpop.f32.mrb[0].mxu0
      %v10357 = vpop.f32.mrb[0].mxu0
      %v10358 = vadd.f32 0.0, %v10357
      %v10359 = vpop.f32.mrb[0].mxu0
      %10360 = vmatprep.mubr.bf16.mxu0 0
      %10361 = vmatmul.mubr.bf16.gmra.mrb[0].mxu0 %v10263
      %v10362 = vpop.f32.mrb[0].mxu0
      %v10363 = vadd.f32 0.0, %v10362
      %v10364 = vpop.f32.mrb[0].mxu0
      %v10365 = vpop.f32.mrb[0].mxu0
      %v10366 = vadd.f32 0.0, %v10365
      %v10367 = vpop.f32.mrb[0].mxu0
      %10368 = vmatprep.mubr.bf16.mxu0 0
      %10369 = vmatmul.mubr.bf16.gmra.mrb[0].mxu0 %v10266
      %v10370 = vpop.f32.mrb[0].mxu0
      %v10371 = vadd.f32 0.0, %v10370
      %v10372 = vpop.f32.mrb[0].mxu0
      %v10373 = vpop.f32.mrb[0].mxu0
      %v10374 = vadd.f32 0.0, %v10373
      %v10375 = vpop.f32.mrb[0].mxu0
      %10376 = vmatprep.mubr.bf16.mxu0 0
      %10377 = vmatmul.mubr.bf16.gmra.mrb[0].mxu0 %v10269
      %v10378 = vpop.f32.mrb[0].mxu0
      %v10379 = vadd.f32 0.0, %v10378
      %v10380 = vpop.f32.mrb[0].mxu0
      %v10381 = vpop.f32.mrb[0].mxu0
      %v10382 = vadd.f32 0.0, %v10381
      %v10383 = vpop.f32.mrb[0].mxu0
      %10384 = vmatprep.mubr.bf16.mxu0 0
      %10385 = vmatmul.mubr.bf16.gmra.mrb[0].mxu0 %v10272
      %v10386 = vpop.f32.mrb[0].mxu0
      %v10387 = vadd.f32 0.0, %v10386
      %v10388 = vpop.f32.mrb[0].mxu0
      %v10389 = vpop.f32.mrb[0].mxu0
      %v10390 = vadd.f32 0.0, %v10389
      %v10391 = vpop.f32.mrb[0].mxu0
      %10392 = vmatprep.mubr.bf16.mxu0 0
      %10393 = vmatmul.mubr.bf16.gmra.mrb[0].mxu0 %v10275
      %v10394 = vpop.f32.mrb[0].mxu0
      %v10395 = vadd.f32 0.0, %v10394
      %v10396 = vpop.f32.mrb[0].mxu0
      %v10397 = vpop.f32.mrb[0].mxu0
      %v10398 = vadd.f32 0.0, %v10397
      %v10399 = vpop.f32.mrb[0].mxu0
      %10400 = vmatprep.mubr.bf16.mxu0 0
      %10401 = vmatmul.mubr.bf16.gmra.mrb[0].mxu0 %v10278
      %v10402 = vpop.f32.mrb[0].mxu0
      %v10403 = vadd.f32 0.0, %v10402
      %v10404 = vpop.f32.mrb[0].mxu0
      %v10405 = vpop.f32.mrb[0].mxu0
      %v10406 = vadd.f32 0.0, %v10405
      %v10407 = vpop.f32.mrb[0].mxu0
      %10408 = vmatprep.mubr.bf16.mxu0 0
      %10409 = vmatmul.mubr.bf16.gmra.mrb[0].mxu0 %v10281
      %v10410 = vpop.f32.mrb[0].mxu0
      %v10411 = vadd.f32 0.0, %v10410
      %v10412 = vpop.f32.mrb[0].mxu0
      %v10413 = vpop.f32.mrb[0].mxu0
      %v10414 = vadd.f32 0.0, %v10413
      %v10415 = vpop.f32.mrb[0].mxu0
      %10416 = vmatprep.mubr.bf16.mxu0 0
      %10417 = vmatmul.mubr.bf16.gmra.mrb[0].mxu0 %v10284
      %v10418 = vpop.f32.mrb[0].mxu0
      %v10419 = vadd.f32 0.0, %v10418
      %v10420 = vpop.f32.mrb[0].mxu0
      %v10421 = vpop.f32.mrb[0].mxu0
      %v10422 = vadd.f32 0.0, %v10421
      %v10423 = vpop.f32.mrb[0].mxu0
      %10424 = vmatprep.mubr.bf16.mxu0 0
      %10425 = vmatmul.mubr.bf16.gmra.mrb[0].mxu0 %v10287
      %v10426 = vpop.f32.mrb[0].mxu0
      %v10427 = vadd.f32 0.0, %v10426
      %v10428 = vpop.f32.mrb[0].mxu0
      %v10429 = vpop.f32.mrb[0].mxu0
      %v10430 = vadd.f32 0.0, %v10429
      %v10431 = vpop.f32.mrb[0].mxu0
      %10432 = vmatprep.mubr.bf16.mxu0 0
      %10433 = vmatmul.mubr.bf16.gmra.mrb[0].mxu0 %v10290
      %v10434 = vpop.f32.mrb[0].mxu0
      %v10435 = vadd.f32 0.0, %v10434
      %v10436 = vpop.f32.mrb[0].mxu0
      %v10437 = vpop.f32.mrb[0].mxu0
      %v10438 = vadd.f32 0.0, %v10437
      %v10439 = vpop.f32.mrb[0].mxu0
      %10440 = vmatprep.mubr.bf16.mxu0 0
      %10441 = vmatmul.mubr.bf16.gmra.mrb[0].mxu0 %v10293
      %v10442 = vpop.f32.mrb[0].mxu0
      %v10443 = vadd.f32 0.0, %v10442
      %v10444 = vpop.f32.mrb[0].mxu0
      %v10445 = vpop.f32.mrb[0].mxu0
      %v10446 = vadd.f32 0.0, %v10445
      %v10447 = vpop.f32.mrb[0].mxu0
      %10448 = vmatprep.mubr.bf16.mxu0 0
      %10449 = vmatmul.mubr.bf16.gmra.mrb[0].mxu0 %v10296
      %v10450 = vpop.f32.mrb[0].mxu0
      %v10451 = vadd.f32 0.0, %v10450
      %v10452 = vpop.f32.mrb[0].mxu0
      %v10453 = vpop.f32.mrb[0].mxu0
      %v10454 = vadd.f32 0.0, %v10453
      %v10455 = vpop.f32.mrb[0].mxu0
      %10456 = vmatprep.mubr.bf16.mxu0 0
      %10457 = vmatmul.mubr.bf16.gmra.mrb[0].mxu0 %v10299
      %v10458 = vpop.f32.mrb[0].mxu0
      %v10459 = vadd.f32 0.0, %v10458
      %v10460 = vpop.f32.mrb[0].mxu0
      %v10461 = vpop.f32.mrb[0].mxu0
      %v10462 = vadd.f32 0.0, %v10461
      %v10463 = vpop.f32.mrb[0].mxu0
      %10464 = vdwg.mxu0
      %v10465 = vadd.f32 %v10140, %v10339
      %v10466 = vadd.f32 %v10141, %v10342
      %v10467 = vadd.f32 %v10142, %v10347
      %v10468 = vadd.f32 %v10143, %v10350
      %v10469 = vadd.f32 %v10144, %v10355
      %v10470 = vadd.f32 %v10145, %v10358
      %v10471 = vadd.f32 %v10146, %v10363
      %v10472 = vadd.f32 %v10147, %v10366
      %v10473 = vadd.f32 %v10148, %v10371
      %v10474 = vadd.f32 %v10149, %v10374
      %v10475 = vadd.f32 %v10150, %v10379
      %v10476 = vadd.f32 %v10151, %v10382
      %v10477 = vadd.f32 %v10152, %v10387
      %v10478 = vadd.f32 %v10153, %v10390
      %v10479 = vadd.f32 %v10154, %v10395
      %v10480 = vadd.f32 %v10155, %v10398
      %v10481 = vadd.f32 %v10156, %v10403
      %v10482 = vadd.f32 %v10157, %v10406
      %v10483 = vadd.f32 %v10158, %v10411
      %v10484 = vadd.f32 %v10159, %v10414
      %v10485 = vadd.f32 %v10160, %v10419
      %v10486 = vadd.f32 %v10161, %v10422
      %v10487 = vadd.f32 %v10162, %v10427
      %v10488 = vadd.f32 %v10163, %v10430
      %v10489 = vadd.f32 %v10164, %v10435
      %v10490 = vadd.f32 %v10165, %v10438
      %v10491 = vadd.f32 %v10166, %v10443
      %v10492 = vadd.f32 %v10167, %v10446
      %v10493 = vadd.f32 %v10168, %v10451
      %v10494 = vadd.f32 %v10169, %v10454
      %v10495 = vadd.f32 %v10170, %v10459
      %v10496 = vadd.f32 %v10171, %v10462
      %v10497 = vld [vmem:[%s9478 + $0x4] sm:$0xf]
      %v10498 = vld [vmem:[%s9478 + $0x8] sm:$0xf]
      %v10499 = vld [vmem:[%s9478 + $0xc] sm:$0x1]
      %v10500 = vld [vmem:[%s9478 + $0x14] sm:$0xf]
      %v10501 = vld [vmem:[%s9478 + $0x18] sm:$0xf]
      %v10502 = vld [vmem:[%s9478 + $0x1c] sm:$0x1]
      %v10503 = vld [vmem:[%s9478 + $0x24] sm:$0xf]
      %v10504 = vld [vmem:[%s9478 + $0x28] sm:$0xf]
      %v10505 = vld [vmem:[%s9478 + $0x2c] sm:$0x1]
      %v10506 = vld [vmem:[%s9478 + $0x34] sm:$0xf]
      %v10507 = vld [vmem:[%s9478 + $0x38] sm:$0xf]
      %v10508 = vld [vmem:[%s9478 + $0x3c] sm:$0x1]
      %v10509 = vld [vmem:[%s9478 + $0x44] sm:$0xf]
      %v10510 = vld [vmem:[%s9478 + $0x48] sm:$0xf]
      %v10511 = vld [vmem:[%s9478 + $0x4c] sm:$0x1]
      %v10512 = vld [vmem:[%s9478 + $0x54] sm:$0xf]
      %v10513 = vld [vmem:[%s9478 + $0x58] sm:$0xf]
      %v10514 = vld [vmem:[%s9478 + $0x5c] sm:$0x1]
      %v10515 = vld [vmem:[%s9478 + $0x64] sm:$0xf]
      %v10516 = vld [vmem:[%s9478 + $0x68] sm:$0xf]
      %v10517 = vld [vmem:[%s9478 + $0x6c] sm:$0x1]
      %v10518 = vld [vmem:[%s9478 + $0x74] sm:$0xf]
      %v10519 = vld [vmem:[%s9478 + $0x78] sm:$0xf]
      %v10520 = vld [vmem:[%s9478 + $0x7c] sm:$0x1]
      %v10521 = vld [vmem:[%s9478 + $0x84] sm:$0xf]
      %v10522 = vld [vmem:[%s9478 + $0x88] sm:$0xf]
      %v10523 = vld [vmem:[%s9478 + $0x8c] sm:$0x1]
      %v10524 = vld [vmem:[%s9478 + $0x94] sm:$0xf]
      %v10525 = vld [vmem:[%s9478 + $0x98] sm:$0xf]
      %v10526 = vld [vmem:[%s9478 + $0x9c] sm:$0x1]
      %v10527 = vld [vmem:[%s9478 + $0xa4] sm:$0xf]
      %v10528 = vld [vmem:[%s9478 + $0xa8] sm:$0xf]
      %v10529 = vld [vmem:[%s9478 + $0xac] sm:$0x1]
      %v10530 = vld [vmem:[%s9478 + $0xb4] sm:$0xf]
      %v10531 = vld [vmem:[%s9478 + $0xb8] sm:$0xf]
      %v10532 = vld [vmem:[%s9478 + $0xbc] sm:$0x1]
      %v10533 = vld [vmem:[%s9478 + $0xc4] sm:$0xf]
      %v10534 = vld [vmem:[%s9478 + $0xc8] sm:$0xf]
      %v10535 = vld [vmem:[%s9478 + $0xcc] sm:$0x1]
      %v10536 = vld [vmem:[%s9478 + $0xd4] sm:$0xf]
      %v10537 = vld [vmem:[%s9478 + $0xd8] sm:$0xf]
      %v10538 = vld [vmem:[%s9478 + $0xdc] sm:$0x1]
      %v10539 = vld [vmem:[%s9478 + $0xe4] sm:$0xf]
      %v10540 = vld [vmem:[%s9478 + $0xe8] sm:$0xf]
      %v10541 = vld [vmem:[%s9478 + $0xec] sm:$0x1]
      %v10542 = vld [vmem:[%s9478 + $0xf4] sm:$0xf]
      %v10543 = vld [vmem:[%s9478 + $0xf8] sm:$0xf]
      %v10544 = vld [vmem:[%s9478 + $0xfc] sm:$0x1]
      %v10546 = vshrl.u32 %v10497, 16
      %v10548 = vrot.slane %v10546, 4
      %v10549 = vshll.u32 %v10497, 16
      %v10551 = vrot.slane %v10549, 5
      %v10552 = vor.u32 %v10548, %v10551
      %v10553 = vrot.slane %v10552, 4
      %v10555 = vshll.u32 %v10498, 16
      %v10557 = vrot.slane %v10555, 5
      %v10558 = vsel %vm1621, %v10553, %v10557
      %v10559 = vshrl.u32 %v10498, 16
      %v10561 = vrot.slane %v10559, 4
      %v10562 = vor.u32 %v10561, %v10557
      %v10563 = vrot.slane %v10562, 4
      %v10565 = vshll.u32 %v10499, 16
      %v10567 = vrot.slane %v10565, 5
      %v10568 = vsel %vm1621, %v10563, %v10567
      %v10570 = vshrl.u32 %v10500, 16
      %v10572 = vrot.slane %v10570, 4
      %v10573 = vshll.u32 %v10500, 16
      %v10575 = vrot.slane %v10573, 5
      %v10576 = vor.u32 %v10572, %v10575
      %v10577 = vrot.slane %v10576, 4
      %v10579 = vshll.u32 %v10501, 16
      %v10581 = vrot.slane %v10579, 5
      %v10582 = vsel %vm1621, %v10577, %v10581
      %v10583 = vshrl.u32 %v10501, 16
      %v10585 = vrot.slane %v10583, 4
      %v10586 = vor.u32 %v10585, %v10581
      %v10587 = vrot.slane %v10586, 4
      %v10589 = vshll.u32 %v10502, 16
      %v10591 = vrot.slane %v10589, 5
      %v10592 = vsel %vm1621, %v10587, %v10591
      %v10594 = vshrl.u32 %v10503, 16
      %v10596 = vrot.slane %v10594, 4
      %v10597 = vshll.u32 %v10503, 16
      %v10599 = vrot.slane %v10597, 5
      %v10600 = vor.u32 %v10596, %v10599
      %v10601 = vrot.slane %v10600, 4
      %v10603 = vshll.u32 %v10504, 16
      %v10605 = vrot.slane %v10603, 5
      %v10606 = vsel %vm1621, %v10601, %v10605
      %v10607 = vshrl.u32 %v10504, 16
      %v10609 = vrot.slane %v10607, 4
      %v10610 = vor.u32 %v10609, %v10605
      %v10611 = vrot.slane %v10610, 4
      %v10613 = vshll.u32 %v10505, 16
      %v10615 = vrot.slane %v10613, 5
      %v10616 = vsel %vm1621, %v10611, %v10615
      %v10618 = vshrl.u32 %v10506, 16
      %v10620 = vrot.slane %v10618, 4
      %v10621 = vshll.u32 %v10506, 16
      %v10623 = vrot.slane %v10621, 5
      %v10624 = vor.u32 %v10620, %v10623
      %v10625 = vrot.slane %v10624, 4
      %v10627 = vshll.u32 %v10507, 16
      %v10629 = vrot.slane %v10627, 5
      %v10630 = vsel %vm1621, %v10625, %v10629
      %v10631 = vshrl.u32 %v10507, 16
      %v10633 = vrot.slane %v10631, 4
      %v10634 = vor.u32 %v10633, %v10629
      %v10635 = vrot.slane %v10634, 4
      %v10637 = vshll.u32 %v10508, 16
      %v10639 = vrot.slane %v10637, 5
      %v10640 = vsel %vm1621, %v10635, %v10639
      %v10642 = vshrl.u32 %v10509, 16
      %v10644 = vrot.slane %v10642, 4
      %v10645 = vshll.u32 %v10509, 16
      %v10647 = vrot.slane %v10645, 5
      %v10648 = vor.u32 %v10644, %v10647
      %v10649 = vrot.slane %v10648, 4
      %v10651 = vshll.u32 %v10510, 16
      %v10653 = vrot.slane %v10651, 5
      %v10654 = vsel %vm1621, %v10649, %v10653
      %v10655 = vshrl.u32 %v10510, 16
      %v10657 = vrot.slane %v10655, 4
      %v10658 = vor.u32 %v10657, %v10653
      %v10659 = vrot.slane %v10658, 4
      %v10661 = vshll.u32 %v10511, 16
      %v10663 = vrot.slane %v10661, 5
      %v10664 = vsel %vm1621, %v10659, %v10663
      %v10666 = vshrl.u32 %v10512, 16
      %v10668 = vrot.slane %v10666, 4
      %v10669 = vshll.u32 %v10512, 16
      %v10671 = vrot.slane %v10669, 5
      %v10672 = vor.u32 %v10668, %v10671
      %v10673 = vrot.slane %v10672, 4
      %v10675 = vshll.u32 %v10513, 16
      %v10677 = vrot.slane %v10675, 5
      %v10678 = vsel %vm1621, %v10673, %v10677
      %v10679 = vshrl.u32 %v10513, 16
      %v10681 = vrot.slane %v10679, 4
      %v10682 = vor.u32 %v10681, %v10677
      %v10683 = vrot.slane %v10682, 4
      %v10685 = vshll.u32 %v10514, 16
      %v10687 = vrot.slane %v10685, 5
      %v10688 = vsel %vm1621, %v10683, %v10687
      %v10690 = vshrl.u32 %v10515, 16
      %v10692 = vrot.slane %v10690, 4
      %v10693 = vshll.u32 %v10515, 16
      %v10695 = vrot.slane %v10693, 5
      %v10696 = vor.u32 %v10692, %v10695
      %v10697 = vrot.slane %v10696, 4
      %v10699 = vshll.u32 %v10516, 16
      %v10701 = vrot.slane %v10699, 5
      %v10702 = vsel %vm1621, %v10697, %v10701
      %v10703 = vshrl.u32 %v10516, 16
      %v10705 = vrot.slane %v10703, 4
      %v10706 = vor.u32 %v10705, %v10701
      %v10707 = vrot.slane %v10706, 4
      %v10709 = vshll.u32 %v10517, 16
      %v10711 = vrot.slane %v10709, 5
      %v10712 = vsel %vm1621, %v10707, %v10711
      %v10714 = vshrl.u32 %v10518, 16
      %v10716 = vrot.slane %v10714, 4
      %v10717 = vshll.u32 %v10518, 16
      %v10719 = vrot.slane %v10717, 5
      %v10720 = vor.u32 %v10716, %v10719
      %v10721 = vrot.slane %v10720, 4
      %v10723 = vshll.u32 %v10519, 16
      %v10725 = vrot.slane %v10723, 5
      %v10726 = vsel %vm1621, %v10721, %v10725
      %v10727 = vshrl.u32 %v10519, 16
      %v10729 = vrot.slane %v10727, 4
      %v10730 = vor.u32 %v10729, %v10725
      %v10731 = vrot.slane %v10730, 4
      %v10733 = vshll.u32 %v10520, 16
      %v10735 = vrot.slane %v10733, 5
      %v10736 = vsel %vm1621, %v10731, %v10735
      %v10738 = vshrl.u32 %v10521, 16
      %v10740 = vrot.slane %v10738, 4
      %v10741 = vshll.u32 %v10521, 16
      %v10743 = vrot.slane %v10741, 5
      %v10744 = vor.u32 %v10740, %v10743
      %v10745 = vrot.slane %v10744, 4
      %v10747 = vshll.u32 %v10522, 16
      %v10749 = vrot.slane %v10747, 5
      %v10750 = vsel %vm1621, %v10745, %v10749
      %v10751 = vshrl.u32 %v10522, 16
      %v10753 = vrot.slane %v10751, 4
      %v10754 = vor.u32 %v10753, %v10749
      %v10755 = vrot.slane %v10754, 4
      %v10757 = vshll.u32 %v10523, 16
      %v10759 = vrot.slane %v10757, 5
      %v10760 = vsel %vm1621, %v10755, %v10759
      %v10762 = vshrl.u32 %v10524, 16
      %v10764 = vrot.slane %v10762, 4
      %v10765 = vshll.u32 %v10524, 16
      %v10767 = vrot.slane %v10765, 5
      %v10768 = vor.u32 %v10764, %v10767
      %v10769 = vrot.slane %v10768, 4
      %v10771 = vshll.u32 %v10525, 16
      %v10773 = vrot.slane %v10771, 5
      %v10774 = vsel %vm1621, %v10769, %v10773
      %v10775 = vshrl.u32 %v10525, 16
      %v10777 = vrot.slane %v10775, 4
      %v10778 = vor.u32 %v10777, %v10773
      %v10779 = vrot.slane %v10778, 4
      %v10781 = vshll.u32 %v10526, 16
      %v10783 = vrot.slane %v10781, 5
      %v10784 = vsel %vm1621, %v10779, %v10783
      %v10786 = vshrl.u32 %v10527, 16
      %v10788 = vrot.slane %v10786, 4
      %v10789 = vshll.u32 %v10527, 16
      %v10791 = vrot.slane %v10789, 5
      %v10792 = vor.u32 %v10788, %v10791
      %v10793 = vrot.slane %v10792, 4
      %v10795 = vshll.u32 %v10528, 16
      %v10797 = vrot.slane %v10795, 5
      %v10798 = vsel %vm1621, %v10793, %v10797
      %v10799 = vshrl.u32 %v10528, 16
      %v10801 = vrot.slane %v10799, 4
      %v10802 = vor.u32 %v10801, %v10797
      %v10803 = vrot.slane %v10802, 4
      %v10805 = vshll.u32 %v10529, 16
      %v10807 = vrot.slane %v10805, 5
      %v10808 = vsel %vm1621, %v10803, %v10807
      %v10810 = vshrl.u32 %v10530, 16
      %v10812 = vrot.slane %v10810, 4
      %v10813 = vshll.u32 %v10530, 16
      %v10815 = vrot.slane %v10813, 5
      %v10816 = vor.u32 %v10812, %v10815
      %v10817 = vrot.slane %v10816, 4
      %v10819 = vshll.u32 %v10531, 16
      %v10821 = vrot.slane %v10819, 5
      %v10822 = vsel %vm1621, %v10817, %v10821
      %v10823 = vshrl.u32 %v10531, 16
      %v10825 = vrot.slane %v10823, 4
      %v10826 = vor.u32 %v10825, %v10821
      %v10827 = vrot.slane %v10826, 4
      %v10829 = vshll.u32 %v10532, 16
      %v10831 = vrot.slane %v10829, 5
      %v10832 = vsel %vm1621, %v10827, %v10831
      %v10834 = vshrl.u32 %v10533, 16
      %v10836 = vrot.slane %v10834, 4
      %v10837 = vshll.u32 %v10533, 16
      %v10839 = vrot.slane %v10837, 5
      %v10840 = vor.u32 %v10836, %v10839
      %v10841 = vrot.slane %v10840, 4
      %v10843 = vshll.u32 %v10534, 16
      %v10845 = vrot.slane %v10843, 5
      %v10846 = vsel %vm1621, %v10841, %v10845
      %v10847 = vshrl.u32 %v10534, 16
      %v10849 = vrot.slane %v10847, 4
      %v10850 = vor.u32 %v10849, %v10845
      %v10851 = vrot.slane %v10850, 4
      %v10853 = vshll.u32 %v10535, 16
      %v10855 = vrot.slane %v10853, 5
      %v10856 = vsel %vm1621, %v10851, %v10855
      %v10858 = vshrl.u32 %v10536, 16
      %v10860 = vrot.slane %v10858, 4
      %v10861 = vshll.u32 %v10536, 16
      %v10863 = vrot.slane %v10861, 5
      %v10864 = vor.u32 %v10860, %v10863
      %v10865 = vrot.slane %v10864, 4
      %v10867 = vshll.u32 %v10537, 16
      %v10869 = vrot.slane %v10867, 5
      %v10870 = vsel %vm1621, %v10865, %v10869
      %v10871 = vshrl.u32 %v10537, 16
      %v10873 = vrot.slane %v10871, 4
      %v10874 = vor.u32 %v10873, %v10869
      %v10875 = vrot.slane %v10874, 4
      %v10877 = vshll.u32 %v10538, 16
      %v10879 = vrot.slane %v10877, 5
      %v10880 = vsel %vm1621, %v10875, %v10879
      %v10882 = vshrl.u32 %v10539, 16
      %v10884 = vrot.slane %v10882, 4
      %v10885 = vshll.u32 %v10539, 16
      %v10887 = vrot.slane %v10885, 5
      %v10888 = vor.u32 %v10884, %v10887
      %v10889 = vrot.slane %v10888, 4
      %v10891 = vshll.u32 %v10540, 16
      %v10893 = vrot.slane %v10891, 5
      %v10894 = vsel %vm1621, %v10889, %v10893
      %v10895 = vshrl.u32 %v10540, 16
      %v10897 = vrot.slane %v10895, 4
      %v10898 = vor.u32 %v10897, %v10893
      %v10899 = vrot.slane %v10898, 4
      %v10901 = vshll.u32 %v10541, 16
      %v10903 = vrot.slane %v10901, 5
      %v10904 = vsel %vm1621, %v10899, %v10903
      %v10906 = vshrl.u32 %v10542, 16
      %v10908 = vrot.slane %v10906, 4
      %v10909 = vshll.u32 %v10542, 16
      %v10911 = vrot.slane %v10909, 5
      %v10912 = vor.u32 %v10908, %v10911
      %v10913 = vrot.slane %v10912, 4
      %v10915 = vshll.u32 %v10543, 16
      %v10917 = vrot.slane %v10915, 5
      %v10918 = vsel %vm1621, %v10913, %v10917
      %v10919 = vshrl.u32 %v10543, 16
      %v10921 = vrot.slane %v10919, 4
      %v10922 = vor.u32 %v10921, %v10917
      %v10923 = vrot.slane %v10922, 4
      %v10925 = vshll.u32 %v10544, 16
      %v10927 = vrot.slane %v10925, 5
      %v10928 = vsel %vm1621, %v10923, %v10927
      %v10929 = vld [vmem:[%s4 + $0x20] sm:$0xf]
      %v10930 = vunpack.c.l.b16 %v10558
      %v10931 = vunpack.c.l.b16 %v10568
      %v10932 = vunpack.c.l.b16 %v10582
      %v10933 = vunpack.c.l.b16 %v10592
      %v10934 = vunpack.c.l.b16 %v10606
      %v10935 = vunpack.c.l.b16 %v10616
      %v10936 = vunpack.c.l.b16 %v10630
      %v10937 = vunpack.c.l.b16 %v10640
      %v10938 = vunpack.c.l.b16 %v10654
      %v10939 = vunpack.c.l.b16 %v10664
      %v10940 = vunpack.c.l.b16 %v10678
      %v10941 = vunpack.c.l.b16 %v10688
      %v10942 = vunpack.c.l.b16 %v10702
      %v10943 = vunpack.c.l.b16 %v10712
      %v10944 = vunpack.c.l.b16 %v10726
      %v10945 = vunpack.c.l.b16 %v10736
      %v10946 = vunpack.c.l.b16 %v10750
      %v10947 = vunpack.c.l.b16 %v10760
      %v10948 = vunpack.c.l.b16 %v10774
      %v10949 = vunpack.c.l.b16 %v10784
      %v10950 = vunpack.c.l.b16 %v10798
      %v10951 = vunpack.c.l.b16 %v10808
      %v10952 = vunpack.c.l.b16 %v10822
      %v10953 = vunpack.c.l.b16 %v10832
      %v10954 = vunpack.c.l.b16 %v10846
      %v10955 = vunpack.c.l.b16 %v10856
      %v10956 = vunpack.c.l.b16 %v10870
      %v10957 = vunpack.c.l.b16 %v10880
      %v10958 = vunpack.c.l.b16 %v10894
      %v10959 = vunpack.c.l.b16 %v10904
      %v10960 = vunpack.c.l.b16 %v10918
      %v10961 = vunpack.c.l.b16 %v10928
      %v10962 = vpack.c.b16 %v10931, %v10930
      %v10963 = vpack.c.b16 %v10933, %v10932
      %v10964 = vpack.c.b16 %v10935, %v10934
      %v10965 = vpack.c.b16 %v10937, %v10936
      %v10966 = vpack.c.b16 %v10939, %v10938
      %v10967 = vpack.c.b16 %v10941, %v10940
      %v10968 = vpack.c.b16 %v10943, %v10942
      %v10969 = vpack.c.b16 %v10945, %v10944
      %v10970 = vpack.c.b16 %v10947, %v10946
      %v10971 = vpack.c.b16 %v10949, %v10948
      %v10972 = vpack.c.b16 %v10951, %v10950
      %v10973 = vpack.c.b16 %v10953, %v10952
      %v10974 = vpack.c.b16 %v10955, %v10954
      %v10975 = vpack.c.b16 %v10957, %v10956
      %v10976 = vpack.c.b16 %v10959, %v10958
      %v10977 = vpack.c.b16 %v10961, %v10960
      %v10979 = vsel %vm1097, %v10962, 0
      %v10982 = vsel %vm1097, %v10963, 0
      %v10985 = vsel %vm1097, %v10964, 0
      %v10988 = vsel %vm1097, %v10965, 0
      %v10991 = vsel %vm1097, %v10966, 0
      %v10994 = vsel %vm1097, %v10967, 0
      %v10997 = vsel %vm1097, %v10968, 0
      %v11000 = vsel %vm1097, %v10969, 0
      %v11003 = vsel %vm1097, %v10970, 0
      %v11006 = vsel %vm1097, %v10971, 0
      %v11009 = vsel %vm1097, %v10972, 0
      %v11012 = vsel %vm1097, %v10973, 0
      %v11015 = vsel %vm1097, %v10974, 0
      %v11018 = vsel %vm1097, %v10975, 0
      %v11021 = vsel %vm1097, %v10976, 0
      %v11024 = vsel %vm1097, %v10977, 0
      %v11027 = vsel %vm1146, %v10929, 0
      %11029 = vmatprep.subr.bf16.mxu0 0
      %11030 = vmatpush1.bf16.msra.mxu0 %v11027
      %11031 = vmatprep.subr.bf16.mxu0 0
      %11032 = vmatpush1.bf16.msra.mxu0 0
      %11033 = vmatprep.subr.bf16.mxu0 0
      %11034 = vmatpush1.bf16.msra.mxu0 0
      %11035 = vmatprep.subr.bf16.mxu0 0
      %11036 = vmatpush1.bf16.msra.mxu0 0
      %11037 = vmatprep.subr.bf16.mxu0 0
      %11038 = vmatpush1.bf16.msra.mxu0 0
      %11039 = vmatprep.subr.bf16.mxu0 0
      %11040 = vmatpush1.bf16.msra.mxu0 0
      %11041 = vmatprep.subr.bf16.mxu0 0
      %11042 = vmatpush1.bf16.msra.mxu0 0
      %11043 = vmatprep.subr.bf16.mxu0 0
      %11044 = vmatpush1.bf16.msra.mxu0 0
      %11045 = vmatprep.subr.bf16.mxu0 0
      %11046 = vmatpush1.bf16.msra.mxu0 0
      %11047 = vmatprep.subr.bf16.mxu0 0
      %11048 = vmatpush1.bf16.msra.mxu0 0
      %11049 = vmatprep.subr.bf16.mxu0 0
      %11050 = vmatpush1.bf16.msra.mxu0 0
      %11051 = vmatprep.subr.bf16.mxu0 0
      %11052 = vmatpush1.bf16.msra.mxu0 0
      %11053 = vmatprep.subr.bf16.mxu0 0
      %11054 = vmatpush1.bf16.msra.mxu0 0
      %11055 = vmatprep.subr.bf16.mxu0 0
      %11056 = vmatpush1.bf16.msra.mxu0 0
      %11057 = vmatprep.subr.bf16.mxu0 0
      %11058 = vmatpush1.bf16.msra.mxu0 0
      %11059 = vmatprep.subr.bf16.mxu0 0
      %11060 = vmatpush1.bf16.msra.mxu0 0
      %11061 = vmatprep.mubr.bf16.mxu0 0
      %11062 = vmatmul.mubr.bf16.gmra.mrb[0].mxu0 %v10979
      %v11063 = vpop.f32.mrb[0].mxu0
      %v11064 = vadd.f32 0.0, %v11063
      %v11065 = vpop.f32.mrb[0].mxu0
      %v11066 = vpop.f32.mrb[0].mxu0
      %v11067 = vadd.f32 0.0, %v11066
      %v11068 = vpop.f32.mrb[0].mxu0
      %11069 = vmatprep.mubr.bf16.mxu0 0
      %11070 = vmatmul.mubr.bf16.gmra.mrb[0].mxu0 %v10982
      %v11071 = vpop.f32.mrb[0].mxu0
      %v11072 = vadd.f32 0.0, %v11071
      %v11073 = vpop.f32.mrb[0].mxu0
      %v11074 = vpop.f32.mrb[0].mxu0
      %v11075 = vadd.f32 0.0, %v11074
      %v11076 = vpop.f32.mrb[0].mxu0
      %11077 = vmatprep.mubr.bf16.mxu0 0
      %11078 = vmatmul.mubr.bf16.gmra.mrb[0].mxu0 %v10985
      %v11079 = vpop.f32.mrb[0].mxu0
      %v11080 = vadd.f32 0.0, %v11079
      %v11081 = vpop.f32.mrb[0].mxu0
      %v11082 = vpop.f32.mrb[0].mxu0
      %v11083 = vadd.f32 0.0, %v11082
      %v11084 = vpop.f32.mrb[0].mxu0
      %11085 = vmatprep.mubr.bf16.mxu0 0
      %11086 = vmatmul.mubr.bf16.gmra.mrb[0].mxu0 %v10988
      %v11087 = vpop.f32.mrb[0].mxu0
      %v11088 = vadd.f32 0.0, %v11087
      %v11089 = vpop.f32.mrb[0].mxu0
      %v11090 = vpop.f32.mrb[0].mxu0
      %v11091 = vadd.f32 0.0, %v11090
      %v11092 = vpop.f32.mrb[0].mxu0
      %11093 = vmatprep.mubr.bf16.mxu0 0
      %11094 = vmatmul.mubr.bf16.gmra.mrb[0].mxu0 %v10991
      %v11095 = vpop.f32.mrb[0].mxu0
      %v11096 = vadd.f32 0.0, %v11095
      %v11097 = vpop.f32.mrb[0].mxu0
      %v11098 = vpop.f32.mrb[0].mxu0
      %v11099 = vadd.f32 0.0, %v11098
      %v11100 = vpop.f32.mrb[0].mxu0
      %11101 = vmatprep.mubr.bf16.mxu0 0
      %11102 = vmatmul.mubr.bf16.gmra.mrb[0].mxu0 %v10994
      %v11103 = vpop.f32.mrb[0].mxu0
      %v11104 = vadd.f32 0.0, %v11103
      %v11105 = vpop.f32.mrb[0].mxu0
      %v11106 = vpop.f32.mrb[0].mxu0
      %v11107 = vadd.f32 0.0, %v11106
      %v11108 = vpop.f32.mrb[0].mxu0
      %11109 = vmatprep.mubr.bf16.mxu0 0
      %11110 = vmatmul.mubr.bf16.gmra.mrb[0].mxu0 %v10997
      %v11111 = vpop.f32.mrb[0].mxu0
      %v11112 = vadd.f32 0.0, %v11111
      %v11113 = vpop.f32.mrb[0].mxu0
      %v11114 = vpop.f32.mrb[0].mxu0
      %v11115 = vadd.f32 0.0, %v11114
      %v11116 = vpop.f32.mrb[0].mxu0
      %11117 = vmatprep.mubr.bf16.mxu0 0
      %11118 = vmatmul.mubr.bf16.gmra.mrb[0].mxu0 %v11000
      %v11119 = vpop.f32.mrb[0].mxu0
      %v11120 = vadd.f32 0.0, %v11119
      %v11121 = vpop.f32.mrb[0].mxu0
      %v11122 = vpop.f32.mrb[0].mxu0
      %v11123 = vadd.f32 0.0, %v11122
      %v11124 = vpop.f32.mrb[0].mxu0
      %11125 = vmatprep.mubr.bf16.mxu0 0
      %11126 = vmatmul.mubr.bf16.gmra.mrb[0].mxu0 %v11003
      %v11127 = vpop.f32.mrb[0].mxu0
      %v11128 = vadd.f32 0.0, %v11127
      %v11129 = vpop.f32.mrb[0].mxu0
      %v11130 = vpop.f32.mrb[0].mxu0
      %v11131 = vadd.f32 0.0, %v11130
      %v11132 = vpop.f32.mrb[0].mxu0
      %11133 = vmatprep.mubr.bf16.mxu0 0
      %11134 = vmatmul.mubr.bf16.gmra.mrb[0].mxu0 %v11006
      %v11135 = vpop.f32.mrb[0].mxu0
      %v11136 = vadd.f32 0.0, %v11135
      %v11137 = vpop.f32.mrb[0].mxu0
      %v11138 = vpop.f32.mrb[0].mxu0
      %v11139 = vadd.f32 0.0, %v11138
      %v11140 = vpop.f32.mrb[0].mxu0
      %11141 = vmatprep.mubr.bf16.mxu0 0
      %11142 = vmatmul.mubr.bf16.gmra.mrb[0].mxu0 %v11009
      %v11143 = vpop.f32.mrb[0].mxu0
      %v11144 = vadd.f32 0.0, %v11143
      %v11145 = vpop.f32.mrb[0].mxu0
      %v11146 = vpop.f32.mrb[0].mxu0
      %v11147 = vadd.f32 0.0, %v11146
      %v11148 = vpop.f32.mrb[0].mxu0
      %11149 = vmatprep.mubr.bf16.mxu0 0
      %11150 = vmatmul.mubr.bf16.gmra.mrb[0].mxu0 %v11012
      %v11151 = vpop.f32.mrb[0].mxu0
      %v11152 = vadd.f32 0.0, %v11151
      %v11153 = vpop.f32.mrb[0].mxu0
      %v11154 = vpop.f32.mrb[0].mxu0
      %v11155 = vadd.f32 0.0, %v11154
      %v11156 = vpop.f32.mrb[0].mxu0
      %11157 = vmatprep.mubr.bf16.mxu0 0
      %11158 = vmatmul.mubr.bf16.gmra.mrb[0].mxu0 %v11015
      %v11159 = vpop.f32.mrb[0].mxu0
      %v11160 = vadd.f32 0.0, %v11159
      %v11161 = vpop.f32.mrb[0].mxu0
      %v11162 = vpop.f32.mrb[0].mxu0
      %v11163 = vadd.f32 0.0, %v11162
      %v11164 = vpop.f32.mrb[0].mxu0
      %11165 = vmatprep.mubr.bf16.mxu0 0
      %11166 = vmatmul.mubr.bf16.gmra.mrb[0].mxu0 %v11018
      %v11167 = vpop.f32.mrb[0].mxu0
      %v11168 = vadd.f32 0.0, %v11167
      %v11169 = vpop.f32.mrb[0].mxu0
      %v11170 = vpop.f32.mrb[0].mxu0
      %v11171 = vadd.f32 0.0, %v11170
      %v11172 = vpop.f32.mrb[0].mxu0
      %11173 = vmatprep.mubr.bf16.mxu0 0
      %11174 = vmatmul.mubr.bf16.gmra.mrb[0].mxu0 %v11021
      %v11175 = vpop.f32.mrb[0].mxu0
      %v11176 = vadd.f32 0.0, %v11175
      %v11177 = vpop.f32.mrb[0].mxu0
      %v11178 = vpop.f32.mrb[0].mxu0
      %v11179 = vadd.f32 0.0, %v11178
      %v11180 = vpop.f32.mrb[0].mxu0
      %11181 = vmatprep.mubr.bf16.mxu0 0
      %11182 = vmatmul.mubr.bf16.gmra.mrb[0].mxu0 %v11024
      %v11183 = vpop.f32.mrb[0].mxu0
      %v11184 = vadd.f32 0.0, %v11183
      %v11185 = vpop.f32.mrb[0].mxu0
      %v11186 = vpop.f32.mrb[0].mxu0
      %v11187 = vadd.f32 0.0, %v11186
      %v11188 = vpop.f32.mrb[0].mxu0
      %11189 = vdwg.mxu0
      %v11190 = vadd.f32 %v10465, %v11064
      %v11191 = vadd.f32 %v10466, %v11067
      %v11192 = vadd.f32 %v10467, %v11072
      %v11193 = vadd.f32 %v10468, %v11075
      %v11194 = vadd.f32 %v10469, %v11080
      %v11195 = vadd.f32 %v10470, %v11083
      %v11196 = vadd.f32 %v10471, %v11088
      %v11197 = vadd.f32 %v10472, %v11091
      %v11198 = vadd.f32 %v10473, %v11096
      %v11199 = vadd.f32 %v10474, %v11099
      %v11200 = vadd.f32 %v10475, %v11104
      %v11201 = vadd.f32 %v10476, %v11107
      %v11202 = vadd.f32 %v10477, %v11112
      %v11203 = vadd.f32 %v10478, %v11115
      %v11204 = vadd.f32 %v10479, %v11120
      %v11205 = vadd.f32 %v10480, %v11123
      %v11206 = vadd.f32 %v10481, %v11128
      %v11207 = vadd.f32 %v10482, %v11131
      %v11208 = vadd.f32 %v10483, %v11136
      %v11209 = vadd.f32 %v10484, %v11139
      %v11210 = vadd.f32 %v10485, %v11144
      %v11211 = vadd.f32 %v10486, %v11147
      %v11212 = vadd.f32 %v10487, %v11152
      %v11213 = vadd.f32 %v10488, %v11155
      %v11214 = vadd.f32 %v10489, %v11160
      %v11215 = vadd.f32 %v10490, %v11163
      %v11216 = vadd.f32 %v10491, %v11168
      %v11217 = vadd.f32 %v10492, %v11171
      %v11218 = vadd.f32 %v10493, %v11176
      %v11219 = vadd.f32 %v10494, %v11179
      %v11220 = vadd.f32 %v10495, %v11184
      %v11221 = vadd.f32 %v10496, %v11187
      %v11222 = vld [vmem:[%s5] sm:$0x1]
      %v11224 = vlaneseq
      %v11225 = vshrl.u32 %v11224, 7
      %v11226 = vsub.s32 0, %v11225
      %v11227 = vrot.slane %v11222, %v11226
      %v11229 = vmul.f32 %v11190, %v11227
      %v11230 = vmul.f32 %v11191, %v11227
      %v11231 = vmul.f32 %v11192, %v11227
      %v11232 = vmul.f32 %v11193, %v11227
      %v11233 = vmul.f32 %v11194, %v11227
      %v11234 = vmul.f32 %v11195, %v11227
      %v11235 = vmul.f32 %v11196, %v11227
      %v11236 = vmul.f32 %v11197, %v11227
      %v11237 = vmul.f32 %v11198, %v11227
      %v11238 = vmul.f32 %v11199, %v11227
      %v11239 = vmul.f32 %v11200, %v11227
      %v11240 = vmul.f32 %v11201, %v11227
      %v11241 = vmul.f32 %v11202, %v11227
      %v11242 = vmul.f32 %v11203, %v11227
      %v11243 = vmul.f32 %v11204, %v11227
      %v11244 = vmul.f32 %v11205, %v11227
      %v11245 = vmul.f32 %v11206, %v11227
      %v11246 = vmul.f32 %v11207, %v11227
      %v11247 = vmul.f32 %v11208, %v11227
      %v11248 = vmul.f32 %v11209, %v11227
      %v11249 = vmul.f32 %v11210, %v11227
      %v11250 = vmul.f32 %v11211, %v11227
      %v11251 = vmul.f32 %v11212, %v11227
      %v11252 = vmul.f32 %v11213, %v11227
      %v11253 = vmul.f32 %v11214, %v11227
      %v11254 = vmul.f32 %v11215, %v11227
      %v11255 = vmul.f32 %v11216, %v11227
      %v11256 = vmul.f32 %v11217, %v11227
      %v11257 = vmul.f32 %v11218, %v11227
      %v11258 = vmul.f32 %v11219, %v11227
      %v11259 = vmul.f32 %v11220, %v11227
      %v11260 = vmul.f32 %v11221, %v11227
      %v11261 = vld [vmem:[%s6] sm:$0x1]
      %v11263 = vlaneseq
      %v11264 = vshrl.u32 %v11263, 7
      %v11265 = vsub.s32 0, %v11264
      %v11266 = vrot.slane %v11261, %v11265
      %v11268 = vadd.f32 %v11229, %v11266
      %v11269 = vadd.f32 %v11230, %v11266
      %v11270 = vadd.f32 %v11231, %v11266
      %v11271 = vadd.f32 %v11232, %v11266
      %v11272 = vadd.f32 %v11233, %v11266
      %v11273 = vadd.f32 %v11234, %v11266
      %v11274 = vadd.f32 %v11235, %v11266
      %v11275 = vadd.f32 %v11236, %v11266
      %v11276 = vadd.f32 %v11237, %v11266
      %v11277 = vadd.f32 %v11238, %v11266
      %v11278 = vadd.f32 %v11239, %v11266
      %v11279 = vadd.f32 %v11240, %v11266
      %v11280 = vadd.f32 %v11241, %v11266
      %v11281 = vadd.f32 %v11242, %v11266
      %v11282 = vadd.f32 %v11243, %v11266
      %v11283 = vadd.f32 %v11244, %v11266
      %v11284 = vadd.f32 %v11245, %v11266
      %v11285 = vadd.f32 %v11246, %v11266
      %v11286 = vadd.f32 %v11247, %v11266
      %v11287 = vadd.f32 %v11248, %v11266
      %v11288 = vadd.f32 %v11249, %v11266
      %v11289 = vadd.f32 %v11250, %v11266
      %v11290 = vadd.f32 %v11251, %v11266
      %v11291 = vadd.f32 %v11252, %v11266
      %v11292 = vadd.f32 %v11253, %v11266
      %v11293 = vadd.f32 %v11254, %v11266
      %v11294 = vadd.f32 %v11255, %v11266
      %v11295 = vadd.f32 %v11256, %v11266
      %v11296 = vadd.f32 %v11257, %v11266
      %v11297 = vadd.f32 %v11258, %v11266
      %v11298 = vadd.f32 %v11259, %v11266
      %v11299 = vadd.f32 %v11260, %v11266
      %v11300 = vmax.f32 %v11268, 0.0
      %v11301 = vmax.f32 %v11269, 0.0
      %v11302 = vmax.f32 %v11270, 0.0
      %v11303 = vmax.f32 %v11271, 0.0
      %v11304 = vmax.f32 %v11272, 0.0
      %v11305 = vmax.f32 %v11273, 0.0
      %v11306 = vmax.f32 %v11274, 0.0
      %v11307 = vmax.f32 %v11275, 0.0
      %v11308 = vmax.f32 %v11276, 0.0
      %v11309 = vmax.f32 %v11277, 0.0
      %v11310 = vmax.f32 %v11278, 0.0
      %v11311 = vmax.f32 %v11279, 0.0
      %v11312 = vmax.f32 %v11280, 0.0
      %v11313 = vmax.f32 %v11281, 0.0
      %v11314 = vmax.f32 %v11282, 0.0
      %v11315 = vmax.f32 %v11283, 0.0
      %v11316 = vmax.f32 %v11284, 0.0
      %v11317 = vmax.f32 %v11285, 0.0
      %v11318 = vmax.f32 %v11286, 0.0
      %v11319 = vmax.f32 %v11287, 0.0
      %v11320 = vmax.f32 %v11288, 0.0
      %v11321 = vmax.f32 %v11289, 0.0
      %v11322 = vmax.f32 %v11290, 0.0
      %v11323 = vmax.f32 %v11291, 0.0
      %v11324 = vmax.f32 %v11292, 0.0
      %v11325 = vmax.f32 %v11293, 0.0
      %v11326 = vmax.f32 %v11294, 0.0
      %v11327 = vmax.f32 %v11295, 0.0
      %v11328 = vmax.f32 %v11296, 0.0
      %v11329 = vmax.f32 %v11297, 0.0
      %v11330 = vmax.f32 %v11298, 0.0
      %v11331 = vmax.f32 %v11299, 0.0
      %11332 = vst.msk [vmem:[%s278] sm:$0xff] %vm1097, %v11300
      %11333 = vst.msk [vmem:[%s278 + $0x8] sm:$0xff] %vm1097, %v11301
      %11334 = vst.msk [vmem:[%s278 + $0x10] sm:$0xff] %vm1097, %v11302
      %11335 = vst.msk [vmem:[%s278 + $0x18] sm:$0xff] %vm1097, %v11303
      %11336 = vst.msk [vmem:[%s278 + $0x20] sm:$0xff] %vm1097, %v11304
      %11337 = vst.msk [vmem:[%s278 + $0x28] sm:$0xff] %vm1097, %v11305
      %11338 = vst.msk [vmem:[%s278 + $0x30] sm:$0xff] %vm1097, %v11306
      %11339 = vst.msk [vmem:[%s278 + $0x38] sm:$0xff] %vm1097, %v11307
      %11340 = vst.msk [vmem:[%s278 + $0x40] sm:$0xff] %vm1097, %v11308
      %11341 = vst.msk [vmem:[%s278 + $0x48] sm:$0xff] %vm1097, %v11309
      %11342 = vst.msk [vmem:[%s278 + $0x50] sm:$0xff] %vm1097, %v11310
      %11343 = vst.msk [vmem:[%s278 + $0x58] sm:$0xff] %vm1097, %v11311
      %11344 = vst.msk [vmem:[%s278 + $0x60] sm:$0xff] %vm1097, %v11312
      %11345 = vst.msk [vmem:[%s278 + $0x68] sm:$0xff] %vm1097, %v11313
      %11346 = vst.msk [vmem:[%s278 + $0x70] sm:$0xff] %vm1097, %v11314
      %11347 = vst.msk [vmem:[%s278 + $0x78] sm:$0xff] %vm1097, %v11315
      %11348 = vst.msk [vmem:[%s278 + $0x80] sm:$0xff] %vm1097, %v11316
      %11349 = vst.msk [vmem:[%s278 + $0x88] sm:$0xff] %vm1097, %v11317
      %11350 = vst.msk [vmem:[%s278 + $0x90] sm:$0xff] %vm1097, %v11318
      %11351 = vst.msk [vmem:[%s278 + $0x98] sm:$0xff] %vm1097, %v11319
      %11352 = vst.msk [vmem:[%s278 + $0xa0] sm:$0xff] %vm1097, %v11320
      %11353 = vst.msk [vmem:[%s278 + $0xa8] sm:$0xff] %vm1097, %v11321
      %11354 = vst.msk [vmem:[%s278 + $0xb0] sm:$0xff] %vm1097, %v11322
      %11355 = vst.msk [vmem:[%s278 + $0xb8] sm:$0xff] %vm1097, %v11323
      %11356 = vst.msk [vmem:[%s278 + $0xc0] sm:$0xff] %vm1097, %v11324
      %11357 = vst.msk [vmem:[%s278 + $0xc8] sm:$0xff] %vm1097, %v11325
      %11358 = vst.msk [vmem:[%s278 + $0xd0] sm:$0xff] %vm1097, %v11326
      %11359 = vst.msk [vmem:[%s278 + $0xd8] sm:$0xff] %vm1097, %v11327
      %11360 = vst.msk [vmem:[%s278 + $0xe0] sm:$0xff] %vm1097, %v11328
      %11361 = vst.msk [vmem:[%s278 + $0xe8] sm:$0xff] %vm1097, %v11329
      %11362 = vst.msk [vmem:[%s278 + $0xf0] sm:$0xff] %vm1097, %v11330
      %11363 = vst.msk [vmem:[%s278 + $0xf8] sm:$0xff] %vm1097, %v11331
      %p11364 = scmp.lt.s32.totalorder %s18, 1
      %s11365 = scalar_select %p11364, %s18, 1
      %s11366 = smul.addr %s11365, 32
      %s11367 = smul.addr %s11366, 8
      %s11368 = scalar_lea.vmem %s7, %s11367
      // Predicated region
      $region49: #{double_conv.1} parent=47 // pred_check
        %p11369 = pneg %p188
      $region50: #{double_conv.1} parent=47 // pred_check_branch
        %11371 = sbr.rel (%p11369) target = $region52
      $region51: #{double_conv.1} parent=47 // pred_region
        _
      $region52: #{double_conv.1} parent=47 // pred_fallthru
        _
    $region48: #{double_conv.1} parent=5 // pred_fallthru
      _
    %p11372 = scmp.le.s32.totalorder 2, %s13
    // Predicated region
    $region53: #{double_conv.1} parent=5 // pred_check
      %p11373 = pneg %p11372
    $region54: #{double_conv.1} parent=5 // pred_check_branch
      %11375 = sbr.rel (%p11373) target = $region56
    $region55: #{double_conv.1} parent=5 // pred_region
      %s11376 = ssub.s32 %s13, 2
      // Predicated region
      $region57: #{double_conv.1} parent=55 // pred_check
        %p11377 = pneg %p194
      $region58: #{double_conv.1} parent=55 // pred_check_branch
        %11379 = sbr.rel (%p11377) target = $region60
      $region59: #{double_conv.1} parent=55 // pred_region
        %p11380 = scmp.lt.s32.totalorder %s19, 1
        %s11381 = scalar_select %p11380, %s19, 1
        %s11382 = smul.addr %s11381, 32
        %s11383 = smul.addr %s11382, 8
        %s11384 = scalar_lea.vmem %s7, %s11383
      $region60: #{double_conv.1} parent=55 // pred_fallthru
        _
    $region56: #{double_conv.1} parent=5 // pred_fallthru
      _
  $region6: #{double_conv.1} parent=0 // loop_footer
    %s17 = sadd.s32 1, %s13
  $region7: #{double_conv.1} parent=0 // loop_footer_branch
    %12 = sbr.rel target = $region3
  $region8: #{double_conv.1} parent=0 // loop_exit
    _

</llo_original>
